<compile_context>
chip_gen: v6e
topology: v6e:2x2x1
jax: 0.10.0
libtpu: 0.0.40
codegen_flags: <defaults>
</compile_context>

<pallas_src>
import jax
import jax.numpy as jnp
from jax.experimental import pallas as pl
from jax.experimental.pallas import tpu as pltpu

# Hyperparameters of the module instance (small, per the task instructions).
BATCH = 2
SEQ_LEN = 8
INPUT_SIZE = 8
HIDDEN_SIZE = 32
NUM_LAYERS = 2
OUTPUT_SIZE = 4


# ----------------------------------- kernel ----------------------------------------
def _biagru_kernel(x_ref, wih0_ref, wihL_ref, whh_ref, bias_ref, bhhn_ref,
                   att_ref, fcw_ref, fcb_ref, out_ref, fwd_hist, bwd_hist):
    """All weights / intermediates stay in VMEM; HBM traffic = read x + weights, write out.

    Packed weight refs (gate order r|z|n along the last axis):
      wih0_ref : (2, D_in, 3H)            layer-0 input weights per direction (transposed)
      wihL_ref : (4*(NL-1), H, 3H)        deeper-layer input weights, [layer, dir, half]
      whh_ref  : (2*NL, H, 3H)            recurrent weights per cell
      bias_ref : (2*NL, 3H)               [b_ih_r+b_hh_r | b_ih_z+b_hh_z | b_ih_n]
      bhhn_ref : (2*NL, H)                b_hh_n (stays inside the r*(.) term)
      att_ref  : (2, H)                   attention vector split into fwd/bwd halves
      fcw_ref  : (2H, O)                  fc weight transposed (fwd rows first)
      fcb_ref  : (1, O)
    """
    f32 = jnp.float32
    B, L, H = BATCH, SEQ_LEN, HIDDEN_SIZE
    G = 3 * H

    # Batch-major stacked input: row index = b*L + t (no transpose anywhere).
    x2d = x_ref[...].astype(f32).reshape(B * L, INPUT_SIZE)

    hist = (fwd_hist, bwd_hist)
    prev_f = prev_b = None          # (B, L, H) histories of the previous layer
    prev_f2d = prev_b2d = None      # (B*L, H) stacked form

    for layer in range(NUM_LAYERS):
        # ---- time-parallel, gate-fused input projections for both directions ----
        gi, w_hh, b_hn = [], [], []
        for d in range(2):
            c = 2 * layer + d
            if layer == 0:
                g = jnp.dot(x2d, wih0_ref[d], preferred_element_type=f32)
            else:
                base = ((layer - 1) * 2 + d) * 2
                g = (jnp.dot(prev_f2d, wihL_ref[base], preferred_element_type=f32)
                     + jnp.dot(prev_b2d, wihL_ref[base + 1], preferred_element_type=f32))
            g = g + bias_ref[c:c + 1, :]           # bias folded once, outside recurrence
            gi.append(g.reshape(B, L, G))          # (B, L, 3H)
            w_hh.append(whh_ref[c])                # (H, 3H)
            b_hn.append(bhhn_ref[c:c + 1, :])      # (1, H)

        # ---- interleaved fwd/bwd recurrence (statically unrolled over time) ----
        h = [jnp.zeros((B, H), f32), jnp.zeros((B, H), f32)]
        for s in range(L):
            t = (s, L - 1 - s)                     # fwd time, bwd time
            for d in range(2):
                gh = jnp.dot(h[d], w_hh[d], preferred_element_type=f32)   # (B, 3H)
                gx = gi[d][:, t[d], :]                                    # (B, 3H)
                rz = jax.nn.sigmoid(gx[:, :2 * H] + gh[:, :2 * H])
                r, z = rz[:, :H], rz[:, H:]
                n = jnp.tanh(gx[:, 2 * H:] + r * (gh[:, 2 * H:] + b_hn[d]))
                h[d] = (1.0 - z) * n + z * h[d]
                hist[d][:, t[d], :] = h[d]

        prev_f = fwd_hist[...]                     # (B, L, H)
        prev_b = bwd_hist[...]
        prev_f2d = prev_f.reshape(B * L, H)
        prev_b2d = prev_b.reshape(B * L, H)

    # ---- attention over the time axis (softmax_t of <h_t, att_w>, weighted sum) ----
    att_f = att_ref[0:1, :]                        # (1, H)
    att_b = att_ref[1:2, :]
    logits = (jnp.sum(prev_f2d * att_f, axis=1, keepdims=True)
              + jnp.sum(prev_b2d * att_b, axis=1, keepdims=True)).reshape(B, L, 1)
    m = jnp.max(logits, axis=1, keepdims=True)                     # (B, 1, 1)
    e = jnp.exp(logits - m)                                        # (B, L, 1)
    inv = pl.reciprocal(jnp.sum(e, axis=1, keepdims=True), approx=True)
    p = e * inv                                                    # (B, L, 1)
    w_f = jnp.sum(prev_f * p, axis=1)                              # (B, H)
    w_b = jnp.sum(prev_b * p, axis=1)

    out = (jnp.dot(w_f, fcw_ref[:H, :], preferred_element_type=f32)
           + jnp.dot(w_b, fcw_ref[H:, :], preferred_element_type=f32)
           + fcb_ref[...])
    out_ref[...] = out.astype(out_ref.dtype)


# ------------------------- one-time host-side weight packing ------------------------
def pack_params(params):
    """Re-layout weights into a few lane-dense slabs. Call ONCE (hoisted out of forward)."""
    H, O = HIDDEN_SIZE, OUTPUT_SIZE
    wih0, wihL, whh, bias, bhhn = [], [], [], [], []
    for layer in range(NUM_LAYERS):
        for d in range(2):
            w_ih, w_hh, b_ih, b_hh = params["gru"][layer][d]
            wih_t = w_ih.T                                   # (D, 3H), gate cols r|z|n
            whh.append(w_hh.T)                               # (H, 3H)
            bias.append(jnp.concatenate([b_ih[:2 * H] + b_hh[:2 * H], b_ih[2 * H:]]))
            bhhn.append(b_hh[2 * H:])
            if layer == 0:
                wih0.append(wih_t)                           # (D_in, 3H)
            else:
                wihL.append(wih_t[:H])                       # fwd-half input features
                wihL.append(wih_t[H:])                       # bwd-half input features
    att_w = params["att_w"][0]                               # (2H,)
    packed = (
        jnp.stack(wih0),                                     # (2, D_in, 3H)
        jnp.stack(wihL),                                     # (4*(NL-1), H, 3H)
        jnp.stack(whh),                                      # (2*NL, H, 3H)
        jnp.stack(bias),                                     # (2*NL, 3H)
        jnp.stack(bhhn),                                     # (2*NL, H)
        jnp.stack([att_w[:H], att_w[H:]]),                   # (2, H)
        params["fc_w"].T,                                    # (2H, O)
        params["fc_b"].reshape(1, O),                        # (1, O)
    )
    return tuple(jnp.asarray(a, jnp.float32) for a in packed)


@jax.jit
def biagru_forward(x, packed):
    vmem = pl.BlockSpec(memory_space=pltpu.MemorySpace.VMEM)
    return pl.pallas_call(
        _biagru_kernel,
        out_shape=jax.ShapeDtypeStruct((BATCH, OUTPUT_SIZE), x.dtype),
        in_specs=[vmem] * (1 + len(packed)),
        out_specs=vmem,
        scratch_shapes=[pltpu.VMEM((BATCH, SEQ_LEN, HIDDEN_SIZE), jnp.float32),
                        pltpu.VMEM((BATCH, SEQ_LEN, HIDDEN_SIZE), jnp.float32)],
    )(x, *packed)


# ----------------------------- pure-JAX reference ----------------------------------
def _gru_direction_ref(x_seq, w_ih, w_hh, b_ih, b_hh, reverse):
    """x_seq: (B, L, D) -> (B, L, H); matches torch.nn.GRU single direction."""
    H = HIDDEN_SIZE
    hp = jax.lax.Precision.HIGHEST

    def step(h, x_t):
        gi = jnp.dot(x_t, w_ih.T, precision=hp) + b_ih
        gh = jnp.dot(h, w_hh.T, precision=hp) + b_hh
        r = jax.nn.sigmoid(gi[:, :H] + gh[:, :H])
        z = jax.nn.sigmoid(gi[:, H:2 * H] + gh[:, H:2 * H])
        n = jnp.tanh(gi[:, 2 * H:] + r * gh[:, 2 * H:])
        h_new = (1.0 - z) * n + z * h
        return h_new, h_new

    xs = jnp.swapaxes(x_seq, 0, 1)                      # (L, B, D)
    if reverse:
        xs = xs[::-1]
    h0 = jnp.zeros((x_seq.shape[0], H), x_seq.dtype)
    _, hs = jax.lax.scan(step, h0, xs)
    if reverse:
        hs = hs[::-1]
    return jnp.swapaxes(hs, 0, 1)                       # (B, L, H)


def _reference_forward(x, params):
    hp = jax.lax.Precision.HIGHEST
    seq = x
    for layer in range(NUM_LAYERS):
        fwd = _gru_direction_ref(seq, *params["gru"][layer][0], reverse=False)
        bwd = _gru_direction_ref(seq, *params["gru"][layer][1], reverse=True)
        seq = jnp.concatenate([fwd, bwd], axis=-1)      # (B, L, 2H)
    logits = jnp.einsum("bld,d->bl", seq, params["att_w"][0], precision=hp)
    probs = jax.nn.softmax(logits, axis=1)
    weighted = jnp.einsum("bld,bl->bd", seq, probs, precision=hp)
    return jnp.dot(weighted, params["fc_w"].T, precision=hp) + params["fc_b"]


def _init_params(key):
    H, O = HIDDEN_SIZE, OUTPUT_SIZE
    bound = 1.0 / float(H) ** 0.5

    def unif(k, shape):
        return jax.random.uniform(k, shape, jnp.float32, minval=-bound, maxval=bound)

    params = {"gru": []}
    for layer in range(NUM_LAYERS):
        d_in = INPUT_SIZE if layer == 0 else 2 * H
        dirs = []
        for _ in range(2):
            key, k1, k2, k3, k4 = jax.random.split(key, 5)
            dirs.append((unif(k1, (3 * H, d_in)), unif(k2, (3 * H, H)),
                         unif(k3, (3 * H,)), unif(k4, (3 * H,))))
        params["gru"].append(dirs)
    key, k1, k2, k3 = jax.random.split(key, 4)
    params["att_w"] = unif(k1, (1, 2 * H))
    params["fc_w"] = unif(k2, (O, 2 * H))
    params["fc_b"] = unif(k3, (O,))
    return params


if __name__ == "__main__":
    key = jax.random.PRNGKey(0)
    kx, kp = jax.random.split(key)
    x = jax.random.normal(kx, (BATCH, SEQ_LEN, INPUT_SIZE), dtype=jnp.float32)
    params = _init_params(kp)

    packed = pack_params(params)          # one-time re-layout, hoisted out of the hot path

    out = biagru_forward(x, packed)
    out = jax.block_until_ready(out)

    ref = _reference_forward(x, params)
    assert out.shape == (BATCH, OUTPUT_SIZE)
    assert jnp.allclose(out, ref, atol=2e-3, rtol=2e-3), (out, ref)
    print("KERNEL_OK")
</pallas_src>

<mosaic_0001>
module attributes {stable_mosaic.version = 11 : i64} {
  func.func @_biagru_kernel(%arg0: memref<2x8x8xf32, #tpu.memory_space<vmem>>, %arg1: memref<2x8x96xf32, #tpu.memory_space<vmem>>, %arg2: memref<4x32x96xf32, #tpu.memory_space<vmem>>, %arg3: memref<4x32x96xf32, #tpu.memory_space<vmem>>, %arg4: memref<4x96xf32, #tpu.memory_space<vmem>>, %arg5: memref<4x32xf32, #tpu.memory_space<vmem>>, %arg6: memref<2x32xf32, #tpu.memory_space<vmem>>, %arg7: memref<64x4xf32, #tpu.memory_space<vmem>>, %arg8: memref<1x4xf32, #tpu.memory_space<vmem>>, %arg9: memref<2x4xf32, #tpu.memory_space<vmem>>, %arg10: memref<2x8x32xf32, #tpu.memory_space<vmem>>, %arg11: memref<2x8x32xf32, #tpu.memory_space<vmem>>) attributes {dimension_semantics = [], scalar_prefetch = 0 : i64, scratch_operands = 2 : i64, tpu.core_type = #tpu.core_type<tc>} {
    %c0 = arith.constant 0 : index
    %c0_0 = arith.constant 0 : index
    %c0_1 = arith.constant 0 : index
    %0 = vector.load %arg0[%c0, %c0_0, %c0_1] : memref<2x8x8xf32, #tpu.memory_space<vmem>>, vector<2x8x8xf32>
    %1 = vector.shape_cast %0 : vector<2x8x8xf32> to vector<16x8xf32>
    %c0_2 = arith.constant 0 : index
    %c0_3 = arith.constant 0 : index
    %c0_4 = arith.constant 0 : index
    %2 = vector.load %arg1[%c0_2, %c0_3, %c0_4] : memref<2x8x96xf32, #tpu.memory_space<vmem>>, vector<1x8x96xf32>
    %3 = vector.shape_cast %2 : vector<1x8x96xf32> to vector<8x96xf32>
    %cst = arith.constant dense<0.000000e+00> : vector<16x96xf32>
    %4 = tpu.matmul %1, %3, %cst {dimension_numbers = #tpu.dot_dimension_numbers<[1], [0], [0], [1], [0, 0, 1, 1], [], []>} : vector<16x8xf32>, vector<8x96xf32>, vector<16x96xf32> -> vector<16x96xf32>
    %c0_5 = arith.constant 0 : index
    %c0_6 = arith.constant 0 : index
    %5 = vector.load %arg4[%c0_5, %c0_6] : memref<4x96xf32, #tpu.memory_space<vmem>>, vector<1x96xf32>
    %6 = vector.broadcast %5 : vector<1x96xf32> to vector<16x96xf32>
    %7 = arith.addf %4, %6 : vector<16x96xf32>
    %8 = vector.shape_cast %7 : vector<16x96xf32> to vector<2x8x96xf32>
    %c0_7 = arith.constant 0 : index
    %c0_8 = arith.constant 0 : index
    %c0_9 = arith.constant 0 : index
    %9 = vector.load %arg3[%c0_7, %c0_8, %c0_9] : memref<4x32x96xf32, #tpu.memory_space<vmem>>, vector<1x32x96xf32>
    %10 = vector.shape_cast %9 : vector<1x32x96xf32> to vector<32x96xf32>
    %c0_10 = arith.constant 0 : index
    %c0_11 = arith.constant 0 : index
    %11 = vector.load %arg5[%c0_10, %c0_11] : memref<4x32xf32, #tpu.memory_space<vmem>>, vector<1x32xf32>
    %c1 = arith.constant 1 : index
    %c0_12 = arith.constant 0 : index
    %c0_13 = arith.constant 0 : index
    %12 = vector.load %arg1[%c1, %c0_12, %c0_13] : memref<2x8x96xf32, #tpu.memory_space<vmem>>, vector<1x8x96xf32>
    %13 = vector.shape_cast %12 : vector<1x8x96xf32> to vector<8x96xf32>
    %cst_14 = arith.constant dense<0.000000e+00> : vector<16x96xf32>
    %14 = tpu.matmul %1, %13, %cst_14 {dimension_numbers = #tpu.dot_dimension_numbers<[1], [0], [0], [1], [0, 0, 1, 1], [], []>} : vector<16x8xf32>, vector<8x96xf32>, vector<16x96xf32> -> vector<16x96xf32>
    %c1_15 = arith.constant 1 : index
    %c0_16 = arith.constant 0 : index
    %15 = vector.load %arg4[%c1_15, %c0_16] : memref<4x96xf32, #tpu.memory_space<vmem>>, vector<1x96xf32>
    %16 = vector.broadcast %15 : vector<1x96xf32> to vector<16x96xf32>
    %17 = arith.addf %14, %16 : vector<16x96xf32>
    %18 = vector.shape_cast %17 : vector<16x96xf32> to vector<2x8x96xf32>
    %c1_17 = arith.constant 1 : index
    %c0_18 = arith.constant 0 : index
    %c0_19 = arith.constant 0 : index
    %19 = vector.load %arg3[%c1_17, %c0_18, %c0_19] : memref<4x32x96xf32, #tpu.memory_space<vmem>>, vector<1x32x96xf32>
    %20 = vector.shape_cast %19 : vector<1x32x96xf32> to vector<32x96xf32>
    %c1_20 = arith.constant 1 : index
    %c0_21 = arith.constant 0 : index
    %21 = vector.load %arg5[%c1_20, %c0_21] : memref<4x32xf32, #tpu.memory_space<vmem>>, vector<1x32xf32>
    %cst_22 = arith.constant 0.000000e+00 : f32
    %22 = vector.broadcast %cst_22 : f32 to vector<2x32xf32>
    %cst_23 = arith.constant 0.000000e+00 : f32
    %23 = vector.broadcast %cst_23 : f32 to vector<2x32xf32>
    %cst_24 = arith.constant dense<0.000000e+00> : vector<2x96xf32>
    %24 = tpu.matmul %22, %10, %cst_24 {dimension_numbers = #tpu.dot_dimension_numbers<[1], [0], [0], [1], [0, 0, 1, 1], [], []>} : vector<2x32xf32>, vector<32x96xf32>, vector<2x96xf32> -> vector<2x96xf32>
    %25 = vector.extract_strided_slice %8 {offsets = [0, 0, 0], sizes = [2, 1, 96], strides = [1, 1, 1]} : vector<2x8x96xf32> to vector<2x1x96xf32>
    %26 = vector.shape_cast %25 : vector<2x1x96xf32> to vector<2x96xf32>
    %27 = vector.extract_strided_slice %26 {offsets = [0, 0], sizes = [2, 64], strides = [1, 1]} : vector<2x96xf32> to vector<2x64xf32>
    %28 = vector.extract_strided_slice %24 {offsets = [0, 0], sizes = [2, 64], strides = [1, 1]} : vector<2x96xf32> to vector<2x64xf32>
    %29 = arith.addf %27, %28 : vector<2x64xf32>
    %30 = arith.negf %29 : vector<2x64xf32>
    %31 = math.exp %30 : vector<2x64xf32>
    %cst_25 = arith.constant 1.000000e+00 : f32
    %32 = vector.broadcast %cst_25 : f32 to vector<2x64xf32>
    %33 = arith.addf %32, %31 : vector<2x64xf32>
    %34 = arith.divf %32, %33 : vector<2x64xf32>
    %35 = vector.extract_strided_slice %34 {offsets = [0, 0], sizes = [2, 32], strides = [1, 1]} : vector<2x64xf32> to vector<2x32xf32>
    %36 = vector.extract_strided_slice %34 {offsets = [0, 32], sizes = [2, 32], strides = [1, 1]} : vector<2x64xf32> to vector<2x32xf32>
    %37 = vector.extract_strided_slice %26 {offsets = [0, 64], sizes = [2, 32], strides = [1, 1]} : vector<2x96xf32> to vector<2x32xf32>
    %38 = vector.extract_strided_slice %24 {offsets = [0, 64], sizes = [2, 32], strides = [1, 1]} : vector<2x96xf32> to vector<2x32xf32>
    %39 = vector.broadcast %11 : vector<1x32xf32> to vector<2x32xf32>
    %40 = arith.addf %38, %39 : vector<2x32xf32>
    %41 = arith.mulf %35, %40 : vector<2x32xf32>
    %42 = arith.addf %37, %41 : vector<2x32xf32>
    %43 = math.tanh %42 : vector<2x32xf32>
    %cst_26 = arith.constant 1.000000e+00 : f32
    %44 = vector.broadcast %cst_26 : f32 to vector<2x32xf32>
    %45 = arith.subf %44, %36 : vector<2x32xf32>
    %46 = arith.mulf %45, %43 : vector<2x32xf32>
    %47 = arith.mulf %36, %22 : vector<2x32xf32>
    %48 = arith.addf %46, %47 : vector<2x32xf32>
    %c0_27 = arith.constant 0 : index
    %c0_28 = arith.constant 0 : index
    %c0_29 = arith.constant 0 : index
    %49 = vector.load %arg10[%c0_27, %c0_28, %c0_29] : memref<2x8x32xf32, #tpu.memory_space<vmem>>, vector<2x1x32xf32>
    %50 = vector.shape_cast %49 : vector<2x1x32xf32> to vector<2x32xf32>
    %51 = vector.shape_cast %48 : vector<2x32xf32> to vector<2x1x32xf32>
    tpu.vector_store %arg10[%c0_27, %c0_28, %c0_29], %51 {strides = array<i32>} : memref<2x8x32xf32, #tpu.memory_space<vmem>>, vector<2x1x32xf32>,
    %cst_30 = arith.constant dense<0.000000e+00> : vector<2x96xf32>
    %52 = tpu.matmul %23, %20, %cst_30 {dimension_numbers = #tpu.dot_dimension_numbers<[1], [0], [0], [1], [0, 0, 1, 1], [], []>} : vector<2x32xf32>, vector<32x96xf32>, vector<2x96xf32> -> vector<2x96xf32>
    %53 = vector.extract_strided_slice %18 {offsets = [0, 7, 0], sizes = [2, 1, 96], strides = [1, 1, 1]} : vector<2x8x96xf32> to vector<2x1x96xf32>
    %54 = vector.shape_cast %53 : vector<2x1x96xf32> to vector<2x96xf32>
    %55 = vector.extract_strided_slice %54 {offsets = [0, 0], sizes = [2, 64], strides = [1, 1]} : vector<2x96xf32> to vector<2x64xf32>
    %56 = vector.extract_strided_slice %52 {offsets = [0, 0], sizes = [2, 64], strides = [1, 1]} : vector<2x96xf32> to vector<2x64xf32>
    %57 = arith.addf %55, %56 : vector<2x64xf32>
    %58 = arith.negf %57 : vector<2x64xf32>
    %59 = math.exp %58 : vector<2x64xf32>
    %cst_31 = arith.constant 1.000000e+00 : f32
    %60 = vector.broadcast %cst_31 : f32 to vector<2x64xf32>
    %61 = arith.addf %60, %59 : vector<2x64xf32>
    %62 = arith.divf %60, %61 : vector<2x64xf32>
    %63 = vector.extract_strided_slice %62 {offsets = [0, 0], sizes = [2, 32], strides = [1, 1]} : vector<2x64xf32> to vector<2x32xf32>
    %64 = vector.extract_strided_slice %62 {offsets = [0, 32], sizes = [2, 32], strides = [1, 1]} : vector<2x64xf32> to vector<2x32xf32>
    %65 = vector.extract_strided_slice %54 {offsets = [0, 64], sizes = [2, 32], strides = [1, 1]} : vector<2x96xf32> to vector<2x32xf32>
    %66 = vector.extract_strided_slice %52 {offsets = [0, 64], sizes = [2, 32], strides = [1, 1]} : vector<2x96xf32> to vector<2x32xf32>
    %67 = vector.broadcast %21 : vector<1x32xf32> to vector<2x32xf32>
    %68 = arith.addf %66, %67 : vector<2x32xf32>
    %69 = arith.mulf %63, %68 : vector<2x32xf32>
    %70 = arith.addf %65, %69 : vector<2x32xf32>
    %71 = math.tanh %70 : vector<2x32xf32>
    %cst_32 = arith.constant 1.000000e+00 : f32
    %72 = vector.broadcast %cst_32 : f32 to vector<2x32xf32>
    %73 = arith.subf %72, %64 : vector<2x32xf32>
    %74 = arith.mulf %73, %71 : vector<2x32xf32>
    %75 = arith.mulf %64, %23 : vector<2x32xf32>
    %76 = arith.addf %74, %75 : vector<2x32xf32>
    %c0_33 = arith.constant 0 : index
    %c7 = arith.constant 7 : index
    %c0_34 = arith.constant 0 : index
    %77 = vector.load %arg11[%c0_33, %c7, %c0_34] : memref<2x8x32xf32, #tpu.memory_space<vmem>>, vector<2x1x32xf32>
    %78 = vector.shape_cast %77 : vector<2x1x32xf32> to vector<2x32xf32>
    %79 = vector.shape_cast %76 : vector<2x32xf32> to vector<2x1x32xf32>
    tpu.vector_store %arg11[%c0_33, %c7, %c0_34], %79 {strides = array<i32>} : memref<2x8x32xf32, #tpu.memory_space<vmem>>, vector<2x1x32xf32>,
    %cst_35 = arith.constant dense<0.000000e+00> : vector<2x96xf32>
    %80 = tpu.matmul %48, %10, %cst_35 {dimension_numbers = #tpu.dot_dimension_numbers<[1], [0], [0], [1], [0, 0, 1, 1], [], []>} : vector<2x32xf32>, vector<32x96xf32>, vector<2x96xf32> -> vector<2x96xf32>
    %81 = vector.extract_strided_slice %8 {offsets = [0, 1, 0], sizes = [2, 1, 96], strides = [1, 1, 1]} : vector<2x8x96xf32> to vector<2x1x96xf32>
    %82 = vector.shape_cast %81 : vector<2x1x96xf32> to vector<2x96xf32>
    %83 = vector.extract_strided_slice %82 {offsets = [0, 0], sizes = [2, 64], strides = [1, 1]} : vector<2x96xf32> to vector<2x64xf32>
    %84 = vector.extract_strided_slice %80 {offsets = [0, 0], sizes = [2, 64], strides = [1, 1]} : vector<2x96xf32> to vector<2x64xf32>
    %85 = arith.addf %83, %84 : vector<2x64xf32>
    %86 = arith.negf %85 : vector<2x64xf32>
    %87 = math.exp %86 : vector<2x64xf32>
    %cst_36 = arith.constant 1.000000e+00 : f32
    %88 = vector.broadcast %cst_36 : f32 to vector<2x64xf32>
    %89 = arith.addf %88, %87 : vector<2x64xf32>
    %90 = arith.divf %88, %89 : vector<2x64xf32>
    %91 = vector.extract_strided_slice %90 {offsets = [0, 0], sizes = [2, 32], strides = [1, 1]} : vector<2x64xf32> to vector<2x32xf32>
    %92 = vector.extract_strided_slice %90 {offsets = [0, 32], sizes = [2, 32], strides = [1, 1]} : vector<2x64xf32> to vector<2x32xf32>
    %93 = vector.extract_strided_slice %82 {offsets = [0, 64], sizes = [2, 32], strides = [1, 1]} : vector<2x96xf32> to vector<2x32xf32>
    %94 = vector.extract_strided_slice %80 {offsets = [0, 64], sizes = [2, 32], strides = [1, 1]} : vector<2x96xf32> to vector<2x32xf32>
    %95 = vector.broadcast %11 : vector<1x32xf32> to vector<2x32xf32>
    %96 = arith.addf %94, %95 : vector<2x32xf32>
    %97 = arith.mulf %91, %96 : vector<2x32xf32>
    %98 = arith.addf %93, %97 : vector<2x32xf32>
    %99 = math.tanh %98 : vector<2x32xf32>
    %cst_37 = arith.constant 1.000000e+00 : f32
    %100 = vector.broadcast %cst_37 : f32 to vector<2x32xf32>
    %101 = arith.subf %100, %92 : vector<2x32xf32>
    %102 = arith.mulf %101, %99 : vector<2x32xf32>
    %103 = arith.mulf %92, %48 : vector<2x32xf32>
    %104 = arith.addf %102, %103 : vector<2x32xf32>
    %c0_38 = arith.constant 0 : index
    %c1_39 = arith.constant 1 : index
    %c0_40 = arith.constant 0 : index
    %105 = vector.load %arg10[%c0_38, %c1_39, %c0_40] : memref<2x8x32xf32, #tpu.memory_space<vmem>>, vector<2x1x32xf32>
    %106 = vector.shape_cast %105 : vector<2x1x32xf32> to vector<2x32xf32>
    %107 = vector.shape_cast %104 : vector<2x32xf32> to vector<2x1x32xf32>
    tpu.vector_store %arg10[%c0_38, %c1_39, %c0_40], %107 {strides = array<i32>} : memref<2x8x32xf32, #tpu.memory_space<vmem>>, vector<2x1x32xf32>,
    %cst_41 = arith.constant dense<0.000000e+00> : vector<2x96xf32>
    %108 = tpu.matmul %76, %20, %cst_41 {dimension_numbers = #tpu.dot_dimension_numbers<[1], [0], [0], [1], [0, 0, 1, 1], [], []>} : vector<2x32xf32>, vector<32x96xf32>, vector<2x96xf32> -> vector<2x96xf32>
    %109 = vector.extract_strided_slice %18 {offsets = [0, 6, 0], sizes = [2, 1, 96], strides = [1, 1, 1]} : vector<2x8x96xf32> to vector<2x1x96xf32>
    %110 = vector.shape_cast %109 : vector<2x1x96xf32> to vector<2x96xf32>
    %111 = vector.extract_strided_slice %110 {offsets = [0, 0], sizes = [2, 64], strides = [1, 1]} : vector<2x96xf32> to vector<2x64xf32>
    %112 = vector.extract_strided_slice %108 {offsets = [0, 0], sizes = [2, 64], strides = [1, 1]} : vector<2x96xf32> to vector<2x64xf32>
    %113 = arith.addf %111, %112 : vector<2x64xf32>
    %114 = arith.negf %113 : vector<2x64xf32>
    %115 = math.exp %114 : vector<2x64xf32>
    %cst_42 = arith.constant 1.000000e+00 : f32
    %116 = vector.broadcast %cst_42 : f32 to vector<2x64xf32>
    %117 = arith.addf %116, %115 : vector<2x64xf32>
    %118 = arith.divf %116, %117 : vector<2x64xf32>
    %119 = vector.extract_strided_slice %118 {offsets = [0, 0], sizes = [2, 32], strides = [1, 1]} : vector<2x64xf32> to vector<2x32xf32>
    %120 = vector.extract_strided_slice %118 {offsets = [0, 32], sizes = [2, 32], strides = [1, 1]} : vector<2x64xf32> to vector<2x32xf32>
    %121 = vector.extract_strided_slice %110 {offsets = [0, 64], sizes = [2, 32], strides = [1, 1]} : vector<2x96xf32> to vector<2x32xf32>
    %122 = vector.extract_strided_slice %108 {offsets = [0, 64], sizes = [2, 32], strides = [1, 1]} : vector<2x96xf32> to vector<2x32xf32>
    %123 = vector.broadcast %21 : vector<1x32xf32> to vector<2x32xf32>
    %124 = arith.addf %122, %123 : vector<2x32xf32>
    %125 = arith.mulf %119, %124 : vector<2x32xf32>
    %126 = arith.addf %121, %125 : vector<2x32xf32>
    %127 = math.tanh %126 : vector<2x32xf32>
    %cst_43 = arith.constant 1.000000e+00 : f32
    %128 = vector.broadcast %cst_43 : f32 to vector<2x32xf32>
    %129 = arith.subf %128, %120 : vector<2x32xf32>
    %130 = arith.mulf %129, %127 : vector<2x32xf32>
    %131 = arith.mulf %120, %76 : vector<2x32xf32>
    %132 = arith.addf %130, %131 : vector<2x32xf32>
    %c0_44 = arith.constant 0 : index
    %c6 = arith.constant 6 : index
    %c0_45 = arith.constant 0 : index
    %133 = vector.load %arg11[%c0_44, %c6, %c0_45] : memref<2x8x32xf32, #tpu.memory_space<vmem>>, vector<2x1x32xf32>
    %134 = vector.shape_cast %133 : vector<2x1x32xf32> to vector<2x32xf32>
    %135 = vector.shape_cast %132 : vector<2x32xf32> to vector<2x1x32xf32>
    tpu.vector_store %arg11[%c0_44, %c6, %c0_45], %135 {strides = array<i32>} : memref<2x8x32xf32, #tpu.memory_space<vmem>>, vector<2x1x32xf32>,
    %cst_46 = arith.constant dense<0.000000e+00> : vector<2x96xf32>
    %136 = tpu.matmul %104, %10, %cst_46 {dimension_numbers = #tpu.dot_dimension_numbers<[1], [0], [0], [1], [0, 0, 1, 1], [], []>} : vector<2x32xf32>, vector<32x96xf32>, vector<2x96xf32> -> vector<2x96xf32>
    %137 = vector.extract_strided_slice %8 {offsets = [0, 2, 0], sizes = [2, 1, 96], strides = [1, 1, 1]} : vector<2x8x96xf32> to vector<2x1x96xf32>
    %138 = vector.shape_cast %137 : vector<2x1x96xf32> to vector<2x96xf32>
    %139 = vector.extract_strided_slice %138 {offsets = [0, 0], sizes = [2, 64], strides = [1, 1]} : vector<2x96xf32> to vector<2x64xf32>
    %140 = vector.extract_strided_slice %136 {offsets = [0, 0], sizes = [2, 64], strides = [1, 1]} : vector<2x96xf32> to vector<2x64xf32>
    %141 = arith.addf %139, %140 : vector<2x64xf32>
    %142 = arith.negf %141 : vector<2x64xf32>
    %143 = math.exp %142 : vector<2x64xf32>
    %cst_47 = arith.constant 1.000000e+00 : f32
    %144 = vector.broadcast %cst_47 : f32 to vector<2x64xf32>
    %145 = arith.addf %144, %143 : vector<2x64xf32>
    %146 = arith.divf %144, %145 : vector<2x64xf32>
    %147 = vector.extract_strided_slice %146 {offsets = [0, 0], sizes = [2, 32], strides = [1, 1]} : vector<2x64xf32> to vector<2x32xf32>
    %148 = vector.extract_strided_slice %146 {offsets = [0, 32], sizes = [2, 32], strides = [1, 1]} : vector<2x64xf32> to vector<2x32xf32>
    %149 = vector.extract_strided_slice %138 {offsets = [0, 64], sizes = [2, 32], strides = [1, 1]} : vector<2x96xf32> to vector<2x32xf32>
    %150 = vector.extract_strided_slice %136 {offsets = [0, 64], sizes = [2, 32], strides = [1, 1]} : vector<2x96xf32> to vector<2x32xf32>
    %151 = vector.broadcast %11 : vector<1x32xf32> to vector<2x32xf32>
    %152 = arith.addf %150, %151 : vector<2x32xf32>
    %153 = arith.mulf %147, %152 : vector<2x32xf32>
    %154 = arith.addf %149, %153 : vector<2x32xf32>
    %155 = math.tanh %154 : vector<2x32xf32>
    %cst_48 = arith.constant 1.000000e+00 : f32
    %156 = vector.broadcast %cst_48 : f32 to vector<2x32xf32>
    %157 = arith.subf %156, %148 : vector<2x32xf32>
    %158 = arith.mulf %157, %155 : vector<2x32xf32>
    %159 = arith.mulf %148, %104 : vector<2x32xf32>
    %160 = arith.addf %158, %159 : vector<2x32xf32>
    %c0_49 = arith.constant 0 : index
    %c2 = arith.constant 2 : index
    %c0_50 = arith.constant 0 : index
    %161 = vector.load %arg10[%c0_49, %c2, %c0_50] : memref<2x8x32xf32, #tpu.memory_space<vmem>>, vector<2x1x32xf32>
    %162 = vector.shape_cast %161 : vector<2x1x32xf32> to vector<2x32xf32>
    %163 = vector.shape_cast %160 : vector<2x32xf32> to vector<2x1x32xf32>
    tpu.vector_store %arg10[%c0_49, %c2, %c0_50], %163 {strides = array<i32>} : memref<2x8x32xf32, #tpu.memory_space<vmem>>, vector<2x1x32xf32>,
    %cst_51 = arith.constant dense<0.000000e+00> : vector<2x96xf32>
    %164 = tpu.matmul %132, %20, %cst_51 {dimension_numbers = #tpu.dot_dimension_numbers<[1], [0], [0], [1], [0, 0, 1, 1], [], []>} : vector<2x32xf32>, vector<32x96xf32>, vector<2x96xf32> -> vector<2x96xf32>
    %165 = vector.extract_strided_slice %18 {offsets = [0, 5, 0], sizes = [2, 1, 96], strides = [1, 1, 1]} : vector<2x8x96xf32> to vector<2x1x96xf32>
    %166 = vector.shape_cast %165 : vector<2x1x96xf32> to vector<2x96xf32>
    %167 = vector.extract_strided_slice %166 {offsets = [0, 0], sizes = [2, 64], strides = [1, 1]} : vector<2x96xf32> to vector<2x64xf32>
    %168 = vector.extract_strided_slice %164 {offsets = [0, 0], sizes = [2, 64], strides = [1, 1]} : vector<2x96xf32> to vector<2x64xf32>
    %169 = arith.addf %167, %168 : vector<2x64xf32>
    %170 = arith.negf %169 : vector<2x64xf32>
    %171 = math.exp %170 : vector<2x64xf32>
    %cst_52 = arith.constant 1.000000e+00 : f32
    %172 = vector.broadcast %cst_52 : f32 to vector<2x64xf32>
    %173 = arith.addf %172, %171 : vector<2x64xf32>
    %174 = arith.divf %172, %173 : vector<2x64xf32>
    %175 = vector.extract_strided_slice %174 {offsets = [0, 0], sizes = [2, 32], strides = [1, 1]} : vector<2x64xf32> to vector<2x32xf32>
    %176 = vector.extract_strided_slice %174 {offsets = [0, 32], sizes = [2, 32], strides = [1, 1]} : vector<2x64xf32> to vector<2x32xf32>
    %177 = vector.extract_strided_slice %166 {offsets = [0, 64], sizes = [2, 32], strides = [1, 1]} : vector<2x96xf32> to vector<2x32xf32>
    %178 = vector.extract_strided_slice %164 {offsets = [0, 64], sizes = [2, 32], strides = [1, 1]} : vector<2x96xf32> to vector<2x32xf32>
    %179 = vector.broadcast %21 : vector<1x32xf32> to vector<2x32xf32>
    %180 = arith.addf %178, %179 : vector<2x32xf32>
    %181 = arith.mulf %175, %180 : vector<2x32xf32>
    %182 = arith.addf %177, %181 : vector<2x32xf32>
    %183 = math.tanh %182 : vector<2x32xf32>
    %cst_53 = arith.constant 1.000000e+00 : f32
    %184 = vector.broadcast %cst_53 : f32 to vector<2x32xf32>
    %185 = arith.subf %184, %176 : vector<2x32xf32>
    %186 = arith.mulf %185, %183 : vector<2x32xf32>
    %187 = arith.mulf %176, %132 : vector<2x32xf32>
    %188 = arith.addf %186, %187 : vector<2x32xf32>
    %c0_54 = arith.constant 0 : index
    %c5 = arith.constant 5 : index
    %c0_55 = arith.constant 0 : index
    %189 = vector.load %arg11[%c0_54, %c5, %c0_55] : memref<2x8x32xf32, #tpu.memory_space<vmem>>, vector<2x1x32xf32>
    %190 = vector.shape_cast %189 : vector<2x1x32xf32> to vector<2x32xf32>
    %191 = vector.shape_cast %188 : vector<2x32xf32> to vector<2x1x32xf32>
    tpu.vector_store %arg11[%c0_54, %c5, %c0_55], %191 {strides = array<i32>} : memref<2x8x32xf32, #tpu.memory_space<vmem>>, vector<2x1x32xf32>,
    %cst_56 = arith.constant dense<0.000000e+00> : vector<2x96xf32>
    %192 = tpu.matmul %160, %10, %cst_56 {dimension_numbers = #tpu.dot_dimension_numbers<[1], [0], [0], [1], [0, 0, 1, 1], [], []>} : vector<2x32xf32>, vector<32x96xf32>, vector<2x96xf32> -> vector<2x96xf32>
    %193 = vector.extract_strided_slice %8 {offsets = [0, 3, 0], sizes = [2, 1, 96], strides = [1, 1, 1]} : vector<2x8x96xf32> to vector<2x1x96xf32>
    %194 = vector.shape_cast %193 : vector<2x1x96xf32> to vector<2x96xf32>
    %195 = vector.extract_strided_slice %194 {offsets = [0, 0], sizes = [2, 64], strides = [1, 1]} : vector<2x96xf32> to vector<2x64xf32>
    %196 = vector.extract_strided_slice %192 {offsets = [0, 0], sizes = [2, 64], strides = [1, 1]} : vector<2x96xf32> to vector<2x64xf32>
    %197 = arith.addf %195, %196 : vector<2x64xf32>
    %198 = arith.negf %197 : vector<2x64xf32>
    %199 = math.exp %198 : vector<2x64xf32>
    %cst_57 = arith.constant 1.000000e+00 : f32
    %200 = vector.broadcast %cst_57 : f32 to vector<2x64xf32>
    %201 = arith.addf %200, %199 : vector<2x64xf32>
    %202 = arith.divf %200, %201 : vector<2x64xf32>
    %203 = vector.extract_strided_slice %202 {offsets = [0, 0], sizes = [2, 32], strides = [1, 1]} : vector<2x64xf32> to vector<2x32xf32>
    %204 = vector.extract_strided_slice %202 {offsets = [0, 32], sizes = [2, 32], strides = [1, 1]} : vector<2x64xf32> to vector<2x32xf32>
    %205 = vector.extract_strided_slice %194 {offsets = [0, 64], sizes = [2, 32], strides = [1, 1]} : vector<2x96xf32> to vector<2x32xf32>
    %206 = vector.extract_strided_slice %192 {offsets = [0, 64], sizes = [2, 32], strides = [1, 1]} : vector<2x96xf32> to vector<2x32xf32>
    %207 = vector.broadcast %11 : vector<1x32xf32> to vector<2x32xf32>
    %208 = arith.addf %206, %207 : vector<2x32xf32>
    %209 = arith.mulf %203, %208 : vector<2x32xf32>
    %210 = arith.addf %205, %209 : vector<2x32xf32>
    %211 = math.tanh %210 : vector<2x32xf32>
    %cst_58 = arith.constant 1.000000e+00 : f32
    %212 = vector.broadcast %cst_58 : f32 to vector<2x32xf32>
    %213 = arith.subf %212, %204 : vector<2x32xf32>
    %214 = arith.mulf %213, %211 : vector<2x32xf32>
    %215 = arith.mulf %204, %160 : vector<2x32xf32>
    %216 = arith.addf %214, %215 : vector<2x32xf32>
    %c0_59 = arith.constant 0 : index
    %c3 = arith.constant 3 : index
    %c0_60 = arith.constant 0 : index
    %217 = vector.load %arg10[%c0_59, %c3, %c0_60] : memref<2x8x32xf32, #tpu.memory_space<vmem>>, vector<2x1x32xf32>
    %218 = vector.shape_cast %217 : vector<2x1x32xf32> to vector<2x32xf32>
    %219 = vector.shape_cast %216 : vector<2x32xf32> to vector<2x1x32xf32>
    tpu.vector_store %arg10[%c0_59, %c3, %c0_60], %219 {strides = array<i32>} : memref<2x8x32xf32, #tpu.memory_space<vmem>>, vector<2x1x32xf32>,
    %cst_61 = arith.constant dense<0.000000e+00> : vector<2x96xf32>
    %220 = tpu.matmul %188, %20, %cst_61 {dimension_numbers = #tpu.dot_dimension_numbers<[1], [0], [0], [1], [0, 0, 1, 1], [], []>} : vector<2x32xf32>, vector<32x96xf32>, vector<2x96xf32> -> vector<2x96xf32>
    %221 = vector.extract_strided_slice %18 {offsets = [0, 4, 0], sizes = [2, 1, 96], strides = [1, 1, 1]} : vector<2x8x96xf32> to vector<2x1x96xf32>
    %222 = vector.shape_cast %221 : vector<2x1x96xf32> to vector<2x96xf32>
    %223 = vector.extract_strided_slice %222 {offsets = [0, 0], sizes = [2, 64], strides = [1, 1]} : vector<2x96xf32> to vector<2x64xf32>
    %224 = vector.extract_strided_slice %220 {offsets = [0, 0], sizes = [2, 64], strides = [1, 1]} : vector<2x96xf32> to vector<2x64xf32>
    %225 = arith.addf %223, %224 : vector<2x64xf32>
    %226 = arith.negf %225 : vector<2x64xf32>
    %227 = math.exp %226 : vector<2x64xf32>
    %cst_62 = arith.constant 1.000000e+00 : f32
    %228 = vector.broadcast %cst_62 : f32 to vector<2x64xf32>
    %229 = arith.addf %228, %227 : vector<2x64xf32>
    %230 = arith.divf %228, %229 : vector<2x64xf32>
    %231 = vector.extract_strided_slice %230 {offsets = [0, 0], sizes = [2, 32], strides = [1, 1]} : vector<2x64xf32> to vector<2x32xf32>
    %232 = vector.extract_strided_slice %230 {offsets = [0, 32], sizes = [2, 32], strides = [1, 1]} : vector<2x64xf32> to vector<2x32xf32>
    %233 = vector.extract_strided_slice %222 {offsets = [0, 64], sizes = [2, 32], strides = [1, 1]} : vector<2x96xf32> to vector<2x32xf32>
    %234 = vector.extract_strided_slice %220 {offsets = [0, 64], sizes = [2, 32], strides = [1, 1]} : vector<2x96xf32> to vector<2x32xf32>
    %235 = vector.broadcast %21 : vector<1x32xf32> to vector<2x32xf32>
    %236 = arith.addf %234, %235 : vector<2x32xf32>
    %237 = arith.mulf %231, %236 : vector<2x32xf32>
    %238 = arith.addf %233, %237 : vector<2x32xf32>
    %239 = math.tanh %238 : vector<2x32xf32>
    %cst_63 = arith.constant 1.000000e+00 : f32
    %240 = vector.broadcast %cst_63 : f32 to vector<2x32xf32>
    %241 = arith.subf %240, %232 : vector<2x32xf32>
    %242 = arith.mulf %241, %239 : vector<2x32xf32>
    %243 = arith.mulf %232, %188 : vector<2x32xf32>
    %244 = arith.addf %242, %243 : vector<2x32xf32>
    %c0_64 = arith.constant 0 : index
    %c4 = arith.constant 4 : index
    %c0_65 = arith.constant 0 : index
    %245 = vector.load %arg11[%c0_64, %c4, %c0_65] : memref<2x8x32xf32, #tpu.memory_space<vmem>>, vector<2x1x32xf32>
    %246 = vector.shape_cast %245 : vector<2x1x32xf32> to vector<2x32xf32>
    %247 = vector.shape_cast %244 : vector<2x32xf32> to vector<2x1x32xf32>
    tpu.vector_store %arg11[%c0_64, %c4, %c0_65], %247 {strides = array<i32>} : memref<2x8x32xf32, #tpu.memory_space<vmem>>, vector<2x1x32xf32>,
    %cst_66 = arith.constant dense<0.000000e+00> : vector<2x96xf32>
    %248 = tpu.matmul %216, %10, %cst_66 {dimension_numbers = #tpu.dot_dimension_numbers<[1], [0], [0], [1], [0, 0, 1, 1], [], []>} : vector<2x32xf32>, vector<32x96xf32>, vector<2x96xf32> -> vector<2x96xf32>
    %249 = vector.extract_strided_slice %8 {offsets = [0, 4, 0], sizes = [2, 1, 96], strides = [1, 1, 1]} : vector<2x8x96xf32> to vector<2x1x96xf32>
    %250 = vector.shape_cast %249 : vector<2x1x96xf32> to vector<2x96xf32>
    %251 = vector.extract_strided_slice %250 {offsets = [0, 0], sizes = [2, 64], strides = [1, 1]} : vector<2x96xf32> to vector<2x64xf32>
    %252 = vector.extract_strided_slice %248 {offsets = [0, 0], sizes = [2, 64], strides = [1, 1]} : vector<2x96xf32> to vector<2x64xf32>
    %253 = arith.addf %251, %252 : vector<2x64xf32>
    %254 = arith.negf %253 : vector<2x64xf32>
    %255 = math.exp %254 : vector<2x64xf32>
    %cst_67 = arith.constant 1.000000e+00 : f32
    %256 = vector.broadcast %cst_67 : f32 to vector<2x64xf32>
    %257 = arith.addf %256, %255 : vector<2x64xf32>
    %258 = arith.divf %256, %257 : vector<2x64xf32>
    %259 = vector.extract_strided_slice %258 {offsets = [0, 0], sizes = [2, 32], strides = [1, 1]} : vector<2x64xf32> to vector<2x32xf32>
    %260 = vector.extract_strided_slice %258 {offsets = [0, 32], sizes = [2, 32], strides = [1, 1]} : vector<2x64xf32> to vector<2x32xf32>
    %261 = vector.extract_strided_slice %250 {offsets = [0, 64], sizes = [2, 32], strides = [1, 1]} : vector<2x96xf32> to vector<2x32xf32>
    %262 = vector.extract_strided_slice %248 {offsets = [0, 64], sizes = [2, 32], strides = [1, 1]} : vector<2x96xf32> to vector<2x32xf32>
    %263 = vector.broadcast %11 : vector<1x32xf32> to vector<2x32xf32>
    %264 = arith.addf %262, %263 : vector<2x32xf32>
    %265 = arith.mulf %259, %264 : vector<2x32xf32>
    %266 = arith.addf %261, %265 : vector<2x32xf32>
    %267 = math.tanh %266 : vector<2x32xf32>
    %cst_68 = arith.constant 1.000000e+00 : f32
    %268 = vector.broadcast %cst_68 : f32 to vector<2x32xf32>
    %269 = arith.subf %268, %260 : vector<2x32xf32>
    %270 = arith.mulf %269, %267 : vector<2x32xf32>
    %271 = arith.mulf %260, %216 : vector<2x32xf32>
    %272 = arith.addf %270, %271 : vector<2x32xf32>
    %c0_69 = arith.constant 0 : index
    %c4_70 = arith.constant 4 : index
    %c0_71 = arith.constant 0 : index
    %273 = vector.load %arg10[%c0_69, %c4_70, %c0_71] : memref<2x8x32xf32, #tpu.memory_space<vmem>>, vector<2x1x32xf32>
    %274 = vector.shape_cast %273 : vector<2x1x32xf32> to vector<2x32xf32>
    %275 = vector.shape_cast %272 : vector<2x32xf32> to vector<2x1x32xf32>
    tpu.vector_store %arg10[%c0_69, %c4_70, %c0_71], %275 {strides = array<i32>} : memref<2x8x32xf32, #tpu.memory_space<vmem>>, vector<2x1x32xf32>,
    %cst_72 = arith.constant dense<0.000000e+00> : vector<2x96xf32>
    %276 = tpu.matmul %244, %20, %cst_72 {dimension_numbers = #tpu.dot_dimension_numbers<[1], [0], [0], [1], [0, 0, 1, 1], [], []>} : vector<2x32xf32>, vector<32x96xf32>, vector<2x96xf32> -> vector<2x96xf32>
    %277 = vector.extract_strided_slice %18 {offsets = [0, 3, 0], sizes = [2, 1, 96], strides = [1, 1, 1]} : vector<2x8x96xf32> to vector<2x1x96xf32>
    %278 = vector.shape_cast %277 : vector<2x1x96xf32> to vector<2x96xf32>
    %279 = vector.extract_strided_slice %278 {offsets = [0, 0], sizes = [2, 64], strides = [1, 1]} : vector<2x96xf32> to vector<2x64xf32>
    %280 = vector.extract_strided_slice %276 {offsets = [0, 0], sizes = [2, 64], strides = [1, 1]} : vector<2x96xf32> to vector<2x64xf32>
    %281 = arith.addf %279, %280 : vector<2x64xf32>
    %282 = arith.negf %281 : vector<2x64xf32>
    %283 = math.exp %282 : vector<2x64xf32>
    %cst_73 = arith.constant 1.000000e+00 : f32
    %284 = vector.broadcast %cst_73 : f32 to vector<2x64xf32>
    %285 = arith.addf %284, %283 : vector<2x64xf32>
    %286 = arith.divf %284, %285 : vector<2x64xf32>
    %287 = vector.extract_strided_slice %286 {offsets = [0, 0], sizes = [2, 32], strides = [1, 1]} : vector<2x64xf32> to vector<2x32xf32>
    %288 = vector.extract_strided_slice %286 {offsets = [0, 32], sizes = [2, 32], strides = [1, 1]} : vector<2x64xf32> to vector<2x32xf32>
    %289 = vector.extract_strided_slice %278 {offsets = [0, 64], sizes = [2, 32], strides = [1, 1]} : vector<2x96xf32> to vector<2x32xf32>
    %290 = vector.extract_strided_slice %276 {offsets = [0, 64], sizes = [2, 32], strides = [1, 1]} : vector<2x96xf32> to vector<2x32xf32>
    %291 = vector.broadcast %21 : vector<1x32xf32> to vector<2x32xf32>
    %292 = arith.addf %290, %291 : vector<2x32xf32>
    %293 = arith.mulf %287, %292 : vector<2x32xf32>
    %294 = arith.addf %289, %293 : vector<2x32xf32>
    %295 = math.tanh %294 : vector<2x32xf32>
    %cst_74 = arith.constant 1.000000e+00 : f32
    %296 = vector.broadcast %cst_74 : f32 to vector<2x32xf32>
    %297 = arith.subf %296, %288 : vector<2x32xf32>
    %298 = arith.mulf %297, %295 : vector<2x32xf32>
    %299 = arith.mulf %288, %244 : vector<2x32xf32>
    %300 = arith.addf %298, %299 : vector<2x32xf32>
    %c0_75 = arith.constant 0 : index
    %c3_76 = arith.constant 3 : index
    %c0_77 = arith.constant 0 : index
    %301 = vector.load %arg11[%c0_75, %c3_76, %c0_77] : memref<2x8x32xf32, #tpu.memory_space<vmem>>, vector<2x1x32xf32>
    %302 = vector.shape_cast %301 : vector<2x1x32xf32> to vector<2x32xf32>
    %303 = vector.shape_cast %300 : vector<2x32xf32> to vector<2x1x32xf32>
    tpu.vector_store %arg11[%c0_75, %c3_76, %c0_77], %303 {strides = array<i32>} : memref<2x8x32xf32, #tpu.memory_space<vmem>>, vector<2x1x32xf32>,
    %cst_78 = arith.constant dense<0.000000e+00> : vector<2x96xf32>
    %304 = tpu.matmul %272, %10, %cst_78 {dimension_numbers = #tpu.dot_dimension_numbers<[1], [0], [0], [1], [0, 0, 1, 1], [], []>} : vector<2x32xf32>, vector<32x96xf32>, vector<2x96xf32> -> vector<2x96xf32>
    %305 = vector.extract_strided_slice %8 {offsets = [0, 5, 0], sizes = [2, 1, 96], strides = [1, 1, 1]} : vector<2x8x96xf32> to vector<2x1x96xf32>
    %306 = vector.shape_cast %305 : vector<2x1x96xf32> to vector<2x96xf32>
    %307 = vector.extract_strided_slice %306 {offsets = [0, 0], sizes = [2, 64], strides = [1, 1]} : vector<2x96xf32> to vector<2x64xf32>
    %308 = vector.extract_strided_slice %304 {offsets = [0, 0], sizes = [2, 64], strides = [1, 1]} : vector<2x96xf32> to vector<2x64xf32>
    %309 = arith.addf %307, %308 : vector<2x64xf32>
    %310 = arith.negf %309 : vector<2x64xf32>
    %311 = math.exp %310 : vector<2x64xf32>
    %cst_79 = arith.constant 1.000000e+00 : f32
    %312 = vector.broadcast %cst_79 : f32 to vector<2x64xf32>
    %313 = arith.addf %312, %311 : vector<2x64xf32>
    %314 = arith.divf %312, %313 : vector<2x64xf32>
    %315 = vector.extract_strided_slice %314 {offsets = [0, 0], sizes = [2, 32], strides = [1, 1]} : vector<2x64xf32> to vector<2x32xf32>
    %316 = vector.extract_strided_slice %314 {offsets = [0, 32], sizes = [2, 32], strides = [1, 1]} : vector<2x64xf32> to vector<2x32xf32>
    %317 = vector.extract_strided_slice %306 {offsets = [0, 64], sizes = [2, 32], strides = [1, 1]} : vector<2x96xf32> to vector<2x32xf32>
    %318 = vector.extract_strided_slice %304 {offsets = [0, 64], sizes = [2, 32], strides = [1, 1]} : vector<2x96xf32> to vector<2x32xf32>
    %319 = vector.broadcast %11 : vector<1x32xf32> to vector<2x32xf32>
    %320 = arith.addf %318, %319 : vector<2x32xf32>
    %321 = arith.mulf %315, %320 : vector<2x32xf32>
    %322 = arith.addf %317, %321 : vector<2x32xf32>
    %323 = math.tanh %322 : vector<2x32xf32>
    %cst_80 = arith.constant 1.000000e+00 : f32
    %324 = vector.broadcast %cst_80 : f32 to vector<2x32xf32>
    %325 = arith.subf %324, %316 : vector<2x32xf32>
    %326 = arith.mulf %325, %323 : vector<2x32xf32>
    %327 = arith.mulf %316, %272 : vector<2x32xf32>
    %328 = arith.addf %326, %327 : vector<2x32xf32>
    %c0_81 = arith.constant 0 : index
    %c5_82 = arith.constant 5 : index
    %c0_83 = arith.constant 0 : index
    %329 = vector.load %arg10[%c0_81, %c5_82, %c0_83] : memref<2x8x32xf32, #tpu.memory_space<vmem>>, vector<2x1x32xf32>
    %330 = vector.shape_cast %329 : vector<2x1x32xf32> to vector<2x32xf32>
    %331 = vector.shape_cast %328 : vector<2x32xf32> to vector<2x1x32xf32>
    tpu.vector_store %arg10[%c0_81, %c5_82, %c0_83], %331 {strides = array<i32>} : memref<2x8x32xf32, #tpu.memory_space<vmem>>, vector<2x1x32xf32>,
    %cst_84 = arith.constant dense<0.000000e+00> : vector<2x96xf32>
    %332 = tpu.matmul %300, %20, %cst_84 {dimension_numbers = #tpu.dot_dimension_numbers<[1], [0], [0], [1], [0, 0, 1, 1], [], []>} : vector<2x32xf32>, vector<32x96xf32>, vector<2x96xf32> -> vector<2x96xf32>
    %333 = vector.extract_strided_slice %18 {offsets = [0, 2, 0], sizes = [2, 1, 96], strides = [1, 1, 1]} : vector<2x8x96xf32> to vector<2x1x96xf32>
    %334 = vector.shape_cast %333 : vector<2x1x96xf32> to vector<2x96xf32>
    %335 = vector.extract_strided_slice %334 {offsets = [0, 0], sizes = [2, 64], strides = [1, 1]} : vector<2x96xf32> to vector<2x64xf32>
    %336 = vector.extract_strided_slice %332 {offsets = [0, 0], sizes = [2, 64], strides = [1, 1]} : vector<2x96xf32> to vector<2x64xf32>
    %337 = arith.addf %335, %336 : vector<2x64xf32>
    %338 = arith.negf %337 : vector<2x64xf32>
    %339 = math.exp %338 : vector<2x64xf32>
    %cst_85 = arith.constant 1.000000e+00 : f32
    %340 = vector.broadcast %cst_85 : f32 to vector<2x64xf32>
    %341 = arith.addf %340, %339 : vector<2x64xf32>
    %342 = arith.divf %340, %341 : vector<2x64xf32>
    %343 = vector.extract_strided_slice %342 {offsets = [0, 0], sizes = [2, 32], strides = [1, 1]} : vector<2x64xf32> to vector<2x32xf32>
    %344 = vector.extract_strided_slice %342 {offsets = [0, 32], sizes = [2, 32], strides = [1, 1]} : vector<2x64xf32> to vector<2x32xf32>
    %345 = vector.extract_strided_slice %334 {offsets = [0, 64], sizes = [2, 32], strides = [1, 1]} : vector<2x96xf32> to vector<2x32xf32>
    %346 = vector.extract_strided_slice %332 {offsets = [0, 64], sizes = [2, 32], strides = [1, 1]} : vector<2x96xf32> to vector<2x32xf32>
    %347 = vector.broadcast %21 : vector<1x32xf32> to vector<2x32xf32>
    %348 = arith.addf %346, %347 : vector<2x32xf32>
    %349 = arith.mulf %343, %348 : vector<2x32xf32>
    %350 = arith.addf %345, %349 : vector<2x32xf32>
    %351 = math.tanh %350 : vector<2x32xf32>
    %cst_86 = arith.constant 1.000000e+00 : f32
    %352 = vector.broadcast %cst_86 : f32 to vector<2x32xf32>
    %353 = arith.subf %352, %344 : vector<2x32xf32>
    %354 = arith.mulf %353, %351 : vector<2x32xf32>
    %355 = arith.mulf %344, %300 : vector<2x32xf32>
    %356 = arith.addf %354, %355 : vector<2x32xf32>
    %c0_87 = arith.constant 0 : index
    %c2_88 = arith.constant 2 : index
    %c0_89 = arith.constant 0 : index
    %357 = vector.load %arg11[%c0_87, %c2_88, %c0_89] : memref<2x8x32xf32, #tpu.memory_space<vmem>>, vector<2x1x32xf32>
    %358 = vector.shape_cast %357 : vector<2x1x32xf32> to vector<2x32xf32>
    %359 = vector.shape_cast %356 : vector<2x32xf32> to vector<2x1x32xf32>
    tpu.vector_store %arg11[%c0_87, %c2_88, %c0_89], %359 {strides = array<i32>} : memref<2x8x32xf32, #tpu.memory_space<vmem>>, vector<2x1x32xf32>,
    %cst_90 = arith.constant dense<0.000000e+00> : vector<2x96xf32>
    %360 = tpu.matmul %328, %10, %cst_90 {dimension_numbers = #tpu.dot_dimension_numbers<[1], [0], [0], [1], [0, 0, 1, 1], [], []>} : vector<2x32xf32>, vector<32x96xf32>, vector<2x96xf32> -> vector<2x96xf32>
    %361 = vector.extract_strided_slice %8 {offsets = [0, 6, 0], sizes = [2, 1, 96], strides = [1, 1, 1]} : vector<2x8x96xf32> to vector<2x1x96xf32>
    %362 = vector.shape_cast %361 : vector<2x1x96xf32> to vector<2x96xf32>
    %363 = vector.extract_strided_slice %362 {offsets = [0, 0], sizes = [2, 64], strides = [1, 1]} : vector<2x96xf32> to vector<2x64xf32>
    %364 = vector.extract_strided_slice %360 {offsets = [0, 0], sizes = [2, 64], strides = [1, 1]} : vector<2x96xf32> to vector<2x64xf32>
    %365 = arith.addf %363, %364 : vector<2x64xf32>
    %366 = arith.negf %365 : vector<2x64xf32>
    %367 = math.exp %366 : vector<2x64xf32>
    %cst_91 = arith.constant 1.000000e+00 : f32
    %368 = vector.broadcast %cst_91 : f32 to vector<2x64xf32>
    %369 = arith.addf %368, %367 : vector<2x64xf32>
    %370 = arith.divf %368, %369 : vector<2x64xf32>
    %371 = vector.extract_strided_slice %370 {offsets = [0, 0], sizes = [2, 32], strides = [1, 1]} : vector<2x64xf32> to vector<2x32xf32>
    %372 = vector.extract_strided_slice %370 {offsets = [0, 32], sizes = [2, 32], strides = [1, 1]} : vector<2x64xf32> to vector<2x32xf32>
    %373 = vector.extract_strided_slice %362 {offsets = [0, 64], sizes = [2, 32], strides = [1, 1]} : vector<2x96xf32> to vector<2x32xf32>
    %374 = vector.extract_strided_slice %360 {offsets = [0, 64], sizes = [2, 32], strides = [1, 1]} : vector<2x96xf32> to vector<2x32xf32>
    %375 = vector.broadcast %11 : vector<1x32xf32> to vector<2x32xf32>
    %376 = arith.addf %374, %375 : vector<2x32xf32>
    %377 = arith.mulf %371, %376 : vector<2x32xf32>
    %378 = arith.addf %373, %377 : vector<2x32xf32>
    %379 = math.tanh %378 : vector<2x32xf32>
    %cst_92 = arith.constant 1.000000e+00 : f32
    %380 = vector.broadcast %cst_92 : f32 to vector<2x32xf32>
    %381 = arith.subf %380, %372 : vector<2x32xf32>
    %382 = arith.mulf %381, %379 : vector<2x32xf32>
    %383 = arith.mulf %372, %328 : vector<2x32xf32>
    %384 = arith.addf %382, %383 : vector<2x32xf32>
    %c0_93 = arith.constant 0 : index
    %c6_94 = arith.constant 6 : index
    %c0_95 = arith.constant 0 : index
    %385 = vector.load %arg10[%c0_93, %c6_94, %c0_95] : memref<2x8x32xf32, #tpu.memory_space<vmem>>, vector<2x1x32xf32>
    %386 = vector.shape_cast %385 : vector<2x1x32xf32> to vector<2x32xf32>
    %387 = vector.shape_cast %384 : vector<2x32xf32> to vector<2x1x32xf32>
    tpu.vector_store %arg10[%c0_93, %c6_94, %c0_95], %387 {strides = array<i32>} : memref<2x8x32xf32, #tpu.memory_space<vmem>>, vector<2x1x32xf32>,
    %cst_96 = arith.constant dense<0.000000e+00> : vector<2x96xf32>
    %388 = tpu.matmul %356, %20, %cst_96 {dimension_numbers = #tpu.dot_dimension_numbers<[1], [0], [0], [1], [0, 0, 1, 1], [], []>} : vector<2x32xf32>, vector<32x96xf32>, vector<2x96xf32> -> vector<2x96xf32>
    %389 = vector.extract_strided_slice %18 {offsets = [0, 1, 0], sizes = [2, 1, 96], strides = [1, 1, 1]} : vector<2x8x96xf32> to vector<2x1x96xf32>
    %390 = vector.shape_cast %389 : vector<2x1x96xf32> to vector<2x96xf32>
    %391 = vector.extract_strided_slice %390 {offsets = [0, 0], sizes = [2, 64], strides = [1, 1]} : vector<2x96xf32> to vector<2x64xf32>
    %392 = vector.extract_strided_slice %388 {offsets = [0, 0], sizes = [2, 64], strides = [1, 1]} : vector<2x96xf32> to vector<2x64xf32>
    %393 = arith.addf %391, %392 : vector<2x64xf32>
    %394 = arith.negf %393 : vector<2x64xf32>
    %395 = math.exp %394 : vector<2x64xf32>
    %cst_97 = arith.constant 1.000000e+00 : f32
    %396 = vector.broadcast %cst_97 : f32 to vector<2x64xf32>
    %397 = arith.addf %396, %395 : vector<2x64xf32>
    %398 = arith.divf %396, %397 : vector<2x64xf32>
    %399 = vector.extract_strided_slice %398 {offsets = [0, 0], sizes = [2, 32], strides = [1, 1]} : vector<2x64xf32> to vector<2x32xf32>
    %400 = vector.extract_strided_slice %398 {offsets = [0, 32], sizes = [2, 32], strides = [1, 1]} : vector<2x64xf32> to vector<2x32xf32>
    %401 = vector.extract_strided_slice %390 {offsets = [0, 64], sizes = [2, 32], strides = [1, 1]} : vector<2x96xf32> to vector<2x32xf32>
    %402 = vector.extract_strided_slice %388 {offsets = [0, 64], sizes = [2, 32], strides = [1, 1]} : vector<2x96xf32> to vector<2x32xf32>
    %403 = vector.broadcast %21 : vector<1x32xf32> to vector<2x32xf32>
    %404 = arith.addf %402, %403 : vector<2x32xf32>
    %405 = arith.mulf %399, %404 : vector<2x32xf32>
    %406 = arith.addf %401, %405 : vector<2x32xf32>
    %407 = math.tanh %406 : vector<2x32xf32>
    %cst_98 = arith.constant 1.000000e+00 : f32
    %408 = vector.broadcast %cst_98 : f32 to vector<2x32xf32>
    %409 = arith.subf %408, %400 : vector<2x32xf32>
    %410 = arith.mulf %409, %407 : vector<2x32xf32>
    %411 = arith.mulf %400, %356 : vector<2x32xf32>
    %412 = arith.addf %410, %411 : vector<2x32xf32>
    %c0_99 = arith.constant 0 : index
    %c1_100 = arith.constant 1 : index
    %c0_101 = arith.constant 0 : index
    %413 = vector.load %arg11[%c0_99, %c1_100, %c0_101] : memref<2x8x32xf32, #tpu.memory_space<vmem>>, vector<2x1x32xf32>
    %414 = vector.shape_cast %413 : vector<2x1x32xf32> to vector<2x32xf32>
    %415 = vector.shape_cast %412 : vector<2x32xf32> to vector<2x1x32xf32>
    tpu.vector_store %arg11[%c0_99, %c1_100, %c0_101], %415 {strides = array<i32>} : memref<2x8x32xf32, #tpu.memory_space<vmem>>, vector<2x1x32xf32>,
    %cst_102 = arith.constant dense<0.000000e+00> : vector<2x96xf32>
    %416 = tpu.matmul %384, %10, %cst_102 {dimension_numbers = #tpu.dot_dimension_numbers<[1], [0], [0], [1], [0, 0, 1, 1], [], []>} : vector<2x32xf32>, vector<32x96xf32>, vector<2x96xf32> -> vector<2x96xf32>
    %417 = vector.extract_strided_slice %8 {offsets = [0, 7, 0], sizes = [2, 1, 96], strides = [1, 1, 1]} : vector<2x8x96xf32> to vector<2x1x96xf32>
    %418 = vector.shape_cast %417 : vector<2x1x96xf32> to vector<2x96xf32>
    %419 = vector.extract_strided_slice %418 {offsets = [0, 0], sizes = [2, 64], strides = [1, 1]} : vector<2x96xf32> to vector<2x64xf32>
    %420 = vector.extract_strided_slice %416 {offsets = [0, 0], sizes = [2, 64], strides = [1, 1]} : vector<2x96xf32> to vector<2x64xf32>
    %421 = arith.addf %419, %420 : vector<2x64xf32>
    %422 = arith.negf %421 : vector<2x64xf32>
    %423 = math.exp %422 : vector<2x64xf32>
    %cst_103 = arith.constant 1.000000e+00 : f32
    %424 = vector.broadcast %cst_103 : f32 to vector<2x64xf32>
    %425 = arith.addf %424, %423 : vector<2x64xf32>
    %426 = arith.divf %424, %425 : vector<2x64xf32>
    %427 = vector.extract_strided_slice %426 {offsets = [0, 0], sizes = [2, 32], strides = [1, 1]} : vector<2x64xf32> to vector<2x32xf32>
    %428 = vector.extract_strided_slice %426 {offsets = [0, 32], sizes = [2, 32], strides = [1, 1]} : vector<2x64xf32> to vector<2x32xf32>
    %429 = vector.extract_strided_slice %418 {offsets = [0, 64], sizes = [2, 32], strides = [1, 1]} : vector<2x96xf32> to vector<2x32xf32>
    %430 = vector.extract_strided_slice %416 {offsets = [0, 64], sizes = [2, 32], strides = [1, 1]} : vector<2x96xf32> to vector<2x32xf32>
    %431 = vector.broadcast %11 : vector<1x32xf32> to vector<2x32xf32>
    %432 = arith.addf %430, %431 : vector<2x32xf32>
    %433 = arith.mulf %427, %432 : vector<2x32xf32>
    %434 = arith.addf %429, %433 : vector<2x32xf32>
    %435 = math.tanh %434 : vector<2x32xf32>
    %cst_104 = arith.constant 1.000000e+00 : f32
    %436 = vector.broadcast %cst_104 : f32 to vector<2x32xf32>
    %437 = arith.subf %436, %428 : vector<2x32xf32>
    %438 = arith.mulf %437, %435 : vector<2x32xf32>
    %439 = arith.mulf %428, %384 : vector<2x32xf32>
    %440 = arith.addf %438, %439 : vector<2x32xf32>
    %c0_105 = arith.constant 0 : index
    %c7_106 = arith.constant 7 : index
    %c0_107 = arith.constant 0 : index
    %441 = vector.load %arg10[%c0_105, %c7_106, %c0_107] : memref<2x8x32xf32, #tpu.memory_space<vmem>>, vector<2x1x32xf32>
    %442 = vector.shape_cast %441 : vector<2x1x32xf32> to vector<2x32xf32>
    %443 = vector.shape_cast %440 : vector<2x32xf32> to vector<2x1x32xf32>
    tpu.vector_store %arg10[%c0_105, %c7_106, %c0_107], %443 {strides = array<i32>} : memref<2x8x32xf32, #tpu.memory_space<vmem>>, vector<2x1x32xf32>,
    %cst_108 = arith.constant dense<0.000000e+00> : vector<2x96xf32>
    %444 = tpu.matmul %412, %20, %cst_108 {dimension_numbers = #tpu.dot_dimension_numbers<[1], [0], [0], [1], [0, 0, 1, 1], [], []>} : vector<2x32xf32>, vector<32x96xf32>, vector<2x96xf32> -> vector<2x96xf32>
    %445 = vector.extract_strided_slice %18 {offsets = [0, 0, 0], sizes = [2, 1, 96], strides = [1, 1, 1]} : vector<2x8x96xf32> to vector<2x1x96xf32>
    %446 = vector.shape_cast %445 : vector<2x1x96xf32> to vector<2x96xf32>
    %447 = vector.extract_strided_slice %446 {offsets = [0, 0], sizes = [2, 64], strides = [1, 1]} : vector<2x96xf32> to vector<2x64xf32>
    %448 = vector.extract_strided_slice %444 {offsets = [0, 0], sizes = [2, 64], strides = [1, 1]} : vector<2x96xf32> to vector<2x64xf32>
    %449 = arith.addf %447, %448 : vector<2x64xf32>
    %450 = arith.negf %449 : vector<2x64xf32>
    %451 = math.exp %450 : vector<2x64xf32>
    %cst_109 = arith.constant 1.000000e+00 : f32
    %452 = vector.broadcast %cst_109 : f32 to vector<2x64xf32>
    %453 = arith.addf %452, %451 : vector<2x64xf32>
    %454 = arith.divf %452, %453 : vector<2x64xf32>
    %455 = vector.extract_strided_slice %454 {offsets = [0, 0], sizes = [2, 32], strides = [1, 1]} : vector<2x64xf32> to vector<2x32xf32>
    %456 = vector.extract_strided_slice %454 {offsets = [0, 32], sizes = [2, 32], strides = [1, 1]} : vector<2x64xf32> to vector<2x32xf32>
    %457 = vector.extract_strided_slice %446 {offsets = [0, 64], sizes = [2, 32], strides = [1, 1]} : vector<2x96xf32> to vector<2x32xf32>
    %458 = vector.extract_strided_slice %444 {offsets = [0, 64], sizes = [2, 32], strides = [1, 1]} : vector<2x96xf32> to vector<2x32xf32>
    %459 = vector.broadcast %21 : vector<1x32xf32> to vector<2x32xf32>
    %460 = arith.addf %458, %459 : vector<2x32xf32>
    %461 = arith.mulf %455, %460 : vector<2x32xf32>
    %462 = arith.addf %457, %461 : vector<2x32xf32>
    %463 = math.tanh %462 : vector<2x32xf32>
    %cst_110 = arith.constant 1.000000e+00 : f32
    %464 = vector.broadcast %cst_110 : f32 to vector<2x32xf32>
    %465 = arith.subf %464, %456 : vector<2x32xf32>
    %466 = arith.mulf %465, %463 : vector<2x32xf32>
    %467 = arith.mulf %456, %412 : vector<2x32xf32>
    %468 = arith.addf %466, %467 : vector<2x32xf32>
    %c0_111 = arith.constant 0 : index
    %c0_112 = arith.constant 0 : index
    %c0_113 = arith.constant 0 : index
    %469 = vector.load %arg11[%c0_111, %c0_112, %c0_113] : memref<2x8x32xf32, #tpu.memory_space<vmem>>, vector<2x1x32xf32>
    %470 = vector.shape_cast %469 : vector<2x1x32xf32> to vector<2x32xf32>
    %471 = vector.shape_cast %468 : vector<2x32xf32> to vector<2x1x32xf32>
    tpu.vector_store %arg11[%c0_111, %c0_112, %c0_113], %471 {strides = array<i32>} : memref<2x8x32xf32, #tpu.memory_space<vmem>>, vector<2x1x32xf32>,
    %c0_114 = arith.constant 0 : index
    %c0_115 = arith.constant 0 : index
    %c0_116 = arith.constant 0 : index
    %472 = vector.load %arg10[%c0_114, %c0_115, %c0_116] : memref<2x8x32xf32, #tpu.memory_space<vmem>>, vector<2x8x32xf32>
    %c0_117 = arith.constant 0 : index
    %c0_118 = arith.constant 0 : index
    %c0_119 = arith.constant 0 : index
    %473 = vector.load %arg11[%c0_117, %c0_118, %c0_119] : memref<2x8x32xf32, #tpu.memory_space<vmem>>, vector<2x8x32xf32>
    %474 = vector.shape_cast %472 : vector<2x8x32xf32> to vector<16x32xf32>
    %475 = vector.shape_cast %473 : vector<2x8x32xf32> to vector<16x32xf32>
    %c0_120 = arith.constant 0 : index
    %c0_121 = arith.constant 0 : index
    %c0_122 = arith.constant 0 : index
    %476 = vector.load %arg2[%c0_120, %c0_121, %c0_122] : memref<4x32x96xf32, #tpu.memory_space<vmem>>, vector<1x32x96xf32>
    %477 = vector.shape_cast %476 : vector<1x32x96xf32> to vector<32x96xf32>
    %cst_123 = arith.constant dense<0.000000e+00> : vector<16x96xf32>
    %478 = tpu.matmul %474, %477, %cst_123 {dimension_numbers = #tpu.dot_dimension_numbers<[1], [0], [0], [1], [0, 0, 1, 1], [], []>} : vector<16x32xf32>, vector<32x96xf32>, vector<16x96xf32> -> vector<16x96xf32>
    %c1_124 = arith.constant 1 : index
    %c0_125 = arith.constant 0 : index
    %c0_126 = arith.constant 0 : index
    %479 = vector.load %arg2[%c1_124, %c0_125, %c0_126] : memref<4x32x96xf32, #tpu.memory_space<vmem>>, vector<1x32x96xf32>
    %480 = vector.shape_cast %479 : vector<1x32x96xf32> to vector<32x96xf32>
    %cst_127 = arith.constant dense<0.000000e+00> : vector<16x96xf32>
    %481 = tpu.matmul %475, %480, %cst_127 {dimension_numbers = #tpu.dot_dimension_numbers<[1], [0], [0], [1], [0, 0, 1, 1], [], []>} : vector<16x32xf32>, vector<32x96xf32>, vector<16x96xf32> -> vector<16x96xf32>
    %482 = arith.addf %478, %481 : vector<16x96xf32>
    %c2_128 = arith.constant 2 : index
    %c0_129 = arith.constant 0 : index
    %483 = vector.load %arg4[%c2_128, %c0_129] : memref<4x96xf32, #tpu.memory_space<vmem>>, vector<1x96xf32>
    %484 = vector.broadcast %483 : vector<1x96xf32> to vector<16x96xf32>
    %485 = arith.addf %482, %484 : vector<16x96xf32>
    %486 = vector.shape_cast %485 : vector<16x96xf32> to vector<2x8x96xf32>
    %c2_130 = arith.constant 2 : index
    %c0_131 = arith.constant 0 : index
    %c0_132 = arith.constant 0 : index
    %487 = vector.load %arg3[%c2_130, %c0_131, %c0_132] : memref<4x32x96xf32, #tpu.memory_space<vmem>>, vector<1x32x96xf32>
    %488 = vector.shape_cast %487 : vector<1x32x96xf32> to vector<32x96xf32>
    %c2_133 = arith.constant 2 : index
    %c0_134 = arith.constant 0 : index
    %489 = vector.load %arg5[%c2_133, %c0_134] : memref<4x32xf32, #tpu.memory_space<vmem>>, vector<1x32xf32>
    %c2_135 = arith.constant 2 : index
    %c0_136 = arith.constant 0 : index
    %c0_137 = arith.constant 0 : index
    %490 = vector.load %arg2[%c2_135, %c0_136, %c0_137] : memref<4x32x96xf32, #tpu.memory_space<vmem>>, vector<1x32x96xf32>
    %491 = vector.shape_cast %490 : vector<1x32x96xf32> to vector<32x96xf32>
    %cst_138 = arith.constant dense<0.000000e+00> : vector<16x96xf32>
    %492 = tpu.matmul %474, %491, %cst_138 {dimension_numbers = #tpu.dot_dimension_numbers<[1], [0], [0], [1], [0, 0, 1, 1], [], []>} : vector<16x32xf32>, vector<32x96xf32>, vector<16x96xf32> -> vector<16x96xf32>
    %c3_139 = arith.constant 3 : index
    %c0_140 = arith.constant 0 : index
    %c0_141 = arith.constant 0 : index
    %493 = vector.load %arg2[%c3_139, %c0_140, %c0_141] : memref<4x32x96xf32, #tpu.memory_space<vmem>>, vector<1x32x96xf32>
    %494 = vector.shape_cast %493 : vector<1x32x96xf32> to vector<32x96xf32>
    %cst_142 = arith.constant dense<0.000000e+00> : vector<16x96xf32>
    %495 = tpu.matmul %475, %494, %cst_142 {dimension_numbers = #tpu.dot_dimension_numbers<[1], [0], [0], [1], [0, 0, 1, 1], [], []>} : vector<16x32xf32>, vector<32x96xf32>, vector<16x96xf32> -> vector<16x96xf32>
    %496 = arith.addf %492, %495 : vector<16x96xf32>
    %c3_143 = arith.constant 3 : index
    %c0_144 = arith.constant 0 : index
    %497 = vector.load %arg4[%c3_143, %c0_144] : memref<4x96xf32, #tpu.memory_space<vmem>>, vector<1x96xf32>
    %498 = vector.broadcast %497 : vector<1x96xf32> to vector<16x96xf32>
    %499 = arith.addf %496, %498 : vector<16x96xf32>
    %500 = vector.shape_cast %499 : vector<16x96xf32> to vector<2x8x96xf32>
    %c3_145 = arith.constant 3 : index
    %c0_146 = arith.constant 0 : index
    %c0_147 = arith.constant 0 : index
    %501 = vector.load %arg3[%c3_145, %c0_146, %c0_147] : memref<4x32x96xf32, #tpu.memory_space<vmem>>, vector<1x32x96xf32>
    %502 = vector.shape_cast %501 : vector<1x32x96xf32> to vector<32x96xf32>
    %c3_148 = arith.constant 3 : index
    %c0_149 = arith.constant 0 : index
    %503 = vector.load %arg5[%c3_148, %c0_149] : memref<4x32xf32, #tpu.memory_space<vmem>>, vector<1x32xf32>
    %cst_150 = arith.constant 0.000000e+00 : f32
    %504 = vector.broadcast %cst_150 : f32 to vector<2x32xf32>
    %cst_151 = arith.constant 0.000000e+00 : f32
    %505 = vector.broadcast %cst_151 : f32 to vector<2x32xf32>
    %cst_152 = arith.constant dense<0.000000e+00> : vector<2x96xf32>
    %506 = tpu.matmul %504, %488, %cst_152 {dimension_numbers = #tpu.dot_dimension_numbers<[1], [0], [0], [1], [0, 0, 1, 1], [], []>} : vector<2x32xf32>, vector<32x96xf32>, vector<2x96xf32> -> vector<2x96xf32>
    %507 = vector.extract_strided_slice %486 {offsets = [0, 0, 0], sizes = [2, 1, 96], strides = [1, 1, 1]} : vector<2x8x96xf32> to vector<2x1x96xf32>
    %508 = vector.shape_cast %507 : vector<2x1x96xf32> to vector<2x96xf32>
    %509 = vector.extract_strided_slice %508 {offsets = [0, 0], sizes = [2, 64], strides = [1, 1]} : vector<2x96xf32> to vector<2x64xf32>
    %510 = vector.extract_strided_slice %506 {offsets = [0, 0], sizes = [2, 64], strides = [1, 1]} : vector<2x96xf32> to vector<2x64xf32>
    %511 = arith.addf %509, %510 : vector<2x64xf32>
    %512 = arith.negf %511 : vector<2x64xf32>
    %513 = math.exp %512 : vector<2x64xf32>
    %cst_153 = arith.constant 1.000000e+00 : f32
    %514 = vector.broadcast %cst_153 : f32 to vector<2x64xf32>
    %515 = arith.addf %514, %513 : vector<2x64xf32>
    %516 = arith.divf %514, %515 : vector<2x64xf32>
    %517 = vector.extract_strided_slice %516 {offsets = [0, 0], sizes = [2, 32], strides = [1, 1]} : vector<2x64xf32> to vector<2x32xf32>
    %518 = vector.extract_strided_slice %516 {offsets = [0, 32], sizes = [2, 32], strides = [1, 1]} : vector<2x64xf32> to vector<2x32xf32>
    %519 = vector.extract_strided_slice %508 {offsets = [0, 64], sizes = [2, 32], strides = [1, 1]} : vector<2x96xf32> to vector<2x32xf32>
    %520 = vector.extract_strided_slice %506 {offsets = [0, 64], sizes = [2, 32], strides = [1, 1]} : vector<2x96xf32> to vector<2x32xf32>
    %521 = vector.broadcast %489 : vector<1x32xf32> to vector<2x32xf32>
    %522 = arith.addf %520, %521 : vector<2x32xf32>
    %523 = arith.mulf %517, %522 : vector<2x32xf32>
    %524 = arith.addf %519, %523 : vector<2x32xf32>
    %525 = math.tanh %524 : vector<2x32xf32>
    %cst_154 = arith.constant 1.000000e+00 : f32
    %526 = vector.broadcast %cst_154 : f32 to vector<2x32xf32>
    %527 = arith.subf %526, %518 : vector<2x32xf32>
    %528 = arith.mulf %527, %525 : vector<2x32xf32>
    %529 = arith.mulf %518, %504 : vector<2x32xf32>
    %530 = arith.addf %528, %529 : vector<2x32xf32>
    %c0_155 = arith.constant 0 : index
    %c0_156 = arith.constant 0 : index
    %c0_157 = arith.constant 0 : index
    %531 = vector.load %arg10[%c0_155, %c0_156, %c0_157] : memref<2x8x32xf32, #tpu.memory_space<vmem>>, vector<2x1x32xf32>
    %532 = vector.shape_cast %531 : vector<2x1x32xf32> to vector<2x32xf32>
    %533 = vector.shape_cast %530 : vector<2x32xf32> to vector<2x1x32xf32>
    tpu.vector_store %arg10[%c0_155, %c0_156, %c0_157], %533 {strides = array<i32>} : memref<2x8x32xf32, #tpu.memory_space<vmem>>, vector<2x1x32xf32>,
    %cst_158 = arith.constant dense<0.000000e+00> : vector<2x96xf32>
    %534 = tpu.matmul %505, %502, %cst_158 {dimension_numbers = #tpu.dot_dimension_numbers<[1], [0], [0], [1], [0, 0, 1, 1], [], []>} : vector<2x32xf32>, vector<32x96xf32>, vector<2x96xf32> -> vector<2x96xf32>
    %535 = vector.extract_strided_slice %500 {offsets = [0, 7, 0], sizes = [2, 1, 96], strides = [1, 1, 1]} : vector<2x8x96xf32> to vector<2x1x96xf32>
    %536 = vector.shape_cast %535 : vector<2x1x96xf32> to vector<2x96xf32>
    %537 = vector.extract_strided_slice %536 {offsets = [0, 0], sizes = [2, 64], strides = [1, 1]} : vector<2x96xf32> to vector<2x64xf32>
    %538 = vector.extract_strided_slice %534 {offsets = [0, 0], sizes = [2, 64], strides = [1, 1]} : vector<2x96xf32> to vector<2x64xf32>
    %539 = arith.addf %537, %538 : vector<2x64xf32>
    %540 = arith.negf %539 : vector<2x64xf32>
    %541 = math.exp %540 : vector<2x64xf32>
    %cst_159 = arith.constant 1.000000e+00 : f32
    %542 = vector.broadcast %cst_159 : f32 to vector<2x64xf32>
    %543 = arith.addf %542, %541 : vector<2x64xf32>
    %544 = arith.divf %542, %543 : vector<2x64xf32>
    %545 = vector.extract_strided_slice %544 {offsets = [0, 0], sizes = [2, 32], strides = [1, 1]} : vector<2x64xf32> to vector<2x32xf32>
    %546 = vector.extract_strided_slice %544 {offsets = [0, 32], sizes = [2, 32], strides = [1, 1]} : vector<2x64xf32> to vector<2x32xf32>
    %547 = vector.extract_strided_slice %536 {offsets = [0, 64], sizes = [2, 32], strides = [1, 1]} : vector<2x96xf32> to vector<2x32xf32>
    %548 = vector.extract_strided_slice %534 {offsets = [0, 64], sizes = [2, 32], strides = [1, 1]} : vector<2x96xf32> to vector<2x32xf32>
    %549 = vector.broadcast %503 : vector<1x32xf32> to vector<2x32xf32>
    %550 = arith.addf %548, %549 : vector<2x32xf32>
    %551 = arith.mulf %545, %550 : vector<2x32xf32>
    %552 = arith.addf %547, %551 : vector<2x32xf32>
    %553 = math.tanh %552 : vector<2x32xf32>
    %cst_160 = arith.constant 1.000000e+00 : f32
    %554 = vector.broadcast %cst_160 : f32 to vector<2x32xf32>
    %555 = arith.subf %554, %546 : vector<2x32xf32>
    %556 = arith.mulf %555, %553 : vector<2x32xf32>
    %557 = arith.mulf %546, %505 : vector<2x32xf32>
    %558 = arith.addf %556, %557 : vector<2x32xf32>
    %c0_161 = arith.constant 0 : index
    %c7_162 = arith.constant 7 : index
    %c0_163 = arith.constant 0 : index
    %559 = vector.load %arg11[%c0_161, %c7_162, %c0_163] : memref<2x8x32xf32, #tpu.memory_space<vmem>>, vector<2x1x32xf32>
    %560 = vector.shape_cast %559 : vector<2x1x32xf32> to vector<2x32xf32>
    %561 = vector.shape_cast %558 : vector<2x32xf32> to vector<2x1x32xf32>
    tpu.vector_store %arg11[%c0_161, %c7_162, %c0_163], %561 {strides = array<i32>} : memref<2x8x32xf32, #tpu.memory_space<vmem>>, vector<2x1x32xf32>,
    %cst_164 = arith.constant dense<0.000000e+00> : vector<2x96xf32>
    %562 = tpu.matmul %530, %488, %cst_164 {dimension_numbers = #tpu.dot_dimension_numbers<[1], [0], [0], [1], [0, 0, 1, 1], [], []>} : vector<2x32xf32>, vector<32x96xf32>, vector<2x96xf32> -> vector<2x96xf32>
    %563 = vector.extract_strided_slice %486 {offsets = [0, 1, 0], sizes = [2, 1, 96], strides = [1, 1, 1]} : vector<2x8x96xf32> to vector<2x1x96xf32>
    %564 = vector.shape_cast %563 : vector<2x1x96xf32> to vector<2x96xf32>
    %565 = vector.extract_strided_slice %564 {offsets = [0, 0], sizes = [2, 64], strides = [1, 1]} : vector<2x96xf32> to vector<2x64xf32>
    %566 = vector.extract_strided_slice %562 {offsets = [0, 0], sizes = [2, 64], strides = [1, 1]} : vector<2x96xf32> to vector<2x64xf32>
    %567 = arith.addf %565, %566 : vector<2x64xf32>
    %568 = arith.negf %567 : vector<2x64xf32>
    %569 = math.exp %568 : vector<2x64xf32>
    %cst_165 = arith.constant 1.000000e+00 : f32
    %570 = vector.broadcast %cst_165 : f32 to vector<2x64xf32>
    %571 = arith.addf %570, %569 : vector<2x64xf32>
    %572 = arith.divf %570, %571 : vector<2x64xf32>
    %573 = vector.extract_strided_slice %572 {offsets = [0, 0], sizes = [2, 32], strides = [1, 1]} : vector<2x64xf32> to vector<2x32xf32>
    %574 = vector.extract_strided_slice %572 {offsets = [0, 32], sizes = [2, 32], strides = [1, 1]} : vector<2x64xf32> to vector<2x32xf32>
    %575 = vector.extract_strided_slice %564 {offsets = [0, 64], sizes = [2, 32], strides = [1, 1]} : vector<2x96xf32> to vector<2x32xf32>
    %576 = vector.extract_strided_slice %562 {offsets = [0, 64], sizes = [2, 32], strides = [1, 1]} : vector<2x96xf32> to vector<2x32xf32>
    %577 = vector.broadcast %489 : vector<1x32xf32> to vector<2x32xf32>
    %578 = arith.addf %576, %577 : vector<2x32xf32>
    %579 = arith.mulf %573, %578 : vector<2x32xf32>
    %580 = arith.addf %575, %579 : vector<2x32xf32>
    %581 = math.tanh %580 : vector<2x32xf32>
    %cst_166 = arith.constant 1.000000e+00 : f32
    %582 = vector.broadcast %cst_166 : f32 to vector<2x32xf32>
    %583 = arith.subf %582, %574 : vector<2x32xf32>
    %584 = arith.mulf %583, %581 : vector<2x32xf32>
    %585 = arith.mulf %574, %530 : vector<2x32xf32>
    %586 = arith.addf %584, %585 : vector<2x32xf32>
    %c0_167 = arith.constant 0 : index
    %c1_168 = arith.constant 1 : index
    %c0_169 = arith.constant 0 : index
    %587 = vector.load %arg10[%c0_167, %c1_168, %c0_169] : memref<2x8x32xf32, #tpu.memory_space<vmem>>, vector<2x1x32xf32>
    %588 = vector.shape_cast %587 : vector<2x1x32xf32> to vector<2x32xf32>
    %589 = vector.shape_cast %586 : vector<2x32xf32> to vector<2x1x32xf32>
    tpu.vector_store %arg10[%c0_167, %c1_168, %c0_169], %589 {strides = array<i32>} : memref<2x8x32xf32, #tpu.memory_space<vmem>>, vector<2x1x32xf32>,
    %cst_170 = arith.constant dense<0.000000e+00> : vector<2x96xf32>
    %590 = tpu.matmul %558, %502, %cst_170 {dimension_numbers = #tpu.dot_dimension_numbers<[1], [0], [0], [1], [0, 0, 1, 1], [], []>} : vector<2x32xf32>, vector<32x96xf32>, vector<2x96xf32> -> vector<2x96xf32>
    %591 = vector.extract_strided_slice %500 {offsets = [0, 6, 0], sizes = [2, 1, 96], strides = [1, 1, 1]} : vector<2x8x96xf32> to vector<2x1x96xf32>
    %592 = vector.shape_cast %591 : vector<2x1x96xf32> to vector<2x96xf32>
    %593 = vector.extract_strided_slice %592 {offsets = [0, 0], sizes = [2, 64], strides = [1, 1]} : vector<2x96xf32> to vector<2x64xf32>
    %594 = vector.extract_strided_slice %590 {offsets = [0, 0], sizes = [2, 64], strides = [1, 1]} : vector<2x96xf32> to vector<2x64xf32>
    %595 = arith.addf %593, %594 : vector<2x64xf32>
    %596 = arith.negf %595 : vector<2x64xf32>
    %597 = math.exp %596 : vector<2x64xf32>
    %cst_171 = arith.constant 1.000000e+00 : f32
    %598 = vector.broadcast %cst_171 : f32 to vector<2x64xf32>
    %599 = arith.addf %598, %597 : vector<2x64xf32>
    %600 = arith.divf %598, %599 : vector<2x64xf32>
    %601 = vector.extract_strided_slice %600 {offsets = [0, 0], sizes = [2, 32], strides = [1, 1]} : vector<2x64xf32> to vector<2x32xf32>
    %602 = vector.extract_strided_slice %600 {offsets = [0, 32], sizes = [2, 32], strides = [1, 1]} : vector<2x64xf32> to vector<2x32xf32>
    %603 = vector.extract_strided_slice %592 {offsets = [0, 64], sizes = [2, 32], strides = [1, 1]} : vector<2x96xf32> to vector<2x32xf32>
    %604 = vector.extract_strided_slice %590 {offsets = [0, 64], sizes = [2, 32], strides = [1, 1]} : vector<2x96xf32> to vector<2x32xf32>
    %605 = vector.broadcast %503 : vector<1x32xf32> to vector<2x32xf32>
    %606 = arith.addf %604, %605 : vector<2x32xf32>
    %607 = arith.mulf %601, %606 : vector<2x32xf32>
    %608 = arith.addf %603, %607 : vector<2x32xf32>
    %609 = math.tanh %608 : vector<2x32xf32>
    %cst_172 = arith.constant 1.000000e+00 : f32
    %610 = vector.broadcast %cst_172 : f32 to vector<2x32xf32>
    %611 = arith.subf %610, %602 : vector<2x32xf32>
    %612 = arith.mulf %611, %609 : vector<2x32xf32>
    %613 = arith.mulf %602, %558 : vector<2x32xf32>
    %614 = arith.addf %612, %613 : vector<2x32xf32>
    %c0_173 = arith.constant 0 : index
    %c6_174 = arith.constant 6 : index
    %c0_175 = arith.constant 0 : index
    %615 = vector.load %arg11[%c0_173, %c6_174, %c0_175] : memref<2x8x32xf32, #tpu.memory_space<vmem>>, vector<2x1x32xf32>
    %616 = vector.shape_cast %615 : vector<2x1x32xf32> to vector<2x32xf32>
    %617 = vector.shape_cast %614 : vector<2x32xf32> to vector<2x1x32xf32>
    tpu.vector_store %arg11[%c0_173, %c6_174, %c0_175], %617 {strides = array<i32>} : memref<2x8x32xf32, #tpu.memory_space<vmem>>, vector<2x1x32xf32>,
    %cst_176 = arith.constant dense<0.000000e+00> : vector<2x96xf32>
    %618 = tpu.matmul %586, %488, %cst_176 {dimension_numbers = #tpu.dot_dimension_numbers<[1], [0], [0], [1], [0, 0, 1, 1], [], []>} : vector<2x32xf32>, vector<32x96xf32>, vector<2x96xf32> -> vector<2x96xf32>
    %619 = vector.extract_strided_slice %486 {offsets = [0, 2, 0], sizes = [2, 1, 96], strides = [1, 1, 1]} : vector<2x8x96xf32> to vector<2x1x96xf32>
    %620 = vector.shape_cast %619 : vector<2x1x96xf32> to vector<2x96xf32>
    %621 = vector.extract_strided_slice %620 {offsets = [0, 0], sizes = [2, 64], strides = [1, 1]} : vector<2x96xf32> to vector<2x64xf32>
    %622 = vector.extract_strided_slice %618 {offsets = [0, 0], sizes = [2, 64], strides = [1, 1]} : vector<2x96xf32> to vector<2x64xf32>
    %623 = arith.addf %621, %622 : vector<2x64xf32>
    %624 = arith.negf %623 : vector<2x64xf32>
    %625 = math.exp %624 : vector<2x64xf32>
    %cst_177 = arith.constant 1.000000e+00 : f32
    %626 = vector.broadcast %cst_177 : f32 to vector<2x64xf32>
    %627 = arith.addf %626, %625 : vector<2x64xf32>
    %628 = arith.divf %626, %627 : vector<2x64xf32>
    %629 = vector.extract_strided_slice %628 {offsets = [0, 0], sizes = [2, 32], strides = [1, 1]} : vector<2x64xf32> to vector<2x32xf32>
    %630 = vector.extract_strided_slice %628 {offsets = [0, 32], sizes = [2, 32], strides = [1, 1]} : vector<2x64xf32> to vector<2x32xf32>
    %631 = vector.extract_strided_slice %620 {offsets = [0, 64], sizes = [2, 32], strides = [1, 1]} : vector<2x96xf32> to vector<2x32xf32>
    %632 = vector.extract_strided_slice %618 {offsets = [0, 64], sizes = [2, 32], strides = [1, 1]} : vector<2x96xf32> to vector<2x32xf32>
    %633 = vector.broadcast %489 : vector<1x32xf32> to vector<2x32xf32>
    %634 = arith.addf %632, %633 : vector<2x32xf32>
    %635 = arith.mulf %629, %634 : vector<2x32xf32>
    %636 = arith.addf %631, %635 : vector<2x32xf32>
    %637 = math.tanh %636 : vector<2x32xf32>
    %cst_178 = arith.constant 1.000000e+00 : f32
    %638 = vector.broadcast %cst_178 : f32 to vector<2x32xf32>
    %639 = arith.subf %638, %630 : vector<2x32xf32>
    %640 = arith.mulf %639, %637 : vector<2x32xf32>
    %641 = arith.mulf %630, %586 : vector<2x32xf32>
    %642 = arith.addf %640, %641 : vector<2x32xf32>
    %c0_179 = arith.constant 0 : index
    %c2_180 = arith.constant 2 : index
    %c0_181 = arith.constant 0 : index
    %643 = vector.load %arg10[%c0_179, %c2_180, %c0_181] : memref<2x8x32xf32, #tpu.memory_space<vmem>>, vector<2x1x32xf32>
    %644 = vector.shape_cast %643 : vector<2x1x32xf32> to vector<2x32xf32>
    %645 = vector.shape_cast %642 : vector<2x32xf32> to vector<2x1x32xf32>
    tpu.vector_store %arg10[%c0_179, %c2_180, %c0_181], %645 {strides = array<i32>} : memref<2x8x32xf32, #tpu.memory_space<vmem>>, vector<2x1x32xf32>,
    %cst_182 = arith.constant dense<0.000000e+00> : vector<2x96xf32>
    %646 = tpu.matmul %614, %502, %cst_182 {dimension_numbers = #tpu.dot_dimension_numbers<[1], [0], [0], [1], [0, 0, 1, 1], [], []>} : vector<2x32xf32>, vector<32x96xf32>, vector<2x96xf32> -> vector<2x96xf32>
    %647 = vector.extract_strided_slice %500 {offsets = [0, 5, 0], sizes = [2, 1, 96], strides = [1, 1, 1]} : vector<2x8x96xf32> to vector<2x1x96xf32>
    %648 = vector.shape_cast %647 : vector<2x1x96xf32> to vector<2x96xf32>
    %649 = vector.extract_strided_slice %648 {offsets = [0, 0], sizes = [2, 64], strides = [1, 1]} : vector<2x96xf32> to vector<2x64xf32>
    %650 = vector.extract_strided_slice %646 {offsets = [0, 0], sizes = [2, 64], strides = [1, 1]} : vector<2x96xf32> to vector<2x64xf32>
    %651 = arith.addf %649, %650 : vector<2x64xf32>
    %652 = arith.negf %651 : vector<2x64xf32>
    %653 = math.exp %652 : vector<2x64xf32>
    %cst_183 = arith.constant 1.000000e+00 : f32
    %654 = vector.broadcast %cst_183 : f32 to vector<2x64xf32>
    %655 = arith.addf %654, %653 : vector<2x64xf32>
    %656 = arith.divf %654, %655 : vector<2x64xf32>
    %657 = vector.extract_strided_slice %656 {offsets = [0, 0], sizes = [2, 32], strides = [1, 1]} : vector<2x64xf32> to vector<2x32xf32>
    %658 = vector.extract_strided_slice %656 {offsets = [0, 32], sizes = [2, 32], strides = [1, 1]} : vector<2x64xf32> to vector<2x32xf32>
    %659 = vector.extract_strided_slice %648 {offsets = [0, 64], sizes = [2, 32], strides = [1, 1]} : vector<2x96xf32> to vector<2x32xf32>
    %660 = vector.extract_strided_slice %646 {offsets = [0, 64], sizes = [2, 32], strides = [1, 1]} : vector<2x96xf32> to vector<2x32xf32>
    %661 = vector.broadcast %503 : vector<1x32xf32> to vector<2x32xf32>
    %662 = arith.addf %660, %661 : vector<2x32xf32>
    %663 = arith.mulf %657, %662 : vector<2x32xf32>
    %664 = arith.addf %659, %663 : vector<2x32xf32>
    %665 = math.tanh %664 : vector<2x32xf32>
    %cst_184 = arith.constant 1.000000e+00 : f32
    %666 = vector.broadcast %cst_184 : f32 to vector<2x32xf32>
    %667 = arith.subf %666, %658 : vector<2x32xf32>
    %668 = arith.mulf %667, %665 : vector<2x32xf32>
    %669 = arith.mulf %658, %614 : vector<2x32xf32>
    %670 = arith.addf %668, %669 : vector<2x32xf32>
    %c0_185 = arith.constant 0 : index
    %c5_186 = arith.constant 5 : index
    %c0_187 = arith.constant 0 : index
    %671 = vector.load %arg11[%c0_185, %c5_186, %c0_187] : memref<2x8x32xf32, #tpu.memory_space<vmem>>, vector<2x1x32xf32>
    %672 = vector.shape_cast %671 : vector<2x1x32xf32> to vector<2x32xf32>
    %673 = vector.shape_cast %670 : vector<2x32xf32> to vector<2x1x32xf32>
    tpu.vector_store %arg11[%c0_185, %c5_186, %c0_187], %673 {strides = array<i32>} : memref<2x8x32xf32, #tpu.memory_space<vmem>>, vector<2x1x32xf32>,
    %cst_188 = arith.constant dense<0.000000e+00> : vector<2x96xf32>
    %674 = tpu.matmul %642, %488, %cst_188 {dimension_numbers = #tpu.dot_dimension_numbers<[1], [0], [0], [1], [0, 0, 1, 1], [], []>} : vector<2x32xf32>, vector<32x96xf32>, vector<2x96xf32> -> vector<2x96xf32>
    %675 = vector.extract_strided_slice %486 {offsets = [0, 3, 0], sizes = [2, 1, 96], strides = [1, 1, 1]} : vector<2x8x96xf32> to vector<2x1x96xf32>
    %676 = vector.shape_cast %675 : vector<2x1x96xf32> to vector<2x96xf32>
    %677 = vector.extract_strided_slice %676 {offsets = [0, 0], sizes = [2, 64], strides = [1, 1]} : vector<2x96xf32> to vector<2x64xf32>
    %678 = vector.extract_strided_slice %674 {offsets = [0, 0], sizes = [2, 64], strides = [1, 1]} : vector<2x96xf32> to vector<2x64xf32>
    %679 = arith.addf %677, %678 : vector<2x64xf32>
    %680 = arith.negf %679 : vector<2x64xf32>
    %681 = math.exp %680 : vector<2x64xf32>
    %cst_189 = arith.constant 1.000000e+00 : f32
    %682 = vector.broadcast %cst_189 : f32 to vector<2x64xf32>
    %683 = arith.addf %682, %681 : vector<2x64xf32>
    %684 = arith.divf %682, %683 : vector<2x64xf32>
    %685 = vector.extract_strided_slice %684 {offsets = [0, 0], sizes = [2, 32], strides = [1, 1]} : vector<2x64xf32> to vector<2x32xf32>
    %686 = vector.extract_strided_slice %684 {offsets = [0, 32], sizes = [2, 32], strides = [1, 1]} : vector<2x64xf32> to vector<2x32xf32>
    %687 = vector.extract_strided_slice %676 {offsets = [0, 64], sizes = [2, 32], strides = [1, 1]} : vector<2x96xf32> to vector<2x32xf32>
    %688 = vector.extract_strided_slice %674 {offsets = [0, 64], sizes = [2, 32], strides = [1, 1]} : vector<2x96xf32> to vector<2x32xf32>
    %689 = vector.broadcast %489 : vector<1x32xf32> to vector<2x32xf32>
    %690 = arith.addf %688, %689 : vector<2x32xf32>
    %691 = arith.mulf %685, %690 : vector<2x32xf32>
    %692 = arith.addf %687, %691 : vector<2x32xf32>
    %693 = math.tanh %692 : vector<2x32xf32>
    %cst_190 = arith.constant 1.000000e+00 : f32
    %694 = vector.broadcast %cst_190 : f32 to vector<2x32xf32>
    %695 = arith.subf %694, %686 : vector<2x32xf32>
    %696 = arith.mulf %695, %693 : vector<2x32xf32>
    %697 = arith.mulf %686, %642 : vector<2x32xf32>
    %698 = arith.addf %696, %697 : vector<2x32xf32>
    %c0_191 = arith.constant 0 : index
    %c3_192 = arith.constant 3 : index
    %c0_193 = arith.constant 0 : index
    %699 = vector.load %arg10[%c0_191, %c3_192, %c0_193] : memref<2x8x32xf32, #tpu.memory_space<vmem>>, vector<2x1x32xf32>
    %700 = vector.shape_cast %699 : vector<2x1x32xf32> to vector<2x32xf32>
    %701 = vector.shape_cast %698 : vector<2x32xf32> to vector<2x1x32xf32>
    tpu.vector_store %arg10[%c0_191, %c3_192, %c0_193], %701 {strides = array<i32>} : memref<2x8x32xf32, #tpu.memory_space<vmem>>, vector<2x1x32xf32>,
    %cst_194 = arith.constant dense<0.000000e+00> : vector<2x96xf32>
    %702 = tpu.matmul %670, %502, %cst_194 {dimension_numbers = #tpu.dot_dimension_numbers<[1], [0], [0], [1], [0, 0, 1, 1], [], []>} : vector<2x32xf32>, vector<32x96xf32>, vector<2x96xf32> -> vector<2x96xf32>
    %703 = vector.extract_strided_slice %500 {offsets = [0, 4, 0], sizes = [2, 1, 96], strides = [1, 1, 1]} : vector<2x8x96xf32> to vector<2x1x96xf32>
    %704 = vector.shape_cast %703 : vector<2x1x96xf32> to vector<2x96xf32>
    %705 = vector.extract_strided_slice %704 {offsets = [0, 0], sizes = [2, 64], strides = [1, 1]} : vector<2x96xf32> to vector<2x64xf32>
    %706 = vector.extract_strided_slice %702 {offsets = [0, 0], sizes = [2, 64], strides = [1, 1]} : vector<2x96xf32> to vector<2x64xf32>
    %707 = arith.addf %705, %706 : vector<2x64xf32>
    %708 = arith.negf %707 : vector<2x64xf32>
    %709 = math.exp %708 : vector<2x64xf32>
    %cst_195 = arith.constant 1.000000e+00 : f32
    %710 = vector.broadcast %cst_195 : f32 to vector<2x64xf32>
    %711 = arith.addf %710, %709 : vector<2x64xf32>
    %712 = arith.divf %710, %711 : vector<2x64xf32>
    %713 = vector.extract_strided_slice %712 {offsets = [0, 0], sizes = [2, 32], strides = [1, 1]} : vector<2x64xf32> to vector<2x32xf32>
    %714 = vector.extract_strided_slice %712 {offsets = [0, 32], sizes = [2, 32], strides = [1, 1]} : vector<2x64xf32> to vector<2x32xf32>
    %715 = vector.extract_strided_slice %704 {offsets = [0, 64], sizes = [2, 32], strides = [1, 1]} : vector<2x96xf32> to vector<2x32xf32>
    %716 = vector.extract_strided_slice %702 {offsets = [0, 64], sizes = [2, 32], strides = [1, 1]} : vector<2x96xf32> to vector<2x32xf32>
    %717 = vector.broadcast %503 : vector<1x32xf32> to vector<2x32xf32>
    %718 = arith.addf %716, %717 : vector<2x32xf32>
    %719 = arith.mulf %713, %718 : vector<2x32xf32>
    %720 = arith.addf %715, %719 : vector<2x32xf32>
    %721 = math.tanh %720 : vector<2x32xf32>
    %cst_196 = arith.constant 1.000000e+00 : f32
    %722 = vector.broadcast %cst_196 : f32 to vector<2x32xf32>
    %723 = arith.subf %722, %714 : vector<2x32xf32>
    %724 = arith.mulf %723, %721 : vector<2x32xf32>
    %725 = arith.mulf %714, %670 : vector<2x32xf32>
    %726 = arith.addf %724, %725 : vector<2x32xf32>
    %c0_197 = arith.constant 0 : index
    %c4_198 = arith.constant 4 : index
    %c0_199 = arith.constant 0 : index
    %727 = vector.load %arg11[%c0_197, %c4_198, %c0_199] : memref<2x8x32xf32, #tpu.memory_space<vmem>>, vector<2x1x32xf32>
    %728 = vector.shape_cast %727 : vector<2x1x32xf32> to vector<2x32xf32>
    %729 = vector.shape_cast %726 : vector<2x32xf32> to vector<2x1x32xf32>
    tpu.vector_store %arg11[%c0_197, %c4_198, %c0_199], %729 {strides = array<i32>} : memref<2x8x32xf32, #tpu.memory_space<vmem>>, vector<2x1x32xf32>,
    %cst_200 = arith.constant dense<0.000000e+00> : vector<2x96xf32>
    %730 = tpu.matmul %698, %488, %cst_200 {dimension_numbers = #tpu.dot_dimension_numbers<[1], [0], [0], [1], [0, 0, 1, 1], [], []>} : vector<2x32xf32>, vector<32x96xf32>, vector<2x96xf32> -> vector<2x96xf32>
    %731 = vector.extract_strided_slice %486 {offsets = [0, 4, 0], sizes = [2, 1, 96], strides = [1, 1, 1]} : vector<2x8x96xf32> to vector<2x1x96xf32>
    %732 = vector.shape_cast %731 : vector<2x1x96xf32> to vector<2x96xf32>
    %733 = vector.extract_strided_slice %732 {offsets = [0, 0], sizes = [2, 64], strides = [1, 1]} : vector<2x96xf32> to vector<2x64xf32>
    %734 = vector.extract_strided_slice %730 {offsets = [0, 0], sizes = [2, 64], strides = [1, 1]} : vector<2x96xf32> to vector<2x64xf32>
    %735 = arith.addf %733, %734 : vector<2x64xf32>
    %736 = arith.negf %735 : vector<2x64xf32>
    %737 = math.exp %736 : vector<2x64xf32>
    %cst_201 = arith.constant 1.000000e+00 : f32
    %738 = vector.broadcast %cst_201 : f32 to vector<2x64xf32>
    %739 = arith.addf %738, %737 : vector<2x64xf32>
    %740 = arith.divf %738, %739 : vector<2x64xf32>
    %741 = vector.extract_strided_slice %740 {offsets = [0, 0], sizes = [2, 32], strides = [1, 1]} : vector<2x64xf32> to vector<2x32xf32>
    %742 = vector.extract_strided_slice %740 {offsets = [0, 32], sizes = [2, 32], strides = [1, 1]} : vector<2x64xf32> to vector<2x32xf32>
    %743 = vector.extract_strided_slice %732 {offsets = [0, 64], sizes = [2, 32], strides = [1, 1]} : vector<2x96xf32> to vector<2x32xf32>
    %744 = vector.extract_strided_slice %730 {offsets = [0, 64], sizes = [2, 32], strides = [1, 1]} : vector<2x96xf32> to vector<2x32xf32>
    %745 = vector.broadcast %489 : vector<1x32xf32> to vector<2x32xf32>
    %746 = arith.addf %744, %745 : vector<2x32xf32>
    %747 = arith.mulf %741, %746 : vector<2x32xf32>
    %748 = arith.addf %743, %747 : vector<2x32xf32>
    %749 = math.tanh %748 : vector<2x32xf32>
    %cst_202 = arith.constant 1.000000e+00 : f32
    %750 = vector.broadcast %cst_202 : f32 to vector<2x32xf32>
    %751 = arith.subf %750, %742 : vector<2x32xf32>
    %752 = arith.mulf %751, %749 : vector<2x32xf32>
    %753 = arith.mulf %742, %698 : vector<2x32xf32>
    %754 = arith.addf %752, %753 : vector<2x32xf32>
    %c0_203 = arith.constant 0 : index
    %c4_204 = arith.constant 4 : index
    %c0_205 = arith.constant 0 : index
    %755 = vector.load %arg10[%c0_203, %c4_204, %c0_205] : memref<2x8x32xf32, #tpu.memory_space<vmem>>, vector<2x1x32xf32>
    %756 = vector.shape_cast %755 : vector<2x1x32xf32> to vector<2x32xf32>
    %757 = vector.shape_cast %754 : vector<2x32xf32> to vector<2x1x32xf32>
    tpu.vector_store %arg10[%c0_203, %c4_204, %c0_205], %757 {strides = array<i32>} : memref<2x8x32xf32, #tpu.memory_space<vmem>>, vector<2x1x32xf32>,
    %cst_206 = arith.constant dense<0.000000e+00> : vector<2x96xf32>
    %758 = tpu.matmul %726, %502, %cst_206 {dimension_numbers = #tpu.dot_dimension_numbers<[1], [0], [0], [1], [0, 0, 1, 1], [], []>} : vector<2x32xf32>, vector<32x96xf32>, vector<2x96xf32> -> vector<2x96xf32>
    %759 = vector.extract_strided_slice %500 {offsets = [0, 3, 0], sizes = [2, 1, 96], strides = [1, 1, 1]} : vector<2x8x96xf32> to vector<2x1x96xf32>
    %760 = vector.shape_cast %759 : vector<2x1x96xf32> to vector<2x96xf32>
    %761 = vector.extract_strided_slice %760 {offsets = [0, 0], sizes = [2, 64], strides = [1, 1]} : vector<2x96xf32> to vector<2x64xf32>
    %762 = vector.extract_strided_slice %758 {offsets = [0, 0], sizes = [2, 64], strides = [1, 1]} : vector<2x96xf32> to vector<2x64xf32>
    %763 = arith.addf %761, %762 : vector<2x64xf32>
    %764 = arith.negf %763 : vector<2x64xf32>
    %765 = math.exp %764 : vector<2x64xf32>
    %cst_207 = arith.constant 1.000000e+00 : f32
    %766 = vector.broadcast %cst_207 : f32 to vector<2x64xf32>
    %767 = arith.addf %766, %765 : vector<2x64xf32>
    %768 = arith.divf %766, %767 : vector<2x64xf32>
    %769 = vector.extract_strided_slice %768 {offsets = [0, 0], sizes = [2, 32], strides = [1, 1]} : vector<2x64xf32> to vector<2x32xf32>
    %770 = vector.extract_strided_slice %768 {offsets = [0, 32], sizes = [2, 32], strides = [1, 1]} : vector<2x64xf32> to vector<2x32xf32>
    %771 = vector.extract_strided_slice %760 {offsets = [0, 64], sizes = [2, 32], strides = [1, 1]} : vector<2x96xf32> to vector<2x32xf32>
    %772 = vector.extract_strided_slice %758 {offsets = [0, 64], sizes = [2, 32], strides = [1, 1]} : vector<2x96xf32> to vector<2x32xf32>
    %773 = vector.broadcast %503 : vector<1x32xf32> to vector<2x32xf32>
    %774 = arith.addf %772, %773 : vector<2x32xf32>
    %775 = arith.mulf %769, %774 : vector<2x32xf32>
    %776 = arith.addf %771, %775 : vector<2x32xf32>
    %777 = math.tanh %776 : vector<2x32xf32>
    %cst_208 = arith.constant 1.000000e+00 : f32
    %778 = vector.broadcast %cst_208 : f32 to vector<2x32xf32>
    %779 = arith.subf %778, %770 : vector<2x32xf32>
    %780 = arith.mulf %779, %777 : vector<2x32xf32>
    %781 = arith.mulf %770, %726 : vector<2x32xf32>
    %782 = arith.addf %780, %781 : vector<2x32xf32>
    %c0_209 = arith.constant 0 : index
    %c3_210 = arith.constant 3 : index
    %c0_211 = arith.constant 0 : index
    %783 = vector.load %arg11[%c0_209, %c3_210, %c0_211] : memref<2x8x32xf32, #tpu.memory_space<vmem>>, vector<2x1x32xf32>
    %784 = vector.shape_cast %783 : vector<2x1x32xf32> to vector<2x32xf32>
    %785 = vector.shape_cast %782 : vector<2x32xf32> to vector<2x1x32xf32>
    tpu.vector_store %arg11[%c0_209, %c3_210, %c0_211], %785 {strides = array<i32>} : memref<2x8x32xf32, #tpu.memory_space<vmem>>, vector<2x1x32xf32>,
    %cst_212 = arith.constant dense<0.000000e+00> : vector<2x96xf32>
    %786 = tpu.matmul %754, %488, %cst_212 {dimension_numbers = #tpu.dot_dimension_numbers<[1], [0], [0], [1], [0, 0, 1, 1], [], []>} : vector<2x32xf32>, vector<32x96xf32>, vector<2x96xf32> -> vector<2x96xf32>
    %787 = vector.extract_strided_slice %486 {offsets = [0, 5, 0], sizes = [2, 1, 96], strides = [1, 1, 1]} : vector<2x8x96xf32> to vector<2x1x96xf32>
    %788 = vector.shape_cast %787 : vector<2x1x96xf32> to vector<2x96xf32>
    %789 = vector.extract_strided_slice %788 {offsets = [0, 0], sizes = [2, 64], strides = [1, 1]} : vector<2x96xf32> to vector<2x64xf32>
    %790 = vector.extract_strided_slice %786 {offsets = [0, 0], sizes = [2, 64], strides = [1, 1]} : vector<2x96xf32> to vector<2x64xf32>
    %791 = arith.addf %789, %790 : vector<2x64xf32>
    %792 = arith.negf %791 : vector<2x64xf32>
    %793 = math.exp %792 : vector<2x64xf32>
    %cst_213 = arith.constant 1.000000e+00 : f32
    %794 = vector.broadcast %cst_213 : f32 to vector<2x64xf32>
    %795 = arith.addf %794, %793 : vector<2x64xf32>
    %796 = arith.divf %794, %795 : vector<2x64xf32>
    %797 = vector.extract_strided_slice %796 {offsets = [0, 0], sizes = [2, 32], strides = [1, 1]} : vector<2x64xf32> to vector<2x32xf32>
    %798 = vector.extract_strided_slice %796 {offsets = [0, 32], sizes = [2, 32], strides = [1, 1]} : vector<2x64xf32> to vector<2x32xf32>
    %799 = vector.extract_strided_slice %788 {offsets = [0, 64], sizes = [2, 32], strides = [1, 1]} : vector<2x96xf32> to vector<2x32xf32>
    %800 = vector.extract_strided_slice %786 {offsets = [0, 64], sizes = [2, 32], strides = [1, 1]} : vector<2x96xf32> to vector<2x32xf32>
    %801 = vector.broadcast %489 : vector<1x32xf32> to vector<2x32xf32>
    %802 = arith.addf %800, %801 : vector<2x32xf32>
    %803 = arith.mulf %797, %802 : vector<2x32xf32>
    %804 = arith.addf %799, %803 : vector<2x32xf32>
    %805 = math.tanh %804 : vector<2x32xf32>
    %cst_214 = arith.constant 1.000000e+00 : f32
    %806 = vector.broadcast %cst_214 : f32 to vector<2x32xf32>
    %807 = arith.subf %806, %798 : vector<2x32xf32>
    %808 = arith.mulf %807, %805 : vector<2x32xf32>
    %809 = arith.mulf %798, %754 : vector<2x32xf32>
    %810 = arith.addf %808, %809 : vector<2x32xf32>
    %c0_215 = arith.constant 0 : index
    %c5_216 = arith.constant 5 : index
    %c0_217 = arith.constant 0 : index
    %811 = vector.load %arg10[%c0_215, %c5_216, %c0_217] : memref<2x8x32xf32, #tpu.memory_space<vmem>>, vector<2x1x32xf32>
    %812 = vector.shape_cast %811 : vector<2x1x32xf32> to vector<2x32xf32>
    %813 = vector.shape_cast %810 : vector<2x32xf32> to vector<2x1x32xf32>
    tpu.vector_store %arg10[%c0_215, %c5_216, %c0_217], %813 {strides = array<i32>} : memref<2x8x32xf32, #tpu.memory_space<vmem>>, vector<2x1x32xf32>,
    %cst_218 = arith.constant dense<0.000000e+00> : vector<2x96xf32>
    %814 = tpu.matmul %782, %502, %cst_218 {dimension_numbers = #tpu.dot_dimension_numbers<[1], [0], [0], [1], [0, 0, 1, 1], [], []>} : vector<2x32xf32>, vector<32x96xf32>, vector<2x96xf32> -> vector<2x96xf32>
    %815 = vector.extract_strided_slice %500 {offsets = [0, 2, 0], sizes = [2, 1, 96], strides = [1, 1, 1]} : vector<2x8x96xf32> to vector<2x1x96xf32>
    %816 = vector.shape_cast %815 : vector<2x1x96xf32> to vector<2x96xf32>
    %817 = vector.extract_strided_slice %816 {offsets = [0, 0], sizes = [2, 64], strides = [1, 1]} : vector<2x96xf32> to vector<2x64xf32>
    %818 = vector.extract_strided_slice %814 {offsets = [0, 0], sizes = [2, 64], strides = [1, 1]} : vector<2x96xf32> to vector<2x64xf32>
    %819 = arith.addf %817, %818 : vector<2x64xf32>
    %820 = arith.negf %819 : vector<2x64xf32>
    %821 = math.exp %820 : vector<2x64xf32>
    %cst_219 = arith.constant 1.000000e+00 : f32
    %822 = vector.broadcast %cst_219 : f32 to vector<2x64xf32>
    %823 = arith.addf %822, %821 : vector<2x64xf32>
    %824 = arith.divf %822, %823 : vector<2x64xf32>
    %825 = vector.extract_strided_slice %824 {offsets = [0, 0], sizes = [2, 32], strides = [1, 1]} : vector<2x64xf32> to vector<2x32xf32>
    %826 = vector.extract_strided_slice %824 {offsets = [0, 32], sizes = [2, 32], strides = [1, 1]} : vector<2x64xf32> to vector<2x32xf32>
    %827 = vector.extract_strided_slice %816 {offsets = [0, 64], sizes = [2, 32], strides = [1, 1]} : vector<2x96xf32> to vector<2x32xf32>
    %828 = vector.extract_strided_slice %814 {offsets = [0, 64], sizes = [2, 32], strides = [1, 1]} : vector<2x96xf32> to vector<2x32xf32>
    %829 = vector.broadcast %503 : vector<1x32xf32> to vector<2x32xf32>
    %830 = arith.addf %828, %829 : vector<2x32xf32>
    %831 = arith.mulf %825, %830 : vector<2x32xf32>
    %832 = arith.addf %827, %831 : vector<2x32xf32>
    %833 = math.tanh %832 : vector<2x32xf32>
    %cst_220 = arith.constant 1.000000e+00 : f32
    %834 = vector.broadcast %cst_220 : f32 to vector<2x32xf32>
    %835 = arith.subf %834, %826 : vector<2x32xf32>
    %836 = arith.mulf %835, %833 : vector<2x32xf32>
    %837 = arith.mulf %826, %782 : vector<2x32xf32>
    %838 = arith.addf %836, %837 : vector<2x32xf32>
    %c0_221 = arith.constant 0 : index
    %c2_222 = arith.constant 2 : index
    %c0_223 = arith.constant 0 : index
    %839 = vector.load %arg11[%c0_221, %c2_222, %c0_223] : memref<2x8x32xf32, #tpu.memory_space<vmem>>, vector<2x1x32xf32>
    %840 = vector.shape_cast %839 : vector<2x1x32xf32> to vector<2x32xf32>
    %841 = vector.shape_cast %838 : vector<2x32xf32> to vector<2x1x32xf32>
    tpu.vector_store %arg11[%c0_221, %c2_222, %c0_223], %841 {strides = array<i32>} : memref<2x8x32xf32, #tpu.memory_space<vmem>>, vector<2x1x32xf32>,
    %cst_224 = arith.constant dense<0.000000e+00> : vector<2x96xf32>
    %842 = tpu.matmul %810, %488, %cst_224 {dimension_numbers = #tpu.dot_dimension_numbers<[1], [0], [0], [1], [0, 0, 1, 1], [], []>} : vector<2x32xf32>, vector<32x96xf32>, vector<2x96xf32> -> vector<2x96xf32>
    %843 = vector.extract_strided_slice %486 {offsets = [0, 6, 0], sizes = [2, 1, 96], strides = [1, 1, 1]} : vector<2x8x96xf32> to vector<2x1x96xf32>
    %844 = vector.shape_cast %843 : vector<2x1x96xf32> to vector<2x96xf32>
    %845 = vector.extract_strided_slice %844 {offsets = [0, 0], sizes = [2, 64], strides = [1, 1]} : vector<2x96xf32> to vector<2x64xf32>
    %846 = vector.extract_strided_slice %842 {offsets = [0, 0], sizes = [2, 64], strides = [1, 1]} : vector<2x96xf32> to vector<2x64xf32>
    %847 = arith.addf %845, %846 : vector<2x64xf32>
    %848 = arith.negf %847 : vector<2x64xf32>
    %849 = math.exp %848 : vector<2x64xf32>
    %cst_225 = arith.constant 1.000000e+00 : f32
    %850 = vector.broadcast %cst_225 : f32 to vector<2x64xf32>
    %851 = arith.addf %850, %849 : vector<2x64xf32>
    %852 = arith.divf %850, %851 : vector<2x64xf32>
    %853 = vector.extract_strided_slice %852 {offsets = [0, 0], sizes = [2, 32], strides = [1, 1]} : vector<2x64xf32> to vector<2x32xf32>
    %854 = vector.extract_strided_slice %852 {offsets = [0, 32], sizes = [2, 32], strides = [1, 1]} : vector<2x64xf32> to vector<2x32xf32>
    %855 = vector.extract_strided_slice %844 {offsets = [0, 64], sizes = [2, 32], strides = [1, 1]} : vector<2x96xf32> to vector<2x32xf32>
    %856 = vector.extract_strided_slice %842 {offsets = [0, 64], sizes = [2, 32], strides = [1, 1]} : vector<2x96xf32> to vector<2x32xf32>
    %857 = vector.broadcast %489 : vector<1x32xf32> to vector<2x32xf32>
    %858 = arith.addf %856, %857 : vector<2x32xf32>
    %859 = arith.mulf %853, %858 : vector<2x32xf32>
    %860 = arith.addf %855, %859 : vector<2x32xf32>
    %861 = math.tanh %860 : vector<2x32xf32>
    %cst_226 = arith.constant 1.000000e+00 : f32
    %862 = vector.broadcast %cst_226 : f32 to vector<2x32xf32>
    %863 = arith.subf %862, %854 : vector<2x32xf32>
    %864 = arith.mulf %863, %861 : vector<2x32xf32>
    %865 = arith.mulf %854, %810 : vector<2x32xf32>
    %866 = arith.addf %864, %865 : vector<2x32xf32>
    %c0_227 = arith.constant 0 : index
    %c6_228 = arith.constant 6 : index
    %c0_229 = arith.constant 0 : index
    %867 = vector.load %arg10[%c0_227, %c6_228, %c0_229] : memref<2x8x32xf32, #tpu.memory_space<vmem>>, vector<2x1x32xf32>
    %868 = vector.shape_cast %867 : vector<2x1x32xf32> to vector<2x32xf32>
    %869 = vector.shape_cast %866 : vector<2x32xf32> to vector<2x1x32xf32>
    tpu.vector_store %arg10[%c0_227, %c6_228, %c0_229], %869 {strides = array<i32>} : memref<2x8x32xf32, #tpu.memory_space<vmem>>, vector<2x1x32xf32>,
    %cst_230 = arith.constant dense<0.000000e+00> : vector<2x96xf32>
    %870 = tpu.matmul %838, %502, %cst_230 {dimension_numbers = #tpu.dot_dimension_numbers<[1], [0], [0], [1], [0, 0, 1, 1], [], []>} : vector<2x32xf32>, vector<32x96xf32>, vector<2x96xf32> -> vector<2x96xf32>
    %871 = vector.extract_strided_slice %500 {offsets = [0, 1, 0], sizes = [2, 1, 96], strides = [1, 1, 1]} : vector<2x8x96xf32> to vector<2x1x96xf32>
    %872 = vector.shape_cast %871 : vector<2x1x96xf32> to vector<2x96xf32>
    %873 = vector.extract_strided_slice %872 {offsets = [0, 0], sizes = [2, 64], strides = [1, 1]} : vector<2x96xf32> to vector<2x64xf32>
    %874 = vector.extract_strided_slice %870 {offsets = [0, 0], sizes = [2, 64], strides = [1, 1]} : vector<2x96xf32> to vector<2x64xf32>
    %875 = arith.addf %873, %874 : vector<2x64xf32>
    %876 = arith.negf %875 : vector<2x64xf32>
    %877 = math.exp %876 : vector<2x64xf32>
    %cst_231 = arith.constant 1.000000e+00 : f32
    %878 = vector.broadcast %cst_231 : f32 to vector<2x64xf32>
    %879 = arith.addf %878, %877 : vector<2x64xf32>
    %880 = arith.divf %878, %879 : vector<2x64xf32>
    %881 = vector.extract_strided_slice %880 {offsets = [0, 0], sizes = [2, 32], strides = [1, 1]} : vector<2x64xf32> to vector<2x32xf32>
    %882 = vector.extract_strided_slice %880 {offsets = [0, 32], sizes = [2, 32], strides = [1, 1]} : vector<2x64xf32> to vector<2x32xf32>
    %883 = vector.extract_strided_slice %872 {offsets = [0, 64], sizes = [2, 32], strides = [1, 1]} : vector<2x96xf32> to vector<2x32xf32>
    %884 = vector.extract_strided_slice %870 {offsets = [0, 64], sizes = [2, 32], strides = [1, 1]} : vector<2x96xf32> to vector<2x32xf32>
    %885 = vector.broadcast %503 : vector<1x32xf32> to vector<2x32xf32>
    %886 = arith.addf %884, %885 : vector<2x32xf32>
    %887 = arith.mulf %881, %886 : vector<2x32xf32>
    %888 = arith.addf %883, %887 : vector<2x32xf32>
    %889 = math.tanh %888 : vector<2x32xf32>
    %cst_232 = arith.constant 1.000000e+00 : f32
    %890 = vector.broadcast %cst_232 : f32 to vector<2x32xf32>
    %891 = arith.subf %890, %882 : vector<2x32xf32>
    %892 = arith.mulf %891, %889 : vector<2x32xf32>
    %893 = arith.mulf %882, %838 : vector<2x32xf32>
    %894 = arith.addf %892, %893 : vector<2x32xf32>
    %c0_233 = arith.constant 0 : index
    %c1_234 = arith.constant 1 : index
    %c0_235 = arith.constant 0 : index
    %895 = vector.load %arg11[%c0_233, %c1_234, %c0_235] : memref<2x8x32xf32, #tpu.memory_space<vmem>>, vector<2x1x32xf32>
    %896 = vector.shape_cast %895 : vector<2x1x32xf32> to vector<2x32xf32>
    %897 = vector.shape_cast %894 : vector<2x32xf32> to vector<2x1x32xf32>
    tpu.vector_store %arg11[%c0_233, %c1_234, %c0_235], %897 {strides = array<i32>} : memref<2x8x32xf32, #tpu.memory_space<vmem>>, vector<2x1x32xf32>,
    %cst_236 = arith.constant dense<0.000000e+00> : vector<2x96xf32>
    %898 = tpu.matmul %866, %488, %cst_236 {dimension_numbers = #tpu.dot_dimension_numbers<[1], [0], [0], [1], [0, 0, 1, 1], [], []>} : vector<2x32xf32>, vector<32x96xf32>, vector<2x96xf32> -> vector<2x96xf32>
    %899 = vector.extract_strided_slice %486 {offsets = [0, 7, 0], sizes = [2, 1, 96], strides = [1, 1, 1]} : vector<2x8x96xf32> to vector<2x1x96xf32>
    %900 = vector.shape_cast %899 : vector<2x1x96xf32> to vector<2x96xf32>
    %901 = vector.extract_strided_slice %900 {offsets = [0, 0], sizes = [2, 64], strides = [1, 1]} : vector<2x96xf32> to vector<2x64xf32>
    %902 = vector.extract_strided_slice %898 {offsets = [0, 0], sizes = [2, 64], strides = [1, 1]} : vector<2x96xf32> to vector<2x64xf32>
    %903 = arith.addf %901, %902 : vector<2x64xf32>
    %904 = arith.negf %903 : vector<2x64xf32>
    %905 = math.exp %904 : vector<2x64xf32>
    %cst_237 = arith.constant 1.000000e+00 : f32
    %906 = vector.broadcast %cst_237 : f32 to vector<2x64xf32>
    %907 = arith.addf %906, %905 : vector<2x64xf32>
    %908 = arith.divf %906, %907 : vector<2x64xf32>
    %909 = vector.extract_strided_slice %908 {offsets = [0, 0], sizes = [2, 32], strides = [1, 1]} : vector<2x64xf32> to vector<2x32xf32>
    %910 = vector.extract_strided_slice %908 {offsets = [0, 32], sizes = [2, 32], strides = [1, 1]} : vector<2x64xf32> to vector<2x32xf32>
    %911 = vector.extract_strided_slice %900 {offsets = [0, 64], sizes = [2, 32], strides = [1, 1]} : vector<2x96xf32> to vector<2x32xf32>
    %912 = vector.extract_strided_slice %898 {offsets = [0, 64], sizes = [2, 32], strides = [1, 1]} : vector<2x96xf32> to vector<2x32xf32>
    %913 = vector.broadcast %489 : vector<1x32xf32> to vector<2x32xf32>
    %914 = arith.addf %912, %913 : vector<2x32xf32>
    %915 = arith.mulf %909, %914 : vector<2x32xf32>
    %916 = arith.addf %911, %915 : vector<2x32xf32>
    %917 = math.tanh %916 : vector<2x32xf32>
    %cst_238 = arith.constant 1.000000e+00 : f32
    %918 = vector.broadcast %cst_238 : f32 to vector<2x32xf32>
    %919 = arith.subf %918, %910 : vector<2x32xf32>
    %920 = arith.mulf %919, %917 : vector<2x32xf32>
    %921 = arith.mulf %910, %866 : vector<2x32xf32>
    %922 = arith.addf %920, %921 : vector<2x32xf32>
    %c0_239 = arith.constant 0 : index
    %c7_240 = arith.constant 7 : index
    %c0_241 = arith.constant 0 : index
    %923 = vector.load %arg10[%c0_239, %c7_240, %c0_241] : memref<2x8x32xf32, #tpu.memory_space<vmem>>, vector<2x1x32xf32>
    %924 = vector.shape_cast %923 : vector<2x1x32xf32> to vector<2x32xf32>
    %925 = vector.shape_cast %922 : vector<2x32xf32> to vector<2x1x32xf32>
    tpu.vector_store %arg10[%c0_239, %c7_240, %c0_241], %925 {strides = array<i32>} : memref<2x8x32xf32, #tpu.memory_space<vmem>>, vector<2x1x32xf32>,
    %cst_242 = arith.constant dense<0.000000e+00> : vector<2x96xf32>
    %926 = tpu.matmul %894, %502, %cst_242 {dimension_numbers = #tpu.dot_dimension_numbers<[1], [0], [0], [1], [0, 0, 1, 1], [], []>} : vector<2x32xf32>, vector<32x96xf32>, vector<2x96xf32> -> vector<2x96xf32>
    %927 = vector.extract_strided_slice %500 {offsets = [0, 0, 0], sizes = [2, 1, 96], strides = [1, 1, 1]} : vector<2x8x96xf32> to vector<2x1x96xf32>
    %928 = vector.shape_cast %927 : vector<2x1x96xf32> to vector<2x96xf32>
    %929 = vector.extract_strided_slice %928 {offsets = [0, 0], sizes = [2, 64], strides = [1, 1]} : vector<2x96xf32> to vector<2x64xf32>
    %930 = vector.extract_strided_slice %926 {offsets = [0, 0], sizes = [2, 64], strides = [1, 1]} : vector<2x96xf32> to vector<2x64xf32>
    %931 = arith.addf %929, %930 : vector<2x64xf32>
    %932 = arith.negf %931 : vector<2x64xf32>
    %933 = math.exp %932 : vector<2x64xf32>
    %cst_243 = arith.constant 1.000000e+00 : f32
    %934 = vector.broadcast %cst_243 : f32 to vector<2x64xf32>
    %935 = arith.addf %934, %933 : vector<2x64xf32>
    %936 = arith.divf %934, %935 : vector<2x64xf32>
    %937 = vector.extract_strided_slice %936 {offsets = [0, 0], sizes = [2, 32], strides = [1, 1]} : vector<2x64xf32> to vector<2x32xf32>
    %938 = vector.extract_strided_slice %936 {offsets = [0, 32], sizes = [2, 32], strides = [1, 1]} : vector<2x64xf32> to vector<2x32xf32>
    %939 = vector.extract_strided_slice %928 {offsets = [0, 64], sizes = [2, 32], strides = [1, 1]} : vector<2x96xf32> to vector<2x32xf32>
    %940 = vector.extract_strided_slice %926 {offsets = [0, 64], sizes = [2, 32], strides = [1, 1]} : vector<2x96xf32> to vector<2x32xf32>
    %941 = vector.broadcast %503 : vector<1x32xf32> to vector<2x32xf32>
    %942 = arith.addf %940, %941 : vector<2x32xf32>
    %943 = arith.mulf %937, %942 : vector<2x32xf32>
    %944 = arith.addf %939, %943 : vector<2x32xf32>
    %945 = math.tanh %944 : vector<2x32xf32>
    %cst_244 = arith.constant 1.000000e+00 : f32
    %946 = vector.broadcast %cst_244 : f32 to vector<2x32xf32>
    %947 = arith.subf %946, %938 : vector<2x32xf32>
    %948 = arith.mulf %947, %945 : vector<2x32xf32>
    %949 = arith.mulf %938, %894 : vector<2x32xf32>
    %950 = arith.addf %948, %949 : vector<2x32xf32>
    %c0_245 = arith.constant 0 : index
    %c0_246 = arith.constant 0 : index
    %c0_247 = arith.constant 0 : index
    %951 = vector.load %arg11[%c0_245, %c0_246, %c0_247] : memref<2x8x32xf32, #tpu.memory_space<vmem>>, vector<2x1x32xf32>
    %952 = vector.shape_cast %951 : vector<2x1x32xf32> to vector<2x32xf32>
    %953 = vector.shape_cast %950 : vector<2x32xf32> to vector<2x1x32xf32>
    tpu.vector_store %arg11[%c0_245, %c0_246, %c0_247], %953 {strides = array<i32>} : memref<2x8x32xf32, #tpu.memory_space<vmem>>, vector<2x1x32xf32>,
    %c0_248 = arith.constant 0 : index
    %c0_249 = arith.constant 0 : index
    %c0_250 = arith.constant 0 : index
    %954 = vector.load %arg10[%c0_248, %c0_249, %c0_250] : memref<2x8x32xf32, #tpu.memory_space<vmem>>, vector<2x8x32xf32>
    %c0_251 = arith.constant 0 : index
    %c0_252 = arith.constant 0 : index
    %c0_253 = arith.constant 0 : index
    %955 = vector.load %arg11[%c0_251, %c0_252, %c0_253] : memref<2x8x32xf32, #tpu.memory_space<vmem>>, vector<2x8x32xf32>
    %956 = vector.shape_cast %954 : vector<2x8x32xf32> to vector<16x32xf32>
    %957 = vector.shape_cast %955 : vector<2x8x32xf32> to vector<16x32xf32>
    %c0_254 = arith.constant 0 : index
    %c0_255 = arith.constant 0 : index
    %958 = vector.load %arg6[%c0_254, %c0_255] : memref<2x32xf32, #tpu.memory_space<vmem>>, vector<1x32xf32>
    %c1_256 = arith.constant 1 : index
    %c0_257 = arith.constant 0 : index
    %959 = vector.load %arg6[%c1_256, %c0_257] : memref<2x32xf32, #tpu.memory_space<vmem>>, vector<1x32xf32>
    %960 = vector.broadcast %958 : vector<1x32xf32> to vector<16x32xf32>
    %961 = arith.mulf %956, %960 : vector<16x32xf32>
    %cst_258 = arith.constant dense<0.000000e+00> : vector<16xf32>
    %962 = vector.multi_reduction <add>, %961, %cst_258 [1] : vector<16x32xf32> to vector<16xf32>
    %963 = vector.shape_cast %962 : vector<16xf32> to vector<16x1xf32>
    %964 = vector.broadcast %959 : vector<1x32xf32> to vector<16x32xf32>
    %965 = arith.mulf %957, %964 : vector<16x32xf32>
    %cst_259 = arith.constant dense<0.000000e+00> : vector<16xf32>
    %966 = vector.multi_reduction <add>, %965, %cst_259 [1] : vector<16x32xf32> to vector<16xf32>
    %967 = vector.shape_cast %966 : vector<16xf32> to vector<16x1xf32>
    %968 = arith.addf %963, %967 : vector<16x1xf32>
    %969 = vector.shape_cast %968 : vector<16x1xf32> to vector<2x8x1xf32>
    %cst_260 = arith.constant dense<0xFF800000> : vector<2x1xf32>
    %970 = vector.multi_reduction <maximumf>, %969, %cst_260 [1] : vector<2x8x1xf32> to vector<2x1xf32>
    %971 = vector.shape_cast %970 : vector<2x1xf32> to vector<2x1x1xf32>
    %972 = vector.broadcast %971 : vector<2x1x1xf32> to vector<2x8x1xf32>
    %973 = arith.subf %969, %972 : vector<2x8x1xf32>
    %974 = math.exp %973 : vector<2x8x1xf32>
    %cst_261 = arith.constant dense<0.000000e+00> : vector<2x1xf32>
    %975 = vector.multi_reduction <add>, %974, %cst_261 [1] : vector<2x8x1xf32> to vector<2x1xf32>
    %976 = vector.shape_cast %975 : vector<2x1xf32> to vector<2x1x1xf32>
    %977 = tpu.reciprocal %976 {approx = true} : vector<2x1x1xf32> -> vector<2x1x1xf32>
    %978 = vector.broadcast %977 : vector<2x1x1xf32> to vector<2x8x1xf32>
    %979 = arith.mulf %974, %978 : vector<2x8x1xf32>
    %980 = vector.broadcast %979 : vector<2x8x1xf32> to vector<2x8x32xf32>
    %981 = arith.mulf %954, %980 : vector<2x8x32xf32>
    %cst_262 = arith.constant dense<0.000000e+00> : vector<2x32xf32>
    %982 = vector.multi_reduction <add>, %981, %cst_262 [1] : vector<2x8x32xf32> to vector<2x32xf32>
    %983 = vector.broadcast %979 : vector<2x8x1xf32> to vector<2x8x32xf32>
    %984 = arith.mulf %955, %983 : vector<2x8x32xf32>
    %cst_263 = arith.constant dense<0.000000e+00> : vector<2x32xf32>
    %985 = vector.multi_reduction <add>, %984, %cst_263 [1] : vector<2x8x32xf32> to vector<2x32xf32>
    %c0_264 = arith.constant 0 : index
    %c0_265 = arith.constant 0 : index
    %986 = vector.load %arg7[%c0_264, %c0_265] : memref<64x4xf32, #tpu.memory_space<vmem>>, vector<32x4xf32>
    %cst_266 = arith.constant dense<0.000000e+00> : vector<2x4xf32>
    %987 = tpu.matmul %982, %986, %cst_266 {dimension_numbers = #tpu.dot_dimension_numbers<[1], [0], [0], [1], [0, 0, 1, 1], [], []>} : vector<2x32xf32>, vector<32x4xf32>, vector<2x4xf32> -> vector<2x4xf32>
    %c32 = arith.constant 32 : index
    %c0_267 = arith.constant 0 : index
    %988 = vector.load %arg7[%c32, %c0_267] : memref<64x4xf32, #tpu.memory_space<vmem>>, vector<32x4xf32>
    %cst_268 = arith.constant dense<0.000000e+00> : vector<2x4xf32>
    %989 = tpu.matmul %985, %988, %cst_268 {dimension_numbers = #tpu.dot_dimension_numbers<[1], [0], [0], [1], [0, 0, 1, 1], [], []>} : vector<2x32xf32>, vector<32x4xf32>, vector<2x4xf32> -> vector<2x4xf32>
    %990 = arith.addf %987, %989 : vector<2x4xf32>
    %c0_269 = arith.constant 0 : index
    %c0_270 = arith.constant 0 : index
    %991 = vector.load %arg8[%c0_269, %c0_270] : memref<1x4xf32, #tpu.memory_space<vmem>>, vector<1x4xf32>
    %992 = vector.broadcast %991 : vector<1x4xf32> to vector<2x4xf32>
    %993 = arith.addf %990, %992 : vector<2x4xf32>
    %c0_271 = arith.constant 0 : index
    %c0_272 = arith.constant 0 : index
    %994 = vector.load %arg9[%c0_271, %c0_272] : memref<2x4xf32, #tpu.memory_space<vmem>>, vector<2x4xf32>
    tpu.vector_store %arg9[%c0_271, %c0_272], %993 {strides = array<i32>} : memref<2x4xf32, #tpu.memory_space<vmem>>, vector<2x4xf32>,
    return
  }
}

</mosaic_0001>

<llo_original>
// kernel: biagru_forward.1
$region0: #{biagru_forward.1}
  #allocation0 [shape = 'u32[]', space=smem, size = 0x4, offset = 0x4, fixed_abs, tag = 'smem constant byte address 0x4 - core index']
  #allocation1 [shape = 'u32[144,128]{1,0:T(1,128)}', space=vmem, size = 0x12000, scoped, tag = 'internal scratch']
  #allocation2 [shape = 'f32[2,8,32]{2,1,0:T(8,128)}', space=vmem, size = 0x2000, scoped, tag = 'scratch operand']
  #allocation3 [shape = 'f32[2,8,32]{2,1,0:T(8,128)}', space=vmem, size = 0x2000, scoped, tag = 'scratch operand']
  %s0 = inlined_call_operand.vmem [shape: f32[2,8,8], index: 0, kind: input, shape index: {}]
  %s1 = inlined_call_operand.vmem [shape: f32[2,8,96], index: 1, kind: input, shape index: {}]
  %s2 = inlined_call_operand.hbm [shape: f32[4,32,96], index: 2, kind: input, shape index: {}]
  %s3 = inlined_call_operand.hbm [shape: f32[4,32,96], index: 3, kind: input, shape index: {}]
  %s4 = inlined_call_operand.vmem [shape: f32[4,96], index: 4, kind: input, shape index: {}]
  %s5 = inlined_call_operand.vmem [shape: f32[4,32], index: 5, kind: input, shape index: {}]
  %s6 = inlined_call_operand.vmem [shape: f32[2,32], index: 6, kind: input, shape index: {}]
  %s7 = inlined_call_operand.vmem [shape: f32[64,4], index: 7, kind: input, shape index: {}]
  %s8 = inlined_call_operand.vmem [shape: f32[1,4], index: 8, kind: input, shape index: {}]
  %s9 = inlined_call_operand.hbm [shape: f32[2,4], index: 9, kind: output, shape index: {}]
  %s10 = sld [smem:[#allocation0]]
  $region54: #{biagru_forward.1} parent=0
    _
  %s12 = ssub.s32 1, %s10
  %s13 = scalar_select 0, %s12, %s10
  $region1: #{biagru_forward.1} parent=0
    #allocation4 [shape = 'u8[65536]{0}', space=vmem, size = 0x10000, scoped, tag = 'input window, operand 2, single buffered']
    #allocation5 [shape = 's32[1]{0}', space=sflag, size = 0x4, scoped, tag = 'scoped memory for biagru_forward.1']
    #allocation6 [shape = 's32[1]{0}', space=sflag, size = 0x4, scoped, tag = 'scoped memory for biagru_forward.1']
    #allocation7 [shape = 'u8[65536]{0}', space=vmem, size = 0x10000, scoped, tag = 'input window, operand 3, single buffered']
    #allocation8 [shape = 's32[1]{0}', space=sflag, size = 0x4, scoped, tag = 'scoped memory for biagru_forward.1']
    #allocation9 [shape = 'u8[1024]{0}', space=vmem, size = 0x400, scoped, tag = 'output window, operand 0, single buffered']
    %14 = vsyncpa [#allocation5], 0
    %15 = vsyncpa [#allocation8], 0
    %16 = vsyncpa [#allocation6], 0
    // Predicated region
    $region2: #{biagru_forward.1} parent=1 // pred_check
      _
    $region3: #{biagru_forward.1} parent=1 // pred_check_branch
      %18 = sbr.rel (0) target = $region5
    $region4: #{biagru_forward.1} parent=1 // pred_region
      _
    $region5: #{biagru_forward.1} parent=1 // pred_fallthru
      _
    // Predicated region
    $region6: #{biagru_forward.1} parent=1 // pred_check
      _
    $region7: #{biagru_forward.1} parent=1 // pred_check_branch
      %20 = sbr.rel (0) target = $region9
    $region8: #{biagru_forward.1} parent=1 // pred_region
      _
    $region9: #{biagru_forward.1} parent=1 // pred_fallthru
      _
    // Predicated region
    $region10: #{biagru_forward.1} parent=1 // pred_check
      _
    $region11: #{biagru_forward.1} parent=1 // pred_check_branch
      %22 = sbr.rel (0) target = $region13
    $region12: #{biagru_forward.1} parent=1 // pred_region
      %s24 = ssub.s32 2048, 2048
      %25 = vsyncadd [#allocation5], %s24
      %s26 = sshll.u32 [#allocation4], 4
      %s27 = int_to_ptr.vmem [resolvable:$true] %s26
      %32 = dma.hbm_to_vmem [thread:$0]  %s2, 2048, %s27, [#allocation5], 128, 128, 8
    $region13: #{biagru_forward.1} parent=1 // pred_fallthru
      _
    // Predicated region
    $region14: #{biagru_forward.1} parent=1 // pred_check
      _
    $region15: #{biagru_forward.1} parent=1 // pred_check_branch
      %34 = sbr.rel (0) target = $region17
    $region16: #{biagru_forward.1} parent=1 // pred_region
      %s36 = ssub.s32 2048, 2048
      %37 = vsyncadd [#allocation8], %s36
      %s38 = sshll.u32 [#allocation7], 4
      %s39 = int_to_ptr.vmem [resolvable:$true] %s38
      %44 = dma.hbm_to_vmem [thread:$0]  %s3, 2048, %s39, [#allocation8], 128, 128, 8
    $region17: #{biagru_forward.1} parent=1 // pred_fallthru
      _
    // Predicated region
    $region18: #{biagru_forward.1} parent=1 // pred_check
      _
    $region19: #{biagru_forward.1} parent=1 // pred_check_branch
      %46 = sbr.rel (0) target = $region21
    $region20: #{biagru_forward.1} parent=1 // pred_region
      _
    $region21: #{biagru_forward.1} parent=1 // pred_fallthru
      _
    // Predicated region
    $region22: #{biagru_forward.1} parent=1 // pred_check
      _
    $region23: #{biagru_forward.1} parent=1 // pred_check_branch
      %48 = sbr.rel (0) target = $region25
    $region24: #{biagru_forward.1} parent=1 // pred_region
      _
    $region25: #{biagru_forward.1} parent=1 // pred_fallthru
      _
    // Predicated region
    $region26: #{biagru_forward.1} parent=1 // pred_check
      _
    $region27: #{biagru_forward.1} parent=1 // pred_check_branch
      %50 = sbr.rel (0) target = $region29
    $region28: #{biagru_forward.1} parent=1 // pred_region
      _
    $region29: #{biagru_forward.1} parent=1 // pred_fallthru
      _
    // Predicated region
    $region30: #{biagru_forward.1} parent=1 // pred_check
      _
    $region31: #{biagru_forward.1} parent=1 // pred_check_branch
      %52 = sbr.rel (0) target = $region33
    $region32: #{biagru_forward.1} parent=1 // pred_region
      _
    $region33: #{biagru_forward.1} parent=1 // pred_fallthru
      _
    // Predicated region
    $region34: #{biagru_forward.1} parent=1 // pred_check
      _
    $region35: #{biagru_forward.1} parent=1 // pred_check_branch
      %54 = sbr.rel (0) target = $region37
    $region36: #{biagru_forward.1} parent=1 // pred_region
      _
    $region37: #{biagru_forward.1} parent=1 // pred_fallthru
      _
    // Predicated region
    $region38: #{biagru_forward.1} parent=1 // pred_check
      _
    $region39: #{biagru_forward.1} parent=1 // pred_check_branch
      %56 = sbr.rel (0) target = $region41
    $region40: #{biagru_forward.1} parent=1 // pred_region
      %57 = dma.done [#allocation5], 2048
    $region41: #{biagru_forward.1} parent=1 // pred_fallthru
      _
    // Predicated region
    $region42: #{biagru_forward.1} parent=1 // pred_check
      _
    $region43: #{biagru_forward.1} parent=1 // pred_check_branch
      %59 = sbr.rel (0) target = $region45
    $region44: #{biagru_forward.1} parent=1 // pred_region
      %60 = dma.done [#allocation8], 2048
    $region45: #{biagru_forward.1} parent=1 // pred_fallthru
      _
    %v61 = vld [vmem:[%s0] sm:$0xff]
    %v62 = vld [vmem:[%s0 + $0x8] sm:$0xff]
    %v63 = vld [vmem:[%s1] sm:$0xff]
    %v64 = vld [vmem:[%s4] sm:$0x1]
    %v65 = vlaneseq
    %v66 = vshrl.u32 %v65, 7
    %v67 = vsub.s32 0, %v66
    %v68 = vrot.slane %v64, %v67
    %vm69 = vcmask 64512
    %v71 = vsel %vm69, %v61, 0
    %v74 = vsel %vm69, %v62, 0
    %76 = vmatprep.subr.mxu0 0.0
    %77 = vmatpush1.msra.mxu0 0.0
    %78 = vmatprep.subr.mxu0 0.0
    %79 = vmatpush1.msra.mxu0 0.0
    %80 = vmatprep.subr.mxu0 0.0
    %81 = vmatpush1.msra.mxu0 0.0
    %82 = vmatprep.subr.mxu0 0.0
    %83 = vmatpush1.msra.mxu0 0.0
    %84 = vmatprep.subr.mxu0 0.0
    %85 = vmatpush1.msra.mxu0 0.0
    %86 = vmatprep.subr.mxu0 0.0
    %87 = vmatpush1.msra.mxu0 0.0
    %88 = vmatprep.subr.mxu0 0.0
    %89 = vmatpush1.msra.mxu0 0.0
    %90 = vmatprep.subr.mxu0 0.0
    %91 = vmatpush1.msra.mxu0 0.0
    %92 = vmatprep.subr.mxu0 0.0
    %93 = vmatpush1.msra.mxu0 0.0
    %94 = vmatprep.subr.mxu0 0.0
    %95 = vmatpush1.msra.mxu0 0.0
    %96 = vmatprep.subr.mxu0 0.0
    %97 = vmatpush1.msra.mxu0 0.0
    %98 = vmatprep.subr.mxu0 0.0
    %99 = vmatpush1.msra.mxu0 0.0
    %100 = vmatprep.subr.mxu0 0.0
    %101 = vmatpush1.msra.mxu0 0.0
    %102 = vmatprep.subr.mxu0 0.0
    %103 = vmatpush1.msra.mxu0 0.0
    %104 = vmatprep.subr.mxu0 0.0
    %105 = vmatpush1.msra.mxu0 0.0
    %106 = vmatprep.subr.mxu0 0.0
    %107 = vmatpush1.msra.mxu0 %v63
    %108 = vmatprep.subr.mxu0 0.0
    %109 = vmatpush2.msra.mxu0 0.0
    %110 = vmatprep.subr.mxu0 0.0
    %111 = vmatpush2.msra.mxu0 0.0
    %112 = vmatprep.subr.mxu0 0.0
    %113 = vmatpush2.msra.mxu0 0.0
    %114 = vmatprep.subr.mxu0 0.0
    %115 = vmatpush2.msra.mxu0 0.0
    %116 = vmatprep.subr.mxu0 0.0
    %117 = vmatpush2.msra.mxu0 0.0
    %118 = vmatprep.subr.mxu0 0.0
    %119 = vmatpush2.msra.mxu0 0.0
    %120 = vmatprep.subr.mxu0 0.0
    %121 = vmatpush2.msra.mxu0 0.0
    %122 = vmatprep.subr.mxu0 0.0
    %123 = vmatpush2.msra.mxu0 0.0
    %124 = vmatprep.subr.mxu0 0.0
    %125 = vmatpush2.msra.mxu0 0.0
    %126 = vmatprep.subr.mxu0 0.0
    %127 = vmatpush2.msra.mxu0 0.0
    %128 = vmatprep.subr.mxu0 0.0
    %129 = vmatpush2.msra.mxu0 0.0
    %130 = vmatprep.subr.mxu0 0.0
    %131 = vmatpush2.msra.mxu0 0.0
    %132 = vmatprep.subr.mxu0 0.0
    %133 = vmatpush2.msra.mxu0 0.0
    %134 = vmatprep.subr.mxu0 0.0
    %135 = vmatpush2.msra.mxu0 0.0
    %136 = vmatprep.subr.mxu0 0.0
    %137 = vmatpush2.msra.mxu0 0.0
    %138 = vmatprep.subr.mxu0 0.0
    %139 = vmatpush2.msra.mxu0 0.0
    %140 = vmatprep.mubr.f32.mxu0 0.0
    %141 = vmatmul.mubr.f32.gmra.mxu0 %v71
    %v142 = vpop.f32.mrf.mxu0
    %v143 = vadd.f32 %v68, %v142
    %v144 = vpop.f32.mrf.mxu0
    %145 = vmatprep.mubr.f32.mxu0 0.0
    %146 = vmatmul.mubr.f32.gmra.mxu0 %v74
    %v147 = vpop.f32.mrf.mxu0
    %v148 = vadd.f32 %v68, %v147
    %v149 = vpop.f32.mrf.mxu0
    %150 = vdwg.mxu0
    %v151 = vld [vmem:[#allocation7] sm:$0xff]
    %v152 = vld [vmem:[#allocation7 + $0x8] sm:$0xff]
    %v153 = vld [vmem:[#allocation7 + $0x10] sm:$0xff]
    %v154 = vld [vmem:[#allocation7 + $0x18] sm:$0xff]
    %v155 = vld [vmem:[%s5] sm:$0x1]
    %s156 = scalar_lea.vmem %s1, 8
    %v157 = vld [vmem:[%s156] sm:$0xff]
    %v158 = vld [vmem:[%s4 + $0x1] sm:$0x1]
    %v159 = vlaneseq
    %v160 = vshrl.u32 %v159, 7
    %v161 = vsub.s32 0, %v160
    %v162 = vrot.slane %v158, %v161
    %163 = vmatprep.subr.mxu0 0.0
    %164 = vmatpush1.msra.mxu0 0.0
    %165 = vmatprep.subr.mxu0 0.0
    %166 = vmatpush1.msra.mxu0 0.0
    %167 = vmatprep.subr.mxu0 0.0
    %168 = vmatpush1.msra.mxu0 0.0
    %169 = vmatprep.subr.mxu0 0.0
    %170 = vmatpush1.msra.mxu0 0.0
    %171 = vmatprep.subr.mxu0 0.0
    %172 = vmatpush1.msra.mxu0 0.0
    %173 = vmatprep.subr.mxu0 0.0
    %174 = vmatpush1.msra.mxu0 0.0
    %175 = vmatprep.subr.mxu0 0.0
    %176 = vmatpush1.msra.mxu0 0.0
    %177 = vmatprep.subr.mxu0 0.0
    %178 = vmatpush1.msra.mxu0 0.0
    %179 = vmatprep.subr.mxu0 0.0
    %180 = vmatpush1.msra.mxu0 0.0
    %181 = vmatprep.subr.mxu0 0.0
    %182 = vmatpush1.msra.mxu0 0.0
    %183 = vmatprep.subr.mxu0 0.0
    %184 = vmatpush1.msra.mxu0 0.0
    %185 = vmatprep.subr.mxu0 0.0
    %186 = vmatpush1.msra.mxu0 0.0
    %187 = vmatprep.subr.mxu0 0.0
    %188 = vmatpush1.msra.mxu0 0.0
    %189 = vmatprep.subr.mxu0 0.0
    %190 = vmatpush1.msra.mxu0 0.0
    %191 = vmatprep.subr.mxu0 0.0
    %192 = vmatpush1.msra.mxu0 0.0
    %193 = vmatprep.subr.mxu0 0.0
    %194 = vmatpush1.msra.mxu0 %v157
    %195 = vmatprep.subr.mxu0 0.0
    %196 = vmatpush2.msra.mxu0 0.0
    %197 = vmatprep.subr.mxu0 0.0
    %198 = vmatpush2.msra.mxu0 0.0
    %199 = vmatprep.subr.mxu0 0.0
    %200 = vmatpush2.msra.mxu0 0.0
    %201 = vmatprep.subr.mxu0 0.0
    %202 = vmatpush2.msra.mxu0 0.0
    %203 = vmatprep.subr.mxu0 0.0
    %204 = vmatpush2.msra.mxu0 0.0
    %205 = vmatprep.subr.mxu0 0.0
    %206 = vmatpush2.msra.mxu0 0.0
    %207 = vmatprep.subr.mxu0 0.0
    %208 = vmatpush2.msra.mxu0 0.0
    %209 = vmatprep.subr.mxu0 0.0
    %210 = vmatpush2.msra.mxu0 0.0
    %211 = vmatprep.subr.mxu0 0.0
    %212 = vmatpush2.msra.mxu0 0.0
    %213 = vmatprep.subr.mxu0 0.0
    %214 = vmatpush2.msra.mxu0 0.0
    %215 = vmatprep.subr.mxu0 0.0
    %216 = vmatpush2.msra.mxu0 0.0
    %217 = vmatprep.subr.mxu0 0.0
    %218 = vmatpush2.msra.mxu0 0.0
    %219 = vmatprep.subr.mxu0 0.0
    %220 = vmatpush2.msra.mxu0 0.0
    %221 = vmatprep.subr.mxu0 0.0
    %222 = vmatpush2.msra.mxu0 0.0
    %223 = vmatprep.subr.mxu0 0.0
    %224 = vmatpush2.msra.mxu0 0.0
    %225 = vmatprep.subr.mxu0 0.0
    %226 = vmatpush2.msra.mxu0 0.0
    %227 = vmatprep.mubr.f32.mxu0 0.0
    %228 = vmatmul.mubr.f32.gmra.mxu0 %v71
    %v229 = vpop.f32.mrf.mxu0
    %v230 = vadd.f32 %v162, %v229
    %v231 = vpop.f32.mrf.mxu0
    %232 = vmatprep.mubr.f32.mxu0 0.0
    %233 = vmatmul.mubr.f32.gmra.mxu0 %v74
    %v234 = vpop.f32.mrf.mxu0
    %v235 = vadd.f32 %v162, %v234
    %v236 = vpop.f32.mrf.mxu0
    %237 = vdwg.mxu0
    %s238 = scalar_lea.vmem [#allocation7], 32
    %v239 = vld [vmem:[%s238] sm:$0xff]
    %v240 = vld [vmem:[%s238 + $0x8] sm:$0xff]
    %v241 = vld [vmem:[%s238 + $0x10] sm:$0xff]
    %v242 = vld [vmem:[%s238 + $0x18] sm:$0xff]
    %v243 = vld [vmem:[%s5 + $0x1] sm:$0x1]
    %vm244 = vcmask 261120
    %v246 = vsel %vm244, 0.0, 0
    %248 = vmatprep.subr.mxu0 0.0
    %249 = vmatpush1.msra.mxu0 0.0
    %250 = vmatprep.subr.mxu0 0.0
    %251 = vmatpush1.msra.mxu0 0.0
    %252 = vmatprep.subr.mxu0 0.0
    %253 = vmatpush1.msra.mxu0 0.0
    %254 = vmatprep.subr.mxu0 0.0
    %255 = vmatpush1.msra.mxu0 0.0
    %256 = vmatprep.subr.mxu0 0.0
    %257 = vmatpush1.msra.mxu0 0.0
    %258 = vmatprep.subr.mxu0 0.0
    %259 = vmatpush1.msra.mxu0 0.0
    %260 = vmatprep.subr.mxu0 0.0
    %261 = vmatpush1.msra.mxu0 0.0
    %262 = vmatprep.subr.mxu0 0.0
    %263 = vmatpush1.msra.mxu0 0.0
    %264 = vmatprep.subr.mxu0 0.0
    %265 = vmatpush1.msra.mxu0 0.0
    %266 = vmatprep.subr.mxu0 0.0
    %267 = vmatpush1.msra.mxu0 0.0
    %268 = vmatprep.subr.mxu0 0.0
    %269 = vmatpush1.msra.mxu0 0.0
    %270 = vmatprep.subr.mxu0 0.0
    %271 = vmatpush1.msra.mxu0 0.0
    %272 = vmatprep.subr.mxu0 0.0
    %273 = vmatpush1.msra.mxu0 %v154
    %274 = vmatprep.subr.mxu0 0.0
    %275 = vmatpush1.msra.mxu0 %v153
    %276 = vmatprep.subr.mxu0 0.0
    %277 = vmatpush1.msra.mxu0 %v152
    %278 = vmatprep.subr.mxu0 0.0
    %279 = vmatpush1.msra.mxu0 %v151
    %280 = vmatprep.subr.mxu0 0.0
    %281 = vmatpush2.msra.mxu0 0.0
    %282 = vmatprep.subr.mxu0 0.0
    %283 = vmatpush2.msra.mxu0 0.0
    %284 = vmatprep.subr.mxu0 0.0
    %285 = vmatpush2.msra.mxu0 0.0
    %286 = vmatprep.subr.mxu0 0.0
    %287 = vmatpush2.msra.mxu0 0.0
    %288 = vmatprep.subr.mxu0 0.0
    %289 = vmatpush2.msra.mxu0 0.0
    %290 = vmatprep.subr.mxu0 0.0
    %291 = vmatpush2.msra.mxu0 0.0
    %292 = vmatprep.subr.mxu0 0.0
    %293 = vmatpush2.msra.mxu0 0.0
    %294 = vmatprep.subr.mxu0 0.0
    %295 = vmatpush2.msra.mxu0 0.0
    %296 = vmatprep.subr.mxu0 0.0
    %297 = vmatpush2.msra.mxu0 0.0
    %298 = vmatprep.subr.mxu0 0.0
    %299 = vmatpush2.msra.mxu0 0.0
    %300 = vmatprep.subr.mxu0 0.0
    %301 = vmatpush2.msra.mxu0 0.0
    %302 = vmatprep.subr.mxu0 0.0
    %303 = vmatpush2.msra.mxu0 0.0
    %304 = vmatprep.subr.mxu0 0.0
    %305 = vmatpush2.msra.mxu0 0.0
    %306 = vmatprep.subr.mxu0 0.0
    %307 = vmatpush2.msra.mxu0 0.0
    %308 = vmatprep.subr.mxu0 0.0
    %309 = vmatpush2.msra.mxu0 0.0
    %310 = vmatprep.subr.mxu0 0.0
    %311 = vmatpush2.msra.mxu0 0.0
    %312 = vmatprep.mubr.f32.mxu0 0.0
    %313 = vmatmul.mubr.f32.gmra.mxu0 %v246
    %v314 = vpop.f32.mrf.mxu0
    %v315 = vadd.f32 0.0, %v314
    %v316 = vpop.f32.mrf.mxu0
    %317 = vdwg.mxu0
    %v319 = vrot.slane %v315, 1
    %v322 = vadd.f32 %v143, %v315
    %v323 = vadd.f32 %v148, %v319
    %v324 = vxor.u32 %v322, 2147483648
    %v325 = vxor.u32 %v323, 2147483648
    %v326 = vmul.f32 %v324, 1.442695
    %v327 = vpow.pop %v326
    %v328 = vmul.f32 %v325, 1.442695
    %v329 = vpow.pop %v328
    %v330 = vadd.f32 %v327, 1.0
    %v331 = vadd.f32 %v329, 1.0
    %v332 = vrcp.pop %v330
    %v333 = vmul.f32 1.0, %v332
    %v334 = vrcp.pop %v331
    %v335 = vmul.f32 1.0, %v334
    %v336 = vlaneseq
    %v337 = vshrl.u32 %v336, 7
    %v338 = vsub.s32 0, %v337
    %v339 = vrot.slane %v155, %v338
    %341 = vrot.lane.b32.xlu0 %v339, 64
    %v342 = vpop.permute.xlu0 %341
    %v344 = vadd.f32 %v315, %v342
    %v346 = vrot.slane %v344, 1
    %347 = vrot.lane.b32.xlu0 %v344, 64
    %v348 = vpop.permute.xlu0 %347
    %349 = vrot.lane.b32.xlu0 %v346, 64
    %v350 = vpop.permute.xlu0 %349
    %v353 = vmul.f32 %v333, %v348
    %v354 = vmul.f32 %v335, %v350
    %357 = vrot.lane.b32.xlu0 %v353, 64
    %v358 = vpop.permute.xlu0 %357
    %359 = vrot.lane.b32.xlu0 %v354, 64
    %v360 = vpop.permute.xlu0 %359
    %v363 = vadd.f32 %v143, %v358
    %v364 = vadd.f32 %v148, %v360
    %v365 = vtanh.pop %v363
    %v366 = vtanh.pop %v364
    %v367 = vsub.f32 1.0, %v333
    %v368 = vsub.f32 1.0, %v335
    %371 = vrot.lane.b32.xlu0 %v365, 96
    %v372 = vpop.permute.xlu0 %371
    %373 = vrot.lane.b32.xlu0 %v366, 96
    %v374 = vpop.permute.xlu0 %373
    %v377 = vmul.f32 %v367, %v372
    %v378 = vmul.f32 %v368, %v374
    %v379 = vmul.f32 %v333, 0.0
    %v380 = vmul.f32 %v335, 0.0
    %v381 = vadd.f32 %v377, %v379
    %v382 = vadd.f32 %v378, %v380
    %385 = vrot.lane.b32.xlu0 %v381, 96
    %v386 = vpop.permute.xlu0 %385
    %387 = vrot.lane.b32.xlu0 %v382, 96
    %v388 = vpop.permute.xlu0 %387
    %vm391 = vcmask 253952
    %392 = vst.msk [vmem:[#allocation2] sm:$0x1] %vm391, %v386
    %393 = vst.msk [vmem:[#allocation2 + $0x8] sm:$0x1] %vm391, %v388
    %394 = vmatprep.subr.mxu0 0.0
    %395 = vmatpush1.msra.mxu0 0.0
    %396 = vmatprep.subr.mxu0 0.0
    %397 = vmatpush1.msra.mxu0 0.0
    %398 = vmatprep.subr.mxu0 0.0
    %399 = vmatpush1.msra.mxu0 0.0
    %400 = vmatprep.subr.mxu0 0.0
    %401 = vmatpush1.msra.mxu0 0.0
    %402 = vmatprep.subr.mxu0 0.0
    %403 = vmatpush1.msra.mxu0 0.0
    %404 = vmatprep.subr.mxu0 0.0
    %405 = vmatpush1.msra.mxu0 0.0
    %406 = vmatprep.subr.mxu0 0.0
    %407 = vmatpush1.msra.mxu0 0.0
    %408 = vmatprep.subr.mxu0 0.0
    %409 = vmatpush1.msra.mxu0 0.0
    %410 = vmatprep.subr.mxu0 0.0
    %411 = vmatpush1.msra.mxu0 0.0
    %412 = vmatprep.subr.mxu0 0.0
    %413 = vmatpush1.msra.mxu0 0.0
    %414 = vmatprep.subr.mxu0 0.0
    %415 = vmatpush1.msra.mxu0 0.0
    %416 = vmatprep.subr.mxu0 0.0
    %417 = vmatpush1.msra.mxu0 0.0
    %418 = vmatprep.subr.mxu0 0.0
    %419 = vmatpush1.msra.mxu0 %v242
    %420 = vmatprep.subr.mxu0 0.0
    %421 = vmatpush1.msra.mxu0 %v241
    %422 = vmatprep.subr.mxu0 0.0
    %423 = vmatpush1.msra.mxu0 %v240
    %424 = vmatprep.subr.mxu0 0.0
    %425 = vmatpush1.msra.mxu0 %v239
    %426 = vmatprep.subr.mxu0 0.0
    %427 = vmatpush2.msra.mxu0 0.0
    %428 = vmatprep.subr.mxu0 0.0
    %429 = vmatpush2.msra.mxu0 0.0
    %430 = vmatprep.subr.mxu0 0.0
    %431 = vmatpush2.msra.mxu0 0.0
    %432 = vmatprep.subr.mxu0 0.0
    %433 = vmatpush2.msra.mxu0 0.0
    %434 = vmatprep.subr.mxu0 0.0
    %435 = vmatpush2.msra.mxu0 0.0
    %436 = vmatprep.subr.mxu0 0.0
    %437 = vmatpush2.msra.mxu0 0.0
    %438 = vmatprep.subr.mxu0 0.0
    %439 = vmatpush2.msra.mxu0 0.0
    %440 = vmatprep.subr.mxu0 0.0
    %441 = vmatpush2.msra.mxu0 0.0
    %442 = vmatprep.subr.mxu0 0.0
    %443 = vmatpush2.msra.mxu0 0.0
    %444 = vmatprep.subr.mxu0 0.0
    %445 = vmatpush2.msra.mxu0 0.0
    %446 = vmatprep.subr.mxu0 0.0
    %447 = vmatpush2.msra.mxu0 0.0
    %448 = vmatprep.subr.mxu0 0.0
    %449 = vmatpush2.msra.mxu0 0.0
    %450 = vmatprep.subr.mxu0 0.0
    %451 = vmatpush2.msra.mxu0 0.0
    %452 = vmatprep.subr.mxu0 0.0
    %453 = vmatpush2.msra.mxu0 0.0
    %454 = vmatprep.subr.mxu0 0.0
    %455 = vmatpush2.msra.mxu0 0.0
    %456 = vmatprep.subr.mxu0 0.0
    %457 = vmatpush2.msra.mxu0 0.0
    %458 = vmatprep.mubr.f32.mxu0 0.0
    %459 = vmatmul.mubr.f32.gmra.mxu0 %v246
    %v460 = vpop.f32.mrf.mxu0
    %v461 = vadd.f32 0.0, %v460
    %v462 = vpop.f32.mrf.mxu0
    %463 = vdwg.mxu0
    %v465 = vrot.slane %v461, 1
    %v466 = vrot.slane %v461, 2
    %v469 = vadd.f32 %v230, %v465
    %v470 = vadd.f32 %v235, %v466
    %v471 = vxor.u32 %v469, 2147483648
    %v472 = vxor.u32 %v470, 2147483648
    %v473 = vmul.f32 %v471, 1.442695
    %v474 = vpow.pop %v473
    %v475 = vmul.f32 %v472, 1.442695
    %v476 = vpow.pop %v475
    %v477 = vadd.f32 %v474, 1.0
    %v478 = vadd.f32 %v476, 1.0
    %v479 = vrcp.pop %v477
    %v480 = vmul.f32 1.0, %v479
    %v481 = vrcp.pop %v478
    %v482 = vmul.f32 1.0, %v481
    %v483 = vlaneseq
    %v484 = vshrl.u32 %v483, 7
    %v485 = vsub.s32 0, %v484
    %v486 = vrot.slane %v243, %v485
    %488 = vrot.lane.b32.xlu0 %v486, 64
    %v489 = vpop.permute.xlu0 %488
    %v491 = vadd.f32 %v461, %v489
    %v493 = vrot.slane %v491, 1
    %v494 = vrot.slane %v491, 2
    %495 = vrot.lane.b32.xlu0 %v493, 64
    %v496 = vpop.permute.xlu0 %495
    %497 = vrot.lane.b32.xlu0 %v494, 64
    %v498 = vpop.permute.xlu0 %497
    %v501 = vmul.f32 %v480, %v496
    %v502 = vmul.f32 %v482, %v498
    %505 = vrot.lane.b32.xlu0 %v501, 64
    %v506 = vpop.permute.xlu0 %505
    %507 = vrot.lane.b32.xlu0 %v502, 64
    %v508 = vpop.permute.xlu0 %507
    %v511 = vadd.f32 %v230, %v506
    %v512 = vadd.f32 %v235, %v508
    %v513 = vtanh.pop %v511
    %v514 = vtanh.pop %v512
    %v515 = vsub.f32 1.0, %v480
    %v516 = vsub.f32 1.0, %v482
    %519 = vrot.lane.b32.xlu0 %v513, 96
    %v520 = vpop.permute.xlu0 %519
    %521 = vrot.lane.b32.xlu0 %v514, 96
    %v522 = vpop.permute.xlu0 %521
    %v525 = vmul.f32 %v515, %v520
    %v526 = vmul.f32 %v516, %v522
    %v527 = vmul.f32 %v480, 0.0
    %v528 = vmul.f32 %v482, 0.0
    %v529 = vadd.f32 %v525, %v527
    %v530 = vadd.f32 %v526, %v528
    %533 = vrot.lane.b32.xlu0 %v529, 96
    %v534 = vpop.permute.xlu0 %533
    %535 = vrot.lane.b32.xlu0 %v530, 96
    %v536 = vpop.permute.xlu0 %535
    %vm539 = vcmask 261127
    %540 = vst.msk [vmem:[#allocation3] sm:$0x80] %vm539, %v534
    %541 = vst.msk [vmem:[#allocation3 + $0x8] sm:$0x80] %vm539, %v536
    %v542 = vrot.slane %v382, 7
    %vm543 = vcmask 1041409
    %v544 = vsel %vm543, %v542, %v381
    %545 = vrot.lane.b32.xlu0 %v544, 96
    %v546 = vpop.permute.xlu0 %545
    %v547 = vsel %vm244, %v546, 0
    %549 = vmatprep.subr.mxu0 0.0
    %550 = vmatpush1.msra.mxu0 0.0
    %551 = vmatprep.subr.mxu0 0.0
    %552 = vmatpush1.msra.mxu0 0.0
    %553 = vmatprep.subr.mxu0 0.0
    %554 = vmatpush1.msra.mxu0 0.0
    %555 = vmatprep.subr.mxu0 0.0
    %556 = vmatpush1.msra.mxu0 0.0
    %557 = vmatprep.subr.mxu0 0.0
    %558 = vmatpush1.msra.mxu0 0.0
    %559 = vmatprep.subr.mxu0 0.0
    %560 = vmatpush1.msra.mxu0 0.0
    %561 = vmatprep.subr.mxu0 0.0
    %562 = vmatpush1.msra.mxu0 0.0
    %563 = vmatprep.subr.mxu0 0.0
    %564 = vmatpush1.msra.mxu0 0.0
    %565 = vmatprep.subr.mxu0 0.0
    %566 = vmatpush1.msra.mxu0 0.0
    %567 = vmatprep.subr.mxu0 0.0
    %568 = vmatpush1.msra.mxu0 0.0
    %569 = vmatprep.subr.mxu0 0.0
    %570 = vmatpush1.msra.mxu0 0.0
    %571 = vmatprep.subr.mxu0 0.0
    %572 = vmatpush1.msra.mxu0 0.0
    %573 = vmatprep.subr.mxu0 0.0
    %574 = vmatpush1.msra.mxu0 %v154
    %575 = vmatprep.subr.mxu0 0.0
    %576 = vmatpush1.msra.mxu0 %v153
    %577 = vmatprep.subr.mxu0 0.0
    %578 = vmatpush1.msra.mxu0 %v152
    %579 = vmatprep.subr.mxu0 0.0
    %580 = vmatpush1.msra.mxu0 %v151
    %581 = vmatprep.subr.mxu0 0.0
    %582 = vmatpush2.msra.mxu0 0.0
    %583 = vmatprep.subr.mxu0 0.0
    %584 = vmatpush2.msra.mxu0 0.0
    %585 = vmatprep.subr.mxu0 0.0
    %586 = vmatpush2.msra.mxu0 0.0
    %587 = vmatprep.subr.mxu0 0.0
    %588 = vmatpush2.msra.mxu0 0.0
    %589 = vmatprep.subr.mxu0 0.0
    %590 = vmatpush2.msra.mxu0 0.0
    %591 = vmatprep.subr.mxu0 0.0
    %592 = vmatpush2.msra.mxu0 0.0
    %593 = vmatprep.subr.mxu0 0.0
    %594 = vmatpush2.msra.mxu0 0.0
    %595 = vmatprep.subr.mxu0 0.0
    %596 = vmatpush2.msra.mxu0 0.0
    %597 = vmatprep.subr.mxu0 0.0
    %598 = vmatpush2.msra.mxu0 0.0
    %599 = vmatprep.subr.mxu0 0.0
    %600 = vmatpush2.msra.mxu0 0.0
    %601 = vmatprep.subr.mxu0 0.0
    %602 = vmatpush2.msra.mxu0 0.0
    %603 = vmatprep.subr.mxu0 0.0
    %604 = vmatpush2.msra.mxu0 0.0
    %605 = vmatprep.subr.mxu0 0.0
    %606 = vmatpush2.msra.mxu0 0.0
    %607 = vmatprep.subr.mxu0 0.0
    %608 = vmatpush2.msra.mxu0 0.0
    %609 = vmatprep.subr.mxu0 0.0
    %610 = vmatpush2.msra.mxu0 0.0
    %611 = vmatprep.subr.mxu0 0.0
    %612 = vmatpush2.msra.mxu0 0.0
    %613 = vmatprep.mubr.f32.mxu0 0.0
    %614 = vmatmul.mubr.f32.gmra.mxu0 %v547
    %v615 = vpop.f32.mrf.mxu0
    %v616 = vadd.f32 0.0, %v615
    %v617 = vpop.f32.mrf.mxu0
    %618 = vdwg.mxu0
    %v620 = vrot.slane %v616, 7
    %v623 = vadd.f32 %v143, %v620
    %v624 = vadd.f32 %v148, %v616
    %v625 = vxor.u32 %v623, 2147483648
    %v626 = vxor.u32 %v624, 2147483648
    %v627 = vmul.f32 %v625, 1.442695
    %v628 = vpow.pop %v627
    %v629 = vmul.f32 %v626, 1.442695
    %v630 = vpow.pop %v629
    %v631 = vadd.f32 %v628, 1.0
    %v632 = vadd.f32 %v630, 1.0
    %v633 = vrcp.pop %v631
    %v634 = vmul.f32 1.0, %v633
    %v635 = vrcp.pop %v632
    %v636 = vmul.f32 1.0, %v635
    %v637 = vadd.f32 %v616, %v342
    %v639 = vrot.slane %v637, 7
    %640 = vrot.lane.b32.xlu0 %v639, 64
    %v641 = vpop.permute.xlu0 %640
    %642 = vrot.lane.b32.xlu0 %v637, 64
    %v643 = vpop.permute.xlu0 %642
    %v646 = vmul.f32 %v634, %v641
    %v647 = vmul.f32 %v636, %v643
    %650 = vrot.lane.b32.xlu0 %v646, 64
    %v651 = vpop.permute.xlu0 %650
    %652 = vrot.lane.b32.xlu0 %v647, 64
    %v653 = vpop.permute.xlu0 %652
    %v656 = vadd.f32 %v143, %v651
    %v657 = vadd.f32 %v148, %v653
    %v658 = vtanh.pop %v656
    %v659 = vtanh.pop %v657
    %v660 = vsub.f32 1.0, %v634
    %v661 = vsub.f32 1.0, %v636
    %664 = vrot.lane.b32.xlu0 %v658, 96
    %v665 = vpop.permute.xlu0 %664
    %666 = vrot.lane.b32.xlu0 %v659, 96
    %v667 = vpop.permute.xlu0 %666
    %v670 = vmul.f32 %v660, %v665
    %v671 = vmul.f32 %v661, %v667
    %v672 = vrot.slane %v381, 7
    %v675 = vmul.f32 %v634, %v672
    %v676 = vmul.f32 %v636, %v542
    %v677 = vadd.f32 %v670, %v675
    %v678 = vadd.f32 %v671, %v676
    %681 = vrot.lane.b32.xlu0 %v677, 96
    %v682 = vpop.permute.xlu0 %681
    %683 = vrot.lane.b32.xlu0 %v678, 96
    %v684 = vpop.permute.xlu0 %683
    %vm687 = vcmask 254977
    %688 = vst.msk [vmem:[#allocation2] sm:$0x2] %vm687, %v682
    %689 = vst.msk [vmem:[#allocation2 + $0x8] sm:$0x2] %vm687, %v684
    %v690 = vrot.slane %v529, 7
    %v691 = vrot.slane %v530, 6
    %v692 = vsel %vm543, %v691, %v690
    %693 = vrot.lane.b32.xlu0 %v692, 96
    %v694 = vpop.permute.xlu0 %693
    %v695 = vsel %vm244, %v694, 0
    %697 = vmatprep.subr.mxu0 0.0
    %698 = vmatpush1.msra.mxu0 0.0
    %699 = vmatprep.subr.mxu0 0.0
    %700 = vmatpush1.msra.mxu0 0.0
    %701 = vmatprep.subr.mxu0 0.0
    %702 = vmatpush1.msra.mxu0 0.0
    %703 = vmatprep.subr.mxu0 0.0
    %704 = vmatpush1.msra.mxu0 0.0
    %705 = vmatprep.subr.mxu0 0.0
    %706 = vmatpush1.msra.mxu0 0.0
    %707 = vmatprep.subr.mxu0 0.0
    %708 = vmatpush1.msra.mxu0 0.0
    %709 = vmatprep.subr.mxu0 0.0
    %710 = vmatpush1.msra.mxu0 0.0
    %711 = vmatprep.subr.mxu0 0.0
    %712 = vmatpush1.msra.mxu0 0.0
    %713 = vmatprep.subr.mxu0 0.0
    %714 = vmatpush1.msra.mxu0 0.0
    %715 = vmatprep.subr.mxu0 0.0
    %716 = vmatpush1.msra.mxu0 0.0
    %717 = vmatprep.subr.mxu0 0.0
    %718 = vmatpush1.msra.mxu0 0.0
    %719 = vmatprep.subr.mxu0 0.0
    %720 = vmatpush1.msra.mxu0 0.0
    %721 = vmatprep.subr.mxu0 0.0
    %722 = vmatpush1.msra.mxu0 %v242
    %723 = vmatprep.subr.mxu0 0.0
    %724 = vmatpush1.msra.mxu0 %v241
    %725 = vmatprep.subr.mxu0 0.0
    %726 = vmatpush1.msra.mxu0 %v240
    %727 = vmatprep.subr.mxu0 0.0
    %728 = vmatpush1.msra.mxu0 %v239
    %729 = vmatprep.subr.mxu0 0.0
    %730 = vmatpush2.msra.mxu0 0.0
    %731 = vmatprep.subr.mxu0 0.0
    %732 = vmatpush2.msra.mxu0 0.0
    %733 = vmatprep.subr.mxu0 0.0
    %734 = vmatpush2.msra.mxu0 0.0
    %735 = vmatprep.subr.mxu0 0.0
    %736 = vmatpush2.msra.mxu0 0.0
    %737 = vmatprep.subr.mxu0 0.0
    %738 = vmatpush2.msra.mxu0 0.0
    %739 = vmatprep.subr.mxu0 0.0
    %740 = vmatpush2.msra.mxu0 0.0
    %741 = vmatprep.subr.mxu0 0.0
    %742 = vmatpush2.msra.mxu0 0.0
    %743 = vmatprep.subr.mxu0 0.0
    %744 = vmatpush2.msra.mxu0 0.0
    %745 = vmatprep.subr.mxu0 0.0
    %746 = vmatpush2.msra.mxu0 0.0
    %747 = vmatprep.subr.mxu0 0.0
    %748 = vmatpush2.msra.mxu0 0.0
    %749 = vmatprep.subr.mxu0 0.0
    %750 = vmatpush2.msra.mxu0 0.0
    %751 = vmatprep.subr.mxu0 0.0
    %752 = vmatpush2.msra.mxu0 0.0
    %753 = vmatprep.subr.mxu0 0.0
    %754 = vmatpush2.msra.mxu0 0.0
    %755 = vmatprep.subr.mxu0 0.0
    %756 = vmatpush2.msra.mxu0 0.0
    %757 = vmatprep.subr.mxu0 0.0
    %758 = vmatpush2.msra.mxu0 0.0
    %759 = vmatprep.subr.mxu0 0.0
    %760 = vmatpush2.msra.mxu0 0.0
    %761 = vmatprep.mubr.f32.mxu0 0.0
    %762 = vmatmul.mubr.f32.gmra.mxu0 %v695
    %v763 = vpop.f32.mrf.mxu0
    %v764 = vadd.f32 0.0, %v763
    %v765 = vpop.f32.mrf.mxu0
    %766 = vdwg.mxu0
    %v768 = vrot.slane %v764, 2
    %v769 = vrot.slane %v764, 3
    %v772 = vadd.f32 %v230, %v768
    %v773 = vadd.f32 %v235, %v769
    %v774 = vxor.u32 %v772, 2147483648
    %v775 = vxor.u32 %v773, 2147483648
    %v776 = vmul.f32 %v774, 1.442695
    %v777 = vpow.pop %v776
    %v778 = vmul.f32 %v775, 1.442695
    %v779 = vpow.pop %v778
    %v780 = vadd.f32 %v777, 1.0
    %v781 = vadd.f32 %v779, 1.0
    %v782 = vrcp.pop %v780
    %v783 = vmul.f32 1.0, %v782
    %v784 = vrcp.pop %v781
    %v785 = vmul.f32 1.0, %v784
    %v786 = vadd.f32 %v764, %v489
    %v788 = vrot.slane %v786, 2
    %v789 = vrot.slane %v786, 3
    %790 = vrot.lane.b32.xlu0 %v788, 64
    %v791 = vpop.permute.xlu0 %790
    %792 = vrot.lane.b32.xlu0 %v789, 64
    %v793 = vpop.permute.xlu0 %792
    %v796 = vmul.f32 %v783, %v791
    %v797 = vmul.f32 %v785, %v793
    %800 = vrot.lane.b32.xlu0 %v796, 64
    %v801 = vpop.permute.xlu0 %800
    %802 = vrot.lane.b32.xlu0 %v797, 64
    %v803 = vpop.permute.xlu0 %802
    %v806 = vadd.f32 %v230, %v801
    %v807 = vadd.f32 %v235, %v803
    %v808 = vtanh.pop %v806
    %v809 = vtanh.pop %v807
    %v810 = vsub.f32 1.0, %v783
    %v811 = vsub.f32 1.0, %v785
    %814 = vrot.lane.b32.xlu0 %v808, 96
    %v815 = vpop.permute.xlu0 %814
    %816 = vrot.lane.b32.xlu0 %v809, 96
    %v817 = vpop.permute.xlu0 %816
    %v820 = vmul.f32 %v810, %v815
    %v821 = vmul.f32 %v811, %v817
    %v822 = vrot.slane %v529, 1
    %v823 = vrot.slane %v530, 1
    %v826 = vmul.f32 %v783, %v822
    %v827 = vmul.f32 %v785, %v823
    %v828 = vadd.f32 %v820, %v826
    %v829 = vadd.f32 %v821, %v827
    %832 = vrot.lane.b32.xlu0 %v828, 96
    %v833 = vpop.permute.xlu0 %832
    %834 = vrot.lane.b32.xlu0 %v829, 96
    %v835 = vpop.permute.xlu0 %834
    %vm838 = vcmask 260102
    %839 = vst.msk [vmem:[#allocation3] sm:$0x40] %vm838, %v833
    %840 = vst.msk [vmem:[#allocation3 + $0x8] sm:$0x40] %vm838, %v835
    %v841 = vrot.slane %v677, 1
    %v842 = vsel %vm543, %v678, %v841
    %843 = vrot.lane.b32.xlu0 %v842, 96
    %v844 = vpop.permute.xlu0 %843
    %v845 = vsel %vm244, %v844, 0
    %847 = vmatprep.subr.mxu0 0.0
    %848 = vmatpush1.msra.mxu0 0.0
    %849 = vmatprep.subr.mxu0 0.0
    %850 = vmatpush1.msra.mxu0 0.0
    %851 = vmatprep.subr.mxu0 0.0
    %852 = vmatpush1.msra.mxu0 0.0
    %853 = vmatprep.subr.mxu0 0.0
    %854 = vmatpush1.msra.mxu0 0.0
    %855 = vmatprep.subr.mxu0 0.0
    %856 = vmatpush1.msra.mxu0 0.0
    %857 = vmatprep.subr.mxu0 0.0
    %858 = vmatpush1.msra.mxu0 0.0
    %859 = vmatprep.subr.mxu0 0.0
    %860 = vmatpush1.msra.mxu0 0.0
    %861 = vmatprep.subr.mxu0 0.0
    %862 = vmatpush1.msra.mxu0 0.0
    %863 = vmatprep.subr.mxu0 0.0
    %864 = vmatpush1.msra.mxu0 0.0
    %865 = vmatprep.subr.mxu0 0.0
    %866 = vmatpush1.msra.mxu0 0.0
    %867 = vmatprep.subr.mxu0 0.0
    %868 = vmatpush1.msra.mxu0 0.0
    %869 = vmatprep.subr.mxu0 0.0
    %870 = vmatpush1.msra.mxu0 0.0
    %871 = vmatprep.subr.mxu0 0.0
    %872 = vmatpush1.msra.mxu0 %v154
    %873 = vmatprep.subr.mxu0 0.0
    %874 = vmatpush1.msra.mxu0 %v153
    %875 = vmatprep.subr.mxu0 0.0
    %876 = vmatpush1.msra.mxu0 %v152
    %877 = vmatprep.subr.mxu0 0.0
    %878 = vmatpush1.msra.mxu0 %v151
    %879 = vmatprep.subr.mxu0 0.0
    %880 = vmatpush2.msra.mxu0 0.0
    %881 = vmatprep.subr.mxu0 0.0
    %882 = vmatpush2.msra.mxu0 0.0
    %883 = vmatprep.subr.mxu0 0.0
    %884 = vmatpush2.msra.mxu0 0.0
    %885 = vmatprep.subr.mxu0 0.0
    %886 = vmatpush2.msra.mxu0 0.0
    %887 = vmatprep.subr.mxu0 0.0
    %888 = vmatpush2.msra.mxu0 0.0
    %889 = vmatprep.subr.mxu0 0.0
    %890 = vmatpush2.msra.mxu0 0.0
    %891 = vmatprep.subr.mxu0 0.0
    %892 = vmatpush2.msra.mxu0 0.0
    %893 = vmatprep.subr.mxu0 0.0
    %894 = vmatpush2.msra.mxu0 0.0
    %895 = vmatprep.subr.mxu0 0.0
    %896 = vmatpush2.msra.mxu0 0.0
    %897 = vmatprep.subr.mxu0 0.0
    %898 = vmatpush2.msra.mxu0 0.0
    %899 = vmatprep.subr.mxu0 0.0
    %900 = vmatpush2.msra.mxu0 0.0
    %901 = vmatprep.subr.mxu0 0.0
    %902 = vmatpush2.msra.mxu0 0.0
    %903 = vmatprep.subr.mxu0 0.0
    %904 = vmatpush2.msra.mxu0 0.0
    %905 = vmatprep.subr.mxu0 0.0
    %906 = vmatpush2.msra.mxu0 0.0
    %907 = vmatprep.subr.mxu0 0.0
    %908 = vmatpush2.msra.mxu0 0.0
    %909 = vmatprep.subr.mxu0 0.0
    %910 = vmatpush2.msra.mxu0 0.0
    %911 = vmatprep.mubr.f32.mxu0 0.0
    %912 = vmatmul.mubr.f32.gmra.mxu0 %v845
    %v913 = vpop.f32.mrf.mxu0
    %v914 = vadd.f32 0.0, %v913
    %v915 = vpop.f32.mrf.mxu0
    %916 = vdwg.mxu0
    %v918 = vrot.slane %v914, 6
    %v919 = vrot.slane %v914, 7
    %v922 = vadd.f32 %v143, %v918
    %v923 = vadd.f32 %v148, %v919
    %v924 = vxor.u32 %v922, 2147483648
    %v925 = vxor.u32 %v923, 2147483648
    %v926 = vmul.f32 %v924, 1.442695
    %v927 = vpow.pop %v926
    %v928 = vmul.f32 %v925, 1.442695
    %v929 = vpow.pop %v928
    %v930 = vadd.f32 %v927, 1.0
    %v931 = vadd.f32 %v929, 1.0
    %v932 = vrcp.pop %v930
    %v933 = vmul.f32 1.0, %v932
    %v934 = vrcp.pop %v931
    %v935 = vmul.f32 1.0, %v934
    %v936 = vadd.f32 %v914, %v342
    %v938 = vrot.slane %v936, 6
    %v939 = vrot.slane %v936, 7
    %940 = vrot.lane.b32.xlu0 %v938, 64
    %v941 = vpop.permute.xlu0 %940
    %942 = vrot.lane.b32.xlu0 %v939, 64
    %v943 = vpop.permute.xlu0 %942
    %v946 = vmul.f32 %v933, %v941
    %v947 = vmul.f32 %v935, %v943
    %950 = vrot.lane.b32.xlu0 %v946, 64
    %v951 = vpop.permute.xlu0 %950
    %952 = vrot.lane.b32.xlu0 %v947, 64
    %v953 = vpop.permute.xlu0 %952
    %v956 = vadd.f32 %v143, %v951
    %v957 = vadd.f32 %v148, %v953
    %v958 = vtanh.pop %v956
    %v959 = vtanh.pop %v957
    %v960 = vsub.f32 1.0, %v933
    %v961 = vsub.f32 1.0, %v935
    %964 = vrot.lane.b32.xlu0 %v958, 96
    %v965 = vpop.permute.xlu0 %964
    %966 = vrot.lane.b32.xlu0 %v959, 96
    %v967 = vpop.permute.xlu0 %966
    %v970 = vmul.f32 %v960, %v965
    %v971 = vmul.f32 %v961, %v967
    %v972 = vrot.slane %v677, 7
    %v973 = vrot.slane %v678, 7
    %v976 = vmul.f32 %v933, %v972
    %v977 = vmul.f32 %v935, %v973
    %v978 = vadd.f32 %v970, %v976
    %v979 = vadd.f32 %v971, %v977
    %982 = vrot.lane.b32.xlu0 %v978, 96
    %v983 = vpop.permute.xlu0 %982
    %984 = vrot.lane.b32.xlu0 %v979, 96
    %v985 = vpop.permute.xlu0 %984
    %vm988 = vcmask 256002
    %989 = vst.msk [vmem:[#allocation2] sm:$0x4] %vm988, %v983
    %990 = vst.msk [vmem:[#allocation2 + $0x8] sm:$0x4] %vm988, %v985
    %v991 = vrot.slane %v828, 6
    %v992 = vrot.slane %v829, 5
    %v993 = vsel %vm543, %v992, %v991
    %994 = vrot.lane.b32.xlu0 %v993, 96
    %v995 = vpop.permute.xlu0 %994
    %v996 = vsel %vm244, %v995, 0
    %998 = vmatprep.subr.mxu0 0.0
    %999 = vmatpush1.msra.mxu0 0.0
    %1000 = vmatprep.subr.mxu0 0.0
    %1001 = vmatpush1.msra.mxu0 0.0
    %1002 = vmatprep.subr.mxu0 0.0
    %1003 = vmatpush1.msra.mxu0 0.0
    %1004 = vmatprep.subr.mxu0 0.0
    %1005 = vmatpush1.msra.mxu0 0.0
    %1006 = vmatprep.subr.mxu0 0.0
    %1007 = vmatpush1.msra.mxu0 0.0
    %1008 = vmatprep.subr.mxu0 0.0
    %1009 = vmatpush1.msra.mxu0 0.0
    %1010 = vmatprep.subr.mxu0 0.0
    %1011 = vmatpush1.msra.mxu0 0.0
    %1012 = vmatprep.subr.mxu0 0.0
    %1013 = vmatpush1.msra.mxu0 0.0
    %1014 = vmatprep.subr.mxu0 0.0
    %1015 = vmatpush1.msra.mxu0 0.0
    %1016 = vmatprep.subr.mxu0 0.0
    %1017 = vmatpush1.msra.mxu0 0.0
    %1018 = vmatprep.subr.mxu0 0.0
    %1019 = vmatpush1.msra.mxu0 0.0
    %1020 = vmatprep.subr.mxu0 0.0
    %1021 = vmatpush1.msra.mxu0 0.0
    %1022 = vmatprep.subr.mxu0 0.0
    %1023 = vmatpush1.msra.mxu0 %v242
    %1024 = vmatprep.subr.mxu0 0.0
    %1025 = vmatpush1.msra.mxu0 %v241
    %1026 = vmatprep.subr.mxu0 0.0
    %1027 = vmatpush1.msra.mxu0 %v240
    %1028 = vmatprep.subr.mxu0 0.0
    %1029 = vmatpush1.msra.mxu0 %v239
    %1030 = vmatprep.subr.mxu0 0.0
    %1031 = vmatpush2.msra.mxu0 0.0
    %1032 = vmatprep.subr.mxu0 0.0
    %1033 = vmatpush2.msra.mxu0 0.0
    %1034 = vmatprep.subr.mxu0 0.0
    %1035 = vmatpush2.msra.mxu0 0.0
    %1036 = vmatprep.subr.mxu0 0.0
    %1037 = vmatpush2.msra.mxu0 0.0
    %1038 = vmatprep.subr.mxu0 0.0
    %1039 = vmatpush2.msra.mxu0 0.0
    %1040 = vmatprep.subr.mxu0 0.0
    %1041 = vmatpush2.msra.mxu0 0.0
    %1042 = vmatprep.subr.mxu0 0.0
    %1043 = vmatpush2.msra.mxu0 0.0
    %1044 = vmatprep.subr.mxu0 0.0
    %1045 = vmatpush2.msra.mxu0 0.0
    %1046 = vmatprep.subr.mxu0 0.0
    %1047 = vmatpush2.msra.mxu0 0.0
    %1048 = vmatprep.subr.mxu0 0.0
    %1049 = vmatpush2.msra.mxu0 0.0
    %1050 = vmatprep.subr.mxu0 0.0
    %1051 = vmatpush2.msra.mxu0 0.0
    %1052 = vmatprep.subr.mxu0 0.0
    %1053 = vmatpush2.msra.mxu0 0.0
    %1054 = vmatprep.subr.mxu0 0.0
    %1055 = vmatpush2.msra.mxu0 0.0
    %1056 = vmatprep.subr.mxu0 0.0
    %1057 = vmatpush2.msra.mxu0 0.0
    %1058 = vmatprep.subr.mxu0 0.0
    %1059 = vmatpush2.msra.mxu0 0.0
    %1060 = vmatprep.subr.mxu0 0.0
    %1061 = vmatpush2.msra.mxu0 0.0
    %1062 = vmatprep.mubr.f32.mxu0 0.0
    %1063 = vmatmul.mubr.f32.gmra.mxu0 %v996
    %v1064 = vpop.f32.mrf.mxu0
    %v1065 = vadd.f32 0.0, %v1064
    %v1066 = vpop.f32.mrf.mxu0
    %1067 = vdwg.mxu0
    %v1069 = vrot.slane %v1065, 3
    %v1070 = vrot.slane %v1065, 4
    %v1073 = vadd.f32 %v230, %v1069
    %v1074 = vadd.f32 %v235, %v1070
    %v1075 = vxor.u32 %v1073, 2147483648
    %v1076 = vxor.u32 %v1074, 2147483648
    %v1077 = vmul.f32 %v1075, 1.442695
    %v1078 = vpow.pop %v1077
    %v1079 = vmul.f32 %v1076, 1.442695
    %v1080 = vpow.pop %v1079
    %v1081 = vadd.f32 %v1078, 1.0
    %v1082 = vadd.f32 %v1080, 1.0
    %v1083 = vrcp.pop %v1081
    %v1084 = vmul.f32 1.0, %v1083
    %v1085 = vrcp.pop %v1082
    %v1086 = vmul.f32 1.0, %v1085
    %v1087 = vadd.f32 %v1065, %v489
    %v1089 = vrot.slane %v1087, 3
    %v1090 = vrot.slane %v1087, 4
    %1091 = vrot.lane.b32.xlu0 %v1089, 64
    %v1092 = vpop.permute.xlu0 %1091
    %1093 = vrot.lane.b32.xlu0 %v1090, 64
    %v1094 = vpop.permute.xlu0 %1093
    %v1097 = vmul.f32 %v1084, %v1092
    %v1098 = vmul.f32 %v1086, %v1094
    %1101 = vrot.lane.b32.xlu0 %v1097, 64
    %v1102 = vpop.permute.xlu0 %1101
    %1103 = vrot.lane.b32.xlu0 %v1098, 64
    %v1104 = vpop.permute.xlu0 %1103
    %v1107 = vadd.f32 %v230, %v1102
    %v1108 = vadd.f32 %v235, %v1104
    %v1109 = vtanh.pop %v1107
    %v1110 = vtanh.pop %v1108
    %v1111 = vsub.f32 1.0, %v1084
    %v1112 = vsub.f32 1.0, %v1086
    %1115 = vrot.lane.b32.xlu0 %v1109, 96
    %v1116 = vpop.permute.xlu0 %1115
    %1117 = vrot.lane.b32.xlu0 %v1110, 96
    %v1118 = vpop.permute.xlu0 %1117
    %v1121 = vmul.f32 %v1111, %v1116
    %v1122 = vmul.f32 %v1112, %v1118
    %v1123 = vrot.slane %v828, 1
    %v1124 = vrot.slane %v829, 1
    %v1127 = vmul.f32 %v1084, %v1123
    %v1128 = vmul.f32 %v1086, %v1124
    %v1129 = vadd.f32 %v1121, %v1127
    %v1130 = vadd.f32 %v1122, %v1128
    %1133 = vrot.lane.b32.xlu0 %v1129, 96
    %v1134 = vpop.permute.xlu0 %1133
    %1135 = vrot.lane.b32.xlu0 %v1130, 96
    %v1136 = vpop.permute.xlu0 %1135
    %vm1139 = vcmask 259077
    %1140 = vst.msk [vmem:[#allocation3] sm:$0x20] %vm1139, %v1134
    %1141 = vst.msk [vmem:[#allocation3 + $0x8] sm:$0x20] %vm1139, %v1136
    %v1142 = vrot.slane %v978, 2
    %v1143 = vrot.slane %v979, 1
    %v1144 = vsel %vm543, %v1143, %v1142
    %1145 = vrot.lane.b32.xlu0 %v1144, 96
    %v1146 = vpop.permute.xlu0 %1145
    %v1147 = vsel %vm244, %v1146, 0
    %1149 = vmatprep.subr.mxu0 0.0
    %1150 = vmatpush1.msra.mxu0 0.0
    %1151 = vmatprep.subr.mxu0 0.0
    %1152 = vmatpush1.msra.mxu0 0.0
    %1153 = vmatprep.subr.mxu0 0.0
    %1154 = vmatpush1.msra.mxu0 0.0
    %1155 = vmatprep.subr.mxu0 0.0
    %1156 = vmatpush1.msra.mxu0 0.0
    %1157 = vmatprep.subr.mxu0 0.0
    %1158 = vmatpush1.msra.mxu0 0.0
    %1159 = vmatprep.subr.mxu0 0.0
    %1160 = vmatpush1.msra.mxu0 0.0
    %1161 = vmatprep.subr.mxu0 0.0
    %1162 = vmatpush1.msra.mxu0 0.0
    %1163 = vmatprep.subr.mxu0 0.0
    %1164 = vmatpush1.msra.mxu0 0.0
    %1165 = vmatprep.subr.mxu0 0.0
    %1166 = vmatpush1.msra.mxu0 0.0
    %1167 = vmatprep.subr.mxu0 0.0
    %1168 = vmatpush1.msra.mxu0 0.0
    %1169 = vmatprep.subr.mxu0 0.0
    %1170 = vmatpush1.msra.mxu0 0.0
    %1171 = vmatprep.subr.mxu0 0.0
    %1172 = vmatpush1.msra.mxu0 0.0
    %1173 = vmatprep.subr.mxu0 0.0
    %1174 = vmatpush1.msra.mxu0 %v154
    %1175 = vmatprep.subr.mxu0 0.0
    %1176 = vmatpush1.msra.mxu0 %v153
    %1177 = vmatprep.subr.mxu0 0.0
    %1178 = vmatpush1.msra.mxu0 %v152
    %1179 = vmatprep.subr.mxu0 0.0
    %1180 = vmatpush1.msra.mxu0 %v151
    %1181 = vmatprep.subr.mxu0 0.0
    %1182 = vmatpush2.msra.mxu0 0.0
    %1183 = vmatprep.subr.mxu0 0.0
    %1184 = vmatpush2.msra.mxu0 0.0
    %1185 = vmatprep.subr.mxu0 0.0
    %1186 = vmatpush2.msra.mxu0 0.0
    %1187 = vmatprep.subr.mxu0 0.0
    %1188 = vmatpush2.msra.mxu0 0.0
    %1189 = vmatprep.subr.mxu0 0.0
    %1190 = vmatpush2.msra.mxu0 0.0
    %1191 = vmatprep.subr.mxu0 0.0
    %1192 = vmatpush2.msra.mxu0 0.0
    %1193 = vmatprep.subr.mxu0 0.0
    %1194 = vmatpush2.msra.mxu0 0.0
    %1195 = vmatprep.subr.mxu0 0.0
    %1196 = vmatpush2.msra.mxu0 0.0
    %1197 = vmatprep.subr.mxu0 0.0
    %1198 = vmatpush2.msra.mxu0 0.0
    %1199 = vmatprep.subr.mxu0 0.0
    %1200 = vmatpush2.msra.mxu0 0.0
    %1201 = vmatprep.subr.mxu0 0.0
    %1202 = vmatpush2.msra.mxu0 0.0
    %1203 = vmatprep.subr.mxu0 0.0
    %1204 = vmatpush2.msra.mxu0 0.0
    %1205 = vmatprep.subr.mxu0 0.0
    %1206 = vmatpush2.msra.mxu0 0.0
    %1207 = vmatprep.subr.mxu0 0.0
    %1208 = vmatpush2.msra.mxu0 0.0
    %1209 = vmatprep.subr.mxu0 0.0
    %1210 = vmatpush2.msra.mxu0 0.0
    %1211 = vmatprep.subr.mxu0 0.0
    %1212 = vmatpush2.msra.mxu0 0.0
    %1213 = vmatprep.mubr.f32.mxu0 0.0
    %1214 = vmatmul.mubr.f32.gmra.mxu0 %v1147
    %v1215 = vpop.f32.mrf.mxu0
    %v1216 = vadd.f32 0.0, %v1215
    %v1217 = vpop.f32.mrf.mxu0
    %1218 = vdwg.mxu0
    %v1220 = vrot.slane %v1216, 5
    %v1221 = vrot.slane %v1216, 6
    %v1224 = vadd.f32 %v143, %v1220
    %v1225 = vadd.f32 %v148, %v1221
    %v1226 = vxor.u32 %v1224, 2147483648
    %v1227 = vxor.u32 %v1225, 2147483648
    %v1228 = vmul.f32 %v1226, 1.442695
    %v1229 = vpow.pop %v1228
    %v1230 = vmul.f32 %v1227, 1.442695
    %v1231 = vpow.pop %v1230
    %v1232 = vadd.f32 %v1229, 1.0
    %v1233 = vadd.f32 %v1231, 1.0
    %v1234 = vrcp.pop %v1232
    %v1235 = vmul.f32 1.0, %v1234
    %v1236 = vrcp.pop %v1233
    %v1237 = vmul.f32 1.0, %v1236
    %v1238 = vadd.f32 %v1216, %v342
    %v1240 = vrot.slane %v1238, 5
    %v1241 = vrot.slane %v1238, 6
    %1242 = vrot.lane.b32.xlu0 %v1240, 64
    %v1243 = vpop.permute.xlu0 %1242
    %1244 = vrot.lane.b32.xlu0 %v1241, 64
    %v1245 = vpop.permute.xlu0 %1244
    %v1248 = vmul.f32 %v1235, %v1243
    %v1249 = vmul.f32 %v1237, %v1245
    %1252 = vrot.lane.b32.xlu0 %v1248, 64
    %v1253 = vpop.permute.xlu0 %1252
    %1254 = vrot.lane.b32.xlu0 %v1249, 64
    %v1255 = vpop.permute.xlu0 %1254
    %v1258 = vadd.f32 %v143, %v1253
    %v1259 = vadd.f32 %v148, %v1255
    %v1260 = vtanh.pop %v1258
    %v1261 = vtanh.pop %v1259
    %v1262 = vsub.f32 1.0, %v1235
    %v1263 = vsub.f32 1.0, %v1237
    %1266 = vrot.lane.b32.xlu0 %v1260, 96
    %v1267 = vpop.permute.xlu0 %1266
    %1268 = vrot.lane.b32.xlu0 %v1261, 96
    %v1269 = vpop.permute.xlu0 %1268
    %v1272 = vmul.f32 %v1262, %v1267
    %v1273 = vmul.f32 %v1263, %v1269
    %v1274 = vrot.slane %v978, 7
    %v1275 = vrot.slane %v979, 7
    %v1278 = vmul.f32 %v1235, %v1274
    %v1279 = vmul.f32 %v1237, %v1275
    %v1280 = vadd.f32 %v1272, %v1278
    %v1281 = vadd.f32 %v1273, %v1279
    %1284 = vrot.lane.b32.xlu0 %v1280, 96
    %v1285 = vpop.permute.xlu0 %1284
    %1286 = vrot.lane.b32.xlu0 %v1281, 96
    %v1287 = vpop.permute.xlu0 %1286
    %vm1290 = vcmask 257027
    %1291 = vst.msk [vmem:[#allocation2] sm:$0x8] %vm1290, %v1285
    %1292 = vst.msk [vmem:[#allocation2 + $0x8] sm:$0x8] %vm1290, %v1287
    %v1293 = vrot.slane %v1129, 5
    %v1294 = vrot.slane %v1130, 4
    %v1295 = vsel %vm543, %v1294, %v1293
    %1296 = vrot.lane.b32.xlu0 %v1295, 96
    %v1297 = vpop.permute.xlu0 %1296
    %v1298 = vsel %vm244, %v1297, 0
    %1300 = vmatprep.subr.mxu0 0.0
    %1301 = vmatpush1.msra.mxu0 0.0
    %1302 = vmatprep.subr.mxu0 0.0
    %1303 = vmatpush1.msra.mxu0 0.0
    %1304 = vmatprep.subr.mxu0 0.0
    %1305 = vmatpush1.msra.mxu0 0.0
    %1306 = vmatprep.subr.mxu0 0.0
    %1307 = vmatpush1.msra.mxu0 0.0
    %1308 = vmatprep.subr.mxu0 0.0
    %1309 = vmatpush1.msra.mxu0 0.0
    %1310 = vmatprep.subr.mxu0 0.0
    %1311 = vmatpush1.msra.mxu0 0.0
    %1312 = vmatprep.subr.mxu0 0.0
    %1313 = vmatpush1.msra.mxu0 0.0
    %1314 = vmatprep.subr.mxu0 0.0
    %1315 = vmatpush1.msra.mxu0 0.0
    %1316 = vmatprep.subr.mxu0 0.0
    %1317 = vmatpush1.msra.mxu0 0.0
    %1318 = vmatprep.subr.mxu0 0.0
    %1319 = vmatpush1.msra.mxu0 0.0
    %1320 = vmatprep.subr.mxu0 0.0
    %1321 = vmatpush1.msra.mxu0 0.0
    %1322 = vmatprep.subr.mxu0 0.0
    %1323 = vmatpush1.msra.mxu0 0.0
    %1324 = vmatprep.subr.mxu0 0.0
    %1325 = vmatpush1.msra.mxu0 %v242
    %1326 = vmatprep.subr.mxu0 0.0
    %1327 = vmatpush1.msra.mxu0 %v241
    %1328 = vmatprep.subr.mxu0 0.0
    %1329 = vmatpush1.msra.mxu0 %v240
    %1330 = vmatprep.subr.mxu0 0.0
    %1331 = vmatpush1.msra.mxu0 %v239
    %1332 = vmatprep.subr.mxu0 0.0
    %1333 = vmatpush2.msra.mxu0 0.0
    %1334 = vmatprep.subr.mxu0 0.0
    %1335 = vmatpush2.msra.mxu0 0.0
    %1336 = vmatprep.subr.mxu0 0.0
    %1337 = vmatpush2.msra.mxu0 0.0
    %1338 = vmatprep.subr.mxu0 0.0
    %1339 = vmatpush2.msra.mxu0 0.0
    %1340 = vmatprep.subr.mxu0 0.0
    %1341 = vmatpush2.msra.mxu0 0.0
    %1342 = vmatprep.subr.mxu0 0.0
    %1343 = vmatpush2.msra.mxu0 0.0
    %1344 = vmatprep.subr.mxu0 0.0
    %1345 = vmatpush2.msra.mxu0 0.0
    %1346 = vmatprep.subr.mxu0 0.0
    %1347 = vmatpush2.msra.mxu0 0.0
    %1348 = vmatprep.subr.mxu0 0.0
    %1349 = vmatpush2.msra.mxu0 0.0
    %1350 = vmatprep.subr.mxu0 0.0
    %1351 = vmatpush2.msra.mxu0 0.0
    %1352 = vmatprep.subr.mxu0 0.0
    %1353 = vmatpush2.msra.mxu0 0.0
    %1354 = vmatprep.subr.mxu0 0.0
    %1355 = vmatpush2.msra.mxu0 0.0
    %1356 = vmatprep.subr.mxu0 0.0
    %1357 = vmatpush2.msra.mxu0 0.0
    %1358 = vmatprep.subr.mxu0 0.0
    %1359 = vmatpush2.msra.mxu0 0.0
    %1360 = vmatprep.subr.mxu0 0.0
    %1361 = vmatpush2.msra.mxu0 0.0
    %1362 = vmatprep.subr.mxu0 0.0
    %1363 = vmatpush2.msra.mxu0 0.0
    %1364 = vmatprep.mubr.f32.mxu0 0.0
    %1365 = vmatmul.mubr.f32.gmra.mxu0 %v1298
    %v1366 = vpop.f32.mrf.mxu0
    %v1367 = vadd.f32 0.0, %v1366
    %v1368 = vpop.f32.mrf.mxu0
    %1369 = vdwg.mxu0
    %v1371 = vrot.slane %v1367, 4
    %v1372 = vrot.slane %v1367, 5
    %v1375 = vadd.f32 %v230, %v1371
    %v1376 = vadd.f32 %v235, %v1372
    %v1377 = vxor.u32 %v1375, 2147483648
    %v1378 = vxor.u32 %v1376, 2147483648
    %v1379 = vmul.f32 %v1377, 1.442695
    %v1380 = vpow.pop %v1379
    %v1381 = vmul.f32 %v1378, 1.442695
    %v1382 = vpow.pop %v1381
    %v1383 = vadd.f32 %v1380, 1.0
    %v1384 = vadd.f32 %v1382, 1.0
    %v1385 = vrcp.pop %v1383
    %v1386 = vmul.f32 1.0, %v1385
    %v1387 = vrcp.pop %v1384
    %v1388 = vmul.f32 1.0, %v1387
    %v1389 = vadd.f32 %v1367, %v489
    %v1391 = vrot.slane %v1389, 4
    %v1392 = vrot.slane %v1389, 5
    %1393 = vrot.lane.b32.xlu0 %v1391, 64
    %v1394 = vpop.permute.xlu0 %1393
    %1395 = vrot.lane.b32.xlu0 %v1392, 64
    %v1396 = vpop.permute.xlu0 %1395
    %v1399 = vmul.f32 %v1386, %v1394
    %v1400 = vmul.f32 %v1388, %v1396
    %1403 = vrot.lane.b32.xlu0 %v1399, 64
    %v1404 = vpop.permute.xlu0 %1403
    %1405 = vrot.lane.b32.xlu0 %v1400, 64
    %v1406 = vpop.permute.xlu0 %1405
    %v1409 = vadd.f32 %v230, %v1404
    %v1410 = vadd.f32 %v235, %v1406
    %v1411 = vtanh.pop %v1409
    %v1412 = vtanh.pop %v1410
    %v1413 = vsub.f32 1.0, %v1386
    %v1414 = vsub.f32 1.0, %v1388
    %1417 = vrot.lane.b32.xlu0 %v1411, 96
    %v1418 = vpop.permute.xlu0 %1417
    %1419 = vrot.lane.b32.xlu0 %v1412, 96
    %v1420 = vpop.permute.xlu0 %1419
    %v1423 = vmul.f32 %v1413, %v1418
    %v1424 = vmul.f32 %v1414, %v1420
    %v1425 = vrot.slane %v1129, 1
    %v1426 = vrot.slane %v1130, 1
    %v1429 = vmul.f32 %v1386, %v1425
    %v1430 = vmul.f32 %v1388, %v1426
    %v1431 = vadd.f32 %v1423, %v1429
    %v1432 = vadd.f32 %v1424, %v1430
    %1435 = vrot.lane.b32.xlu0 %v1431, 96
    %v1436 = vpop.permute.xlu0 %1435
    %1437 = vrot.lane.b32.xlu0 %v1432, 96
    %v1438 = vpop.permute.xlu0 %1437
    %vm1441 = vcmask 258052
    %1442 = vst.msk [vmem:[#allocation3] sm:$0x10] %vm1441, %v1436
    %1443 = vst.msk [vmem:[#allocation3 + $0x8] sm:$0x10] %vm1441, %v1438
    %v1444 = vrot.slane %v1280, 3
    %v1445 = vrot.slane %v1281, 2
    %v1446 = vsel %vm543, %v1445, %v1444
    %1447 = vrot.lane.b32.xlu0 %v1446, 96
    %v1448 = vpop.permute.xlu0 %1447
    %v1449 = vsel %vm244, %v1448, 0
    %1451 = vmatprep.subr.mxu0 0.0
    %1452 = vmatpush1.msra.mxu0 0.0
    %1453 = vmatprep.subr.mxu0 0.0
    %1454 = vmatpush1.msra.mxu0 0.0
    %1455 = vmatprep.subr.mxu0 0.0
    %1456 = vmatpush1.msra.mxu0 0.0
    %1457 = vmatprep.subr.mxu0 0.0
    %1458 = vmatpush1.msra.mxu0 0.0
    %1459 = vmatprep.subr.mxu0 0.0
    %1460 = vmatpush1.msra.mxu0 0.0
    %1461 = vmatprep.subr.mxu0 0.0
    %1462 = vmatpush1.msra.mxu0 0.0
    %1463 = vmatprep.subr.mxu0 0.0
    %1464 = vmatpush1.msra.mxu0 0.0
    %1465 = vmatprep.subr.mxu0 0.0
    %1466 = vmatpush1.msra.mxu0 0.0
    %1467 = vmatprep.subr.mxu0 0.0
    %1468 = vmatpush1.msra.mxu0 0.0
    %1469 = vmatprep.subr.mxu0 0.0
    %1470 = vmatpush1.msra.mxu0 0.0
    %1471 = vmatprep.subr.mxu0 0.0
    %1472 = vmatpush1.msra.mxu0 0.0
    %1473 = vmatprep.subr.mxu0 0.0
    %1474 = vmatpush1.msra.mxu0 0.0
    %1475 = vmatprep.subr.mxu0 0.0
    %1476 = vmatpush1.msra.mxu0 %v154
    %1477 = vmatprep.subr.mxu0 0.0
    %1478 = vmatpush1.msra.mxu0 %v153
    %1479 = vmatprep.subr.mxu0 0.0
    %1480 = vmatpush1.msra.mxu0 %v152
    %1481 = vmatprep.subr.mxu0 0.0
    %1482 = vmatpush1.msra.mxu0 %v151
    %1483 = vmatprep.subr.mxu0 0.0
    %1484 = vmatpush2.msra.mxu0 0.0
    %1485 = vmatprep.subr.mxu0 0.0
    %1486 = vmatpush2.msra.mxu0 0.0
    %1487 = vmatprep.subr.mxu0 0.0
    %1488 = vmatpush2.msra.mxu0 0.0
    %1489 = vmatprep.subr.mxu0 0.0
    %1490 = vmatpush2.msra.mxu0 0.0
    %1491 = vmatprep.subr.mxu0 0.0
    %1492 = vmatpush2.msra.mxu0 0.0
    %1493 = vmatprep.subr.mxu0 0.0
    %1494 = vmatpush2.msra.mxu0 0.0
    %1495 = vmatprep.subr.mxu0 0.0
    %1496 = vmatpush2.msra.mxu0 0.0
    %1497 = vmatprep.subr.mxu0 0.0
    %1498 = vmatpush2.msra.mxu0 0.0
    %1499 = vmatprep.subr.mxu0 0.0
    %1500 = vmatpush2.msra.mxu0 0.0
    %1501 = vmatprep.subr.mxu0 0.0
    %1502 = vmatpush2.msra.mxu0 0.0
    %1503 = vmatprep.subr.mxu0 0.0
    %1504 = vmatpush2.msra.mxu0 0.0
    %1505 = vmatprep.subr.mxu0 0.0
    %1506 = vmatpush2.msra.mxu0 0.0
    %1507 = vmatprep.subr.mxu0 0.0
    %1508 = vmatpush2.msra.mxu0 0.0
    %1509 = vmatprep.subr.mxu0 0.0
    %1510 = vmatpush2.msra.mxu0 0.0
    %1511 = vmatprep.subr.mxu0 0.0
    %1512 = vmatpush2.msra.mxu0 0.0
    %1513 = vmatprep.subr.mxu0 0.0
    %1514 = vmatpush2.msra.mxu0 0.0
    %1515 = vmatprep.mubr.f32.mxu0 0.0
    %1516 = vmatmul.mubr.f32.gmra.mxu0 %v1449
    %v1517 = vpop.f32.mrf.mxu0
    %v1518 = vadd.f32 0.0, %v1517
    %v1519 = vpop.f32.mrf.mxu0
    %1520 = vdwg.mxu0
    %v1522 = vrot.slane %v1518, 4
    %v1523 = vrot.slane %v1518, 5
    %v1526 = vadd.f32 %v143, %v1522
    %v1527 = vadd.f32 %v148, %v1523
    %v1528 = vxor.u32 %v1526, 2147483648
    %v1529 = vxor.u32 %v1527, 2147483648
    %v1530 = vmul.f32 %v1528, 1.442695
    %v1531 = vpow.pop %v1530
    %v1532 = vmul.f32 %v1529, 1.442695
    %v1533 = vpow.pop %v1532
    %v1534 = vadd.f32 %v1531, 1.0
    %v1535 = vadd.f32 %v1533, 1.0
    %v1536 = vrcp.pop %v1534
    %v1537 = vmul.f32 1.0, %v1536
    %v1538 = vrcp.pop %v1535
    %v1539 = vmul.f32 1.0, %v1538
    %v1540 = vadd.f32 %v1518, %v342
    %v1542 = vrot.slane %v1540, 4
    %v1543 = vrot.slane %v1540, 5
    %1544 = vrot.lane.b32.xlu0 %v1542, 64
    %v1545 = vpop.permute.xlu0 %1544
    %1546 = vrot.lane.b32.xlu0 %v1543, 64
    %v1547 = vpop.permute.xlu0 %1546
    %v1550 = vmul.f32 %v1537, %v1545
    %v1551 = vmul.f32 %v1539, %v1547
    %1554 = vrot.lane.b32.xlu0 %v1550, 64
    %v1555 = vpop.permute.xlu0 %1554
    %1556 = vrot.lane.b32.xlu0 %v1551, 64
    %v1557 = vpop.permute.xlu0 %1556
    %v1560 = vadd.f32 %v143, %v1555
    %v1561 = vadd.f32 %v148, %v1557
    %v1562 = vtanh.pop %v1560
    %v1563 = vtanh.pop %v1561
    %v1564 = vsub.f32 1.0, %v1537
    %v1565 = vsub.f32 1.0, %v1539
    %1568 = vrot.lane.b32.xlu0 %v1562, 96
    %v1569 = vpop.permute.xlu0 %1568
    %1570 = vrot.lane.b32.xlu0 %v1563, 96
    %v1571 = vpop.permute.xlu0 %1570
    %v1574 = vmul.f32 %v1564, %v1569
    %v1575 = vmul.f32 %v1565, %v1571
    %v1576 = vrot.slane %v1280, 7
    %v1577 = vrot.slane %v1281, 7
    %v1580 = vmul.f32 %v1537, %v1576
    %v1581 = vmul.f32 %v1539, %v1577
    %v1582 = vadd.f32 %v1574, %v1580
    %v1583 = vadd.f32 %v1575, %v1581
    %1586 = vrot.lane.b32.xlu0 %v1582, 96
    %v1587 = vpop.permute.xlu0 %1586
    %1588 = vrot.lane.b32.xlu0 %v1583, 96
    %v1589 = vpop.permute.xlu0 %1588
    %1592 = vst.msk [vmem:[#allocation2] sm:$0x10] %vm1441, %v1587
    %1593 = vst.msk [vmem:[#allocation2 + $0x8] sm:$0x10] %vm1441, %v1589
    %v1594 = vrot.slane %v1431, 4
    %v1595 = vrot.slane %v1432, 3
    %v1596 = vsel %vm543, %v1595, %v1594
    %1597 = vrot.lane.b32.xlu0 %v1596, 96
    %v1598 = vpop.permute.xlu0 %1597
    %v1599 = vsel %vm244, %v1598, 0
    %1601 = vmatprep.subr.mxu0 0.0
    %1602 = vmatpush1.msra.mxu0 0.0
    %1603 = vmatprep.subr.mxu0 0.0
    %1604 = vmatpush1.msra.mxu0 0.0
    %1605 = vmatprep.subr.mxu0 0.0
    %1606 = vmatpush1.msra.mxu0 0.0
    %1607 = vmatprep.subr.mxu0 0.0
    %1608 = vmatpush1.msra.mxu0 0.0
    %1609 = vmatprep.subr.mxu0 0.0
    %1610 = vmatpush1.msra.mxu0 0.0
    %1611 = vmatprep.subr.mxu0 0.0
    %1612 = vmatpush1.msra.mxu0 0.0
    %1613 = vmatprep.subr.mxu0 0.0
    %1614 = vmatpush1.msra.mxu0 0.0
    %1615 = vmatprep.subr.mxu0 0.0
    %1616 = vmatpush1.msra.mxu0 0.0
    %1617 = vmatprep.subr.mxu0 0.0
    %1618 = vmatpush1.msra.mxu0 0.0
    %1619 = vmatprep.subr.mxu0 0.0
    %1620 = vmatpush1.msra.mxu0 0.0
    %1621 = vmatprep.subr.mxu0 0.0
    %1622 = vmatpush1.msra.mxu0 0.0
    %1623 = vmatprep.subr.mxu0 0.0
    %1624 = vmatpush1.msra.mxu0 0.0
    %1625 = vmatprep.subr.mxu0 0.0
    %1626 = vmatpush1.msra.mxu0 %v242
    %1627 = vmatprep.subr.mxu0 0.0
    %1628 = vmatpush1.msra.mxu0 %v241
    %1629 = vmatprep.subr.mxu0 0.0
    %1630 = vmatpush1.msra.mxu0 %v240
    %1631 = vmatprep.subr.mxu0 0.0
    %1632 = vmatpush1.msra.mxu0 %v239
    %1633 = vmatprep.subr.mxu0 0.0
    %1634 = vmatpush2.msra.mxu0 0.0
    %1635 = vmatprep.subr.mxu0 0.0
    %1636 = vmatpush2.msra.mxu0 0.0
    %1637 = vmatprep.subr.mxu0 0.0
    %1638 = vmatpush2.msra.mxu0 0.0
    %1639 = vmatprep.subr.mxu0 0.0
    %1640 = vmatpush2.msra.mxu0 0.0
    %1641 = vmatprep.subr.mxu0 0.0
    %1642 = vmatpush2.msra.mxu0 0.0
    %1643 = vmatprep.subr.mxu0 0.0
    %1644 = vmatpush2.msra.mxu0 0.0
    %1645 = vmatprep.subr.mxu0 0.0
    %1646 = vmatpush2.msra.mxu0 0.0
    %1647 = vmatprep.subr.mxu0 0.0
    %1648 = vmatpush2.msra.mxu0 0.0
    %1649 = vmatprep.subr.mxu0 0.0
    %1650 = vmatpush2.msra.mxu0 0.0
    %1651 = vmatprep.subr.mxu0 0.0
    %1652 = vmatpush2.msra.mxu0 0.0
    %1653 = vmatprep.subr.mxu0 0.0
    %1654 = vmatpush2.msra.mxu0 0.0
    %1655 = vmatprep.subr.mxu0 0.0
    %1656 = vmatpush2.msra.mxu0 0.0
    %1657 = vmatprep.subr.mxu0 0.0
    %1658 = vmatpush2.msra.mxu0 0.0
    %1659 = vmatprep.subr.mxu0 0.0
    %1660 = vmatpush2.msra.mxu0 0.0
    %1661 = vmatprep.subr.mxu0 0.0
    %1662 = vmatpush2.msra.mxu0 0.0
    %1663 = vmatprep.subr.mxu0 0.0
    %1664 = vmatpush2.msra.mxu0 0.0
    %1665 = vmatprep.mubr.f32.mxu0 0.0
    %1666 = vmatmul.mubr.f32.gmra.mxu0 %v1599
    %v1667 = vpop.f32.mrf.mxu0
    %v1668 = vadd.f32 0.0, %v1667
    %v1669 = vpop.f32.mrf.mxu0
    %1670 = vdwg.mxu0
    %v1672 = vrot.slane %v1668, 5
    %v1673 = vrot.slane %v1668, 6
    %v1676 = vadd.f32 %v230, %v1672
    %v1677 = vadd.f32 %v235, %v1673
    %v1678 = vxor.u32 %v1676, 2147483648
    %v1679 = vxor.u32 %v1677, 2147483648
    %v1680 = vmul.f32 %v1678, 1.442695
    %v1681 = vpow.pop %v1680
    %v1682 = vmul.f32 %v1679, 1.442695
    %v1683 = vpow.pop %v1682
    %v1684 = vadd.f32 %v1681, 1.0
    %v1685 = vadd.f32 %v1683, 1.0
    %v1686 = vrcp.pop %v1684
    %v1687 = vmul.f32 1.0, %v1686
    %v1688 = vrcp.pop %v1685
    %v1689 = vmul.f32 1.0, %v1688
    %v1690 = vadd.f32 %v1668, %v489
    %v1692 = vrot.slane %v1690, 5
    %v1693 = vrot.slane %v1690, 6
    %1694 = vrot.lane.b32.xlu0 %v1692, 64
    %v1695 = vpop.permute.xlu0 %1694
    %1696 = vrot.lane.b32.xlu0 %v1693, 64
    %v1697 = vpop.permute.xlu0 %1696
    %v1700 = vmul.f32 %v1687, %v1695
    %v1701 = vmul.f32 %v1689, %v1697
    %1704 = vrot.lane.b32.xlu0 %v1700, 64
    %v1705 = vpop.permute.xlu0 %1704
    %1706 = vrot.lane.b32.xlu0 %v1701, 64
    %v1707 = vpop.permute.xlu0 %1706
    %v1710 = vadd.f32 %v230, %v1705
    %v1711 = vadd.f32 %v235, %v1707
    %v1712 = vtanh.pop %v1710
    %v1713 = vtanh.pop %v1711
    %v1714 = vsub.f32 1.0, %v1687
    %v1715 = vsub.f32 1.0, %v1689
    %1718 = vrot.lane.b32.xlu0 %v1712, 96
    %v1719 = vpop.permute.xlu0 %1718
    %1720 = vrot.lane.b32.xlu0 %v1713, 96
    %v1721 = vpop.permute.xlu0 %1720
    %v1724 = vmul.f32 %v1714, %v1719
    %v1725 = vmul.f32 %v1715, %v1721
    %v1726 = vrot.slane %v1431, 1
    %v1727 = vrot.slane %v1432, 1
    %v1730 = vmul.f32 %v1687, %v1726
    %v1731 = vmul.f32 %v1689, %v1727
    %v1732 = vadd.f32 %v1724, %v1730
    %v1733 = vadd.f32 %v1725, %v1731
    %1736 = vrot.lane.b32.xlu0 %v1732, 96
    %v1737 = vpop.permute.xlu0 %1736
    %1738 = vrot.lane.b32.xlu0 %v1733, 96
    %v1739 = vpop.permute.xlu0 %1738
    %1742 = vst.msk [vmem:[#allocation3] sm:$0x8] %vm1290, %v1737
    %1743 = vst.msk [vmem:[#allocation3 + $0x8] sm:$0x8] %vm1290, %v1739
    %v1744 = vrot.slane %v1582, 4
    %v1745 = vrot.slane %v1583, 3
    %v1746 = vsel %vm543, %v1745, %v1744
    %1747 = vrot.lane.b32.xlu0 %v1746, 96
    %v1748 = vpop.permute.xlu0 %1747
    %v1749 = vsel %vm244, %v1748, 0
    %1751 = vmatprep.subr.mxu0 0.0
    %1752 = vmatpush1.msra.mxu0 0.0
    %1753 = vmatprep.subr.mxu0 0.0
    %1754 = vmatpush1.msra.mxu0 0.0
    %1755 = vmatprep.subr.mxu0 0.0
    %1756 = vmatpush1.msra.mxu0 0.0
    %1757 = vmatprep.subr.mxu0 0.0
    %1758 = vmatpush1.msra.mxu0 0.0
    %1759 = vmatprep.subr.mxu0 0.0
    %1760 = vmatpush1.msra.mxu0 0.0
    %1761 = vmatprep.subr.mxu0 0.0
    %1762 = vmatpush1.msra.mxu0 0.0
    %1763 = vmatprep.subr.mxu0 0.0
    %1764 = vmatpush1.msra.mxu0 0.0
    %1765 = vmatprep.subr.mxu0 0.0
    %1766 = vmatpush1.msra.mxu0 0.0
    %1767 = vmatprep.subr.mxu0 0.0
    %1768 = vmatpush1.msra.mxu0 0.0
    %1769 = vmatprep.subr.mxu0 0.0
    %1770 = vmatpush1.msra.mxu0 0.0
    %1771 = vmatprep.subr.mxu0 0.0
    %1772 = vmatpush1.msra.mxu0 0.0
    %1773 = vmatprep.subr.mxu0 0.0
    %1774 = vmatpush1.msra.mxu0 0.0
    %1775 = vmatprep.subr.mxu0 0.0
    %1776 = vmatpush1.msra.mxu0 %v154
    %1777 = vmatprep.subr.mxu0 0.0
    %1778 = vmatpush1.msra.mxu0 %v153
    %1779 = vmatprep.subr.mxu0 0.0
    %1780 = vmatpush1.msra.mxu0 %v152
    %1781 = vmatprep.subr.mxu0 0.0
    %1782 = vmatpush1.msra.mxu0 %v151
    %1783 = vmatprep.subr.mxu0 0.0
    %1784 = vmatpush2.msra.mxu0 0.0
    %1785 = vmatprep.subr.mxu0 0.0
    %1786 = vmatpush2.msra.mxu0 0.0
    %1787 = vmatprep.subr.mxu0 0.0
    %1788 = vmatpush2.msra.mxu0 0.0
    %1789 = vmatprep.subr.mxu0 0.0
    %1790 = vmatpush2.msra.mxu0 0.0
    %1791 = vmatprep.subr.mxu0 0.0
    %1792 = vmatpush2.msra.mxu0 0.0
    %1793 = vmatprep.subr.mxu0 0.0
    %1794 = vmatpush2.msra.mxu0 0.0
    %1795 = vmatprep.subr.mxu0 0.0
    %1796 = vmatpush2.msra.mxu0 0.0
    %1797 = vmatprep.subr.mxu0 0.0
    %1798 = vmatpush2.msra.mxu0 0.0
    %1799 = vmatprep.subr.mxu0 0.0
    %1800 = vmatpush2.msra.mxu0 0.0
    %1801 = vmatprep.subr.mxu0 0.0
    %1802 = vmatpush2.msra.mxu0 0.0
    %1803 = vmatprep.subr.mxu0 0.0
    %1804 = vmatpush2.msra.mxu0 0.0
    %1805 = vmatprep.subr.mxu0 0.0
    %1806 = vmatpush2.msra.mxu0 0.0
    %1807 = vmatprep.subr.mxu0 0.0
    %1808 = vmatpush2.msra.mxu0 0.0
    %1809 = vmatprep.subr.mxu0 0.0
    %1810 = vmatpush2.msra.mxu0 0.0
    %1811 = vmatprep.subr.mxu0 0.0
    %1812 = vmatpush2.msra.mxu0 0.0
    %1813 = vmatprep.subr.mxu0 0.0
    %1814 = vmatpush2.msra.mxu0 0.0
    %1815 = vmatprep.mubr.f32.mxu0 0.0
    %1816 = vmatmul.mubr.f32.gmra.mxu0 %v1749
    %v1817 = vpop.f32.mrf.mxu0
    %v1818 = vadd.f32 0.0, %v1817
    %v1819 = vpop.f32.mrf.mxu0
    %1820 = vdwg.mxu0
    %v1822 = vrot.slane %v1818, 3
    %v1823 = vrot.slane %v1818, 4
    %v1826 = vadd.f32 %v143, %v1822
    %v1827 = vadd.f32 %v148, %v1823
    %v1828 = vxor.u32 %v1826, 2147483648
    %v1829 = vxor.u32 %v1827, 2147483648
    %v1830 = vmul.f32 %v1828, 1.442695
    %v1831 = vpow.pop %v1830
    %v1832 = vmul.f32 %v1829, 1.442695
    %v1833 = vpow.pop %v1832
    %v1834 = vadd.f32 %v1831, 1.0
    %v1835 = vadd.f32 %v1833, 1.0
    %v1836 = vrcp.pop %v1834
    %v1837 = vmul.f32 1.0, %v1836
    %v1838 = vrcp.pop %v1835
    %v1839 = vmul.f32 1.0, %v1838
    %v1840 = vadd.f32 %v1818, %v342
    %v1842 = vrot.slane %v1840, 3
    %v1843 = vrot.slane %v1840, 4
    %1844 = vrot.lane.b32.xlu0 %v1842, 64
    %v1845 = vpop.permute.xlu0 %1844
    %1846 = vrot.lane.b32.xlu0 %v1843, 64
    %v1847 = vpop.permute.xlu0 %1846
    %v1850 = vmul.f32 %v1837, %v1845
    %v1851 = vmul.f32 %v1839, %v1847
    %1854 = vrot.lane.b32.xlu0 %v1850, 64
    %v1855 = vpop.permute.xlu0 %1854
    %1856 = vrot.lane.b32.xlu0 %v1851, 64
    %v1857 = vpop.permute.xlu0 %1856
    %v1860 = vadd.f32 %v143, %v1855
    %v1861 = vadd.f32 %v148, %v1857
    %v1862 = vtanh.pop %v1860
    %v1863 = vtanh.pop %v1861
    %v1864 = vsub.f32 1.0, %v1837
    %v1865 = vsub.f32 1.0, %v1839
    %1868 = vrot.lane.b32.xlu0 %v1862, 96
    %v1869 = vpop.permute.xlu0 %1868
    %1870 = vrot.lane.b32.xlu0 %v1863, 96
    %v1871 = vpop.permute.xlu0 %1870
    %v1874 = vmul.f32 %v1864, %v1869
    %v1875 = vmul.f32 %v1865, %v1871
    %v1876 = vrot.slane %v1582, 7
    %v1877 = vrot.slane %v1583, 7
    %v1880 = vmul.f32 %v1837, %v1876
    %v1881 = vmul.f32 %v1839, %v1877
    %v1882 = vadd.f32 %v1874, %v1880
    %v1883 = vadd.f32 %v1875, %v1881
    %1886 = vrot.lane.b32.xlu0 %v1882, 96
    %v1887 = vpop.permute.xlu0 %1886
    %1888 = vrot.lane.b32.xlu0 %v1883, 96
    %v1889 = vpop.permute.xlu0 %1888
    %1892 = vst.msk [vmem:[#allocation2] sm:$0x20] %vm1139, %v1887
    %1893 = vst.msk [vmem:[#allocation2 + $0x8] sm:$0x20] %vm1139, %v1889
    %v1894 = vrot.slane %v1732, 3
    %v1895 = vrot.slane %v1733, 2
    %v1896 = vsel %vm543, %v1895, %v1894
    %1897 = vrot.lane.b32.xlu0 %v1896, 96
    %v1898 = vpop.permute.xlu0 %1897
    %v1899 = vsel %vm244, %v1898, 0
    %1901 = vmatprep.subr.mxu0 0.0
    %1902 = vmatpush1.msra.mxu0 0.0
    %1903 = vmatprep.subr.mxu0 0.0
    %1904 = vmatpush1.msra.mxu0 0.0
    %1905 = vmatprep.subr.mxu0 0.0
    %1906 = vmatpush1.msra.mxu0 0.0
    %1907 = vmatprep.subr.mxu0 0.0
    %1908 = vmatpush1.msra.mxu0 0.0
    %1909 = vmatprep.subr.mxu0 0.0
    %1910 = vmatpush1.msra.mxu0 0.0
    %1911 = vmatprep.subr.mxu0 0.0
    %1912 = vmatpush1.msra.mxu0 0.0
    %1913 = vmatprep.subr.mxu0 0.0
    %1914 = vmatpush1.msra.mxu0 0.0
    %1915 = vmatprep.subr.mxu0 0.0
    %1916 = vmatpush1.msra.mxu0 0.0
    %1917 = vmatprep.subr.mxu0 0.0
    %1918 = vmatpush1.msra.mxu0 0.0
    %1919 = vmatprep.subr.mxu0 0.0
    %1920 = vmatpush1.msra.mxu0 0.0
    %1921 = vmatprep.subr.mxu0 0.0
    %1922 = vmatpush1.msra.mxu0 0.0
    %1923 = vmatprep.subr.mxu0 0.0
    %1924 = vmatpush1.msra.mxu0 0.0
    %1925 = vmatprep.subr.mxu0 0.0
    %1926 = vmatpush1.msra.mxu0 %v242
    %1927 = vmatprep.subr.mxu0 0.0
    %1928 = vmatpush1.msra.mxu0 %v241
    %1929 = vmatprep.subr.mxu0 0.0
    %1930 = vmatpush1.msra.mxu0 %v240
    %1931 = vmatprep.subr.mxu0 0.0
    %1932 = vmatpush1.msra.mxu0 %v239
    %1933 = vmatprep.subr.mxu0 0.0
    %1934 = vmatpush2.msra.mxu0 0.0
    %1935 = vmatprep.subr.mxu0 0.0
    %1936 = vmatpush2.msra.mxu0 0.0
    %1937 = vmatprep.subr.mxu0 0.0
    %1938 = vmatpush2.msra.mxu0 0.0
    %1939 = vmatprep.subr.mxu0 0.0
    %1940 = vmatpush2.msra.mxu0 0.0
    %1941 = vmatprep.subr.mxu0 0.0
    %1942 = vmatpush2.msra.mxu0 0.0
    %1943 = vmatprep.subr.mxu0 0.0
    %1944 = vmatpush2.msra.mxu0 0.0
    %1945 = vmatprep.subr.mxu0 0.0
    %1946 = vmatpush2.msra.mxu0 0.0
    %1947 = vmatprep.subr.mxu0 0.0
    %1948 = vmatpush2.msra.mxu0 0.0
    %1949 = vmatprep.subr.mxu0 0.0
    %1950 = vmatpush2.msra.mxu0 0.0
    %1951 = vmatprep.subr.mxu0 0.0
    %1952 = vmatpush2.msra.mxu0 0.0
    %1953 = vmatprep.subr.mxu0 0.0
    %1954 = vmatpush2.msra.mxu0 0.0
    %1955 = vmatprep.subr.mxu0 0.0
    %1956 = vmatpush2.msra.mxu0 0.0
    %1957 = vmatprep.subr.mxu0 0.0
    %1958 = vmatpush2.msra.mxu0 0.0
    %1959 = vmatprep.subr.mxu0 0.0
    %1960 = vmatpush2.msra.mxu0 0.0
    %1961 = vmatprep.subr.mxu0 0.0
    %1962 = vmatpush2.msra.mxu0 0.0
    %1963 = vmatprep.subr.mxu0 0.0
    %1964 = vmatpush2.msra.mxu0 0.0
    %1965 = vmatprep.mubr.f32.mxu0 0.0
    %1966 = vmatmul.mubr.f32.gmra.mxu0 %v1899
    %v1967 = vpop.f32.mrf.mxu0
    %v1968 = vadd.f32 0.0, %v1967
    %v1969 = vpop.f32.mrf.mxu0
    %1970 = vdwg.mxu0
    %v1972 = vrot.slane %v1968, 6
    %v1973 = vrot.slane %v1968, 7
    %v1976 = vadd.f32 %v230, %v1972
    %v1977 = vadd.f32 %v235, %v1973
    %v1978 = vxor.u32 %v1976, 2147483648
    %v1979 = vxor.u32 %v1977, 2147483648
    %v1980 = vmul.f32 %v1978, 1.442695
    %v1981 = vpow.pop %v1980
    %v1982 = vmul.f32 %v1979, 1.442695
    %v1983 = vpow.pop %v1982
    %v1984 = vadd.f32 %v1981, 1.0
    %v1985 = vadd.f32 %v1983, 1.0
    %v1986 = vrcp.pop %v1984
    %v1987 = vmul.f32 1.0, %v1986
    %v1988 = vrcp.pop %v1985
    %v1989 = vmul.f32 1.0, %v1988
    %v1990 = vadd.f32 %v1968, %v489
    %v1992 = vrot.slane %v1990, 6
    %v1993 = vrot.slane %v1990, 7
    %1994 = vrot.lane.b32.xlu0 %v1992, 64
    %v1995 = vpop.permute.xlu0 %1994
    %1996 = vrot.lane.b32.xlu0 %v1993, 64
    %v1997 = vpop.permute.xlu0 %1996
    %v2000 = vmul.f32 %v1987, %v1995
    %v2001 = vmul.f32 %v1989, %v1997
    %2004 = vrot.lane.b32.xlu0 %v2000, 64
    %v2005 = vpop.permute.xlu0 %2004
    %2006 = vrot.lane.b32.xlu0 %v2001, 64
    %v2007 = vpop.permute.xlu0 %2006
    %v2010 = vadd.f32 %v230, %v2005
    %v2011 = vadd.f32 %v235, %v2007
    %v2012 = vtanh.pop %v2010
    %v2013 = vtanh.pop %v2011
    %v2014 = vsub.f32 1.0, %v1987
    %v2015 = vsub.f32 1.0, %v1989
    %2018 = vrot.lane.b32.xlu0 %v2012, 96
    %v2019 = vpop.permute.xlu0 %2018
    %2020 = vrot.lane.b32.xlu0 %v2013, 96
    %v2021 = vpop.permute.xlu0 %2020
    %v2024 = vmul.f32 %v2014, %v2019
    %v2025 = vmul.f32 %v2015, %v2021
    %v2026 = vrot.slane %v1732, 1
    %v2027 = vrot.slane %v1733, 1
    %v2030 = vmul.f32 %v1987, %v2026
    %v2031 = vmul.f32 %v1989, %v2027
    %v2032 = vadd.f32 %v2024, %v2030
    %v2033 = vadd.f32 %v2025, %v2031
    %2036 = vrot.lane.b32.xlu0 %v2032, 96
    %v2037 = vpop.permute.xlu0 %2036
    %2038 = vrot.lane.b32.xlu0 %v2033, 96
    %v2039 = vpop.permute.xlu0 %2038
    %2042 = vst.msk [vmem:[#allocation3] sm:$0x4] %vm988, %v2037
    %2043 = vst.msk [vmem:[#allocation3 + $0x8] sm:$0x4] %vm988, %v2039
    %v2044 = vrot.slane %v1882, 5
    %v2045 = vrot.slane %v1883, 4
    %v2046 = vsel %vm543, %v2045, %v2044
    %2047 = vrot.lane.b32.xlu0 %v2046, 96
    %v2048 = vpop.permute.xlu0 %2047
    %v2049 = vsel %vm244, %v2048, 0
    %2051 = vmatprep.subr.mxu0 0.0
    %2052 = vmatpush1.msra.mxu0 0.0
    %2053 = vmatprep.subr.mxu0 0.0
    %2054 = vmatpush1.msra.mxu0 0.0
    %2055 = vmatprep.subr.mxu0 0.0
    %2056 = vmatpush1.msra.mxu0 0.0
    %2057 = vmatprep.subr.mxu0 0.0
    %2058 = vmatpush1.msra.mxu0 0.0
    %2059 = vmatprep.subr.mxu0 0.0
    %2060 = vmatpush1.msra.mxu0 0.0
    %2061 = vmatprep.subr.mxu0 0.0
    %2062 = vmatpush1.msra.mxu0 0.0
    %2063 = vmatprep.subr.mxu0 0.0
    %2064 = vmatpush1.msra.mxu0 0.0
    %2065 = vmatprep.subr.mxu0 0.0
    %2066 = vmatpush1.msra.mxu0 0.0
    %2067 = vmatprep.subr.mxu0 0.0
    %2068 = vmatpush1.msra.mxu0 0.0
    %2069 = vmatprep.subr.mxu0 0.0
    %2070 = vmatpush1.msra.mxu0 0.0
    %2071 = vmatprep.subr.mxu0 0.0
    %2072 = vmatpush1.msra.mxu0 0.0
    %2073 = vmatprep.subr.mxu0 0.0
    %2074 = vmatpush1.msra.mxu0 0.0
    %2075 = vmatprep.subr.mxu0 0.0
    %2076 = vmatpush1.msra.mxu0 %v154
    %2077 = vmatprep.subr.mxu0 0.0
    %2078 = vmatpush1.msra.mxu0 %v153
    %2079 = vmatprep.subr.mxu0 0.0
    %2080 = vmatpush1.msra.mxu0 %v152
    %2081 = vmatprep.subr.mxu0 0.0
    %2082 = vmatpush1.msra.mxu0 %v151
    %2083 = vmatprep.subr.mxu0 0.0
    %2084 = vmatpush2.msra.mxu0 0.0
    %2085 = vmatprep.subr.mxu0 0.0
    %2086 = vmatpush2.msra.mxu0 0.0
    %2087 = vmatprep.subr.mxu0 0.0
    %2088 = vmatpush2.msra.mxu0 0.0
    %2089 = vmatprep.subr.mxu0 0.0
    %2090 = vmatpush2.msra.mxu0 0.0
    %2091 = vmatprep.subr.mxu0 0.0
    %2092 = vmatpush2.msra.mxu0 0.0
    %2093 = vmatprep.subr.mxu0 0.0
    %2094 = vmatpush2.msra.mxu0 0.0
    %2095 = vmatprep.subr.mxu0 0.0
    %2096 = vmatpush2.msra.mxu0 0.0
    %2097 = vmatprep.subr.mxu0 0.0
    %2098 = vmatpush2.msra.mxu0 0.0
    %2099 = vmatprep.subr.mxu0 0.0
    %2100 = vmatpush2.msra.mxu0 0.0
    %2101 = vmatprep.subr.mxu0 0.0
    %2102 = vmatpush2.msra.mxu0 0.0
    %2103 = vmatprep.subr.mxu0 0.0
    %2104 = vmatpush2.msra.mxu0 0.0
    %2105 = vmatprep.subr.mxu0 0.0
    %2106 = vmatpush2.msra.mxu0 0.0
    %2107 = vmatprep.subr.mxu0 0.0
    %2108 = vmatpush2.msra.mxu0 0.0
    %2109 = vmatprep.subr.mxu0 0.0
    %2110 = vmatpush2.msra.mxu0 0.0
    %2111 = vmatprep.subr.mxu0 0.0
    %2112 = vmatpush2.msra.mxu0 0.0
    %2113 = vmatprep.subr.mxu0 0.0
    %2114 = vmatpush2.msra.mxu0 0.0
    %2115 = vmatprep.mubr.f32.mxu0 0.0
    %2116 = vmatmul.mubr.f32.gmra.mxu0 %v2049
    %v2117 = vpop.f32.mrf.mxu0
    %v2118 = vadd.f32 0.0, %v2117
    %v2119 = vpop.f32.mrf.mxu0
    %2120 = vdwg.mxu0
    %v2122 = vrot.slane %v2118, 2
    %v2123 = vrot.slane %v2118, 3
    %v2126 = vadd.f32 %v143, %v2122
    %v2127 = vadd.f32 %v148, %v2123
    %v2128 = vxor.u32 %v2126, 2147483648
    %v2129 = vxor.u32 %v2127, 2147483648
    %v2130 = vmul.f32 %v2128, 1.442695
    %v2131 = vpow.pop %v2130
    %v2132 = vmul.f32 %v2129, 1.442695
    %v2133 = vpow.pop %v2132
    %v2134 = vadd.f32 %v2131, 1.0
    %v2135 = vadd.f32 %v2133, 1.0
    %v2136 = vrcp.pop %v2134
    %v2137 = vmul.f32 1.0, %v2136
    %v2138 = vrcp.pop %v2135
    %v2139 = vmul.f32 1.0, %v2138
    %v2140 = vadd.f32 %v2118, %v342
    %v2142 = vrot.slane %v2140, 2
    %v2143 = vrot.slane %v2140, 3
    %2144 = vrot.lane.b32.xlu0 %v2142, 64
    %v2145 = vpop.permute.xlu0 %2144
    %2146 = vrot.lane.b32.xlu0 %v2143, 64
    %v2147 = vpop.permute.xlu0 %2146
    %v2150 = vmul.f32 %v2137, %v2145
    %v2151 = vmul.f32 %v2139, %v2147
    %2154 = vrot.lane.b32.xlu0 %v2150, 64
    %v2155 = vpop.permute.xlu0 %2154
    %2156 = vrot.lane.b32.xlu0 %v2151, 64
    %v2157 = vpop.permute.xlu0 %2156
    %v2160 = vadd.f32 %v143, %v2155
    %v2161 = vadd.f32 %v148, %v2157
    %v2162 = vtanh.pop %v2160
    %v2163 = vtanh.pop %v2161
    %v2164 = vsub.f32 1.0, %v2137
    %v2165 = vsub.f32 1.0, %v2139
    %2168 = vrot.lane.b32.xlu0 %v2162, 96
    %v2169 = vpop.permute.xlu0 %2168
    %2170 = vrot.lane.b32.xlu0 %v2163, 96
    %v2171 = vpop.permute.xlu0 %2170
    %v2174 = vmul.f32 %v2164, %v2169
    %v2175 = vmul.f32 %v2165, %v2171
    %v2176 = vrot.slane %v1882, 7
    %v2177 = vrot.slane %v1883, 7
    %v2180 = vmul.f32 %v2137, %v2176
    %v2181 = vmul.f32 %v2139, %v2177
    %v2182 = vadd.f32 %v2174, %v2180
    %v2183 = vadd.f32 %v2175, %v2181
    %2186 = vrot.lane.b32.xlu0 %v2182, 96
    %v2187 = vpop.permute.xlu0 %2186
    %2188 = vrot.lane.b32.xlu0 %v2183, 96
    %v2189 = vpop.permute.xlu0 %2188
    %2192 = vst.msk [vmem:[#allocation2] sm:$0x40] %vm838, %v2187
    %2193 = vst.msk [vmem:[#allocation2 + $0x8] sm:$0x40] %vm838, %v2189
    %v2194 = vrot.slane %v2032, 2
    %v2195 = vrot.slane %v2033, 1
    %v2196 = vsel %vm543, %v2195, %v2194
    %2197 = vrot.lane.b32.xlu0 %v2196, 96
    %v2198 = vpop.permute.xlu0 %2197
    %v2199 = vsel %vm244, %v2198, 0
    %2201 = vmatprep.subr.mxu0 0.0
    %2202 = vmatpush1.msra.mxu0 0.0
    %2203 = vmatprep.subr.mxu0 0.0
    %2204 = vmatpush1.msra.mxu0 0.0
    %2205 = vmatprep.subr.mxu0 0.0
    %2206 = vmatpush1.msra.mxu0 0.0
    %2207 = vmatprep.subr.mxu0 0.0
    %2208 = vmatpush1.msra.mxu0 0.0
    %2209 = vmatprep.subr.mxu0 0.0
    %2210 = vmatpush1.msra.mxu0 0.0
    %2211 = vmatprep.subr.mxu0 0.0
    %2212 = vmatpush1.msra.mxu0 0.0
    %2213 = vmatprep.subr.mxu0 0.0
    %2214 = vmatpush1.msra.mxu0 0.0
    %2215 = vmatprep.subr.mxu0 0.0
    %2216 = vmatpush1.msra.mxu0 0.0
    %2217 = vmatprep.subr.mxu0 0.0
    %2218 = vmatpush1.msra.mxu0 0.0
    %2219 = vmatprep.subr.mxu0 0.0
    %2220 = vmatpush1.msra.mxu0 0.0
    %2221 = vmatprep.subr.mxu0 0.0
    %2222 = vmatpush1.msra.mxu0 0.0
    %2223 = vmatprep.subr.mxu0 0.0
    %2224 = vmatpush1.msra.mxu0 0.0
    %2225 = vmatprep.subr.mxu0 0.0
    %2226 = vmatpush1.msra.mxu0 %v242
    %2227 = vmatprep.subr.mxu0 0.0
    %2228 = vmatpush1.msra.mxu0 %v241
    %2229 = vmatprep.subr.mxu0 0.0
    %2230 = vmatpush1.msra.mxu0 %v240
    %2231 = vmatprep.subr.mxu0 0.0
    %2232 = vmatpush1.msra.mxu0 %v239
    %2233 = vmatprep.subr.mxu0 0.0
    %2234 = vmatpush2.msra.mxu0 0.0
    %2235 = vmatprep.subr.mxu0 0.0
    %2236 = vmatpush2.msra.mxu0 0.0
    %2237 = vmatprep.subr.mxu0 0.0
    %2238 = vmatpush2.msra.mxu0 0.0
    %2239 = vmatprep.subr.mxu0 0.0
    %2240 = vmatpush2.msra.mxu0 0.0
    %2241 = vmatprep.subr.mxu0 0.0
    %2242 = vmatpush2.msra.mxu0 0.0
    %2243 = vmatprep.subr.mxu0 0.0
    %2244 = vmatpush2.msra.mxu0 0.0
    %2245 = vmatprep.subr.mxu0 0.0
    %2246 = vmatpush2.msra.mxu0 0.0
    %2247 = vmatprep.subr.mxu0 0.0
    %2248 = vmatpush2.msra.mxu0 0.0
    %2249 = vmatprep.subr.mxu0 0.0
    %2250 = vmatpush2.msra.mxu0 0.0
    %2251 = vmatprep.subr.mxu0 0.0
    %2252 = vmatpush2.msra.mxu0 0.0
    %2253 = vmatprep.subr.mxu0 0.0
    %2254 = vmatpush2.msra.mxu0 0.0
    %2255 = vmatprep.subr.mxu0 0.0
    %2256 = vmatpush2.msra.mxu0 0.0
    %2257 = vmatprep.subr.mxu0 0.0
    %2258 = vmatpush2.msra.mxu0 0.0
    %2259 = vmatprep.subr.mxu0 0.0
    %2260 = vmatpush2.msra.mxu0 0.0
    %2261 = vmatprep.subr.mxu0 0.0
    %2262 = vmatpush2.msra.mxu0 0.0
    %2263 = vmatprep.subr.mxu0 0.0
    %2264 = vmatpush2.msra.mxu0 0.0
    %2265 = vmatprep.mubr.f32.mxu0 0.0
    %2266 = vmatmul.mubr.f32.gmra.mxu0 %v2199
    %v2267 = vpop.f32.mrf.mxu0
    %v2268 = vadd.f32 0.0, %v2267
    %v2269 = vpop.f32.mrf.mxu0
    %2270 = vdwg.mxu0
    %v2272 = vrot.slane %v2268, 7
    %v2275 = vadd.f32 %v230, %v2272
    %v2276 = vadd.f32 %v235, %v2268
    %v2277 = vxor.u32 %v2275, 2147483648
    %v2278 = vxor.u32 %v2276, 2147483648
    %v2279 = vmul.f32 %v2277, 1.442695
    %v2280 = vpow.pop %v2279
    %v2281 = vmul.f32 %v2278, 1.442695
    %v2282 = vpow.pop %v2281
    %v2283 = vadd.f32 %v2280, 1.0
    %v2284 = vadd.f32 %v2282, 1.0
    %v2285 = vrcp.pop %v2283
    %v2286 = vmul.f32 1.0, %v2285
    %v2287 = vrcp.pop %v2284
    %v2288 = vmul.f32 1.0, %v2287
    %v2289 = vadd.f32 %v2268, %v489
    %v2291 = vrot.slane %v2289, 7
    %2292 = vrot.lane.b32.xlu0 %v2291, 64
    %v2293 = vpop.permute.xlu0 %2292
    %2294 = vrot.lane.b32.xlu0 %v2289, 64
    %v2295 = vpop.permute.xlu0 %2294
    %v2298 = vmul.f32 %v2286, %v2293
    %v2299 = vmul.f32 %v2288, %v2295
    %2302 = vrot.lane.b32.xlu0 %v2298, 64
    %v2303 = vpop.permute.xlu0 %2302
    %2304 = vrot.lane.b32.xlu0 %v2299, 64
    %v2305 = vpop.permute.xlu0 %2304
    %v2308 = vadd.f32 %v230, %v2303
    %v2309 = vadd.f32 %v235, %v2305
    %v2310 = vtanh.pop %v2308
    %v2311 = vtanh.pop %v2309
    %v2312 = vsub.f32 1.0, %v2286
    %v2313 = vsub.f32 1.0, %v2288
    %2316 = vrot.lane.b32.xlu0 %v2310, 96
    %v2317 = vpop.permute.xlu0 %2316
    %2318 = vrot.lane.b32.xlu0 %v2311, 96
    %v2319 = vpop.permute.xlu0 %2318
    %v2322 = vmul.f32 %v2312, %v2317
    %v2323 = vmul.f32 %v2313, %v2319
    %v2324 = vrot.slane %v2032, 1
    %v2327 = vmul.f32 %v2286, %v2324
    %v2328 = vmul.f32 %v2288, %v2195
    %v2329 = vadd.f32 %v2322, %v2327
    %v2330 = vadd.f32 %v2323, %v2328
    %2333 = vrot.lane.b32.xlu0 %v2329, 96
    %v2334 = vpop.permute.xlu0 %2333
    %2335 = vrot.lane.b32.xlu0 %v2330, 96
    %v2336 = vpop.permute.xlu0 %2335
    %2339 = vst.msk [vmem:[#allocation3] sm:$0x2] %vm687, %v2334
    %2340 = vst.msk [vmem:[#allocation3 + $0x8] sm:$0x2] %vm687, %v2336
    %v2341 = vrot.slane %v2182, 6
    %v2342 = vrot.slane %v2183, 5
    %v2343 = vsel %vm543, %v2342, %v2341
    %2344 = vrot.lane.b32.xlu0 %v2343, 96
    %v2345 = vpop.permute.xlu0 %2344
    %v2346 = vsel %vm244, %v2345, 0
    %2348 = vmatprep.subr.mxu0 0.0
    %2349 = vmatpush1.msra.mxu0 0.0
    %2350 = vmatprep.subr.mxu0 0.0
    %2351 = vmatpush1.msra.mxu0 0.0
    %2352 = vmatprep.subr.mxu0 0.0
    %2353 = vmatpush1.msra.mxu0 0.0
    %2354 = vmatprep.subr.mxu0 0.0
    %2355 = vmatpush1.msra.mxu0 0.0
    %2356 = vmatprep.subr.mxu0 0.0
    %2357 = vmatpush1.msra.mxu0 0.0
    %2358 = vmatprep.subr.mxu0 0.0
    %2359 = vmatpush1.msra.mxu0 0.0
    %2360 = vmatprep.subr.mxu0 0.0
    %2361 = vmatpush1.msra.mxu0 0.0
    %2362 = vmatprep.subr.mxu0 0.0
    %2363 = vmatpush1.msra.mxu0 0.0
    %2364 = vmatprep.subr.mxu0 0.0
    %2365 = vmatpush1.msra.mxu0 0.0
    %2366 = vmatprep.subr.mxu0 0.0
    %2367 = vmatpush1.msra.mxu0 0.0
    %2368 = vmatprep.subr.mxu0 0.0
    %2369 = vmatpush1.msra.mxu0 0.0
    %2370 = vmatprep.subr.mxu0 0.0
    %2371 = vmatpush1.msra.mxu0 0.0
    %2372 = vmatprep.subr.mxu0 0.0
    %2373 = vmatpush1.msra.mxu0 %v154
    %2374 = vmatprep.subr.mxu0 0.0
    %2375 = vmatpush1.msra.mxu0 %v153
    %2376 = vmatprep.subr.mxu0 0.0
    %2377 = vmatpush1.msra.mxu0 %v152
    %2378 = vmatprep.subr.mxu0 0.0
    %2379 = vmatpush1.msra.mxu0 %v151
    %2380 = vmatprep.subr.mxu0 0.0
    %2381 = vmatpush2.msra.mxu0 0.0
    %2382 = vmatprep.subr.mxu0 0.0
    %2383 = vmatpush2.msra.mxu0 0.0
    %2384 = vmatprep.subr.mxu0 0.0
    %2385 = vmatpush2.msra.mxu0 0.0
    %2386 = vmatprep.subr.mxu0 0.0
    %2387 = vmatpush2.msra.mxu0 0.0
    %2388 = vmatprep.subr.mxu0 0.0
    %2389 = vmatpush2.msra.mxu0 0.0
    %2390 = vmatprep.subr.mxu0 0.0
    %2391 = vmatpush2.msra.mxu0 0.0
    %2392 = vmatprep.subr.mxu0 0.0
    %2393 = vmatpush2.msra.mxu0 0.0
    %2394 = vmatprep.subr.mxu0 0.0
    %2395 = vmatpush2.msra.mxu0 0.0
    %2396 = vmatprep.subr.mxu0 0.0
    %2397 = vmatpush2.msra.mxu0 0.0
    %2398 = vmatprep.subr.mxu0 0.0
    %2399 = vmatpush2.msra.mxu0 0.0
    %2400 = vmatprep.subr.mxu0 0.0
    %2401 = vmatpush2.msra.mxu0 0.0
    %2402 = vmatprep.subr.mxu0 0.0
    %2403 = vmatpush2.msra.mxu0 0.0
    %2404 = vmatprep.subr.mxu0 0.0
    %2405 = vmatpush2.msra.mxu0 0.0
    %2406 = vmatprep.subr.mxu0 0.0
    %2407 = vmatpush2.msra.mxu0 0.0
    %2408 = vmatprep.subr.mxu0 0.0
    %2409 = vmatpush2.msra.mxu0 0.0
    %2410 = vmatprep.subr.mxu0 0.0
    %2411 = vmatpush2.msra.mxu0 0.0
    %2412 = vmatprep.mubr.f32.mxu0 0.0
    %2413 = vmatmul.mubr.f32.gmra.mxu0 %v2346
    %v2414 = vpop.f32.mrf.mxu0
    %v2415 = vadd.f32 0.0, %v2414
    %v2416 = vpop.f32.mrf.mxu0
    %2417 = vdwg.mxu0
    %v2419 = vrot.slane %v2415, 1
    %v2420 = vrot.slane %v2415, 2
    %v2423 = vadd.f32 %v143, %v2419
    %v2424 = vadd.f32 %v148, %v2420
    %v2425 = vxor.u32 %v2423, 2147483648
    %v2426 = vxor.u32 %v2424, 2147483648
    %v2427 = vmul.f32 %v2425, 1.442695
    %v2428 = vpow.pop %v2427
    %v2429 = vmul.f32 %v2426, 1.442695
    %v2430 = vpow.pop %v2429
    %v2431 = vadd.f32 %v2428, 1.0
    %v2432 = vadd.f32 %v2430, 1.0
    %v2433 = vrcp.pop %v2431
    %v2434 = vmul.f32 1.0, %v2433
    %v2435 = vrcp.pop %v2432
    %v2436 = vmul.f32 1.0, %v2435
    %v2437 = vadd.f32 %v2415, %v342
    %v2439 = vrot.slane %v2437, 1
    %v2440 = vrot.slane %v2437, 2
    %2441 = vrot.lane.b32.xlu0 %v2439, 64
    %v2442 = vpop.permute.xlu0 %2441
    %2443 = vrot.lane.b32.xlu0 %v2440, 64
    %v2444 = vpop.permute.xlu0 %2443
    %v2447 = vmul.f32 %v2434, %v2442
    %v2448 = vmul.f32 %v2436, %v2444
    %2451 = vrot.lane.b32.xlu0 %v2447, 64
    %v2452 = vpop.permute.xlu0 %2451
    %2453 = vrot.lane.b32.xlu0 %v2448, 64
    %v2454 = vpop.permute.xlu0 %2453
    %v2457 = vadd.f32 %v143, %v2452
    %v2458 = vadd.f32 %v148, %v2454
    %v2459 = vtanh.pop %v2457
    %v2460 = vtanh.pop %v2458
    %v2461 = vsub.f32 1.0, %v2434
    %v2462 = vsub.f32 1.0, %v2436
    %2465 = vrot.lane.b32.xlu0 %v2459, 96
    %v2466 = vpop.permute.xlu0 %2465
    %2467 = vrot.lane.b32.xlu0 %v2460, 96
    %v2468 = vpop.permute.xlu0 %2467
    %v2471 = vmul.f32 %v2461, %v2466
    %v2472 = vmul.f32 %v2462, %v2468
    %v2473 = vrot.slane %v2182, 7
    %v2474 = vrot.slane %v2183, 7
    %v2477 = vmul.f32 %v2434, %v2473
    %v2478 = vmul.f32 %v2436, %v2474
    %v2479 = vadd.f32 %v2471, %v2477
    %v2480 = vadd.f32 %v2472, %v2478
    %2483 = vrot.lane.b32.xlu0 %v2479, 96
    %v2484 = vpop.permute.xlu0 %2483
    %2485 = vrot.lane.b32.xlu0 %v2480, 96
    %v2486 = vpop.permute.xlu0 %2485
    %2489 = vst.msk [vmem:[#allocation2] sm:$0x80] %vm539, %v2484
    %2490 = vst.msk [vmem:[#allocation2 + $0x8] sm:$0x80] %vm539, %v2486
    %v2491 = vrot.slane %v2329, 1
    %v2492 = vsel %vm543, %v2330, %v2491
    %2493 = vrot.lane.b32.xlu0 %v2492, 96
    %v2494 = vpop.permute.xlu0 %2493
    %v2495 = vsel %vm244, %v2494, 0
    %2497 = vmatprep.subr.mxu0 0.0
    %2498 = vmatpush1.msra.mxu0 0.0
    %2499 = vmatprep.subr.mxu0 0.0
    %2500 = vmatpush1.msra.mxu0 0.0
    %2501 = vmatprep.subr.mxu0 0.0
    %2502 = vmatpush1.msra.mxu0 0.0
    %2503 = vmatprep.subr.mxu0 0.0
    %2504 = vmatpush1.msra.mxu0 0.0
    %2505 = vmatprep.subr.mxu0 0.0
    %2506 = vmatpush1.msra.mxu0 0.0
    %2507 = vmatprep.subr.mxu0 0.0
    %2508 = vmatpush1.msra.mxu0 0.0
    %2509 = vmatprep.subr.mxu0 0.0
    %2510 = vmatpush1.msra.mxu0 0.0
    %2511 = vmatprep.subr.mxu0 0.0
    %2512 = vmatpush1.msra.mxu0 0.0
    %2513 = vmatprep.subr.mxu0 0.0
    %2514 = vmatpush1.msra.mxu0 0.0
    %2515 = vmatprep.subr.mxu0 0.0
    %2516 = vmatpush1.msra.mxu0 0.0
    %2517 = vmatprep.subr.mxu0 0.0
    %2518 = vmatpush1.msra.mxu0 0.0
    %2519 = vmatprep.subr.mxu0 0.0
    %2520 = vmatpush1.msra.mxu0 0.0
    %2521 = vmatprep.subr.mxu0 0.0
    %2522 = vmatpush1.msra.mxu0 %v242
    %2523 = vmatprep.subr.mxu0 0.0
    %2524 = vmatpush1.msra.mxu0 %v241
    %2525 = vmatprep.subr.mxu0 0.0
    %2526 = vmatpush1.msra.mxu0 %v240
    %2527 = vmatprep.subr.mxu0 0.0
    %2528 = vmatpush1.msra.mxu0 %v239
    %2529 = vmatprep.subr.mxu0 0.0
    %2530 = vmatpush2.msra.mxu0 0.0
    %2531 = vmatprep.subr.mxu0 0.0
    %2532 = vmatpush2.msra.mxu0 0.0
    %2533 = vmatprep.subr.mxu0 0.0
    %2534 = vmatpush2.msra.mxu0 0.0
    %2535 = vmatprep.subr.mxu0 0.0
    %2536 = vmatpush2.msra.mxu0 0.0
    %2537 = vmatprep.subr.mxu0 0.0
    %2538 = vmatpush2.msra.mxu0 0.0
    %2539 = vmatprep.subr.mxu0 0.0
    %2540 = vmatpush2.msra.mxu0 0.0
    %2541 = vmatprep.subr.mxu0 0.0
    %2542 = vmatpush2.msra.mxu0 0.0
    %2543 = vmatprep.subr.mxu0 0.0
    %2544 = vmatpush2.msra.mxu0 0.0
    %2545 = vmatprep.subr.mxu0 0.0
    %2546 = vmatpush2.msra.mxu0 0.0
    %2547 = vmatprep.subr.mxu0 0.0
    %2548 = vmatpush2.msra.mxu0 0.0
    %2549 = vmatprep.subr.mxu0 0.0
    %2550 = vmatpush2.msra.mxu0 0.0
    %2551 = vmatprep.subr.mxu0 0.0
    %2552 = vmatpush2.msra.mxu0 0.0
    %2553 = vmatprep.subr.mxu0 0.0
    %2554 = vmatpush2.msra.mxu0 0.0
    %2555 = vmatprep.subr.mxu0 0.0
    %2556 = vmatpush2.msra.mxu0 0.0
    %2557 = vmatprep.subr.mxu0 0.0
    %2558 = vmatpush2.msra.mxu0 0.0
    %2559 = vmatprep.subr.mxu0 0.0
    %2560 = vmatpush2.msra.mxu0 0.0
    %2561 = vmatprep.mubr.f32.mxu0 0.0
    %2562 = vmatmul.mubr.f32.gmra.mxu0 %v2495
    %v2563 = vpop.f32.mrf.mxu0
    %v2564 = vadd.f32 0.0, %v2563
    %v2565 = vpop.f32.mrf.mxu0
    %2566 = vdwg.mxu0
    %v2568 = vrot.slane %v2564, 1
    %v2571 = vadd.f32 %v230, %v2564
    %v2572 = vadd.f32 %v235, %v2568
    %v2573 = vxor.u32 %v2571, 2147483648
    %v2574 = vxor.u32 %v2572, 2147483648
    %v2575 = vmul.f32 %v2573, 1.442695
    %v2576 = vpow.pop %v2575
    %v2577 = vmul.f32 %v2574, 1.442695
    %v2578 = vpow.pop %v2577
    %v2579 = vadd.f32 %v2576, 1.0
    %v2580 = vadd.f32 %v2578, 1.0
    %v2581 = vrcp.pop %v2579
    %v2582 = vmul.f32 1.0, %v2581
    %v2583 = vrcp.pop %v2580
    %v2584 = vmul.f32 1.0, %v2583
    %v2585 = vadd.f32 %v2564, %v489
    %v2587 = vrot.slane %v2585, 1
    %2588 = vrot.lane.b32.xlu0 %v2585, 64
    %v2589 = vpop.permute.xlu0 %2588
    %2590 = vrot.lane.b32.xlu0 %v2587, 64
    %v2591 = vpop.permute.xlu0 %2590
    %v2594 = vmul.f32 %v2582, %v2589
    %v2595 = vmul.f32 %v2584, %v2591
    %2598 = vrot.lane.b32.xlu0 %v2594, 64
    %v2599 = vpop.permute.xlu0 %2598
    %2600 = vrot.lane.b32.xlu0 %v2595, 64
    %v2601 = vpop.permute.xlu0 %2600
    %v2604 = vadd.f32 %v230, %v2599
    %v2605 = vadd.f32 %v235, %v2601
    %v2606 = vtanh.pop %v2604
    %v2607 = vtanh.pop %v2605
    %v2608 = vsub.f32 1.0, %v2582
    %v2609 = vsub.f32 1.0, %v2584
    %2612 = vrot.lane.b32.xlu0 %v2606, 96
    %v2613 = vpop.permute.xlu0 %2612
    %2614 = vrot.lane.b32.xlu0 %v2607, 96
    %v2615 = vpop.permute.xlu0 %2614
    %v2618 = vmul.f32 %v2608, %v2613
    %v2619 = vmul.f32 %v2609, %v2615
    %v2620 = vrot.slane %v2330, 1
    %v2623 = vmul.f32 %v2582, %v2491
    %v2624 = vmul.f32 %v2584, %v2620
    %v2625 = vadd.f32 %v2618, %v2623
    %v2626 = vadd.f32 %v2619, %v2624
    %2629 = vrot.lane.b32.xlu0 %v2625, 96
    %v2630 = vpop.permute.xlu0 %2629
    %2631 = vrot.lane.b32.xlu0 %v2626, 96
    %v2632 = vpop.permute.xlu0 %2631
    %2635 = vst.msk [vmem:[#allocation3] sm:$0x1] %vm391, %v2630
    %2636 = vst.msk [vmem:[#allocation3 + $0x8] sm:$0x1] %vm391, %v2632
    %v2637 = vld [vmem:[#allocation2] sm:$0xff]
    %v2638 = vld [vmem:[#allocation2 + $0x8] sm:$0xff]
    %v2639 = vld [vmem:[#allocation3] sm:$0xff]
    %v2640 = vld [vmem:[#allocation3 + $0x8] sm:$0xff]
    %v2641 = vld [vmem:[#allocation4] sm:$0xff]
    %v2642 = vld [vmem:[#allocation4 + $0x8] sm:$0xff]
    %v2643 = vld [vmem:[#allocation4 + $0x10] sm:$0xff]
    %v2644 = vld [vmem:[#allocation4 + $0x18] sm:$0xff]
    %s2645 = scalar_lea.vmem [#allocation4], 32
    %v2646 = vld [vmem:[%s2645] sm:$0xff]
    %v2647 = vld [vmem:[%s2645 + $0x8] sm:$0xff]
    %v2648 = vld [vmem:[%s2645 + $0x10] sm:$0xff]
    %v2649 = vld [vmem:[%s2645 + $0x18] sm:$0xff]
    %v2651 = vsel %vm244, %v2639, 0
    %v2654 = vsel %vm244, %v2640, 0
    %2656 = vmatprep.subr.mxu0 0.0
    %2657 = vmatpush1.msra.mxu0 0.0
    %2658 = vmatprep.subr.mxu0 0.0
    %2659 = vmatpush1.msra.mxu0 0.0
    %2660 = vmatprep.subr.mxu0 0.0
    %2661 = vmatpush1.msra.mxu0 0.0
    %2662 = vmatprep.subr.mxu0 0.0
    %2663 = vmatpush1.msra.mxu0 0.0
    %2664 = vmatprep.subr.mxu0 0.0
    %2665 = vmatpush1.msra.mxu0 0.0
    %2666 = vmatprep.subr.mxu0 0.0
    %2667 = vmatpush1.msra.mxu0 0.0
    %2668 = vmatprep.subr.mxu0 0.0
    %2669 = vmatpush1.msra.mxu0 0.0
    %2670 = vmatprep.subr.mxu0 0.0
    %2671 = vmatpush1.msra.mxu0 0.0
    %2672 = vmatprep.subr.mxu0 0.0
    %2673 = vmatpush1.msra.mxu0 0.0
    %2674 = vmatprep.subr.mxu0 0.0
    %2675 = vmatpush1.msra.mxu0 0.0
    %2676 = vmatprep.subr.mxu0 0.0
    %2677 = vmatpush1.msra.mxu0 0.0
    %2678 = vmatprep.subr.mxu0 0.0
    %2679 = vmatpush1.msra.mxu0 0.0
    %2680 = vmatprep.subr.mxu0 0.0
    %2681 = vmatpush1.msra.mxu0 %v2649
    %2682 = vmatprep.subr.mxu0 0.0
    %2683 = vmatpush1.msra.mxu0 %v2648
    %2684 = vmatprep.subr.mxu0 0.0
    %2685 = vmatpush1.msra.mxu0 %v2647
    %2686 = vmatprep.subr.mxu0 0.0
    %2687 = vmatpush1.msra.mxu0 %v2646
    %2688 = vmatprep.subr.mxu0 0.0
    %2689 = vmatpush2.msra.mxu0 0.0
    %2690 = vmatprep.subr.mxu0 0.0
    %2691 = vmatpush2.msra.mxu0 0.0
    %2692 = vmatprep.subr.mxu0 0.0
    %2693 = vmatpush2.msra.mxu0 0.0
    %2694 = vmatprep.subr.mxu0 0.0
    %2695 = vmatpush2.msra.mxu0 0.0
    %2696 = vmatprep.subr.mxu0 0.0
    %2697 = vmatpush2.msra.mxu0 0.0
    %2698 = vmatprep.subr.mxu0 0.0
    %2699 = vmatpush2.msra.mxu0 0.0
    %2700 = vmatprep.subr.mxu0 0.0
    %2701 = vmatpush2.msra.mxu0 0.0
    %2702 = vmatprep.subr.mxu0 0.0
    %2703 = vmatpush2.msra.mxu0 0.0
    %2704 = vmatprep.subr.mxu0 0.0
    %2705 = vmatpush2.msra.mxu0 0.0
    %2706 = vmatprep.subr.mxu0 0.0
    %2707 = vmatpush2.msra.mxu0 0.0
    %2708 = vmatprep.subr.mxu0 0.0
    %2709 = vmatpush2.msra.mxu0 0.0
    %2710 = vmatprep.subr.mxu0 0.0
    %2711 = vmatpush2.msra.mxu0 0.0
    %2712 = vmatprep.subr.mxu0 0.0
    %2713 = vmatpush2.msra.mxu0 0.0
    %2714 = vmatprep.subr.mxu0 0.0
    %2715 = vmatpush2.msra.mxu0 0.0
    %2716 = vmatprep.subr.mxu0 0.0
    %2717 = vmatpush2.msra.mxu0 0.0
    %2718 = vmatprep.subr.mxu0 0.0
    %2719 = vmatpush2.msra.mxu0 0.0
    %2720 = vmatprep.mubr.f32.mxu0 0.0
    %2721 = vmatmul.mubr.f32.gmra.mxu0 %v2651
    %v2722 = vpop.f32.mrf.mxu0
    %v2723 = vadd.f32 0.0, %v2722
    %v2724 = vpop.f32.mrf.mxu0
    %2725 = vmatprep.mubr.f32.mxu0 0.0
    %2726 = vmatmul.mubr.f32.gmra.mxu0 %v2654
    %v2727 = vpop.f32.mrf.mxu0
    %v2728 = vadd.f32 0.0, %v2727
    %v2729 = vpop.f32.mrf.mxu0
    %2730 = vdwg.mxu0
    %v2732 = vsel %vm244, %v2637, 0
    %v2735 = vsel %vm244, %v2638, 0
    %2737 = vmatprep.subr.mxu0 0.0
    %2738 = vmatpush1.msra.mxu0 0.0
    %2739 = vmatprep.subr.mxu0 0.0
    %2740 = vmatpush1.msra.mxu0 0.0
    %2741 = vmatprep.subr.mxu0 0.0
    %2742 = vmatpush1.msra.mxu0 0.0
    %2743 = vmatprep.subr.mxu0 0.0
    %2744 = vmatpush1.msra.mxu0 0.0
    %2745 = vmatprep.subr.mxu0 0.0
    %2746 = vmatpush1.msra.mxu0 0.0
    %2747 = vmatprep.subr.mxu0 0.0
    %2748 = vmatpush1.msra.mxu0 0.0
    %2749 = vmatprep.subr.mxu0 0.0
    %2750 = vmatpush1.msra.mxu0 0.0
    %2751 = vmatprep.subr.mxu0 0.0
    %2752 = vmatpush1.msra.mxu0 0.0
    %2753 = vmatprep.subr.mxu0 0.0
    %2754 = vmatpush1.msra.mxu0 0.0
    %2755 = vmatprep.subr.mxu0 0.0
    %2756 = vmatpush1.msra.mxu0 0.0
    %2757 = vmatprep.subr.mxu0 0.0
    %2758 = vmatpush1.msra.mxu0 0.0
    %2759 = vmatprep.subr.mxu0 0.0
    %2760 = vmatpush1.msra.mxu0 0.0
    %2761 = vmatprep.subr.mxu0 0.0
    %2762 = vmatpush1.msra.mxu0 %v2644
    %2763 = vmatprep.subr.mxu0 0.0
    %2764 = vmatpush1.msra.mxu0 %v2643
    %2765 = vmatprep.subr.mxu0 0.0
    %2766 = vmatpush1.msra.mxu0 %v2642
    %2767 = vmatprep.subr.mxu0 0.0
    %2768 = vmatpush1.msra.mxu0 %v2641
    %2769 = vmatprep.subr.mxu0 0.0
    %2770 = vmatpush2.msra.mxu0 0.0
    %2771 = vmatprep.subr.mxu0 0.0
    %2772 = vmatpush2.msra.mxu0 0.0
    %2773 = vmatprep.subr.mxu0 0.0
    %2774 = vmatpush2.msra.mxu0 0.0
    %2775 = vmatprep.subr.mxu0 0.0
    %2776 = vmatpush2.msra.mxu0 0.0
    %2777 = vmatprep.subr.mxu0 0.0
    %2778 = vmatpush2.msra.mxu0 0.0
    %2779 = vmatprep.subr.mxu0 0.0
    %2780 = vmatpush2.msra.mxu0 0.0
    %2781 = vmatprep.subr.mxu0 0.0
    %2782 = vmatpush2.msra.mxu0 0.0
    %2783 = vmatprep.subr.mxu0 0.0
    %2784 = vmatpush2.msra.mxu0 0.0
    %2785 = vmatprep.subr.mxu0 0.0
    %2786 = vmatpush2.msra.mxu0 0.0
    %2787 = vmatprep.subr.mxu0 0.0
    %2788 = vmatpush2.msra.mxu0 0.0
    %2789 = vmatprep.subr.mxu0 0.0
    %2790 = vmatpush2.msra.mxu0 0.0
    %2791 = vmatprep.subr.mxu0 0.0
    %2792 = vmatpush2.msra.mxu0 0.0
    %2793 = vmatprep.subr.mxu0 0.0
    %2794 = vmatpush2.msra.mxu0 0.0
    %2795 = vmatprep.subr.mxu0 0.0
    %2796 = vmatpush2.msra.mxu0 0.0
    %2797 = vmatprep.subr.mxu0 0.0
    %2798 = vmatpush2.msra.mxu0 0.0
    %2799 = vmatprep.subr.mxu0 0.0
    %2800 = vmatpush2.msra.mxu0 0.0
    %2801 = vmatprep.mubr.f32.mxu0 0.0
    %2802 = vmatmul.mubr.f32.gmra.mxu0 %v2732
    %v2803 = vpop.f32.mrf.mxu0
    %v2804 = vadd.f32 %v2723, %v2803
    %v2805 = vpop.f32.mrf.mxu0
    %2806 = vmatprep.mubr.f32.mxu0 0.0
    %2807 = vmatmul.mubr.f32.gmra.mxu0 %v2735
    %v2808 = vpop.f32.mrf.mxu0
    %v2809 = vadd.f32 %v2728, %v2808
    %v2810 = vpop.f32.mrf.mxu0
    %2811 = vdwg.mxu0
    %v2812 = vld [vmem:[%s4 + $0x2] sm:$0x1]
    %v2813 = vlaneseq
    %v2814 = vshrl.u32 %v2813, 7
    %v2815 = vsub.s32 0, %v2814
    %v2816 = vrot.slane %v2812, %v2815
    %v2817 = vadd.f32 %v2804, %v2816
    %v2818 = vadd.f32 %v2809, %v2816
    %s2819 = scalar_lea.vmem [#allocation7], 64
    %v2820 = vld [vmem:[%s2819] sm:$0xff]
    %v2821 = vld [vmem:[%s2819 + $0x8] sm:$0xff]
    %v2822 = vld [vmem:[%s2819 + $0x10] sm:$0xff]
    %v2823 = vld [vmem:[%s2819 + $0x18] sm:$0xff]
    %v2824 = vld [vmem:[%s5 + $0x2] sm:$0x1]
    %s2825 = scalar_lea.vmem [#allocation4], 64
    %v2826 = vld [vmem:[%s2825] sm:$0xff]
    %v2827 = vld [vmem:[%s2825 + $0x8] sm:$0xff]
    %v2828 = vld [vmem:[%s2825 + $0x10] sm:$0xff]
    %v2829 = vld [vmem:[%s2825 + $0x18] sm:$0xff]
    %s2830 = scalar_lea.vmem [#allocation4], 96
    %v2831 = vld [vmem:[%s2830] sm:$0xff]
    %v2832 = vld [vmem:[%s2830 + $0x8] sm:$0xff]
    %v2833 = vld [vmem:[%s2830 + $0x10] sm:$0xff]
    %v2834 = vld [vmem:[%s2830 + $0x18] sm:$0xff]
    %2835 = vmatprep.subr.mxu0 0.0
    %2836 = vmatpush1.msra.mxu0 0.0
    %2837 = vmatprep.subr.mxu0 0.0
    %2838 = vmatpush1.msra.mxu0 0.0
    %2839 = vmatprep.subr.mxu0 0.0
    %2840 = vmatpush1.msra.mxu0 0.0
    %2841 = vmatprep.subr.mxu0 0.0
    %2842 = vmatpush1.msra.mxu0 0.0
    %2843 = vmatprep.subr.mxu0 0.0
    %2844 = vmatpush1.msra.mxu0 0.0
    %2845 = vmatprep.subr.mxu0 0.0
    %2846 = vmatpush1.msra.mxu0 0.0
    %2847 = vmatprep.subr.mxu0 0.0
    %2848 = vmatpush1.msra.mxu0 0.0
    %2849 = vmatprep.subr.mxu0 0.0
    %2850 = vmatpush1.msra.mxu0 0.0
    %2851 = vmatprep.subr.mxu0 0.0
    %2852 = vmatpush1.msra.mxu0 0.0
    %2853 = vmatprep.subr.mxu0 0.0
    %2854 = vmatpush1.msra.mxu0 0.0
    %2855 = vmatprep.subr.mxu0 0.0
    %2856 = vmatpush1.msra.mxu0 0.0
    %2857 = vmatprep.subr.mxu0 0.0
    %2858 = vmatpush1.msra.mxu0 0.0
    %2859 = vmatprep.subr.mxu0 0.0
    %2860 = vmatpush1.msra.mxu0 %v2834
    %2861 = vmatprep.subr.mxu0 0.0
    %2862 = vmatpush1.msra.mxu0 %v2833
    %2863 = vmatprep.subr.mxu0 0.0
    %2864 = vmatpush1.msra.mxu0 %v2832
    %2865 = vmatprep.subr.mxu0 0.0
    %2866 = vmatpush1.msra.mxu0 %v2831
    %2867 = vmatprep.subr.mxu0 0.0
    %2868 = vmatpush2.msra.mxu0 0.0
    %2869 = vmatprep.subr.mxu0 0.0
    %2870 = vmatpush2.msra.mxu0 0.0
    %2871 = vmatprep.subr.mxu0 0.0
    %2872 = vmatpush2.msra.mxu0 0.0
    %2873 = vmatprep.subr.mxu0 0.0
    %2874 = vmatpush2.msra.mxu0 0.0
    %2875 = vmatprep.subr.mxu0 0.0
    %2876 = vmatpush2.msra.mxu0 0.0
    %2877 = vmatprep.subr.mxu0 0.0
    %2878 = vmatpush2.msra.mxu0 0.0
    %2879 = vmatprep.subr.mxu0 0.0
    %2880 = vmatpush2.msra.mxu0 0.0
    %2881 = vmatprep.subr.mxu0 0.0
    %2882 = vmatpush2.msra.mxu0 0.0
    %2883 = vmatprep.subr.mxu0 0.0
    %2884 = vmatpush2.msra.mxu0 0.0
    %2885 = vmatprep.subr.mxu0 0.0
    %2886 = vmatpush2.msra.mxu0 0.0
    %2887 = vmatprep.subr.mxu0 0.0
    %2888 = vmatpush2.msra.mxu0 0.0
    %2889 = vmatprep.subr.mxu0 0.0
    %2890 = vmatpush2.msra.mxu0 0.0
    %2891 = vmatprep.subr.mxu0 0.0
    %2892 = vmatpush2.msra.mxu0 0.0
    %2893 = vmatprep.subr.mxu0 0.0
    %2894 = vmatpush2.msra.mxu0 0.0
    %2895 = vmatprep.subr.mxu0 0.0
    %2896 = vmatpush2.msra.mxu0 0.0
    %2897 = vmatprep.subr.mxu0 0.0
    %2898 = vmatpush2.msra.mxu0 0.0
    %2899 = vmatprep.mubr.f32.mxu0 0.0
    %2900 = vmatmul.mubr.f32.gmra.mxu0 %v2651
    %v2901 = vpop.f32.mrf.mxu0
    %v2902 = vadd.f32 0.0, %v2901
    %v2903 = vpop.f32.mrf.mxu0
    %2904 = vmatprep.mubr.f32.mxu0 0.0
    %2905 = vmatmul.mubr.f32.gmra.mxu0 %v2654
    %v2906 = vpop.f32.mrf.mxu0
    %v2907 = vadd.f32 0.0, %v2906
    %v2908 = vpop.f32.mrf.mxu0
    %2909 = vdwg.mxu0
    %2910 = vmatprep.subr.mxu0 0.0
    %2911 = vmatpush1.msra.mxu0 0.0
    %2912 = vmatprep.subr.mxu0 0.0
    %2913 = vmatpush1.msra.mxu0 0.0
    %2914 = vmatprep.subr.mxu0 0.0
    %2915 = vmatpush1.msra.mxu0 0.0
    %2916 = vmatprep.subr.mxu0 0.0
    %2917 = vmatpush1.msra.mxu0 0.0
    %2918 = vmatprep.subr.mxu0 0.0
    %2919 = vmatpush1.msra.mxu0 0.0
    %2920 = vmatprep.subr.mxu0 0.0
    %2921 = vmatpush1.msra.mxu0 0.0
    %2922 = vmatprep.subr.mxu0 0.0
    %2923 = vmatpush1.msra.mxu0 0.0
    %2924 = vmatprep.subr.mxu0 0.0
    %2925 = vmatpush1.msra.mxu0 0.0
    %2926 = vmatprep.subr.mxu0 0.0
    %2927 = vmatpush1.msra.mxu0 0.0
    %2928 = vmatprep.subr.mxu0 0.0
    %2929 = vmatpush1.msra.mxu0 0.0
    %2930 = vmatprep.subr.mxu0 0.0
    %2931 = vmatpush1.msra.mxu0 0.0
    %2932 = vmatprep.subr.mxu0 0.0
    %2933 = vmatpush1.msra.mxu0 0.0
    %2934 = vmatprep.subr.mxu0 0.0
    %2935 = vmatpush1.msra.mxu0 %v2829
    %2936 = vmatprep.subr.mxu0 0.0
    %2937 = vmatpush1.msra.mxu0 %v2828
    %2938 = vmatprep.subr.mxu0 0.0
    %2939 = vmatpush1.msra.mxu0 %v2827
    %2940 = vmatprep.subr.mxu0 0.0
    %2941 = vmatpush1.msra.mxu0 %v2826
    %2942 = vmatprep.subr.mxu0 0.0
    %2943 = vmatpush2.msra.mxu0 0.0
    %2944 = vmatprep.subr.mxu0 0.0
    %2945 = vmatpush2.msra.mxu0 0.0
    %2946 = vmatprep.subr.mxu0 0.0
    %2947 = vmatpush2.msra.mxu0 0.0
    %2948 = vmatprep.subr.mxu0 0.0
    %2949 = vmatpush2.msra.mxu0 0.0
    %2950 = vmatprep.subr.mxu0 0.0
    %2951 = vmatpush2.msra.mxu0 0.0
    %2952 = vmatprep.subr.mxu0 0.0
    %2953 = vmatpush2.msra.mxu0 0.0
    %2954 = vmatprep.subr.mxu0 0.0
    %2955 = vmatpush2.msra.mxu0 0.0
    %2956 = vmatprep.subr.mxu0 0.0
    %2957 = vmatpush2.msra.mxu0 0.0
    %2958 = vmatprep.subr.mxu0 0.0
    %2959 = vmatpush2.msra.mxu0 0.0
    %2960 = vmatprep.subr.mxu0 0.0
    %2961 = vmatpush2.msra.mxu0 0.0
    %2962 = vmatprep.subr.mxu0 0.0
    %2963 = vmatpush2.msra.mxu0 0.0
    %2964 = vmatprep.subr.mxu0 0.0
    %2965 = vmatpush2.msra.mxu0 0.0
    %2966 = vmatprep.subr.mxu0 0.0
    %2967 = vmatpush2.msra.mxu0 0.0
    %2968 = vmatprep.subr.mxu0 0.0
    %2969 = vmatpush2.msra.mxu0 0.0
    %2970 = vmatprep.subr.mxu0 0.0
    %2971 = vmatpush2.msra.mxu0 0.0
    %2972 = vmatprep.subr.mxu0 0.0
    %2973 = vmatpush2.msra.mxu0 0.0
    %2974 = vmatprep.mubr.f32.mxu0 0.0
    %2975 = vmatmul.mubr.f32.gmra.mxu0 %v2732
    %v2976 = vpop.f32.mrf.mxu0
    %v2977 = vadd.f32 %v2902, %v2976
    %v2978 = vpop.f32.mrf.mxu0
    %2979 = vmatprep.mubr.f32.mxu0 0.0
    %2980 = vmatmul.mubr.f32.gmra.mxu0 %v2735
    %v2981 = vpop.f32.mrf.mxu0
    %v2982 = vadd.f32 %v2907, %v2981
    %v2983 = vpop.f32.mrf.mxu0
    %2984 = vdwg.mxu0
    %v2985 = vld [vmem:[%s4 + $0x3] sm:$0x1]
    %v2986 = vlaneseq
    %v2987 = vshrl.u32 %v2986, 7
    %v2988 = vsub.s32 0, %v2987
    %v2989 = vrot.slane %v2985, %v2988
    %v2990 = vadd.f32 %v2977, %v2989
    %v2991 = vadd.f32 %v2982, %v2989
    %s2992 = scalar_lea.vmem [#allocation7], 96
    %v2993 = vld [vmem:[%s2992] sm:$0xff]
    %v2994 = vld [vmem:[%s2992 + $0x8] sm:$0xff]
    %v2995 = vld [vmem:[%s2992 + $0x10] sm:$0xff]
    %v2996 = vld [vmem:[%s2992 + $0x18] sm:$0xff]
    %v2997 = vld [vmem:[%s5 + $0x3] sm:$0x1]
    %2998 = vmatprep.subr.mxu0 0.0
    %2999 = vmatpush1.msra.mxu0 0.0
    %3000 = vmatprep.subr.mxu0 0.0
    %3001 = vmatpush1.msra.mxu0 0.0
    %3002 = vmatprep.subr.mxu0 0.0
    %3003 = vmatpush1.msra.mxu0 0.0
    %3004 = vmatprep.subr.mxu0 0.0
    %3005 = vmatpush1.msra.mxu0 0.0
    %3006 = vmatprep.subr.mxu0 0.0
    %3007 = vmatpush1.msra.mxu0 0.0
    %3008 = vmatprep.subr.mxu0 0.0
    %3009 = vmatpush1.msra.mxu0 0.0
    %3010 = vmatprep.subr.mxu0 0.0
    %3011 = vmatpush1.msra.mxu0 0.0
    %3012 = vmatprep.subr.mxu0 0.0
    %3013 = vmatpush1.msra.mxu0 0.0
    %3014 = vmatprep.subr.mxu0 0.0
    %3015 = vmatpush1.msra.mxu0 0.0
    %3016 = vmatprep.subr.mxu0 0.0
    %3017 = vmatpush1.msra.mxu0 0.0
    %3018 = vmatprep.subr.mxu0 0.0
    %3019 = vmatpush1.msra.mxu0 0.0
    %3020 = vmatprep.subr.mxu0 0.0
    %3021 = vmatpush1.msra.mxu0 0.0
    %3022 = vmatprep.subr.mxu0 0.0
    %3023 = vmatpush1.msra.mxu0 %v2823
    %3024 = vmatprep.subr.mxu0 0.0
    %3025 = vmatpush1.msra.mxu0 %v2822
    %3026 = vmatprep.subr.mxu0 0.0
    %3027 = vmatpush1.msra.mxu0 %v2821
    %3028 = vmatprep.subr.mxu0 0.0
    %3029 = vmatpush1.msra.mxu0 %v2820
    %3030 = vmatprep.subr.mxu0 0.0
    %3031 = vmatpush2.msra.mxu0 0.0
    %3032 = vmatprep.subr.mxu0 0.0
    %3033 = vmatpush2.msra.mxu0 0.0
    %3034 = vmatprep.subr.mxu0 0.0
    %3035 = vmatpush2.msra.mxu0 0.0
    %3036 = vmatprep.subr.mxu0 0.0
    %3037 = vmatpush2.msra.mxu0 0.0
    %3038 = vmatprep.subr.mxu0 0.0
    %3039 = vmatpush2.msra.mxu0 0.0
    %3040 = vmatprep.subr.mxu0 0.0
    %3041 = vmatpush2.msra.mxu0 0.0
    %3042 = vmatprep.subr.mxu0 0.0
    %3043 = vmatpush2.msra.mxu0 0.0
    %3044 = vmatprep.subr.mxu0 0.0
    %3045 = vmatpush2.msra.mxu0 0.0
    %3046 = vmatprep.subr.mxu0 0.0
    %3047 = vmatpush2.msra.mxu0 0.0
    %3048 = vmatprep.subr.mxu0 0.0
    %3049 = vmatpush2.msra.mxu0 0.0
    %3050 = vmatprep.subr.mxu0 0.0
    %3051 = vmatpush2.msra.mxu0 0.0
    %3052 = vmatprep.subr.mxu0 0.0
    %3053 = vmatpush2.msra.mxu0 0.0
    %3054 = vmatprep.subr.mxu0 0.0
    %3055 = vmatpush2.msra.mxu0 0.0
    %3056 = vmatprep.subr.mxu0 0.0
    %3057 = vmatpush2.msra.mxu0 0.0
    %3058 = vmatprep.subr.mxu0 0.0
    %3059 = vmatpush2.msra.mxu0 0.0
    %3060 = vmatprep.subr.mxu0 0.0
    %3061 = vmatpush2.msra.mxu0 0.0
    %3062 = vmatprep.mubr.f32.mxu0 0.0
    %3063 = vmatmul.mubr.f32.gmra.mxu0 %v246
    %v3064 = vpop.f32.mrf.mxu0
    %v3065 = vadd.f32 0.0, %v3064
    %v3066 = vpop.f32.mrf.mxu0
    %3067 = vdwg.mxu0
    %v3069 = vrot.slane %v3065, 1
    %v3072 = vadd.f32 %v2817, %v3065
    %v3073 = vadd.f32 %v2818, %v3069
    %v3074 = vxor.u32 %v3072, 2147483648
    %v3075 = vxor.u32 %v3073, 2147483648
    %v3076 = vmul.f32 %v3074, 1.442695
    %v3077 = vpow.pop %v3076
    %v3078 = vmul.f32 %v3075, 1.442695
    %v3079 = vpow.pop %v3078
    %v3080 = vadd.f32 %v3077, 1.0
    %v3081 = vadd.f32 %v3079, 1.0
    %v3082 = vrcp.pop %v3080
    %v3083 = vmul.f32 1.0, %v3082
    %v3084 = vrcp.pop %v3081
    %v3085 = vmul.f32 1.0, %v3084
    %v3086 = vlaneseq
    %v3087 = vshrl.u32 %v3086, 7
    %v3088 = vsub.s32 0, %v3087
    %v3089 = vrot.slane %v2824, %v3088
    %3091 = vrot.lane.b32.xlu0 %v3089, 64
    %v3092 = vpop.permute.xlu0 %3091
    %v3094 = vadd.f32 %v3065, %v3092
    %v3096 = vrot.slane %v3094, 1
    %3097 = vrot.lane.b32.xlu0 %v3094, 64
    %v3098 = vpop.permute.xlu0 %3097
    %3099 = vrot.lane.b32.xlu0 %v3096, 64
    %v3100 = vpop.permute.xlu0 %3099
    %v3103 = vmul.f32 %v3083, %v3098
    %v3104 = vmul.f32 %v3085, %v3100
    %3107 = vrot.lane.b32.xlu0 %v3103, 64
    %v3108 = vpop.permute.xlu0 %3107
    %3109 = vrot.lane.b32.xlu0 %v3104, 64
    %v3110 = vpop.permute.xlu0 %3109
    %v3113 = vadd.f32 %v2817, %v3108
    %v3114 = vadd.f32 %v2818, %v3110
    %v3115 = vtanh.pop %v3113
    %v3116 = vtanh.pop %v3114
    %v3117 = vsub.f32 1.0, %v3083
    %v3118 = vsub.f32 1.0, %v3085
    %3121 = vrot.lane.b32.xlu0 %v3115, 96
    %v3122 = vpop.permute.xlu0 %3121
    %3123 = vrot.lane.b32.xlu0 %v3116, 96
    %v3124 = vpop.permute.xlu0 %3123
    %v3127 = vmul.f32 %v3117, %v3122
    %v3128 = vmul.f32 %v3118, %v3124
    %v3129 = vmul.f32 %v3083, 0.0
    %v3130 = vmul.f32 %v3085, 0.0
    %v3131 = vadd.f32 %v3127, %v3129
    %v3132 = vadd.f32 %v3128, %v3130
    %3135 = vrot.lane.b32.xlu0 %v3131, 96
    %v3136 = vpop.permute.xlu0 %3135
    %3137 = vrot.lane.b32.xlu0 %v3132, 96
    %v3138 = vpop.permute.xlu0 %3137
    %3141 = vst.msk [vmem:[#allocation2] sm:$0x1] %vm391, %v3136
    %3142 = vst.msk [vmem:[#allocation2 + $0x8] sm:$0x1] %vm391, %v3138
    %3143 = vmatprep.subr.mxu0 0.0
    %3144 = vmatpush1.msra.mxu0 0.0
    %3145 = vmatprep.subr.mxu0 0.0
    %3146 = vmatpush1.msra.mxu0 0.0
    %3147 = vmatprep.subr.mxu0 0.0
    %3148 = vmatpush1.msra.mxu0 0.0
    %3149 = vmatprep.subr.mxu0 0.0
    %3150 = vmatpush1.msra.mxu0 0.0
    %3151 = vmatprep.subr.mxu0 0.0
    %3152 = vmatpush1.msra.mxu0 0.0
    %3153 = vmatprep.subr.mxu0 0.0
    %3154 = vmatpush1.msra.mxu0 0.0
    %3155 = vmatprep.subr.mxu0 0.0
    %3156 = vmatpush1.msra.mxu0 0.0
    %3157 = vmatprep.subr.mxu0 0.0
    %3158 = vmatpush1.msra.mxu0 0.0
    %3159 = vmatprep.subr.mxu0 0.0
    %3160 = vmatpush1.msra.mxu0 0.0
    %3161 = vmatprep.subr.mxu0 0.0
    %3162 = vmatpush1.msra.mxu0 0.0
    %3163 = vmatprep.subr.mxu0 0.0
    %3164 = vmatpush1.msra.mxu0 0.0
    %3165 = vmatprep.subr.mxu0 0.0
    %3166 = vmatpush1.msra.mxu0 0.0
    %3167 = vmatprep.subr.mxu0 0.0
    %3168 = vmatpush1.msra.mxu0 %v2996
    %3169 = vmatprep.subr.mxu0 0.0
    %3170 = vmatpush1.msra.mxu0 %v2995
    %3171 = vmatprep.subr.mxu0 0.0
    %3172 = vmatpush1.msra.mxu0 %v2994
    %3173 = vmatprep.subr.mxu0 0.0
    %3174 = vmatpush1.msra.mxu0 %v2993
    %3175 = vmatprep.subr.mxu0 0.0
    %3176 = vmatpush2.msra.mxu0 0.0
    %3177 = vmatprep.subr.mxu0 0.0
    %3178 = vmatpush2.msra.mxu0 0.0
    %3179 = vmatprep.subr.mxu0 0.0
    %3180 = vmatpush2.msra.mxu0 0.0
    %3181 = vmatprep.subr.mxu0 0.0
    %3182 = vmatpush2.msra.mxu0 0.0
    %3183 = vmatprep.subr.mxu0 0.0
    %3184 = vmatpush2.msra.mxu0 0.0
    %3185 = vmatprep.subr.mxu0 0.0
    %3186 = vmatpush2.msra.mxu0 0.0
    %3187 = vmatprep.subr.mxu0 0.0
    %3188 = vmatpush2.msra.mxu0 0.0
    %3189 = vmatprep.subr.mxu0 0.0
    %3190 = vmatpush2.msra.mxu0 0.0
    %3191 = vmatprep.subr.mxu0 0.0
    %3192 = vmatpush2.msra.mxu0 0.0
    %3193 = vmatprep.subr.mxu0 0.0
    %3194 = vmatpush2.msra.mxu0 0.0
    %3195 = vmatprep.subr.mxu0 0.0
    %3196 = vmatpush2.msra.mxu0 0.0
    %3197 = vmatprep.subr.mxu0 0.0
    %3198 = vmatpush2.msra.mxu0 0.0
    %3199 = vmatprep.subr.mxu0 0.0
    %3200 = vmatpush2.msra.mxu0 0.0
    %3201 = vmatprep.subr.mxu0 0.0
    %3202 = vmatpush2.msra.mxu0 0.0
    %3203 = vmatprep.subr.mxu0 0.0
    %3204 = vmatpush2.msra.mxu0 0.0
    %3205 = vmatprep.subr.mxu0 0.0
    %3206 = vmatpush2.msra.mxu0 0.0
    %3207 = vmatprep.mubr.f32.mxu0 0.0
    %3208 = vmatmul.mubr.f32.gmra.mxu0 %v246
    %v3209 = vpop.f32.mrf.mxu0
    %v3210 = vadd.f32 0.0, %v3209
    %v3211 = vpop.f32.mrf.mxu0
    %3212 = vdwg.mxu0
    %v3214 = vrot.slane %v3210, 1
    %v3215 = vrot.slane %v3210, 2
    %v3218 = vadd.f32 %v2990, %v3214
    %v3219 = vadd.f32 %v2991, %v3215
    %v3220 = vxor.u32 %v3218, 2147483648
    %v3221 = vxor.u32 %v3219, 2147483648
    %v3222 = vmul.f32 %v3220, 1.442695
    %v3223 = vpow.pop %v3222
    %v3224 = vmul.f32 %v3221, 1.442695
    %v3225 = vpow.pop %v3224
    %v3226 = vadd.f32 %v3223, 1.0
    %v3227 = vadd.f32 %v3225, 1.0
    %v3228 = vrcp.pop %v3226
    %v3229 = vmul.f32 1.0, %v3228
    %v3230 = vrcp.pop %v3227
    %v3231 = vmul.f32 1.0, %v3230
    %v3232 = vlaneseq
    %v3233 = vshrl.u32 %v3232, 7
    %v3234 = vsub.s32 0, %v3233
    %v3235 = vrot.slane %v2997, %v3234
    %3237 = vrot.lane.b32.xlu0 %v3235, 64
    %v3238 = vpop.permute.xlu0 %3237
    %v3240 = vadd.f32 %v3210, %v3238
    %v3242 = vrot.slane %v3240, 1
    %v3243 = vrot.slane %v3240, 2
    %3244 = vrot.lane.b32.xlu0 %v3242, 64
    %v3245 = vpop.permute.xlu0 %3244
    %3246 = vrot.lane.b32.xlu0 %v3243, 64
    %v3247 = vpop.permute.xlu0 %3246
    %v3250 = vmul.f32 %v3229, %v3245
    %v3251 = vmul.f32 %v3231, %v3247
    %3254 = vrot.lane.b32.xlu0 %v3250, 64
    %v3255 = vpop.permute.xlu0 %3254
    %3256 = vrot.lane.b32.xlu0 %v3251, 64
    %v3257 = vpop.permute.xlu0 %3256
    %v3260 = vadd.f32 %v2990, %v3255
    %v3261 = vadd.f32 %v2991, %v3257
    %v3262 = vtanh.pop %v3260
    %v3263 = vtanh.pop %v3261
    %v3264 = vsub.f32 1.0, %v3229
    %v3265 = vsub.f32 1.0, %v3231
    %3268 = vrot.lane.b32.xlu0 %v3262, 96
    %v3269 = vpop.permute.xlu0 %3268
    %3270 = vrot.lane.b32.xlu0 %v3263, 96
    %v3271 = vpop.permute.xlu0 %3270
    %v3274 = vmul.f32 %v3264, %v3269
    %v3275 = vmul.f32 %v3265, %v3271
    %v3276 = vmul.f32 %v3229, 0.0
    %v3277 = vmul.f32 %v3231, 0.0
    %v3278 = vadd.f32 %v3274, %v3276
    %v3279 = vadd.f32 %v3275, %v3277
    %3282 = vrot.lane.b32.xlu0 %v3278, 96
    %v3283 = vpop.permute.xlu0 %3282
    %3284 = vrot.lane.b32.xlu0 %v3279, 96
    %v3285 = vpop.permute.xlu0 %3284
    %3288 = vst.msk [vmem:[#allocation3] sm:$0x80] %vm539, %v3283
    %3289 = vst.msk [vmem:[#allocation3 + $0x8] sm:$0x80] %vm539, %v3285
    %v3290 = vrot.slane %v3132, 7
    %v3291 = vsel %vm543, %v3290, %v3131
    %3292 = vrot.lane.b32.xlu0 %v3291, 96
    %v3293 = vpop.permute.xlu0 %3292
    %v3294 = vsel %vm244, %v3293, 0
    %3296 = vmatprep.subr.mxu0 0.0
    %3297 = vmatpush1.msra.mxu0 0.0
    %3298 = vmatprep.subr.mxu0 0.0
    %3299 = vmatpush1.msra.mxu0 0.0
    %3300 = vmatprep.subr.mxu0 0.0
    %3301 = vmatpush1.msra.mxu0 0.0
    %3302 = vmatprep.subr.mxu0 0.0
    %3303 = vmatpush1.msra.mxu0 0.0
    %3304 = vmatprep.subr.mxu0 0.0
    %3305 = vmatpush1.msra.mxu0 0.0
    %3306 = vmatprep.subr.mxu0 0.0
    %3307 = vmatpush1.msra.mxu0 0.0
    %3308 = vmatprep.subr.mxu0 0.0
    %3309 = vmatpush1.msra.mxu0 0.0
    %3310 = vmatprep.subr.mxu0 0.0
    %3311 = vmatpush1.msra.mxu0 0.0
    %3312 = vmatprep.subr.mxu0 0.0
    %3313 = vmatpush1.msra.mxu0 0.0
    %3314 = vmatprep.subr.mxu0 0.0
    %3315 = vmatpush1.msra.mxu0 0.0
    %3316 = vmatprep.subr.mxu0 0.0
    %3317 = vmatpush1.msra.mxu0 0.0
    %3318 = vmatprep.subr.mxu0 0.0
    %3319 = vmatpush1.msra.mxu0 0.0
    %3320 = vmatprep.subr.mxu0 0.0
    %3321 = vmatpush1.msra.mxu0 %v2823
    %3322 = vmatprep.subr.mxu0 0.0
    %3323 = vmatpush1.msra.mxu0 %v2822
    %3324 = vmatprep.subr.mxu0 0.0
    %3325 = vmatpush1.msra.mxu0 %v2821
    %3326 = vmatprep.subr.mxu0 0.0
    %3327 = vmatpush1.msra.mxu0 %v2820
    %3328 = vmatprep.subr.mxu0 0.0
    %3329 = vmatpush2.msra.mxu0 0.0
    %3330 = vmatprep.subr.mxu0 0.0
    %3331 = vmatpush2.msra.mxu0 0.0
    %3332 = vmatprep.subr.mxu0 0.0
    %3333 = vmatpush2.msra.mxu0 0.0
    %3334 = vmatprep.subr.mxu0 0.0
    %3335 = vmatpush2.msra.mxu0 0.0
    %3336 = vmatprep.subr.mxu0 0.0
    %3337 = vmatpush2.msra.mxu0 0.0
    %3338 = vmatprep.subr.mxu0 0.0
    %3339 = vmatpush2.msra.mxu0 0.0
    %3340 = vmatprep.subr.mxu0 0.0
    %3341 = vmatpush2.msra.mxu0 0.0
    %3342 = vmatprep.subr.mxu0 0.0
    %3343 = vmatpush2.msra.mxu0 0.0
    %3344 = vmatprep.subr.mxu0 0.0
    %3345 = vmatpush2.msra.mxu0 0.0
    %3346 = vmatprep.subr.mxu0 0.0
    %3347 = vmatpush2.msra.mxu0 0.0
    %3348 = vmatprep.subr.mxu0 0.0
    %3349 = vmatpush2.msra.mxu0 0.0
    %3350 = vmatprep.subr.mxu0 0.0
    %3351 = vmatpush2.msra.mxu0 0.0
    %3352 = vmatprep.subr.mxu0 0.0
    %3353 = vmatpush2.msra.mxu0 0.0
    %3354 = vmatprep.subr.mxu0 0.0
    %3355 = vmatpush2.msra.mxu0 0.0
    %3356 = vmatprep.subr.mxu0 0.0
    %3357 = vmatpush2.msra.mxu0 0.0
    %3358 = vmatprep.subr.mxu0 0.0
    %3359 = vmatpush2.msra.mxu0 0.0
    %3360 = vmatprep.mubr.f32.mxu0 0.0
    %3361 = vmatmul.mubr.f32.gmra.mxu0 %v3294
    %v3362 = vpop.f32.mrf.mxu0
    %v3363 = vadd.f32 0.0, %v3362
    %v3364 = vpop.f32.mrf.mxu0
    %3365 = vdwg.mxu0
    %v3367 = vrot.slane %v3363, 7
    %v3370 = vadd.f32 %v2817, %v3367
    %v3371 = vadd.f32 %v2818, %v3363
    %v3372 = vxor.u32 %v3370, 2147483648
    %v3373 = vxor.u32 %v3371, 2147483648
    %v3374 = vmul.f32 %v3372, 1.442695
    %v3375 = vpow.pop %v3374
    %v3376 = vmul.f32 %v3373, 1.442695
    %v3377 = vpow.pop %v3376
    %v3378 = vadd.f32 %v3375, 1.0
    %v3379 = vadd.f32 %v3377, 1.0
    %v3380 = vrcp.pop %v3378
    %v3381 = vmul.f32 1.0, %v3380
    %v3382 = vrcp.pop %v3379
    %v3383 = vmul.f32 1.0, %v3382
    %v3384 = vadd.f32 %v3363, %v3092
    %v3386 = vrot.slane %v3384, 7
    %3387 = vrot.lane.b32.xlu0 %v3386, 64
    %v3388 = vpop.permute.xlu0 %3387
    %3389 = vrot.lane.b32.xlu0 %v3384, 64
    %v3390 = vpop.permute.xlu0 %3389
    %v3393 = vmul.f32 %v3381, %v3388
    %v3394 = vmul.f32 %v3383, %v3390
    %3397 = vrot.lane.b32.xlu0 %v3393, 64
    %v3398 = vpop.permute.xlu0 %3397
    %3399 = vrot.lane.b32.xlu0 %v3394, 64
    %v3400 = vpop.permute.xlu0 %3399
    %v3403 = vadd.f32 %v2817, %v3398
    %v3404 = vadd.f32 %v2818, %v3400
    %v3405 = vtanh.pop %v3403
    %v3406 = vtanh.pop %v3404
    %v3407 = vsub.f32 1.0, %v3381
    %v3408 = vsub.f32 1.0, %v3383
    %3411 = vrot.lane.b32.xlu0 %v3405, 96
    %v3412 = vpop.permute.xlu0 %3411
    %3413 = vrot.lane.b32.xlu0 %v3406, 96
    %v3414 = vpop.permute.xlu0 %3413
    %v3417 = vmul.f32 %v3407, %v3412
    %v3418 = vmul.f32 %v3408, %v3414
    %v3419 = vrot.slane %v3131, 7
    %v3422 = vmul.f32 %v3381, %v3419
    %v3423 = vmul.f32 %v3383, %v3290
    %v3424 = vadd.f32 %v3417, %v3422
    %v3425 = vadd.f32 %v3418, %v3423
    %3428 = vrot.lane.b32.xlu0 %v3424, 96
    %v3429 = vpop.permute.xlu0 %3428
    %3430 = vrot.lane.b32.xlu0 %v3425, 96
    %v3431 = vpop.permute.xlu0 %3430
    %3434 = vst.msk [vmem:[#allocation2] sm:$0x2] %vm687, %v3429
    %3435 = vst.msk [vmem:[#allocation2 + $0x8] sm:$0x2] %vm687, %v3431
    %v3436 = vrot.slane %v3278, 7
    %v3437 = vrot.slane %v3279, 6
    %v3438 = vsel %vm543, %v3437, %v3436
    %3439 = vrot.lane.b32.xlu0 %v3438, 96
    %v3440 = vpop.permute.xlu0 %3439
    %v3441 = vsel %vm244, %v3440, 0
    %3443 = vmatprep.subr.mxu0 0.0
    %3444 = vmatpush1.msra.mxu0 0.0
    %3445 = vmatprep.subr.mxu0 0.0
    %3446 = vmatpush1.msra.mxu0 0.0
    %3447 = vmatprep.subr.mxu0 0.0
    %3448 = vmatpush1.msra.mxu0 0.0
    %3449 = vmatprep.subr.mxu0 0.0
    %3450 = vmatpush1.msra.mxu0 0.0
    %3451 = vmatprep.subr.mxu0 0.0
    %3452 = vmatpush1.msra.mxu0 0.0
    %3453 = vmatprep.subr.mxu0 0.0
    %3454 = vmatpush1.msra.mxu0 0.0
    %3455 = vmatprep.subr.mxu0 0.0
    %3456 = vmatpush1.msra.mxu0 0.0
    %3457 = vmatprep.subr.mxu0 0.0
    %3458 = vmatpush1.msra.mxu0 0.0
    %3459 = vmatprep.subr.mxu0 0.0
    %3460 = vmatpush1.msra.mxu0 0.0
    %3461 = vmatprep.subr.mxu0 0.0
    %3462 = vmatpush1.msra.mxu0 0.0
    %3463 = vmatprep.subr.mxu0 0.0
    %3464 = vmatpush1.msra.mxu0 0.0
    %3465 = vmatprep.subr.mxu0 0.0
    %3466 = vmatpush1.msra.mxu0 0.0
    %3467 = vmatprep.subr.mxu0 0.0
    %3468 = vmatpush1.msra.mxu0 %v2996
    %3469 = vmatprep.subr.mxu0 0.0
    %3470 = vmatpush1.msra.mxu0 %v2995
    %3471 = vmatprep.subr.mxu0 0.0
    %3472 = vmatpush1.msra.mxu0 %v2994
    %3473 = vmatprep.subr.mxu0 0.0
    %3474 = vmatpush1.msra.mxu0 %v2993
    %3475 = vmatprep.subr.mxu0 0.0
    %3476 = vmatpush2.msra.mxu0 0.0
    %3477 = vmatprep.subr.mxu0 0.0
    %3478 = vmatpush2.msra.mxu0 0.0
    %3479 = vmatprep.subr.mxu0 0.0
    %3480 = vmatpush2.msra.mxu0 0.0
    %3481 = vmatprep.subr.mxu0 0.0
    %3482 = vmatpush2.msra.mxu0 0.0
    %3483 = vmatprep.subr.mxu0 0.0
    %3484 = vmatpush2.msra.mxu0 0.0
    %3485 = vmatprep.subr.mxu0 0.0
    %3486 = vmatpush2.msra.mxu0 0.0
    %3487 = vmatprep.subr.mxu0 0.0
    %3488 = vmatpush2.msra.mxu0 0.0
    %3489 = vmatprep.subr.mxu0 0.0
    %3490 = vmatpush2.msra.mxu0 0.0
    %3491 = vmatprep.subr.mxu0 0.0
    %3492 = vmatpush2.msra.mxu0 0.0
    %3493 = vmatprep.subr.mxu0 0.0
    %3494 = vmatpush2.msra.mxu0 0.0
    %3495 = vmatprep.subr.mxu0 0.0
    %3496 = vmatpush2.msra.mxu0 0.0
    %3497 = vmatprep.subr.mxu0 0.0
    %3498 = vmatpush2.msra.mxu0 0.0
    %3499 = vmatprep.subr.mxu0 0.0
    %3500 = vmatpush2.msra.mxu0 0.0
    %3501 = vmatprep.subr.mxu0 0.0
    %3502 = vmatpush2.msra.mxu0 0.0
    %3503 = vmatprep.subr.mxu0 0.0
    %3504 = vmatpush2.msra.mxu0 0.0
    %3505 = vmatprep.subr.mxu0 0.0
    %3506 = vmatpush2.msra.mxu0 0.0
    %3507 = vmatprep.mubr.f32.mxu0 0.0
    %3508 = vmatmul.mubr.f32.gmra.mxu0 %v3441
    %v3509 = vpop.f32.mrf.mxu0
    %v3510 = vadd.f32 0.0, %v3509
    %v3511 = vpop.f32.mrf.mxu0
    %3512 = vdwg.mxu0
    %v3514 = vrot.slane %v3510, 2
    %v3515 = vrot.slane %v3510, 3
    %v3518 = vadd.f32 %v2990, %v3514
    %v3519 = vadd.f32 %v2991, %v3515
    %v3520 = vxor.u32 %v3518, 2147483648
    %v3521 = vxor.u32 %v3519, 2147483648
    %v3522 = vmul.f32 %v3520, 1.442695
    %v3523 = vpow.pop %v3522
    %v3524 = vmul.f32 %v3521, 1.442695
    %v3525 = vpow.pop %v3524
    %v3526 = vadd.f32 %v3523, 1.0
    %v3527 = vadd.f32 %v3525, 1.0
    %v3528 = vrcp.pop %v3526
    %v3529 = vmul.f32 1.0, %v3528
    %v3530 = vrcp.pop %v3527
    %v3531 = vmul.f32 1.0, %v3530
    %v3532 = vadd.f32 %v3510, %v3238
    %v3534 = vrot.slane %v3532, 2
    %v3535 = vrot.slane %v3532, 3
    %3536 = vrot.lane.b32.xlu0 %v3534, 64
    %v3537 = vpop.permute.xlu0 %3536
    %3538 = vrot.lane.b32.xlu0 %v3535, 64
    %v3539 = vpop.permute.xlu0 %3538
    %v3542 = vmul.f32 %v3529, %v3537
    %v3543 = vmul.f32 %v3531, %v3539
    %3546 = vrot.lane.b32.xlu0 %v3542, 64
    %v3547 = vpop.permute.xlu0 %3546
    %3548 = vrot.lane.b32.xlu0 %v3543, 64
    %v3549 = vpop.permute.xlu0 %3548
    %v3552 = vadd.f32 %v2990, %v3547
    %v3553 = vadd.f32 %v2991, %v3549
    %v3554 = vtanh.pop %v3552
    %v3555 = vtanh.pop %v3553
    %v3556 = vsub.f32 1.0, %v3529
    %v3557 = vsub.f32 1.0, %v3531
    %3560 = vrot.lane.b32.xlu0 %v3554, 96
    %v3561 = vpop.permute.xlu0 %3560
    %3562 = vrot.lane.b32.xlu0 %v3555, 96
    %v3563 = vpop.permute.xlu0 %3562
    %v3566 = vmul.f32 %v3556, %v3561
    %v3567 = vmul.f32 %v3557, %v3563
    %v3568 = vrot.slane %v3278, 1
    %v3569 = vrot.slane %v3279, 1
    %v3572 = vmul.f32 %v3529, %v3568
    %v3573 = vmul.f32 %v3531, %v3569
    %v3574 = vadd.f32 %v3566, %v3572
    %v3575 = vadd.f32 %v3567, %v3573
    %3578 = vrot.lane.b32.xlu0 %v3574, 96
    %v3579 = vpop.permute.xlu0 %3578
    %3580 = vrot.lane.b32.xlu0 %v3575, 96
    %v3581 = vpop.permute.xlu0 %3580
    %3584 = vst.msk [vmem:[#allocation3] sm:$0x40] %vm838, %v3579
    %3585 = vst.msk [vmem:[#allocation3 + $0x8] sm:$0x40] %vm838, %v3581
    %v3586 = vrot.slane %v3424, 1
    %v3587 = vsel %vm543, %v3425, %v3586
    %3588 = vrot.lane.b32.xlu0 %v3587, 96
    %v3589 = vpop.permute.xlu0 %3588
    %v3590 = vsel %vm244, %v3589, 0
    %3592 = vmatprep.subr.mxu0 0.0
    %3593 = vmatpush1.msra.mxu0 0.0
    %3594 = vmatprep.subr.mxu0 0.0
    %3595 = vmatpush1.msra.mxu0 0.0
    %3596 = vmatprep.subr.mxu0 0.0
    %3597 = vmatpush1.msra.mxu0 0.0
    %3598 = vmatprep.subr.mxu0 0.0
    %3599 = vmatpush1.msra.mxu0 0.0
    %3600 = vmatprep.subr.mxu0 0.0
    %3601 = vmatpush1.msra.mxu0 0.0
    %3602 = vmatprep.subr.mxu0 0.0
    %3603 = vmatpush1.msra.mxu0 0.0
    %3604 = vmatprep.subr.mxu0 0.0
    %3605 = vmatpush1.msra.mxu0 0.0
    %3606 = vmatprep.subr.mxu0 0.0
    %3607 = vmatpush1.msra.mxu0 0.0
    %3608 = vmatprep.subr.mxu0 0.0
    %3609 = vmatpush1.msra.mxu0 0.0
    %3610 = vmatprep.subr.mxu0 0.0
    %3611 = vmatpush1.msra.mxu0 0.0
    %3612 = vmatprep.subr.mxu0 0.0
    %3613 = vmatpush1.msra.mxu0 0.0
    %3614 = vmatprep.subr.mxu0 0.0
    %3615 = vmatpush1.msra.mxu0 0.0
    %3616 = vmatprep.subr.mxu0 0.0
    %3617 = vmatpush1.msra.mxu0 %v2823
    %3618 = vmatprep.subr.mxu0 0.0
    %3619 = vmatpush1.msra.mxu0 %v2822
    %3620 = vmatprep.subr.mxu0 0.0
    %3621 = vmatpush1.msra.mxu0 %v2821
    %3622 = vmatprep.subr.mxu0 0.0
    %3623 = vmatpush1.msra.mxu0 %v2820
    %3624 = vmatprep.subr.mxu0 0.0
    %3625 = vmatpush2.msra.mxu0 0.0
    %3626 = vmatprep.subr.mxu0 0.0
    %3627 = vmatpush2.msra.mxu0 0.0
    %3628 = vmatprep.subr.mxu0 0.0
    %3629 = vmatpush2.msra.mxu0 0.0
    %3630 = vmatprep.subr.mxu0 0.0
    %3631 = vmatpush2.msra.mxu0 0.0
    %3632 = vmatprep.subr.mxu0 0.0
    %3633 = vmatpush2.msra.mxu0 0.0
    %3634 = vmatprep.subr.mxu0 0.0
    %3635 = vmatpush2.msra.mxu0 0.0
    %3636 = vmatprep.subr.mxu0 0.0
    %3637 = vmatpush2.msra.mxu0 0.0
    %3638 = vmatprep.subr.mxu0 0.0
    %3639 = vmatpush2.msra.mxu0 0.0
    %3640 = vmatprep.subr.mxu0 0.0
    %3641 = vmatpush2.msra.mxu0 0.0
    %3642 = vmatprep.subr.mxu0 0.0
    %3643 = vmatpush2.msra.mxu0 0.0
    %3644 = vmatprep.subr.mxu0 0.0
    %3645 = vmatpush2.msra.mxu0 0.0
    %3646 = vmatprep.subr.mxu0 0.0
    %3647 = vmatpush2.msra.mxu0 0.0
    %3648 = vmatprep.subr.mxu0 0.0
    %3649 = vmatpush2.msra.mxu0 0.0
    %3650 = vmatprep.subr.mxu0 0.0
    %3651 = vmatpush2.msra.mxu0 0.0
    %3652 = vmatprep.subr.mxu0 0.0
    %3653 = vmatpush2.msra.mxu0 0.0
    %3654 = vmatprep.subr.mxu0 0.0
    %3655 = vmatpush2.msra.mxu0 0.0
    %3656 = vmatprep.mubr.f32.mxu0 0.0
    %3657 = vmatmul.mubr.f32.gmra.mxu0 %v3590
    %v3658 = vpop.f32.mrf.mxu0
    %v3659 = vadd.f32 0.0, %v3658
    %v3660 = vpop.f32.mrf.mxu0
    %3661 = vdwg.mxu0
    %v3663 = vrot.slane %v3659, 6
    %v3664 = vrot.slane %v3659, 7
    %v3667 = vadd.f32 %v2817, %v3663
    %v3668 = vadd.f32 %v2818, %v3664
    %v3669 = vxor.u32 %v3667, 2147483648
    %v3670 = vxor.u32 %v3668, 2147483648
    %v3671 = vmul.f32 %v3669, 1.442695
    %v3672 = vpow.pop %v3671
    %v3673 = vmul.f32 %v3670, 1.442695
    %v3674 = vpow.pop %v3673
    %v3675 = vadd.f32 %v3672, 1.0
    %v3676 = vadd.f32 %v3674, 1.0
    %v3677 = vrcp.pop %v3675
    %v3678 = vmul.f32 1.0, %v3677
    %v3679 = vrcp.pop %v3676
    %v3680 = vmul.f32 1.0, %v3679
    %v3681 = vadd.f32 %v3659, %v3092
    %v3683 = vrot.slane %v3681, 6
    %v3684 = vrot.slane %v3681, 7
    %3685 = vrot.lane.b32.xlu0 %v3683, 64
    %v3686 = vpop.permute.xlu0 %3685
    %3687 = vrot.lane.b32.xlu0 %v3684, 64
    %v3688 = vpop.permute.xlu0 %3687
    %v3691 = vmul.f32 %v3678, %v3686
    %v3692 = vmul.f32 %v3680, %v3688
    %3695 = vrot.lane.b32.xlu0 %v3691, 64
    %v3696 = vpop.permute.xlu0 %3695
    %3697 = vrot.lane.b32.xlu0 %v3692, 64
    %v3698 = vpop.permute.xlu0 %3697
    %v3701 = vadd.f32 %v2817, %v3696
    %v3702 = vadd.f32 %v2818, %v3698
    %v3703 = vtanh.pop %v3701
    %v3704 = vtanh.pop %v3702
    %v3705 = vsub.f32 1.0, %v3678
    %v3706 = vsub.f32 1.0, %v3680
    %3709 = vrot.lane.b32.xlu0 %v3703, 96
    %v3710 = vpop.permute.xlu0 %3709
    %3711 = vrot.lane.b32.xlu0 %v3704, 96
    %v3712 = vpop.permute.xlu0 %3711
    %v3715 = vmul.f32 %v3705, %v3710
    %v3716 = vmul.f32 %v3706, %v3712
    %v3717 = vrot.slane %v3424, 7
    %v3718 = vrot.slane %v3425, 7
    %v3721 = vmul.f32 %v3678, %v3717
    %v3722 = vmul.f32 %v3680, %v3718
    %v3723 = vadd.f32 %v3715, %v3721
    %v3724 = vadd.f32 %v3716, %v3722
    %3727 = vrot.lane.b32.xlu0 %v3723, 96
    %v3728 = vpop.permute.xlu0 %3727
    %3729 = vrot.lane.b32.xlu0 %v3724, 96
    %v3730 = vpop.permute.xlu0 %3729
    %3733 = vst.msk [vmem:[#allocation2] sm:$0x4] %vm988, %v3728
    %3734 = vst.msk [vmem:[#allocation2 + $0x8] sm:$0x4] %vm988, %v3730
    %v3735 = vrot.slane %v3574, 6
    %v3736 = vrot.slane %v3575, 5
    %v3737 = vsel %vm543, %v3736, %v3735
    %3738 = vrot.lane.b32.xlu0 %v3737, 96
    %v3739 = vpop.permute.xlu0 %3738
    %v3740 = vsel %vm244, %v3739, 0
    %3742 = vmatprep.subr.mxu0 0.0
    %3743 = vmatpush1.msra.mxu0 0.0
    %3744 = vmatprep.subr.mxu0 0.0
    %3745 = vmatpush1.msra.mxu0 0.0
    %3746 = vmatprep.subr.mxu0 0.0
    %3747 = vmatpush1.msra.mxu0 0.0
    %3748 = vmatprep.subr.mxu0 0.0
    %3749 = vmatpush1.msra.mxu0 0.0
    %3750 = vmatprep.subr.mxu0 0.0
    %3751 = vmatpush1.msra.mxu0 0.0
    %3752 = vmatprep.subr.mxu0 0.0
    %3753 = vmatpush1.msra.mxu0 0.0
    %3754 = vmatprep.subr.mxu0 0.0
    %3755 = vmatpush1.msra.mxu0 0.0
    %3756 = vmatprep.subr.mxu0 0.0
    %3757 = vmatpush1.msra.mxu0 0.0
    %3758 = vmatprep.subr.mxu0 0.0
    %3759 = vmatpush1.msra.mxu0 0.0
    %3760 = vmatprep.subr.mxu0 0.0
    %3761 = vmatpush1.msra.mxu0 0.0
    %3762 = vmatprep.subr.mxu0 0.0
    %3763 = vmatpush1.msra.mxu0 0.0
    %3764 = vmatprep.subr.mxu0 0.0
    %3765 = vmatpush1.msra.mxu0 0.0
    %3766 = vmatprep.subr.mxu0 0.0
    %3767 = vmatpush1.msra.mxu0 %v2996
    %3768 = vmatprep.subr.mxu0 0.0
    %3769 = vmatpush1.msra.mxu0 %v2995
    %3770 = vmatprep.subr.mxu0 0.0
    %3771 = vmatpush1.msra.mxu0 %v2994
    %3772 = vmatprep.subr.mxu0 0.0
    %3773 = vmatpush1.msra.mxu0 %v2993
    %3774 = vmatprep.subr.mxu0 0.0
    %3775 = vmatpush2.msra.mxu0 0.0
    %3776 = vmatprep.subr.mxu0 0.0
    %3777 = vmatpush2.msra.mxu0 0.0
    %3778 = vmatprep.subr.mxu0 0.0
    %3779 = vmatpush2.msra.mxu0 0.0
    %3780 = vmatprep.subr.mxu0 0.0
    %3781 = vmatpush2.msra.mxu0 0.0
    %3782 = vmatprep.subr.mxu0 0.0
    %3783 = vmatpush2.msra.mxu0 0.0
    %3784 = vmatprep.subr.mxu0 0.0
    %3785 = vmatpush2.msra.mxu0 0.0
    %3786 = vmatprep.subr.mxu0 0.0
    %3787 = vmatpush2.msra.mxu0 0.0
    %3788 = vmatprep.subr.mxu0 0.0
    %3789 = vmatpush2.msra.mxu0 0.0
    %3790 = vmatprep.subr.mxu0 0.0
    %3791 = vmatpush2.msra.mxu0 0.0
    %3792 = vmatprep.subr.mxu0 0.0
    %3793 = vmatpush2.msra.mxu0 0.0
    %3794 = vmatprep.subr.mxu0 0.0
    %3795 = vmatpush2.msra.mxu0 0.0
    %3796 = vmatprep.subr.mxu0 0.0
    %3797 = vmatpush2.msra.mxu0 0.0
    %3798 = vmatprep.subr.mxu0 0.0
    %3799 = vmatpush2.msra.mxu0 0.0
    %3800 = vmatprep.subr.mxu0 0.0
    %3801 = vmatpush2.msra.mxu0 0.0
    %3802 = vmatprep.subr.mxu0 0.0
    %3803 = vmatpush2.msra.mxu0 0.0
    %3804 = vmatprep.subr.mxu0 0.0
    %3805 = vmatpush2.msra.mxu0 0.0
    %3806 = vmatprep.mubr.f32.mxu0 0.0
    %3807 = vmatmul.mubr.f32.gmra.mxu0 %v3740
    %v3808 = vpop.f32.mrf.mxu0
    %v3809 = vadd.f32 0.0, %v3808
    %v3810 = vpop.f32.mrf.mxu0
    %3811 = vdwg.mxu0
    %v3813 = vrot.slane %v3809, 3
    %v3814 = vrot.slane %v3809, 4
    %v3817 = vadd.f32 %v2990, %v3813
    %v3818 = vadd.f32 %v2991, %v3814
    %v3819 = vxor.u32 %v3817, 2147483648
    %v3820 = vxor.u32 %v3818, 2147483648
    %v3821 = vmul.f32 %v3819, 1.442695
    %v3822 = vpow.pop %v3821
    %v3823 = vmul.f32 %v3820, 1.442695
    %v3824 = vpow.pop %v3823
    %v3825 = vadd.f32 %v3822, 1.0
    %v3826 = vadd.f32 %v3824, 1.0
    %v3827 = vrcp.pop %v3825
    %v3828 = vmul.f32 1.0, %v3827
    %v3829 = vrcp.pop %v3826
    %v3830 = vmul.f32 1.0, %v3829
    %v3831 = vadd.f32 %v3809, %v3238
    %v3833 = vrot.slane %v3831, 3
    %v3834 = vrot.slane %v3831, 4
    %3835 = vrot.lane.b32.xlu0 %v3833, 64
    %v3836 = vpop.permute.xlu0 %3835
    %3837 = vrot.lane.b32.xlu0 %v3834, 64
    %v3838 = vpop.permute.xlu0 %3837
    %v3841 = vmul.f32 %v3828, %v3836
    %v3842 = vmul.f32 %v3830, %v3838
    %3845 = vrot.lane.b32.xlu0 %v3841, 64
    %v3846 = vpop.permute.xlu0 %3845
    %3847 = vrot.lane.b32.xlu0 %v3842, 64
    %v3848 = vpop.permute.xlu0 %3847
    %v3851 = vadd.f32 %v2990, %v3846
    %v3852 = vadd.f32 %v2991, %v3848
    %v3853 = vtanh.pop %v3851
    %v3854 = vtanh.pop %v3852
    %v3855 = vsub.f32 1.0, %v3828
    %v3856 = vsub.f32 1.0, %v3830
    %3859 = vrot.lane.b32.xlu0 %v3853, 96
    %v3860 = vpop.permute.xlu0 %3859
    %3861 = vrot.lane.b32.xlu0 %v3854, 96
    %v3862 = vpop.permute.xlu0 %3861
    %v3865 = vmul.f32 %v3855, %v3860
    %v3866 = vmul.f32 %v3856, %v3862
    %v3867 = vrot.slane %v3574, 1
    %v3868 = vrot.slane %v3575, 1
    %v3871 = vmul.f32 %v3828, %v3867
    %v3872 = vmul.f32 %v3830, %v3868
    %v3873 = vadd.f32 %v3865, %v3871
    %v3874 = vadd.f32 %v3866, %v3872
    %3877 = vrot.lane.b32.xlu0 %v3873, 96
    %v3878 = vpop.permute.xlu0 %3877
    %3879 = vrot.lane.b32.xlu0 %v3874, 96
    %v3880 = vpop.permute.xlu0 %3879
    %3883 = vst.msk [vmem:[#allocation3] sm:$0x20] %vm1139, %v3878
    %3884 = vst.msk [vmem:[#allocation3 + $0x8] sm:$0x20] %vm1139, %v3880
    %v3885 = vrot.slane %v3723, 2
    %v3886 = vrot.slane %v3724, 1
    %v3887 = vsel %vm543, %v3886, %v3885
    %3888 = vrot.lane.b32.xlu0 %v3887, 96
    %v3889 = vpop.permute.xlu0 %3888
    %v3890 = vsel %vm244, %v3889, 0
    %3892 = vmatprep.subr.mxu0 0.0
    %3893 = vmatpush1.msra.mxu0 0.0
    %3894 = vmatprep.subr.mxu0 0.0
    %3895 = vmatpush1.msra.mxu0 0.0
    %3896 = vmatprep.subr.mxu0 0.0
    %3897 = vmatpush1.msra.mxu0 0.0
    %3898 = vmatprep.subr.mxu0 0.0
    %3899 = vmatpush1.msra.mxu0 0.0
    %3900 = vmatprep.subr.mxu0 0.0
    %3901 = vmatpush1.msra.mxu0 0.0
    %3902 = vmatprep.subr.mxu0 0.0
    %3903 = vmatpush1.msra.mxu0 0.0
    %3904 = vmatprep.subr.mxu0 0.0
    %3905 = vmatpush1.msra.mxu0 0.0
    %3906 = vmatprep.subr.mxu0 0.0
    %3907 = vmatpush1.msra.mxu0 0.0
    %3908 = vmatprep.subr.mxu0 0.0
    %3909 = vmatpush1.msra.mxu0 0.0
    %3910 = vmatprep.subr.mxu0 0.0
    %3911 = vmatpush1.msra.mxu0 0.0
    %3912 = vmatprep.subr.mxu0 0.0
    %3913 = vmatpush1.msra.mxu0 0.0
    %3914 = vmatprep.subr.mxu0 0.0
    %3915 = vmatpush1.msra.mxu0 0.0
    %3916 = vmatprep.subr.mxu0 0.0
    %3917 = vmatpush1.msra.mxu0 %v2823
    %3918 = vmatprep.subr.mxu0 0.0
    %3919 = vmatpush1.msra.mxu0 %v2822
    %3920 = vmatprep.subr.mxu0 0.0
    %3921 = vmatpush1.msra.mxu0 %v2821
    %3922 = vmatprep.subr.mxu0 0.0
    %3923 = vmatpush1.msra.mxu0 %v2820
    %3924 = vmatprep.subr.mxu0 0.0
    %3925 = vmatpush2.msra.mxu0 0.0
    %3926 = vmatprep.subr.mxu0 0.0
    %3927 = vmatpush2.msra.mxu0 0.0
    %3928 = vmatprep.subr.mxu0 0.0
    %3929 = vmatpush2.msra.mxu0 0.0
    %3930 = vmatprep.subr.mxu0 0.0
    %3931 = vmatpush2.msra.mxu0 0.0
    %3932 = vmatprep.subr.mxu0 0.0
    %3933 = vmatpush2.msra.mxu0 0.0
    %3934 = vmatprep.subr.mxu0 0.0
    %3935 = vmatpush2.msra.mxu0 0.0
    %3936 = vmatprep.subr.mxu0 0.0
    %3937 = vmatpush2.msra.mxu0 0.0
    %3938 = vmatprep.subr.mxu0 0.0
    %3939 = vmatpush2.msra.mxu0 0.0
    %3940 = vmatprep.subr.mxu0 0.0
    %3941 = vmatpush2.msra.mxu0 0.0
    %3942 = vmatprep.subr.mxu0 0.0
    %3943 = vmatpush2.msra.mxu0 0.0
    %3944 = vmatprep.subr.mxu0 0.0
    %3945 = vmatpush2.msra.mxu0 0.0
    %3946 = vmatprep.subr.mxu0 0.0
    %3947 = vmatpush2.msra.mxu0 0.0
    %3948 = vmatprep.subr.mxu0 0.0
    %3949 = vmatpush2.msra.mxu0 0.0
    %3950 = vmatprep.subr.mxu0 0.0
    %3951 = vmatpush2.msra.mxu0 0.0
    %3952 = vmatprep.subr.mxu0 0.0
    %3953 = vmatpush2.msra.mxu0 0.0
    %3954 = vmatprep.subr.mxu0 0.0
    %3955 = vmatpush2.msra.mxu0 0.0
    %3956 = vmatprep.mubr.f32.mxu0 0.0
    %3957 = vmatmul.mubr.f32.gmra.mxu0 %v3890
    %v3958 = vpop.f32.mrf.mxu0
    %v3959 = vadd.f32 0.0, %v3958
    %v3960 = vpop.f32.mrf.mxu0
    %3961 = vdwg.mxu0
    %v3963 = vrot.slane %v3959, 5
    %v3964 = vrot.slane %v3959, 6
    %v3967 = vadd.f32 %v2817, %v3963
    %v3968 = vadd.f32 %v2818, %v3964
    %v3969 = vxor.u32 %v3967, 2147483648
    %v3970 = vxor.u32 %v3968, 2147483648
    %v3971 = vmul.f32 %v3969, 1.442695
    %v3972 = vpow.pop %v3971
    %v3973 = vmul.f32 %v3970, 1.442695
    %v3974 = vpow.pop %v3973
    %v3975 = vadd.f32 %v3972, 1.0
    %v3976 = vadd.f32 %v3974, 1.0
    %v3977 = vrcp.pop %v3975
    %v3978 = vmul.f32 1.0, %v3977
    %v3979 = vrcp.pop %v3976
    %v3980 = vmul.f32 1.0, %v3979
    %v3981 = vadd.f32 %v3959, %v3092
    %v3983 = vrot.slane %v3981, 5
    %v3984 = vrot.slane %v3981, 6
    %3985 = vrot.lane.b32.xlu0 %v3983, 64
    %v3986 = vpop.permute.xlu0 %3985
    %3987 = vrot.lane.b32.xlu0 %v3984, 64
    %v3988 = vpop.permute.xlu0 %3987
    %v3991 = vmul.f32 %v3978, %v3986
    %v3992 = vmul.f32 %v3980, %v3988
    %3995 = vrot.lane.b32.xlu0 %v3991, 64
    %v3996 = vpop.permute.xlu0 %3995
    %3997 = vrot.lane.b32.xlu0 %v3992, 64
    %v3998 = vpop.permute.xlu0 %3997
    %v4001 = vadd.f32 %v2817, %v3996
    %v4002 = vadd.f32 %v2818, %v3998
    %v4003 = vtanh.pop %v4001
    %v4004 = vtanh.pop %v4002
    %v4005 = vsub.f32 1.0, %v3978
    %v4006 = vsub.f32 1.0, %v3980
    %4009 = vrot.lane.b32.xlu0 %v4003, 96
    %v4010 = vpop.permute.xlu0 %4009
    %4011 = vrot.lane.b32.xlu0 %v4004, 96
    %v4012 = vpop.permute.xlu0 %4011
    %v4015 = vmul.f32 %v4005, %v4010
    %v4016 = vmul.f32 %v4006, %v4012
    %v4017 = vrot.slane %v3723, 7
    %v4018 = vrot.slane %v3724, 7
    %v4021 = vmul.f32 %v3978, %v4017
    %v4022 = vmul.f32 %v3980, %v4018
    %v4023 = vadd.f32 %v4015, %v4021
    %v4024 = vadd.f32 %v4016, %v4022
    %4027 = vrot.lane.b32.xlu0 %v4023, 96
    %v4028 = vpop.permute.xlu0 %4027
    %4029 = vrot.lane.b32.xlu0 %v4024, 96
    %v4030 = vpop.permute.xlu0 %4029
    %4033 = vst.msk [vmem:[#allocation2] sm:$0x8] %vm1290, %v4028
    %4034 = vst.msk [vmem:[#allocation2 + $0x8] sm:$0x8] %vm1290, %v4030
    %v4035 = vrot.slane %v3873, 5
    %v4036 = vrot.slane %v3874, 4
    %v4037 = vsel %vm543, %v4036, %v4035
    %4038 = vrot.lane.b32.xlu0 %v4037, 96
    %v4039 = vpop.permute.xlu0 %4038
    %v4040 = vsel %vm244, %v4039, 0
    %4042 = vmatprep.subr.mxu0 0.0
    %4043 = vmatpush1.msra.mxu0 0.0
    %4044 = vmatprep.subr.mxu0 0.0
    %4045 = vmatpush1.msra.mxu0 0.0
    %4046 = vmatprep.subr.mxu0 0.0
    %4047 = vmatpush1.msra.mxu0 0.0
    %4048 = vmatprep.subr.mxu0 0.0
    %4049 = vmatpush1.msra.mxu0 0.0
    %4050 = vmatprep.subr.mxu0 0.0
    %4051 = vmatpush1.msra.mxu0 0.0
    %4052 = vmatprep.subr.mxu0 0.0
    %4053 = vmatpush1.msra.mxu0 0.0
    %4054 = vmatprep.subr.mxu0 0.0
    %4055 = vmatpush1.msra.mxu0 0.0
    %4056 = vmatprep.subr.mxu0 0.0
    %4057 = vmatpush1.msra.mxu0 0.0
    %4058 = vmatprep.subr.mxu0 0.0
    %4059 = vmatpush1.msra.mxu0 0.0
    %4060 = vmatprep.subr.mxu0 0.0
    %4061 = vmatpush1.msra.mxu0 0.0
    %4062 = vmatprep.subr.mxu0 0.0
    %4063 = vmatpush1.msra.mxu0 0.0
    %4064 = vmatprep.subr.mxu0 0.0
    %4065 = vmatpush1.msra.mxu0 0.0
    %4066 = vmatprep.subr.mxu0 0.0
    %4067 = vmatpush1.msra.mxu0 %v2996
    %4068 = vmatprep.subr.mxu0 0.0
    %4069 = vmatpush1.msra.mxu0 %v2995
    %4070 = vmatprep.subr.mxu0 0.0
    %4071 = vmatpush1.msra.mxu0 %v2994
    %4072 = vmatprep.subr.mxu0 0.0
    %4073 = vmatpush1.msra.mxu0 %v2993
    %4074 = vmatprep.subr.mxu0 0.0
    %4075 = vmatpush2.msra.mxu0 0.0
    %4076 = vmatprep.subr.mxu0 0.0
    %4077 = vmatpush2.msra.mxu0 0.0
    %4078 = vmatprep.subr.mxu0 0.0
    %4079 = vmatpush2.msra.mxu0 0.0
    %4080 = vmatprep.subr.mxu0 0.0
    %4081 = vmatpush2.msra.mxu0 0.0
    %4082 = vmatprep.subr.mxu0 0.0
    %4083 = vmatpush2.msra.mxu0 0.0
    %4084 = vmatprep.subr.mxu0 0.0
    %4085 = vmatpush2.msra.mxu0 0.0
    %4086 = vmatprep.subr.mxu0 0.0
    %4087 = vmatpush2.msra.mxu0 0.0
    %4088 = vmatprep.subr.mxu0 0.0
    %4089 = vmatpush2.msra.mxu0 0.0
    %4090 = vmatprep.subr.mxu0 0.0
    %4091 = vmatpush2.msra.mxu0 0.0
    %4092 = vmatprep.subr.mxu0 0.0
    %4093 = vmatpush2.msra.mxu0 0.0
    %4094 = vmatprep.subr.mxu0 0.0
    %4095 = vmatpush2.msra.mxu0 0.0
    %4096 = vmatprep.subr.mxu0 0.0
    %4097 = vmatpush2.msra.mxu0 0.0
    %4098 = vmatprep.subr.mxu0 0.0
    %4099 = vmatpush2.msra.mxu0 0.0
    %4100 = vmatprep.subr.mxu0 0.0
    %4101 = vmatpush2.msra.mxu0 0.0
    %4102 = vmatprep.subr.mxu0 0.0
    %4103 = vmatpush2.msra.mxu0 0.0
    %4104 = vmatprep.subr.mxu0 0.0
    %4105 = vmatpush2.msra.mxu0 0.0
    %4106 = vmatprep.mubr.f32.mxu0 0.0
    %4107 = vmatmul.mubr.f32.gmra.mxu0 %v4040
    %v4108 = vpop.f32.mrf.mxu0
    %v4109 = vadd.f32 0.0, %v4108
    %v4110 = vpop.f32.mrf.mxu0
    %4111 = vdwg.mxu0
    %v4113 = vrot.slane %v4109, 4
    %v4114 = vrot.slane %v4109, 5
    %v4117 = vadd.f32 %v2990, %v4113
    %v4118 = vadd.f32 %v2991, %v4114
    %v4119 = vxor.u32 %v4117, 2147483648
    %v4120 = vxor.u32 %v4118, 2147483648
    %v4121 = vmul.f32 %v4119, 1.442695
    %v4122 = vpow.pop %v4121
    %v4123 = vmul.f32 %v4120, 1.442695
    %v4124 = vpow.pop %v4123
    %v4125 = vadd.f32 %v4122, 1.0
    %v4126 = vadd.f32 %v4124, 1.0
    %v4127 = vrcp.pop %v4125
    %v4128 = vmul.f32 1.0, %v4127
    %v4129 = vrcp.pop %v4126
    %v4130 = vmul.f32 1.0, %v4129
    %v4131 = vadd.f32 %v4109, %v3238
    %v4133 = vrot.slane %v4131, 4
    %v4134 = vrot.slane %v4131, 5
    %4135 = vrot.lane.b32.xlu0 %v4133, 64
    %v4136 = vpop.permute.xlu0 %4135
    %4137 = vrot.lane.b32.xlu0 %v4134, 64
    %v4138 = vpop.permute.xlu0 %4137
    %v4141 = vmul.f32 %v4128, %v4136
    %v4142 = vmul.f32 %v4130, %v4138
    %4145 = vrot.lane.b32.xlu0 %v4141, 64
    %v4146 = vpop.permute.xlu0 %4145
    %4147 = vrot.lane.b32.xlu0 %v4142, 64
    %v4148 = vpop.permute.xlu0 %4147
    %v4151 = vadd.f32 %v2990, %v4146
    %v4152 = vadd.f32 %v2991, %v4148
    %v4153 = vtanh.pop %v4151
    %v4154 = vtanh.pop %v4152
    %v4155 = vsub.f32 1.0, %v4128
    %v4156 = vsub.f32 1.0, %v4130
    %4159 = vrot.lane.b32.xlu0 %v4153, 96
    %v4160 = vpop.permute.xlu0 %4159
    %4161 = vrot.lane.b32.xlu0 %v4154, 96
    %v4162 = vpop.permute.xlu0 %4161
    %v4165 = vmul.f32 %v4155, %v4160
    %v4166 = vmul.f32 %v4156, %v4162
    %v4167 = vrot.slane %v3873, 1
    %v4168 = vrot.slane %v3874, 1
    %v4171 = vmul.f32 %v4128, %v4167
    %v4172 = vmul.f32 %v4130, %v4168
    %v4173 = vadd.f32 %v4165, %v4171
    %v4174 = vadd.f32 %v4166, %v4172
    %4177 = vrot.lane.b32.xlu0 %v4173, 96
    %v4178 = vpop.permute.xlu0 %4177
    %4179 = vrot.lane.b32.xlu0 %v4174, 96
    %v4180 = vpop.permute.xlu0 %4179
    %4183 = vst.msk [vmem:[#allocation3] sm:$0x10] %vm1441, %v4178
    %4184 = vst.msk [vmem:[#allocation3 + $0x8] sm:$0x10] %vm1441, %v4180
    %v4185 = vrot.slane %v4023, 3
    %v4186 = vrot.slane %v4024, 2
    %v4187 = vsel %vm543, %v4186, %v4185
    %4188 = vrot.lane.b32.xlu0 %v4187, 96
    %v4189 = vpop.permute.xlu0 %4188
    %v4190 = vsel %vm244, %v4189, 0
    %4192 = vmatprep.subr.mxu0 0.0
    %4193 = vmatpush1.msra.mxu0 0.0
    %4194 = vmatprep.subr.mxu0 0.0
    %4195 = vmatpush1.msra.mxu0 0.0
    %4196 = vmatprep.subr.mxu0 0.0
    %4197 = vmatpush1.msra.mxu0 0.0
    %4198 = vmatprep.subr.mxu0 0.0
    %4199 = vmatpush1.msra.mxu0 0.0
    %4200 = vmatprep.subr.mxu0 0.0
    %4201 = vmatpush1.msra.mxu0 0.0
    %4202 = vmatprep.subr.mxu0 0.0
    %4203 = vmatpush1.msra.mxu0 0.0
    %4204 = vmatprep.subr.mxu0 0.0
    %4205 = vmatpush1.msra.mxu0 0.0
    %4206 = vmatprep.subr.mxu0 0.0
    %4207 = vmatpush1.msra.mxu0 0.0
    %4208 = vmatprep.subr.mxu0 0.0
    %4209 = vmatpush1.msra.mxu0 0.0
    %4210 = vmatprep.subr.mxu0 0.0
    %4211 = vmatpush1.msra.mxu0 0.0
    %4212 = vmatprep.subr.mxu0 0.0
    %4213 = vmatpush1.msra.mxu0 0.0
    %4214 = vmatprep.subr.mxu0 0.0
    %4215 = vmatpush1.msra.mxu0 0.0
    %4216 = vmatprep.subr.mxu0 0.0
    %4217 = vmatpush1.msra.mxu0 %v2823
    %4218 = vmatprep.subr.mxu0 0.0
    %4219 = vmatpush1.msra.mxu0 %v2822
    %4220 = vmatprep.subr.mxu0 0.0
    %4221 = vmatpush1.msra.mxu0 %v2821
    %4222 = vmatprep.subr.mxu0 0.0
    %4223 = vmatpush1.msra.mxu0 %v2820
    %4224 = vmatprep.subr.mxu0 0.0
    %4225 = vmatpush2.msra.mxu0 0.0
    %4226 = vmatprep.subr.mxu0 0.0
    %4227 = vmatpush2.msra.mxu0 0.0
    %4228 = vmatprep.subr.mxu0 0.0
    %4229 = vmatpush2.msra.mxu0 0.0
    %4230 = vmatprep.subr.mxu0 0.0
    %4231 = vmatpush2.msra.mxu0 0.0
    %4232 = vmatprep.subr.mxu0 0.0
    %4233 = vmatpush2.msra.mxu0 0.0
    %4234 = vmatprep.subr.mxu0 0.0
    %4235 = vmatpush2.msra.mxu0 0.0
    %4236 = vmatprep.subr.mxu0 0.0
    %4237 = vmatpush2.msra.mxu0 0.0
    %4238 = vmatprep.subr.mxu0 0.0
    %4239 = vmatpush2.msra.mxu0 0.0
    %4240 = vmatprep.subr.mxu0 0.0
    %4241 = vmatpush2.msra.mxu0 0.0
    %4242 = vmatprep.subr.mxu0 0.0
    %4243 = vmatpush2.msra.mxu0 0.0
    %4244 = vmatprep.subr.mxu0 0.0
    %4245 = vmatpush2.msra.mxu0 0.0
    %4246 = vmatprep.subr.mxu0 0.0
    %4247 = vmatpush2.msra.mxu0 0.0
    %4248 = vmatprep.subr.mxu0 0.0
    %4249 = vmatpush2.msra.mxu0 0.0
    %4250 = vmatprep.subr.mxu0 0.0
    %4251 = vmatpush2.msra.mxu0 0.0
    %4252 = vmatprep.subr.mxu0 0.0
    %4253 = vmatpush2.msra.mxu0 0.0
    %4254 = vmatprep.subr.mxu0 0.0
    %4255 = vmatpush2.msra.mxu0 0.0
    %4256 = vmatprep.mubr.f32.mxu0 0.0
    %4257 = vmatmul.mubr.f32.gmra.mxu0 %v4190
    %v4258 = vpop.f32.mrf.mxu0
    %v4259 = vadd.f32 0.0, %v4258
    %v4260 = vpop.f32.mrf.mxu0
    %4261 = vdwg.mxu0
    %v4263 = vrot.slane %v4259, 4
    %v4264 = vrot.slane %v4259, 5
    %v4267 = vadd.f32 %v2817, %v4263
    %v4268 = vadd.f32 %v2818, %v4264
    %v4269 = vxor.u32 %v4267, 2147483648
    %v4270 = vxor.u32 %v4268, 2147483648
    %v4271 = vmul.f32 %v4269, 1.442695
    %v4272 = vpow.pop %v4271
    %v4273 = vmul.f32 %v4270, 1.442695
    %v4274 = vpow.pop %v4273
    %v4275 = vadd.f32 %v4272, 1.0
    %v4276 = vadd.f32 %v4274, 1.0
    %v4277 = vrcp.pop %v4275
    %v4278 = vmul.f32 1.0, %v4277
    %v4279 = vrcp.pop %v4276
    %v4280 = vmul.f32 1.0, %v4279
    %v4281 = vadd.f32 %v4259, %v3092
    %v4283 = vrot.slane %v4281, 4
    %v4284 = vrot.slane %v4281, 5
    %4285 = vrot.lane.b32.xlu0 %v4283, 64
    %v4286 = vpop.permute.xlu0 %4285
    %4287 = vrot.lane.b32.xlu0 %v4284, 64
    %v4288 = vpop.permute.xlu0 %4287
    %v4291 = vmul.f32 %v4278, %v4286
    %v4292 = vmul.f32 %v4280, %v4288
    %4295 = vrot.lane.b32.xlu0 %v4291, 64
    %v4296 = vpop.permute.xlu0 %4295
    %4297 = vrot.lane.b32.xlu0 %v4292, 64
    %v4298 = vpop.permute.xlu0 %4297
    %v4301 = vadd.f32 %v2817, %v4296
    %v4302 = vadd.f32 %v2818, %v4298
    %v4303 = vtanh.pop %v4301
    %v4304 = vtanh.pop %v4302
    %v4305 = vsub.f32 1.0, %v4278
    %v4306 = vsub.f32 1.0, %v4280
    %4309 = vrot.lane.b32.xlu0 %v4303, 96
    %v4310 = vpop.permute.xlu0 %4309
    %4311 = vrot.lane.b32.xlu0 %v4304, 96
    %v4312 = vpop.permute.xlu0 %4311
    %v4315 = vmul.f32 %v4305, %v4310
    %v4316 = vmul.f32 %v4306, %v4312
    %v4317 = vrot.slane %v4023, 7
    %v4318 = vrot.slane %v4024, 7
    %v4321 = vmul.f32 %v4278, %v4317
    %v4322 = vmul.f32 %v4280, %v4318
    %v4323 = vadd.f32 %v4315, %v4321
    %v4324 = vadd.f32 %v4316, %v4322
    %4327 = vrot.lane.b32.xlu0 %v4323, 96
    %v4328 = vpop.permute.xlu0 %4327
    %4329 = vrot.lane.b32.xlu0 %v4324, 96
    %v4330 = vpop.permute.xlu0 %4329
    %4333 = vst.msk [vmem:[#allocation2] sm:$0x10] %vm1441, %v4328
    %4334 = vst.msk [vmem:[#allocation2 + $0x8] sm:$0x10] %vm1441, %v4330
    %v4335 = vrot.slane %v4173, 4
    %v4336 = vrot.slane %v4174, 3
    %v4337 = vsel %vm543, %v4336, %v4335
    %4338 = vrot.lane.b32.xlu0 %v4337, 96
    %v4339 = vpop.permute.xlu0 %4338
    %v4340 = vsel %vm244, %v4339, 0
    %4342 = vmatprep.subr.mxu0 0.0
    %4343 = vmatpush1.msra.mxu0 0.0
    %4344 = vmatprep.subr.mxu0 0.0
    %4345 = vmatpush1.msra.mxu0 0.0
    %4346 = vmatprep.subr.mxu0 0.0
    %4347 = vmatpush1.msra.mxu0 0.0
    %4348 = vmatprep.subr.mxu0 0.0
    %4349 = vmatpush1.msra.mxu0 0.0
    %4350 = vmatprep.subr.mxu0 0.0
    %4351 = vmatpush1.msra.mxu0 0.0
    %4352 = vmatprep.subr.mxu0 0.0
    %4353 = vmatpush1.msra.mxu0 0.0
    %4354 = vmatprep.subr.mxu0 0.0
    %4355 = vmatpush1.msra.mxu0 0.0
    %4356 = vmatprep.subr.mxu0 0.0
    %4357 = vmatpush1.msra.mxu0 0.0
    %4358 = vmatprep.subr.mxu0 0.0
    %4359 = vmatpush1.msra.mxu0 0.0
    %4360 = vmatprep.subr.mxu0 0.0
    %4361 = vmatpush1.msra.mxu0 0.0
    %4362 = vmatprep.subr.mxu0 0.0
    %4363 = vmatpush1.msra.mxu0 0.0
    %4364 = vmatprep.subr.mxu0 0.0
    %4365 = vmatpush1.msra.mxu0 0.0
    %4366 = vmatprep.subr.mxu0 0.0
    %4367 = vmatpush1.msra.mxu0 %v2996
    %4368 = vmatprep.subr.mxu0 0.0
    %4369 = vmatpush1.msra.mxu0 %v2995
    %4370 = vmatprep.subr.mxu0 0.0
    %4371 = vmatpush1.msra.mxu0 %v2994
    %4372 = vmatprep.subr.mxu0 0.0
    %4373 = vmatpush1.msra.mxu0 %v2993
    %4374 = vmatprep.subr.mxu0 0.0
    %4375 = vmatpush2.msra.mxu0 0.0
    %4376 = vmatprep.subr.mxu0 0.0
    %4377 = vmatpush2.msra.mxu0 0.0
    %4378 = vmatprep.subr.mxu0 0.0
    %4379 = vmatpush2.msra.mxu0 0.0
    %4380 = vmatprep.subr.mxu0 0.0
    %4381 = vmatpush2.msra.mxu0 0.0
    %4382 = vmatprep.subr.mxu0 0.0
    %4383 = vmatpush2.msra.mxu0 0.0
    %4384 = vmatprep.subr.mxu0 0.0
    %4385 = vmatpush2.msra.mxu0 0.0
    %4386 = vmatprep.subr.mxu0 0.0
    %4387 = vmatpush2.msra.mxu0 0.0
    %4388 = vmatprep.subr.mxu0 0.0
    %4389 = vmatpush2.msra.mxu0 0.0
    %4390 = vmatprep.subr.mxu0 0.0
    %4391 = vmatpush2.msra.mxu0 0.0
    %4392 = vmatprep.subr.mxu0 0.0
    %4393 = vmatpush2.msra.mxu0 0.0
    %4394 = vmatprep.subr.mxu0 0.0
    %4395 = vmatpush2.msra.mxu0 0.0
    %4396 = vmatprep.subr.mxu0 0.0
    %4397 = vmatpush2.msra.mxu0 0.0
    %4398 = vmatprep.subr.mxu0 0.0
    %4399 = vmatpush2.msra.mxu0 0.0
    %4400 = vmatprep.subr.mxu0 0.0
    %4401 = vmatpush2.msra.mxu0 0.0
    %4402 = vmatprep.subr.mxu0 0.0
    %4403 = vmatpush2.msra.mxu0 0.0
    %4404 = vmatprep.subr.mxu0 0.0
    %4405 = vmatpush2.msra.mxu0 0.0
    %4406 = vmatprep.mubr.f32.mxu0 0.0
    %4407 = vmatmul.mubr.f32.gmra.mxu0 %v4340
    %v4408 = vpop.f32.mrf.mxu0
    %v4409 = vadd.f32 0.0, %v4408
    %v4410 = vpop.f32.mrf.mxu0
    %4411 = vdwg.mxu0
    %v4413 = vrot.slane %v4409, 5
    %v4414 = vrot.slane %v4409, 6
    %v4417 = vadd.f32 %v2990, %v4413
    %v4418 = vadd.f32 %v2991, %v4414
    %v4419 = vxor.u32 %v4417, 2147483648
    %v4420 = vxor.u32 %v4418, 2147483648
    %v4421 = vmul.f32 %v4419, 1.442695
    %v4422 = vpow.pop %v4421
    %v4423 = vmul.f32 %v4420, 1.442695
    %v4424 = vpow.pop %v4423
    %v4425 = vadd.f32 %v4422, 1.0
    %v4426 = vadd.f32 %v4424, 1.0
    %v4427 = vrcp.pop %v4425
    %v4428 = vmul.f32 1.0, %v4427
    %v4429 = vrcp.pop %v4426
    %v4430 = vmul.f32 1.0, %v4429
    %v4431 = vadd.f32 %v4409, %v3238
    %v4433 = vrot.slane %v4431, 5
    %v4434 = vrot.slane %v4431, 6
    %4435 = vrot.lane.b32.xlu0 %v4433, 64
    %v4436 = vpop.permute.xlu0 %4435
    %4437 = vrot.lane.b32.xlu0 %v4434, 64
    %v4438 = vpop.permute.xlu0 %4437
    %v4441 = vmul.f32 %v4428, %v4436
    %v4442 = vmul.f32 %v4430, %v4438
    %4445 = vrot.lane.b32.xlu0 %v4441, 64
    %v4446 = vpop.permute.xlu0 %4445
    %4447 = vrot.lane.b32.xlu0 %v4442, 64
    %v4448 = vpop.permute.xlu0 %4447
    %v4451 = vadd.f32 %v2990, %v4446
    %v4452 = vadd.f32 %v2991, %v4448
    %v4453 = vtanh.pop %v4451
    %v4454 = vtanh.pop %v4452
    %v4455 = vsub.f32 1.0, %v4428
    %v4456 = vsub.f32 1.0, %v4430
    %4459 = vrot.lane.b32.xlu0 %v4453, 96
    %v4460 = vpop.permute.xlu0 %4459
    %4461 = vrot.lane.b32.xlu0 %v4454, 96
    %v4462 = vpop.permute.xlu0 %4461
    %v4465 = vmul.f32 %v4455, %v4460
    %v4466 = vmul.f32 %v4456, %v4462
    %v4467 = vrot.slane %v4173, 1
    %v4468 = vrot.slane %v4174, 1
    %v4471 = vmul.f32 %v4428, %v4467
    %v4472 = vmul.f32 %v4430, %v4468
    %v4473 = vadd.f32 %v4465, %v4471
    %v4474 = vadd.f32 %v4466, %v4472
    %4477 = vrot.lane.b32.xlu0 %v4473, 96
    %v4478 = vpop.permute.xlu0 %4477
    %4479 = vrot.lane.b32.xlu0 %v4474, 96
    %v4480 = vpop.permute.xlu0 %4479
    %4483 = vst.msk [vmem:[#allocation3] sm:$0x8] %vm1290, %v4478
    %4484 = vst.msk [vmem:[#allocation3 + $0x8] sm:$0x8] %vm1290, %v4480
    %v4485 = vrot.slane %v4323, 4
    %v4486 = vrot.slane %v4324, 3
    %v4487 = vsel %vm543, %v4486, %v4485
    %4488 = vrot.lane.b32.xlu0 %v4487, 96
    %v4489 = vpop.permute.xlu0 %4488
    %v4490 = vsel %vm244, %v4489, 0
    %4492 = vmatprep.subr.mxu0 0.0
    %4493 = vmatpush1.msra.mxu0 0.0
    %4494 = vmatprep.subr.mxu0 0.0
    %4495 = vmatpush1.msra.mxu0 0.0
    %4496 = vmatprep.subr.mxu0 0.0
    %4497 = vmatpush1.msra.mxu0 0.0
    %4498 = vmatprep.subr.mxu0 0.0
    %4499 = vmatpush1.msra.mxu0 0.0
    %4500 = vmatprep.subr.mxu0 0.0
    %4501 = vmatpush1.msra.mxu0 0.0
    %4502 = vmatprep.subr.mxu0 0.0
    %4503 = vmatpush1.msra.mxu0 0.0
    %4504 = vmatprep.subr.mxu0 0.0
    %4505 = vmatpush1.msra.mxu0 0.0
    %4506 = vmatprep.subr.mxu0 0.0
    %4507 = vmatpush1.msra.mxu0 0.0
    %4508 = vmatprep.subr.mxu0 0.0
    %4509 = vmatpush1.msra.mxu0 0.0
    %4510 = vmatprep.subr.mxu0 0.0
    %4511 = vmatpush1.msra.mxu0 0.0
    %4512 = vmatprep.subr.mxu0 0.0
    %4513 = vmatpush1.msra.mxu0 0.0
    %4514 = vmatprep.subr.mxu0 0.0
    %4515 = vmatpush1.msra.mxu0 0.0
    %4516 = vmatprep.subr.mxu0 0.0
    %4517 = vmatpush1.msra.mxu0 %v2823
    %4518 = vmatprep.subr.mxu0 0.0
    %4519 = vmatpush1.msra.mxu0 %v2822
    %4520 = vmatprep.subr.mxu0 0.0
    %4521 = vmatpush1.msra.mxu0 %v2821
    %4522 = vmatprep.subr.mxu0 0.0
    %4523 = vmatpush1.msra.mxu0 %v2820
    %4524 = vmatprep.subr.mxu0 0.0
    %4525 = vmatpush2.msra.mxu0 0.0
    %4526 = vmatprep.subr.mxu0 0.0
    %4527 = vmatpush2.msra.mxu0 0.0
    %4528 = vmatprep.subr.mxu0 0.0
    %4529 = vmatpush2.msra.mxu0 0.0
    %4530 = vmatprep.subr.mxu0 0.0
    %4531 = vmatpush2.msra.mxu0 0.0
    %4532 = vmatprep.subr.mxu0 0.0
    %4533 = vmatpush2.msra.mxu0 0.0
    %4534 = vmatprep.subr.mxu0 0.0
    %4535 = vmatpush2.msra.mxu0 0.0
    %4536 = vmatprep.subr.mxu0 0.0
    %4537 = vmatpush2.msra.mxu0 0.0
    %4538 = vmatprep.subr.mxu0 0.0
    %4539 = vmatpush2.msra.mxu0 0.0
    %4540 = vmatprep.subr.mxu0 0.0
    %4541 = vmatpush2.msra.mxu0 0.0
    %4542 = vmatprep.subr.mxu0 0.0
    %4543 = vmatpush2.msra.mxu0 0.0
    %4544 = vmatprep.subr.mxu0 0.0
    %4545 = vmatpush2.msra.mxu0 0.0
    %4546 = vmatprep.subr.mxu0 0.0
    %4547 = vmatpush2.msra.mxu0 0.0
    %4548 = vmatprep.subr.mxu0 0.0
    %4549 = vmatpush2.msra.mxu0 0.0
    %4550 = vmatprep.subr.mxu0 0.0
    %4551 = vmatpush2.msra.mxu0 0.0
    %4552 = vmatprep.subr.mxu0 0.0
    %4553 = vmatpush2.msra.mxu0 0.0
    %4554 = vmatprep.subr.mxu0 0.0
    %4555 = vmatpush2.msra.mxu0 0.0
    %4556 = vmatprep.mubr.f32.mxu0 0.0
    %4557 = vmatmul.mubr.f32.gmra.mxu0 %v4490
    %v4558 = vpop.f32.mrf.mxu0
    %v4559 = vadd.f32 0.0, %v4558
    %v4560 = vpop.f32.mrf.mxu0
    %4561 = vdwg.mxu0
    %v4563 = vrot.slane %v4559, 3
    %v4564 = vrot.slane %v4559, 4
    %v4567 = vadd.f32 %v2817, %v4563
    %v4568 = vadd.f32 %v2818, %v4564
    %v4569 = vxor.u32 %v4567, 2147483648
    %v4570 = vxor.u32 %v4568, 2147483648
    %v4571 = vmul.f32 %v4569, 1.442695
    %v4572 = vpow.pop %v4571
    %v4573 = vmul.f32 %v4570, 1.442695
    %v4574 = vpow.pop %v4573
    %v4575 = vadd.f32 %v4572, 1.0
    %v4576 = vadd.f32 %v4574, 1.0
    %v4577 = vrcp.pop %v4575
    %v4578 = vmul.f32 1.0, %v4577
    %v4579 = vrcp.pop %v4576
    %v4580 = vmul.f32 1.0, %v4579
    %v4581 = vadd.f32 %v4559, %v3092
    %v4583 = vrot.slane %v4581, 3
    %v4584 = vrot.slane %v4581, 4
    %4585 = vrot.lane.b32.xlu0 %v4583, 64
    %v4586 = vpop.permute.xlu0 %4585
    %4587 = vrot.lane.b32.xlu0 %v4584, 64
    %v4588 = vpop.permute.xlu0 %4587
    %v4591 = vmul.f32 %v4578, %v4586
    %v4592 = vmul.f32 %v4580, %v4588
    %4595 = vrot.lane.b32.xlu0 %v4591, 64
    %v4596 = vpop.permute.xlu0 %4595
    %4597 = vrot.lane.b32.xlu0 %v4592, 64
    %v4598 = vpop.permute.xlu0 %4597
    %v4601 = vadd.f32 %v2817, %v4596
    %v4602 = vadd.f32 %v2818, %v4598
    %v4603 = vtanh.pop %v4601
    %v4604 = vtanh.pop %v4602
    %v4605 = vsub.f32 1.0, %v4578
    %v4606 = vsub.f32 1.0, %v4580
    %4609 = vrot.lane.b32.xlu0 %v4603, 96
    %v4610 = vpop.permute.xlu0 %4609
    %4611 = vrot.lane.b32.xlu0 %v4604, 96
    %v4612 = vpop.permute.xlu0 %4611
    %v4615 = vmul.f32 %v4605, %v4610
    %v4616 = vmul.f32 %v4606, %v4612
    %v4617 = vrot.slane %v4323, 7
    %v4618 = vrot.slane %v4324, 7
    %v4621 = vmul.f32 %v4578, %v4617
    %v4622 = vmul.f32 %v4580, %v4618
    %v4623 = vadd.f32 %v4615, %v4621
    %v4624 = vadd.f32 %v4616, %v4622
    %4627 = vrot.lane.b32.xlu0 %v4623, 96
    %v4628 = vpop.permute.xlu0 %4627
    %4629 = vrot.lane.b32.xlu0 %v4624, 96
    %v4630 = vpop.permute.xlu0 %4629
    %4633 = vst.msk [vmem:[#allocation2] sm:$0x20] %vm1139, %v4628
    %4634 = vst.msk [vmem:[#allocation2 + $0x8] sm:$0x20] %vm1139, %v4630
    %v4635 = vrot.slane %v4473, 3
    %v4636 = vrot.slane %v4474, 2
    %v4637 = vsel %vm543, %v4636, %v4635
    %4638 = vrot.lane.b32.xlu0 %v4637, 96
    %v4639 = vpop.permute.xlu0 %4638
    %v4640 = vsel %vm244, %v4639, 0
    %4642 = vmatprep.subr.mxu0 0.0
    %4643 = vmatpush1.msra.mxu0 0.0
    %4644 = vmatprep.subr.mxu0 0.0
    %4645 = vmatpush1.msra.mxu0 0.0
    %4646 = vmatprep.subr.mxu0 0.0
    %4647 = vmatpush1.msra.mxu0 0.0
    %4648 = vmatprep.subr.mxu0 0.0
    %4649 = vmatpush1.msra.mxu0 0.0
    %4650 = vmatprep.subr.mxu0 0.0
    %4651 = vmatpush1.msra.mxu0 0.0
    %4652 = vmatprep.subr.mxu0 0.0
    %4653 = vmatpush1.msra.mxu0 0.0
    %4654 = vmatprep.subr.mxu0 0.0
    %4655 = vmatpush1.msra.mxu0 0.0
    %4656 = vmatprep.subr.mxu0 0.0
    %4657 = vmatpush1.msra.mxu0 0.0
    %4658 = vmatprep.subr.mxu0 0.0
    %4659 = vmatpush1.msra.mxu0 0.0
    %4660 = vmatprep.subr.mxu0 0.0
    %4661 = vmatpush1.msra.mxu0 0.0
    %4662 = vmatprep.subr.mxu0 0.0
    %4663 = vmatpush1.msra.mxu0 0.0
    %4664 = vmatprep.subr.mxu0 0.0
    %4665 = vmatpush1.msra.mxu0 0.0
    %4666 = vmatprep.subr.mxu0 0.0
    %4667 = vmatpush1.msra.mxu0 %v2996
    %4668 = vmatprep.subr.mxu0 0.0
    %4669 = vmatpush1.msra.mxu0 %v2995
    %4670 = vmatprep.subr.mxu0 0.0
    %4671 = vmatpush1.msra.mxu0 %v2994
    %4672 = vmatprep.subr.mxu0 0.0
    %4673 = vmatpush1.msra.mxu0 %v2993
    %4674 = vmatprep.subr.mxu0 0.0
    %4675 = vmatpush2.msra.mxu0 0.0
    %4676 = vmatprep.subr.mxu0 0.0
    %4677 = vmatpush2.msra.mxu0 0.0
    %4678 = vmatprep.subr.mxu0 0.0
    %4679 = vmatpush2.msra.mxu0 0.0
    %4680 = vmatprep.subr.mxu0 0.0
    %4681 = vmatpush2.msra.mxu0 0.0
    %4682 = vmatprep.subr.mxu0 0.0
    %4683 = vmatpush2.msra.mxu0 0.0
    %4684 = vmatprep.subr.mxu0 0.0
    %4685 = vmatpush2.msra.mxu0 0.0
    %4686 = vmatprep.subr.mxu0 0.0
    %4687 = vmatpush2.msra.mxu0 0.0
    %4688 = vmatprep.subr.mxu0 0.0
    %4689 = vmatpush2.msra.mxu0 0.0
    %4690 = vmatprep.subr.mxu0 0.0
    %4691 = vmatpush2.msra.mxu0 0.0
    %4692 = vmatprep.subr.mxu0 0.0
    %4693 = vmatpush2.msra.mxu0 0.0
    %4694 = vmatprep.subr.mxu0 0.0
    %4695 = vmatpush2.msra.mxu0 0.0
    %4696 = vmatprep.subr.mxu0 0.0
    %4697 = vmatpush2.msra.mxu0 0.0
    %4698 = vmatprep.subr.mxu0 0.0
    %4699 = vmatpush2.msra.mxu0 0.0
    %4700 = vmatprep.subr.mxu0 0.0
    %4701 = vmatpush2.msra.mxu0 0.0
    %4702 = vmatprep.subr.mxu0 0.0
    %4703 = vmatpush2.msra.mxu0 0.0
    %4704 = vmatprep.subr.mxu0 0.0
    %4705 = vmatpush2.msra.mxu0 0.0
    %4706 = vmatprep.mubr.f32.mxu0 0.0
    %4707 = vmatmul.mubr.f32.gmra.mxu0 %v4640
    %v4708 = vpop.f32.mrf.mxu0
    %v4709 = vadd.f32 0.0, %v4708
    %v4710 = vpop.f32.mrf.mxu0
    %4711 = vdwg.mxu0
    %v4713 = vrot.slane %v4709, 6
    %v4714 = vrot.slane %v4709, 7
    %v4717 = vadd.f32 %v2990, %v4713
    %v4718 = vadd.f32 %v2991, %v4714
    %v4719 = vxor.u32 %v4717, 2147483648
    %v4720 = vxor.u32 %v4718, 2147483648
    %v4721 = vmul.f32 %v4719, 1.442695
    %v4722 = vpow.pop %v4721
    %v4723 = vmul.f32 %v4720, 1.442695
    %v4724 = vpow.pop %v4723
    %v4725 = vadd.f32 %v4722, 1.0
    %v4726 = vadd.f32 %v4724, 1.0
    %v4727 = vrcp.pop %v4725
    %v4728 = vmul.f32 1.0, %v4727
    %v4729 = vrcp.pop %v4726
    %v4730 = vmul.f32 1.0, %v4729
    %v4731 = vadd.f32 %v4709, %v3238
    %v4733 = vrot.slane %v4731, 6
    %v4734 = vrot.slane %v4731, 7
    %4735 = vrot.lane.b32.xlu0 %v4733, 64
    %v4736 = vpop.permute.xlu0 %4735
    %4737 = vrot.lane.b32.xlu0 %v4734, 64
    %v4738 = vpop.permute.xlu0 %4737
    %v4741 = vmul.f32 %v4728, %v4736
    %v4742 = vmul.f32 %v4730, %v4738
    %4745 = vrot.lane.b32.xlu0 %v4741, 64
    %v4746 = vpop.permute.xlu0 %4745
    %4747 = vrot.lane.b32.xlu0 %v4742, 64
    %v4748 = vpop.permute.xlu0 %4747
    %v4751 = vadd.f32 %v2990, %v4746
    %v4752 = vadd.f32 %v2991, %v4748
    %v4753 = vtanh.pop %v4751
    %v4754 = vtanh.pop %v4752
    %v4755 = vsub.f32 1.0, %v4728
    %v4756 = vsub.f32 1.0, %v4730
    %4759 = vrot.lane.b32.xlu0 %v4753, 96
    %v4760 = vpop.permute.xlu0 %4759
    %4761 = vrot.lane.b32.xlu0 %v4754, 96
    %v4762 = vpop.permute.xlu0 %4761
    %v4765 = vmul.f32 %v4755, %v4760
    %v4766 = vmul.f32 %v4756, %v4762
    %v4767 = vrot.slane %v4473, 1
    %v4768 = vrot.slane %v4474, 1
    %v4771 = vmul.f32 %v4728, %v4767
    %v4772 = vmul.f32 %v4730, %v4768
    %v4773 = vadd.f32 %v4765, %v4771
    %v4774 = vadd.f32 %v4766, %v4772
    %4777 = vrot.lane.b32.xlu0 %v4773, 96
    %v4778 = vpop.permute.xlu0 %4777
    %4779 = vrot.lane.b32.xlu0 %v4774, 96
    %v4780 = vpop.permute.xlu0 %4779
    %4783 = vst.msk [vmem:[#allocation3] sm:$0x4] %vm988, %v4778
    %4784 = vst.msk [vmem:[#allocation3 + $0x8] sm:$0x4] %vm988, %v4780
    %v4785 = vrot.slane %v4623, 5
    %v4786 = vrot.slane %v4624, 4
    %v4787 = vsel %vm543, %v4786, %v4785
    %4788 = vrot.lane.b32.xlu0 %v4787, 96
    %v4789 = vpop.permute.xlu0 %4788
    %v4790 = vsel %vm244, %v4789, 0
    %4792 = vmatprep.subr.mxu0 0.0
    %4793 = vmatpush1.msra.mxu0 0.0
    %4794 = vmatprep.subr.mxu0 0.0
    %4795 = vmatpush1.msra.mxu0 0.0
    %4796 = vmatprep.subr.mxu0 0.0
    %4797 = vmatpush1.msra.mxu0 0.0
    %4798 = vmatprep.subr.mxu0 0.0
    %4799 = vmatpush1.msra.mxu0 0.0
    %4800 = vmatprep.subr.mxu0 0.0
    %4801 = vmatpush1.msra.mxu0 0.0
    %4802 = vmatprep.subr.mxu0 0.0
    %4803 = vmatpush1.msra.mxu0 0.0
    %4804 = vmatprep.subr.mxu0 0.0
    %4805 = vmatpush1.msra.mxu0 0.0
    %4806 = vmatprep.subr.mxu0 0.0
    %4807 = vmatpush1.msra.mxu0 0.0
    %4808 = vmatprep.subr.mxu0 0.0
    %4809 = vmatpush1.msra.mxu0 0.0
    %4810 = vmatprep.subr.mxu0 0.0
    %4811 = vmatpush1.msra.mxu0 0.0
    %4812 = vmatprep.subr.mxu0 0.0
    %4813 = vmatpush1.msra.mxu0 0.0
    %4814 = vmatprep.subr.mxu0 0.0
    %4815 = vmatpush1.msra.mxu0 0.0
    %4816 = vmatprep.subr.mxu0 0.0
    %4817 = vmatpush1.msra.mxu0 %v2823
    %4818 = vmatprep.subr.mxu0 0.0
    %4819 = vmatpush1.msra.mxu0 %v2822
    %4820 = vmatprep.subr.mxu0 0.0
    %4821 = vmatpush1.msra.mxu0 %v2821
    %4822 = vmatprep.subr.mxu0 0.0
    %4823 = vmatpush1.msra.mxu0 %v2820
    %4824 = vmatprep.subr.mxu0 0.0
    %4825 = vmatpush2.msra.mxu0 0.0
    %4826 = vmatprep.subr.mxu0 0.0
    %4827 = vmatpush2.msra.mxu0 0.0
    %4828 = vmatprep.subr.mxu0 0.0
    %4829 = vmatpush2.msra.mxu0 0.0
    %4830 = vmatprep.subr.mxu0 0.0
    %4831 = vmatpush2.msra.mxu0 0.0
    %4832 = vmatprep.subr.mxu0 0.0
    %4833 = vmatpush2.msra.mxu0 0.0
    %4834 = vmatprep.subr.mxu0 0.0
    %4835 = vmatpush2.msra.mxu0 0.0
    %4836 = vmatprep.subr.mxu0 0.0
    %4837 = vmatpush2.msra.mxu0 0.0
    %4838 = vmatprep.subr.mxu0 0.0
    %4839 = vmatpush2.msra.mxu0 0.0
    %4840 = vmatprep.subr.mxu0 0.0
    %4841 = vmatpush2.msra.mxu0 0.0
    %4842 = vmatprep.subr.mxu0 0.0
    %4843 = vmatpush2.msra.mxu0 0.0
    %4844 = vmatprep.subr.mxu0 0.0
    %4845 = vmatpush2.msra.mxu0 0.0
    %4846 = vmatprep.subr.mxu0 0.0
    %4847 = vmatpush2.msra.mxu0 0.0
    %4848 = vmatprep.subr.mxu0 0.0
    %4849 = vmatpush2.msra.mxu0 0.0
    %4850 = vmatprep.subr.mxu0 0.0
    %4851 = vmatpush2.msra.mxu0 0.0
    %4852 = vmatprep.subr.mxu0 0.0
    %4853 = vmatpush2.msra.mxu0 0.0
    %4854 = vmatprep.subr.mxu0 0.0
    %4855 = vmatpush2.msra.mxu0 0.0
    %4856 = vmatprep.mubr.f32.mxu0 0.0
    %4857 = vmatmul.mubr.f32.gmra.mxu0 %v4790
    %v4858 = vpop.f32.mrf.mxu0
    %v4859 = vadd.f32 0.0, %v4858
    %v4860 = vpop.f32.mrf.mxu0
    %4861 = vdwg.mxu0
    %v4863 = vrot.slane %v4859, 2
    %v4864 = vrot.slane %v4859, 3
    %v4867 = vadd.f32 %v2817, %v4863
    %v4868 = vadd.f32 %v2818, %v4864
    %v4869 = vxor.u32 %v4867, 2147483648
    %v4870 = vxor.u32 %v4868, 2147483648
    %v4871 = vmul.f32 %v4869, 1.442695
    %v4872 = vpow.pop %v4871
    %v4873 = vmul.f32 %v4870, 1.442695
    %v4874 = vpow.pop %v4873
    %v4875 = vadd.f32 %v4872, 1.0
    %v4876 = vadd.f32 %v4874, 1.0
    %v4877 = vrcp.pop %v4875
    %v4878 = vmul.f32 1.0, %v4877
    %v4879 = vrcp.pop %v4876
    %v4880 = vmul.f32 1.0, %v4879
    %v4881 = vadd.f32 %v4859, %v3092
    %v4883 = vrot.slane %v4881, 2
    %v4884 = vrot.slane %v4881, 3
    %4885 = vrot.lane.b32.xlu0 %v4883, 64
    %v4886 = vpop.permute.xlu0 %4885
    %4887 = vrot.lane.b32.xlu0 %v4884, 64
    %v4888 = vpop.permute.xlu0 %4887
    %v4891 = vmul.f32 %v4878, %v4886
    %v4892 = vmul.f32 %v4880, %v4888
    %4895 = vrot.lane.b32.xlu0 %v4891, 64
    %v4896 = vpop.permute.xlu0 %4895
    %4897 = vrot.lane.b32.xlu0 %v4892, 64
    %v4898 = vpop.permute.xlu0 %4897
    %v4901 = vadd.f32 %v2817, %v4896
    %v4902 = vadd.f32 %v2818, %v4898
    %v4903 = vtanh.pop %v4901
    %v4904 = vtanh.pop %v4902
    %v4905 = vsub.f32 1.0, %v4878
    %v4906 = vsub.f32 1.0, %v4880
    %4909 = vrot.lane.b32.xlu0 %v4903, 96
    %v4910 = vpop.permute.xlu0 %4909
    %4911 = vrot.lane.b32.xlu0 %v4904, 96
    %v4912 = vpop.permute.xlu0 %4911
    %v4915 = vmul.f32 %v4905, %v4910
    %v4916 = vmul.f32 %v4906, %v4912
    %v4917 = vrot.slane %v4623, 7
    %v4918 = vrot.slane %v4624, 7
    %v4921 = vmul.f32 %v4878, %v4917
    %v4922 = vmul.f32 %v4880, %v4918
    %v4923 = vadd.f32 %v4915, %v4921
    %v4924 = vadd.f32 %v4916, %v4922
    %4927 = vrot.lane.b32.xlu0 %v4923, 96
    %v4928 = vpop.permute.xlu0 %4927
    %4929 = vrot.lane.b32.xlu0 %v4924, 96
    %v4930 = vpop.permute.xlu0 %4929
    %4933 = vst.msk [vmem:[#allocation2] sm:$0x40] %vm838, %v4928
    %4934 = vst.msk [vmem:[#allocation2 + $0x8] sm:$0x40] %vm838, %v4930
    %v4935 = vrot.slane %v4773, 2
    %v4936 = vrot.slane %v4774, 1
    %v4937 = vsel %vm543, %v4936, %v4935
    %4938 = vrot.lane.b32.xlu0 %v4937, 96
    %v4939 = vpop.permute.xlu0 %4938
    %v4940 = vsel %vm244, %v4939, 0
    %4942 = vmatprep.subr.mxu0 0.0
    %4943 = vmatpush1.msra.mxu0 0.0
    %4944 = vmatprep.subr.mxu0 0.0
    %4945 = vmatpush1.msra.mxu0 0.0
    %4946 = vmatprep.subr.mxu0 0.0
    %4947 = vmatpush1.msra.mxu0 0.0
    %4948 = vmatprep.subr.mxu0 0.0
    %4949 = vmatpush1.msra.mxu0 0.0
    %4950 = vmatprep.subr.mxu0 0.0
    %4951 = vmatpush1.msra.mxu0 0.0
    %4952 = vmatprep.subr.mxu0 0.0
    %4953 = vmatpush1.msra.mxu0 0.0
    %4954 = vmatprep.subr.mxu0 0.0
    %4955 = vmatpush1.msra.mxu0 0.0
    %4956 = vmatprep.subr.mxu0 0.0
    %4957 = vmatpush1.msra.mxu0 0.0
    %4958 = vmatprep.subr.mxu0 0.0
    %4959 = vmatpush1.msra.mxu0 0.0
    %4960 = vmatprep.subr.mxu0 0.0
    %4961 = vmatpush1.msra.mxu0 0.0
    %4962 = vmatprep.subr.mxu0 0.0
    %4963 = vmatpush1.msra.mxu0 0.0
    %4964 = vmatprep.subr.mxu0 0.0
    %4965 = vmatpush1.msra.mxu0 0.0
    %4966 = vmatprep.subr.mxu0 0.0
    %4967 = vmatpush1.msra.mxu0 %v2996
    %4968 = vmatprep.subr.mxu0 0.0
    %4969 = vmatpush1.msra.mxu0 %v2995
    %4970 = vmatprep.subr.mxu0 0.0
    %4971 = vmatpush1.msra.mxu0 %v2994
    %4972 = vmatprep.subr.mxu0 0.0
    %4973 = vmatpush1.msra.mxu0 %v2993
    %4974 = vmatprep.subr.mxu0 0.0
    %4975 = vmatpush2.msra.mxu0 0.0
    %4976 = vmatprep.subr.mxu0 0.0
    %4977 = vmatpush2.msra.mxu0 0.0
    %4978 = vmatprep.subr.mxu0 0.0
    %4979 = vmatpush2.msra.mxu0 0.0
    %4980 = vmatprep.subr.mxu0 0.0
    %4981 = vmatpush2.msra.mxu0 0.0
    %4982 = vmatprep.subr.mxu0 0.0
    %4983 = vmatpush2.msra.mxu0 0.0
    %4984 = vmatprep.subr.mxu0 0.0
    %4985 = vmatpush2.msra.mxu0 0.0
    %4986 = vmatprep.subr.mxu0 0.0
    %4987 = vmatpush2.msra.mxu0 0.0
    %4988 = vmatprep.subr.mxu0 0.0
    %4989 = vmatpush2.msra.mxu0 0.0
    %4990 = vmatprep.subr.mxu0 0.0
    %4991 = vmatpush2.msra.mxu0 0.0
    %4992 = vmatprep.subr.mxu0 0.0
    %4993 = vmatpush2.msra.mxu0 0.0
    %4994 = vmatprep.subr.mxu0 0.0
    %4995 = vmatpush2.msra.mxu0 0.0
    %4996 = vmatprep.subr.mxu0 0.0
    %4997 = vmatpush2.msra.mxu0 0.0
    %4998 = vmatprep.subr.mxu0 0.0
    %4999 = vmatpush2.msra.mxu0 0.0
    %5000 = vmatprep.subr.mxu0 0.0
    %5001 = vmatpush2.msra.mxu0 0.0
    %5002 = vmatprep.subr.mxu0 0.0
    %5003 = vmatpush2.msra.mxu0 0.0
    %5004 = vmatprep.subr.mxu0 0.0
    %5005 = vmatpush2.msra.mxu0 0.0
    %5006 = vmatprep.mubr.f32.mxu0 0.0
    %5007 = vmatmul.mubr.f32.gmra.mxu0 %v4940
    %v5008 = vpop.f32.mrf.mxu0
    %v5009 = vadd.f32 0.0, %v5008
    %v5010 = vpop.f32.mrf.mxu0
    %5011 = vdwg.mxu0
    %v5013 = vrot.slane %v5009, 7
    %v5016 = vadd.f32 %v2990, %v5013
    %v5017 = vadd.f32 %v2991, %v5009
    %v5018 = vxor.u32 %v5016, 2147483648
    %v5019 = vxor.u32 %v5017, 2147483648
    %v5020 = vmul.f32 %v5018, 1.442695
    %v5021 = vpow.pop %v5020
    %v5022 = vmul.f32 %v5019, 1.442695
    %v5023 = vpow.pop %v5022
    %v5024 = vadd.f32 %v5021, 1.0
    %v5025 = vadd.f32 %v5023, 1.0
    %v5026 = vrcp.pop %v5024
    %v5027 = vmul.f32 1.0, %v5026
    %v5028 = vrcp.pop %v5025
    %v5029 = vmul.f32 1.0, %v5028
    %v5030 = vadd.f32 %v5009, %v3238
    %v5032 = vrot.slane %v5030, 7
    %5033 = vrot.lane.b32.xlu0 %v5032, 64
    %v5034 = vpop.permute.xlu0 %5033
    %5035 = vrot.lane.b32.xlu0 %v5030, 64
    %v5036 = vpop.permute.xlu0 %5035
    %v5039 = vmul.f32 %v5027, %v5034
    %v5040 = vmul.f32 %v5029, %v5036
    %5043 = vrot.lane.b32.xlu0 %v5039, 64
    %v5044 = vpop.permute.xlu0 %5043
    %5045 = vrot.lane.b32.xlu0 %v5040, 64
    %v5046 = vpop.permute.xlu0 %5045
    %v5049 = vadd.f32 %v2990, %v5044
    %v5050 = vadd.f32 %v2991, %v5046
    %v5051 = vtanh.pop %v5049
    %v5052 = vtanh.pop %v5050
    %v5053 = vsub.f32 1.0, %v5027
    %v5054 = vsub.f32 1.0, %v5029
    %5057 = vrot.lane.b32.xlu0 %v5051, 96
    %v5058 = vpop.permute.xlu0 %5057
    %5059 = vrot.lane.b32.xlu0 %v5052, 96
    %v5060 = vpop.permute.xlu0 %5059
    %v5063 = vmul.f32 %v5053, %v5058
    %v5064 = vmul.f32 %v5054, %v5060
    %v5065 = vrot.slane %v4773, 1
    %v5068 = vmul.f32 %v5027, %v5065
    %v5069 = vmul.f32 %v5029, %v4936
    %v5070 = vadd.f32 %v5063, %v5068
    %v5071 = vadd.f32 %v5064, %v5069
    %5074 = vrot.lane.b32.xlu0 %v5070, 96
    %v5075 = vpop.permute.xlu0 %5074
    %5076 = vrot.lane.b32.xlu0 %v5071, 96
    %v5077 = vpop.permute.xlu0 %5076
    %5080 = vst.msk [vmem:[#allocation3] sm:$0x2] %vm687, %v5075
    %5081 = vst.msk [vmem:[#allocation3 + $0x8] sm:$0x2] %vm687, %v5077
    %v5082 = vrot.slane %v4923, 6
    %v5083 = vrot.slane %v4924, 5
    %v5084 = vsel %vm543, %v5083, %v5082
    %5085 = vrot.lane.b32.xlu0 %v5084, 96
    %v5086 = vpop.permute.xlu0 %5085
    %v5087 = vsel %vm244, %v5086, 0
    %5089 = vmatprep.subr.mxu0 0.0
    %5090 = vmatpush1.msra.mxu0 0.0
    %5091 = vmatprep.subr.mxu0 0.0
    %5092 = vmatpush1.msra.mxu0 0.0
    %5093 = vmatprep.subr.mxu0 0.0
    %5094 = vmatpush1.msra.mxu0 0.0
    %5095 = vmatprep.subr.mxu0 0.0
    %5096 = vmatpush1.msra.mxu0 0.0
    %5097 = vmatprep.subr.mxu0 0.0
    %5098 = vmatpush1.msra.mxu0 0.0
    %5099 = vmatprep.subr.mxu0 0.0
    %5100 = vmatpush1.msra.mxu0 0.0
    %5101 = vmatprep.subr.mxu0 0.0
    %5102 = vmatpush1.msra.mxu0 0.0
    %5103 = vmatprep.subr.mxu0 0.0
    %5104 = vmatpush1.msra.mxu0 0.0
    %5105 = vmatprep.subr.mxu0 0.0
    %5106 = vmatpush1.msra.mxu0 0.0
    %5107 = vmatprep.subr.mxu0 0.0
    %5108 = vmatpush1.msra.mxu0 0.0
    %5109 = vmatprep.subr.mxu0 0.0
    %5110 = vmatpush1.msra.mxu0 0.0
    %5111 = vmatprep.subr.mxu0 0.0
    %5112 = vmatpush1.msra.mxu0 0.0
    %5113 = vmatprep.subr.mxu0 0.0
    %5114 = vmatpush1.msra.mxu0 %v2823
    %5115 = vmatprep.subr.mxu0 0.0
    %5116 = vmatpush1.msra.mxu0 %v2822
    %5117 = vmatprep.subr.mxu0 0.0
    %5118 = vmatpush1.msra.mxu0 %v2821
    %5119 = vmatprep.subr.mxu0 0.0
    %5120 = vmatpush1.msra.mxu0 %v2820
    %5121 = vmatprep.subr.mxu0 0.0
    %5122 = vmatpush2.msra.mxu0 0.0
    %5123 = vmatprep.subr.mxu0 0.0
    %5124 = vmatpush2.msra.mxu0 0.0
    %5125 = vmatprep.subr.mxu0 0.0
    %5126 = vmatpush2.msra.mxu0 0.0
    %5127 = vmatprep.subr.mxu0 0.0
    %5128 = vmatpush2.msra.mxu0 0.0
    %5129 = vmatprep.subr.mxu0 0.0
    %5130 = vmatpush2.msra.mxu0 0.0
    %5131 = vmatprep.subr.mxu0 0.0
    %5132 = vmatpush2.msra.mxu0 0.0
    %5133 = vmatprep.subr.mxu0 0.0
    %5134 = vmatpush2.msra.mxu0 0.0
    %5135 = vmatprep.subr.mxu0 0.0
    %5136 = vmatpush2.msra.mxu0 0.0
    %5137 = vmatprep.subr.mxu0 0.0
    %5138 = vmatpush2.msra.mxu0 0.0
    %5139 = vmatprep.subr.mxu0 0.0
    %5140 = vmatpush2.msra.mxu0 0.0
    %5141 = vmatprep.subr.mxu0 0.0
    %5142 = vmatpush2.msra.mxu0 0.0
    %5143 = vmatprep.subr.mxu0 0.0
    %5144 = vmatpush2.msra.mxu0 0.0
    %5145 = vmatprep.subr.mxu0 0.0
    %5146 = vmatpush2.msra.mxu0 0.0
    %5147 = vmatprep.subr.mxu0 0.0
    %5148 = vmatpush2.msra.mxu0 0.0
    %5149 = vmatprep.subr.mxu0 0.0
    %5150 = vmatpush2.msra.mxu0 0.0
    %5151 = vmatprep.subr.mxu0 0.0
    %5152 = vmatpush2.msra.mxu0 0.0
    %5153 = vmatprep.mubr.f32.mxu0 0.0
    %5154 = vmatmul.mubr.f32.gmra.mxu0 %v5087
    %v5155 = vpop.f32.mrf.mxu0
    %v5156 = vadd.f32 0.0, %v5155
    %v5157 = vpop.f32.mrf.mxu0
    %5158 = vdwg.mxu0
    %v5160 = vrot.slane %v5156, 1
    %v5161 = vrot.slane %v5156, 2
    %v5164 = vadd.f32 %v2817, %v5160
    %v5165 = vadd.f32 %v2818, %v5161
    %v5166 = vxor.u32 %v5164, 2147483648
    %v5167 = vxor.u32 %v5165, 2147483648
    %v5168 = vmul.f32 %v5166, 1.442695
    %v5169 = vpow.pop %v5168
    %v5170 = vmul.f32 %v5167, 1.442695
    %v5171 = vpow.pop %v5170
    %v5172 = vadd.f32 %v5169, 1.0
    %v5173 = vadd.f32 %v5171, 1.0
    %v5174 = vrcp.pop %v5172
    %v5175 = vmul.f32 1.0, %v5174
    %v5176 = vrcp.pop %v5173
    %v5177 = vmul.f32 1.0, %v5176
    %v5178 = vadd.f32 %v5156, %v3092
    %v5180 = vrot.slane %v5178, 1
    %v5181 = vrot.slane %v5178, 2
    %5182 = vrot.lane.b32.xlu0 %v5180, 64
    %v5183 = vpop.permute.xlu0 %5182
    %5184 = vrot.lane.b32.xlu0 %v5181, 64
    %v5185 = vpop.permute.xlu0 %5184
    %v5188 = vmul.f32 %v5175, %v5183
    %v5189 = vmul.f32 %v5177, %v5185
    %5192 = vrot.lane.b32.xlu0 %v5188, 64
    %v5193 = vpop.permute.xlu0 %5192
    %5194 = vrot.lane.b32.xlu0 %v5189, 64
    %v5195 = vpop.permute.xlu0 %5194
    %v5198 = vadd.f32 %v2817, %v5193
    %v5199 = vadd.f32 %v2818, %v5195
    %v5200 = vtanh.pop %v5198
    %v5201 = vtanh.pop %v5199
    %v5202 = vsub.f32 1.0, %v5175
    %v5203 = vsub.f32 1.0, %v5177
    %5206 = vrot.lane.b32.xlu0 %v5200, 96
    %v5207 = vpop.permute.xlu0 %5206
    %5208 = vrot.lane.b32.xlu0 %v5201, 96
    %v5209 = vpop.permute.xlu0 %5208
    %v5212 = vmul.f32 %v5202, %v5207
    %v5213 = vmul.f32 %v5203, %v5209
    %v5214 = vrot.slane %v4923, 7
    %v5215 = vrot.slane %v4924, 7
    %v5218 = vmul.f32 %v5175, %v5214
    %v5219 = vmul.f32 %v5177, %v5215
    %v5220 = vadd.f32 %v5212, %v5218
    %v5221 = vadd.f32 %v5213, %v5219
    %5224 = vrot.lane.b32.xlu0 %v5220, 96
    %v5225 = vpop.permute.xlu0 %5224
    %5226 = vrot.lane.b32.xlu0 %v5221, 96
    %v5227 = vpop.permute.xlu0 %5226
    %5230 = vst.msk [vmem:[#allocation2] sm:$0x80] %vm539, %v5225
    %5231 = vst.msk [vmem:[#allocation2 + $0x8] sm:$0x80] %vm539, %v5227
    %v5232 = vrot.slane %v5070, 1
    %v5233 = vsel %vm543, %v5071, %v5232
    %5234 = vrot.lane.b32.xlu0 %v5233, 96
    %v5235 = vpop.permute.xlu0 %5234
    %v5236 = vsel %vm244, %v5235, 0
    %5238 = vmatprep.subr.mxu0 0.0
    %5239 = vmatpush1.msra.mxu0 0.0
    %5240 = vmatprep.subr.mxu0 0.0
    %5241 = vmatpush1.msra.mxu0 0.0
    %5242 = vmatprep.subr.mxu0 0.0
    %5243 = vmatpush1.msra.mxu0 0.0
    %5244 = vmatprep.subr.mxu0 0.0
    %5245 = vmatpush1.msra.mxu0 0.0
    %5246 = vmatprep.subr.mxu0 0.0
    %5247 = vmatpush1.msra.mxu0 0.0
    %5248 = vmatprep.subr.mxu0 0.0
    %5249 = vmatpush1.msra.mxu0 0.0
    %5250 = vmatprep.subr.mxu0 0.0
    %5251 = vmatpush1.msra.mxu0 0.0
    %5252 = vmatprep.subr.mxu0 0.0
    %5253 = vmatpush1.msra.mxu0 0.0
    %5254 = vmatprep.subr.mxu0 0.0
    %5255 = vmatpush1.msra.mxu0 0.0
    %5256 = vmatprep.subr.mxu0 0.0
    %5257 = vmatpush1.msra.mxu0 0.0
    %5258 = vmatprep.subr.mxu0 0.0
    %5259 = vmatpush1.msra.mxu0 0.0
    %5260 = vmatprep.subr.mxu0 0.0
    %5261 = vmatpush1.msra.mxu0 0.0
    %5262 = vmatprep.subr.mxu0 0.0
    %5263 = vmatpush1.msra.mxu0 %v2996
    %5264 = vmatprep.subr.mxu0 0.0
    %5265 = vmatpush1.msra.mxu0 %v2995
    %5266 = vmatprep.subr.mxu0 0.0
    %5267 = vmatpush1.msra.mxu0 %v2994
    %5268 = vmatprep.subr.mxu0 0.0
    %5269 = vmatpush1.msra.mxu0 %v2993
    %5270 = vmatprep.subr.mxu0 0.0
    %5271 = vmatpush2.msra.mxu0 0.0
    %5272 = vmatprep.subr.mxu0 0.0
    %5273 = vmatpush2.msra.mxu0 0.0
    %5274 = vmatprep.subr.mxu0 0.0
    %5275 = vmatpush2.msra.mxu0 0.0
    %5276 = vmatprep.subr.mxu0 0.0
    %5277 = vmatpush2.msra.mxu0 0.0
    %5278 = vmatprep.subr.mxu0 0.0
    %5279 = vmatpush2.msra.mxu0 0.0
    %5280 = vmatprep.subr.mxu0 0.0
    %5281 = vmatpush2.msra.mxu0 0.0
    %5282 = vmatprep.subr.mxu0 0.0
    %5283 = vmatpush2.msra.mxu0 0.0
    %5284 = vmatprep.subr.mxu0 0.0
    %5285 = vmatpush2.msra.mxu0 0.0
    %5286 = vmatprep.subr.mxu0 0.0
    %5287 = vmatpush2.msra.mxu0 0.0
    %5288 = vmatprep.subr.mxu0 0.0
    %5289 = vmatpush2.msra.mxu0 0.0
    %5290 = vmatprep.subr.mxu0 0.0
    %5291 = vmatpush2.msra.mxu0 0.0
    %5292 = vmatprep.subr.mxu0 0.0
    %5293 = vmatpush2.msra.mxu0 0.0
    %5294 = vmatprep.subr.mxu0 0.0
    %5295 = vmatpush2.msra.mxu0 0.0
    %5296 = vmatprep.subr.mxu0 0.0
    %5297 = vmatpush2.msra.mxu0 0.0
    %5298 = vmatprep.subr.mxu0 0.0
    %5299 = vmatpush2.msra.mxu0 0.0
    %5300 = vmatprep.subr.mxu0 0.0
    %5301 = vmatpush2.msra.mxu0 0.0
    %5302 = vmatprep.mubr.f32.mxu0 0.0
    %5303 = vmatmul.mubr.f32.gmra.mxu0 %v5236
    %v5304 = vpop.f32.mrf.mxu0
    %v5305 = vadd.f32 0.0, %v5304
    %v5306 = vpop.f32.mrf.mxu0
    %5307 = vdwg.mxu0
    %v5309 = vrot.slane %v5305, 1
    %v5312 = vadd.f32 %v2990, %v5305
    %v5313 = vadd.f32 %v2991, %v5309
    %v5314 = vxor.u32 %v5312, 2147483648
    %v5315 = vxor.u32 %v5313, 2147483648
    %v5316 = vmul.f32 %v5314, 1.442695
    %v5317 = vpow.pop %v5316
    %v5318 = vmul.f32 %v5315, 1.442695
    %v5319 = vpow.pop %v5318
    %v5320 = vadd.f32 %v5317, 1.0
    %v5321 = vadd.f32 %v5319, 1.0
    %v5322 = vrcp.pop %v5320
    %v5323 = vmul.f32 1.0, %v5322
    %v5324 = vrcp.pop %v5321
    %v5325 = vmul.f32 1.0, %v5324
    %v5326 = vadd.f32 %v5305, %v3238
    %v5328 = vrot.slane %v5326, 1
    %5329 = vrot.lane.b32.xlu0 %v5326, 64
    %v5330 = vpop.permute.xlu0 %5329
    %5331 = vrot.lane.b32.xlu0 %v5328, 64
    %v5332 = vpop.permute.xlu0 %5331
    %v5335 = vmul.f32 %v5323, %v5330
    %v5336 = vmul.f32 %v5325, %v5332
    %5339 = vrot.lane.b32.xlu0 %v5335, 64
    %v5340 = vpop.permute.xlu0 %5339
    %5341 = vrot.lane.b32.xlu0 %v5336, 64
    %v5342 = vpop.permute.xlu0 %5341
    %v5345 = vadd.f32 %v2990, %v5340
    %v5346 = vadd.f32 %v2991, %v5342
    %v5347 = vtanh.pop %v5345
    %v5348 = vtanh.pop %v5346
    %v5349 = vsub.f32 1.0, %v5323
    %v5350 = vsub.f32 1.0, %v5325
    %5353 = vrot.lane.b32.xlu0 %v5347, 96
    %v5354 = vpop.permute.xlu0 %5353
    %5355 = vrot.lane.b32.xlu0 %v5348, 96
    %v5356 = vpop.permute.xlu0 %5355
    %v5359 = vmul.f32 %v5349, %v5354
    %v5360 = vmul.f32 %v5350, %v5356
    %v5361 = vrot.slane %v5071, 1
    %v5364 = vmul.f32 %v5323, %v5232
    %v5365 = vmul.f32 %v5325, %v5361
    %v5366 = vadd.f32 %v5359, %v5364
    %v5367 = vadd.f32 %v5360, %v5365
    %5370 = vrot.lane.b32.xlu0 %v5366, 96
    %v5371 = vpop.permute.xlu0 %5370
    %5372 = vrot.lane.b32.xlu0 %v5367, 96
    %v5373 = vpop.permute.xlu0 %5372
    %5376 = vst.msk [vmem:[#allocation3] sm:$0x1] %vm391, %v5371
    %5377 = vst.msk [vmem:[#allocation3 + $0x8] sm:$0x1] %vm391, %v5373
    %v5378 = vld [vmem:[#allocation2] sm:$0xff]
    %v5379 = vld [vmem:[#allocation2 + $0x8] sm:$0xff]
    %v5380 = vld [vmem:[#allocation3] sm:$0xff]
    %v5381 = vld [vmem:[#allocation3 + $0x8] sm:$0xff]
    %v5382 = vld [vmem:[%s6] sm:$0x1]
    %v5383 = vld [vmem:[%s6 + $0x1] sm:$0x1]
    %v5384 = vlaneseq
    %v5385 = vshrl.u32 %v5384, 7
    %v5386 = vsub.s32 0, %v5385
    %v5387 = vrot.slane %v5382, %v5386
    %v5388 = vmul.f32 %v5378, %v5387
    %v5389 = vmul.f32 %v5379, %v5387
    %v5390 = vsel %vm244, %v5388, 0.0
    %5391 = vadd.xlane.f32.xlu0 %v5390
    %v5392 = vpop.xlane.xlu0 %5391
    %v5393 = vsel %vm244, %v5389, 0.0
    %5394 = vadd.xlane.f32.xlu0 %v5393
    %v5395 = vpop.xlane.xlu0 %5394
    %v5396 = vlaneseq
    %v5397 = vshrl.u32 %v5396, 7
    %v5398 = vsub.s32 0, %v5397
    %v5399 = vrot.slane %v5383, %v5398
    %v5400 = vmul.f32 %v5380, %v5399
    %v5401 = vmul.f32 %v5381, %v5399
    %v5402 = vsel %vm244, %v5400, 0.0
    %5403 = vadd.xlane.f32.xlu0 %v5402
    %v5404 = vpop.xlane.xlu0 %5403
    %v5405 = vsel %vm244, %v5401, 0.0
    %5406 = vadd.xlane.f32.xlu0 %v5405
    %v5407 = vpop.xlane.xlu0 %5406
    %v5408 = vadd.f32 %v5392, %v5404
    %v5409 = vadd.f32 %v5395, %v5407
    %v5410 = vrot.slane %v5408, 4
    %v5411 = vmax.f32 %v5408, %v5410
    %v5412 = vrot.slane %v5411, 2
    %v5413 = vmax.f32 %v5411, %v5412
    %v5414 = vrot.slane %v5413, 1
    %v5415 = vmax.f32 %v5413, %v5414
    %v5416 = vrot.slane %v5409, 4
    %v5417 = vmax.f32 %v5409, %v5416
    %v5418 = vrot.slane %v5417, 2
    %v5419 = vmax.f32 %v5417, %v5418
    %v5420 = vrot.slane %v5419, 1
    %v5421 = vmax.f32 %v5419, %v5420
    %v5422 = vsub.f32 %v5408, %v5415
    %v5423 = vsub.f32 %v5409, %v5421
    %v5424 = vmul.f32 %v5422, 1.442695
    %v5425 = vpow.pop %v5424
    %v5426 = vmul.f32 %v5423, 1.442695
    %v5427 = vpow.pop %v5426
    %v5428 = vrot.slane %v5425, 4
    %v5429 = vadd.f32 %v5425, %v5428
    %v5430 = vrot.slane %v5429, 2
    %v5431 = vadd.f32 %v5429, %v5430
    %v5432 = vrot.slane %v5431, 1
    %v5433 = vadd.f32 %v5431, %v5432
    %v5434 = vrot.slane %v5427, 4
    %v5435 = vadd.f32 %v5427, %v5434
    %v5436 = vrot.slane %v5435, 2
    %v5437 = vadd.f32 %v5435, %v5436
    %v5438 = vrot.slane %v5437, 1
    %v5439 = vadd.f32 %v5437, %v5438
    %v5440 = vrcp.pop %v5433
    %v5441 = vrcp.pop %v5439
    %v5442 = vmul.f32 %v5425, %v5440
    %v5443 = vmul.f32 %v5427, %v5441
    %v5444 = vmul.f32 %v5378, %v5442
    %v5445 = vmul.f32 %v5379, %v5443
    %v5446 = vsel %vm244, %v5444, 0.0
    %v5447 = vrot.slane %v5446, 4
    %v5448 = vadd.f32 %v5446, %v5447
    %v5449 = vrot.slane %v5448, 2
    %v5450 = vadd.f32 %v5448, %v5449
    %v5451 = vrot.slane %v5450, 1
    %v5452 = vadd.f32 %v5450, %v5451
    %v5453 = vsel %vm244, %v5445, 0.0
    %v5454 = vrot.slane %v5453, 4
    %v5455 = vadd.f32 %v5453, %v5454
    %v5456 = vrot.slane %v5455, 2
    %v5457 = vadd.f32 %v5455, %v5456
    %v5458 = vrot.slane %v5457, 1
    %v5459 = vadd.f32 %v5457, %v5458
    %v5460 = vmul.f32 %v5380, %v5442
    %v5461 = vmul.f32 %v5381, %v5443
    %v5462 = vsel %vm244, %v5460, 0.0
    %v5463 = vrot.slane %v5462, 4
    %v5464 = vadd.f32 %v5462, %v5463
    %v5465 = vrot.slane %v5464, 2
    %v5466 = vadd.f32 %v5464, %v5465
    %v5467 = vrot.slane %v5466, 1
    %v5468 = vadd.f32 %v5466, %v5467
    %v5469 = vsel %vm244, %v5461, 0.0
    %v5470 = vrot.slane %v5469, 4
    %v5471 = vadd.f32 %v5469, %v5470
    %v5472 = vrot.slane %v5471, 2
    %v5473 = vadd.f32 %v5471, %v5472
    %v5474 = vrot.slane %v5473, 1
    %v5475 = vadd.f32 %v5473, %v5474
    %v5476 = vld [vmem:[%s7] sm:$0xff]
    %v5477 = vld [vmem:[%s7 + $0x8] sm:$0xff]
    %v5478 = vld [vmem:[%s7 + $0x10] sm:$0xff]
    %v5479 = vld [vmem:[%s7 + $0x18] sm:$0xff]
    %v5480 = vld [vmem:[%s7 + $0x20] sm:$0xff]
    %v5481 = vld [vmem:[%s7 + $0x28] sm:$0xff]
    %v5482 = vld [vmem:[%s7 + $0x30] sm:$0xff]
    %v5483 = vld [vmem:[%s7 + $0x38] sm:$0xff]
    %v5486 = vsel %vm543, %v5475, %v5468
    %v5487 = vsel %vm244, %v5486, 0
    %5489 = vmatprep.subr.mxu0 0.0
    %5490 = vmatpush1.msra.mxu0 0.0
    %5491 = vmatprep.subr.mxu0 0.0
    %5492 = vmatpush1.msra.mxu0 0.0
    %5493 = vmatprep.subr.mxu0 0.0
    %5494 = vmatpush1.msra.mxu0 0.0
    %5495 = vmatprep.subr.mxu0 0.0
    %5496 = vmatpush1.msra.mxu0 0.0
    %5497 = vmatprep.subr.mxu0 0.0
    %5498 = vmatpush1.msra.mxu0 0.0
    %5499 = vmatprep.subr.mxu0 0.0
    %5500 = vmatpush1.msra.mxu0 0.0
    %5501 = vmatprep.subr.mxu0 0.0
    %5502 = vmatpush1.msra.mxu0 0.0
    %5503 = vmatprep.subr.mxu0 0.0
    %5504 = vmatpush1.msra.mxu0 0.0
    %5505 = vmatprep.subr.mxu0 0.0
    %5506 = vmatpush1.msra.mxu0 0.0
    %5507 = vmatprep.subr.mxu0 0.0
    %5508 = vmatpush1.msra.mxu0 0.0
    %5509 = vmatprep.subr.mxu0 0.0
    %5510 = vmatpush1.msra.mxu0 0.0
    %5511 = vmatprep.subr.mxu0 0.0
    %5512 = vmatpush1.msra.mxu0 0.0
    %5513 = vmatprep.subr.mxu0 0.0
    %5514 = vmatpush1.msra.mxu0 %v5483
    %5515 = vmatprep.subr.mxu0 0.0
    %5516 = vmatpush1.msra.mxu0 %v5482
    %5517 = vmatprep.subr.mxu0 0.0
    %5518 = vmatpush1.msra.mxu0 %v5481
    %5519 = vmatprep.subr.mxu0 0.0
    %5520 = vmatpush1.msra.mxu0 %v5480
    %5521 = vmatprep.subr.mxu0 0.0
    %5522 = vmatpush2.msra.mxu0 0.0
    %5523 = vmatprep.subr.mxu0 0.0
    %5524 = vmatpush2.msra.mxu0 0.0
    %5525 = vmatprep.subr.mxu0 0.0
    %5526 = vmatpush2.msra.mxu0 0.0
    %5527 = vmatprep.subr.mxu0 0.0
    %5528 = vmatpush2.msra.mxu0 0.0
    %5529 = vmatprep.subr.mxu0 0.0
    %5530 = vmatpush2.msra.mxu0 0.0
    %5531 = vmatprep.subr.mxu0 0.0
    %5532 = vmatpush2.msra.mxu0 0.0
    %5533 = vmatprep.subr.mxu0 0.0
    %5534 = vmatpush2.msra.mxu0 0.0
    %5535 = vmatprep.subr.mxu0 0.0
    %5536 = vmatpush2.msra.mxu0 0.0
    %5537 = vmatprep.subr.mxu0 0.0
    %5538 = vmatpush2.msra.mxu0 0.0
    %5539 = vmatprep.subr.mxu0 0.0
    %5540 = vmatpush2.msra.mxu0 0.0
    %5541 = vmatprep.subr.mxu0 0.0
    %5542 = vmatpush2.msra.mxu0 0.0
    %5543 = vmatprep.subr.mxu0 0.0
    %5544 = vmatpush2.msra.mxu0 0.0
    %5545 = vmatprep.subr.mxu0 0.0
    %5546 = vmatpush2.msra.mxu0 0.0
    %5547 = vmatprep.subr.mxu0 0.0
    %5548 = vmatpush2.msra.mxu0 0.0
    %5549 = vmatprep.subr.mxu0 0.0
    %5550 = vmatpush2.msra.mxu0 0.0
    %5551 = vmatprep.subr.mxu0 0.0
    %5552 = vmatpush2.msra.mxu0 0.0
    %5553 = vmatprep.mubr.f32.mxu0 0.0
    %5554 = vmatmul.mubr.f32.gmra.mxu0 %v5487
    %v5555 = vpop.f32.mrf.mxu0
    %v5556 = vadd.f32 0.0, %v5555
    %v5557 = vpop.f32.mrf.mxu0
    %5558 = vdwg.mxu0
    %v5561 = vsel %vm543, %v5459, %v5452
    %v5562 = vsel %vm244, %v5561, 0
    %5564 = vmatprep.subr.mxu0 0.0
    %5565 = vmatpush1.msra.mxu0 0.0
    %5566 = vmatprep.subr.mxu0 0.0
    %5567 = vmatpush1.msra.mxu0 0.0
    %5568 = vmatprep.subr.mxu0 0.0
    %5569 = vmatpush1.msra.mxu0 0.0
    %5570 = vmatprep.subr.mxu0 0.0
    %5571 = vmatpush1.msra.mxu0 0.0
    %5572 = vmatprep.subr.mxu0 0.0
    %5573 = vmatpush1.msra.mxu0 0.0
    %5574 = vmatprep.subr.mxu0 0.0
    %5575 = vmatpush1.msra.mxu0 0.0
    %5576 = vmatprep.subr.mxu0 0.0
    %5577 = vmatpush1.msra.mxu0 0.0
    %5578 = vmatprep.subr.mxu0 0.0
    %5579 = vmatpush1.msra.mxu0 0.0
    %5580 = vmatprep.subr.mxu0 0.0
    %5581 = vmatpush1.msra.mxu0 0.0
    %5582 = vmatprep.subr.mxu0 0.0
    %5583 = vmatpush1.msra.mxu0 0.0
    %5584 = vmatprep.subr.mxu0 0.0
    %5585 = vmatpush1.msra.mxu0 0.0
    %5586 = vmatprep.subr.mxu0 0.0
    %5587 = vmatpush1.msra.mxu0 0.0
    %5588 = vmatprep.subr.mxu0 0.0
    %5589 = vmatpush1.msra.mxu0 %v5479
    %5590 = vmatprep.subr.mxu0 0.0
    %5591 = vmatpush1.msra.mxu0 %v5478
    %5592 = vmatprep.subr.mxu0 0.0
    %5593 = vmatpush1.msra.mxu0 %v5477
    %5594 = vmatprep.subr.mxu0 0.0
    %5595 = vmatpush1.msra.mxu0 %v5476
    %5596 = vmatprep.subr.mxu0 0.0
    %5597 = vmatpush2.msra.mxu0 0.0
    %5598 = vmatprep.subr.mxu0 0.0
    %5599 = vmatpush2.msra.mxu0 0.0
    %5600 = vmatprep.subr.mxu0 0.0
    %5601 = vmatpush2.msra.mxu0 0.0
    %5602 = vmatprep.subr.mxu0 0.0
    %5603 = vmatpush2.msra.mxu0 0.0
    %5604 = vmatprep.subr.mxu0 0.0
    %5605 = vmatpush2.msra.mxu0 0.0
    %5606 = vmatprep.subr.mxu0 0.0
    %5607 = vmatpush2.msra.mxu0 0.0
    %5608 = vmatprep.subr.mxu0 0.0
    %5609 = vmatpush2.msra.mxu0 0.0
    %5610 = vmatprep.subr.mxu0 0.0
    %5611 = vmatpush2.msra.mxu0 0.0
    %5612 = vmatprep.subr.mxu0 0.0
    %5613 = vmatpush2.msra.mxu0 0.0
    %5614 = vmatprep.subr.mxu0 0.0
    %5615 = vmatpush2.msra.mxu0 0.0
    %5616 = vmatprep.subr.mxu0 0.0
    %5617 = vmatpush2.msra.mxu0 0.0
    %5618 = vmatprep.subr.mxu0 0.0
    %5619 = vmatpush2.msra.mxu0 0.0
    %5620 = vmatprep.subr.mxu0 0.0
    %5621 = vmatpush2.msra.mxu0 0.0
    %5622 = vmatprep.subr.mxu0 0.0
    %5623 = vmatpush2.msra.mxu0 0.0
    %5624 = vmatprep.subr.mxu0 0.0
    %5625 = vmatpush2.msra.mxu0 0.0
    %5626 = vmatprep.subr.mxu0 0.0
    %5627 = vmatpush2.msra.mxu0 0.0
    %5628 = vmatprep.mubr.f32.mxu0 0.0
    %5629 = vmatmul.mubr.f32.gmra.mxu0 %v5562
    %v5630 = vpop.f32.mrf.mxu0
    %v5631 = vadd.f32 %v5556, %v5630
    %v5632 = vpop.f32.mrf.mxu0
    %5633 = vdwg.mxu0
    %v5634 = vld [vmem:[%s8] sm:$0x1]
    %v5636 = vlaneseq
    %v5637 = vshrl.u32 %v5636, 7
    %v5638 = vsub.s32 0, %v5637
    %v5639 = vrot.slane %v5634, %v5638
    %v5641 = vadd.f32 %v5631, %v5639
    %vm5642 = vcmask 25600
    %5643 = vst.msk [vmem:[#allocation9] sm:$0x3] %vm5642, %v5641
    // Predicated region
    $region46: #{biagru_forward.1} parent=1 // pred_check
      _
    $region47: #{biagru_forward.1} parent=1 // pred_check_branch
      %5645 = sbr.rel (0) target = $region49
    $region48: #{biagru_forward.1} parent=1 // pred_region
      %s5647 = ssub.s32 32, 32
      %5648 = vsyncadd [#allocation6], %s5647
      %s5650 = sshll.u32 [#allocation9], 4
      %s5651 = int_to_ptr.vmem [resolvable:$true] %s5650
      %5653 = dma.vmem_to_hbm [thread:$0]  %s5651, 32, %s9, [#allocation6]
    $region49: #{biagru_forward.1} parent=1 // pred_fallthru
      _
    // Predicated region
    $region50: #{biagru_forward.1} parent=1 // pred_check
      _
    $region51: #{biagru_forward.1} parent=1 // pred_check_branch
      %5655 = sbr.rel (0) target = $region53
    $region52: #{biagru_forward.1} parent=1 // pred_region
      %5656 = dma.done [#allocation6], 32
    $region53: #{biagru_forward.1} parent=1 // pred_fallthru
      _
    %5657 = vsyncpa [#allocation5], 1
    %5658 = vsyncpa [#allocation8], 1
    %5659 = vsyncpa [#allocation6], 1

</llo_original>
